<compile_context>
chip_gen: v6e
topology: v6e:2x2x1
jax: 0.10.0
libtpu: 0.0.40
codegen_flags: <defaults>
</compile_context>

<pallas_src>
import jax
import jax.numpy as jnp
from jax.experimental import pallas as pl
from jax.experimental.pallas import tpu as pltpu


def _round_up(x, m):
    return (x + m - 1) // m * m


def _webpage_kernel(idx_ref,          # VMEM: (TB, F)        int32
                    emb_ref,          # VMEM: (vocab, E)     f32   (resident)
                    w1_ref, b1_ref,   # VMEM: (F*E, Hp), (1, Hp)   (resident)
                    w2_ref, b2_ref,   # VMEM: (Hp, Cp),  (1, Cp)   (resident)
                    out_ref):         # VMEM: (TB, Cp)       f32
    tb, n_features = idx_ref.shape
    vocab, embed = emb_ref.shape
    hidden_p = w1_ref.shape[1]

    emb = emb_ref[...]                                          # (vocab, E)
    # Hoisted out of the loop (broadcasts are not CSE'd by JAX).
    vocab_iota = jax.lax.broadcasted_iota(jnp.int32, (tb, vocab), 1)

    acc = jnp.zeros((tb, hidden_p), jnp.float32)
    # Static unrolled loop over features: each step is a pair of clean 2-D MXU
    # matmuls (one-hot gather, then the partial first-layer contraction), with
    # only static slices -- no reshapes, no dynamic lane offsets.
    for f in range(n_features):
        ids = idx_ref[:, pl.ds(f, 1)]                           # (TB, 1)
        onehot = jnp.where(ids == vocab_iota, 1.0, 0.0)         # (TB, vocab) f32
        gathered = jnp.dot(onehot, emb,
                           preferred_element_type=jnp.float32,
                           precision=jax.lax.Precision.HIGHEST)  # (TB, E)
        w1_f = w1_ref[pl.ds(f * embed, embed), :]               # (E, Hp) static
        acc = acc + jnp.dot(gathered, w1_f,
                            preferred_element_type=jnp.float32,
                            precision=jax.lax.Precision.HIGHEST)

    hidden = jnp.maximum(acc + b1_ref[...], 0.0)                # ReLU
    # Dropout == identity at inference.
    logits = jnp.dot(hidden, w2_ref[...],
                     preferred_element_type=jnp.float32,
                     precision=jax.lax.Precision.HIGHEST) + b2_ref[...]
    out_ref[...] = logits.astype(out_ref.dtype)


def webpage_classification_forward(t, embeddings, w1, b1, w2, b2, *, block_b=128):
    """Batched forward.

    t: (B, n_features) int32 token ids (a 1-D (n_features,) input is treated as
       batch 1, matching the PyTorch module's single-example forward).
    embeddings: (vocab, embed)       w1: (n_features*embed, hidden)
    b1: (hidden,) or (1, hidden)     w2: (hidden, n_classes)
    b2: (n_classes,) or (1, n_classes)
    Returns logits of shape (B, n_classes) (or (1, n_classes) for 1-D t).
    """
    if t.ndim == 1:
        t = t[None, :]
    batch, n_features = t.shape
    vocab, embed = embeddings.shape
    flat_dim, hidden = w1.shape
    assert flat_dim == n_features * embed
    n_classes = w2.shape[1]

    # Lane-dense padding of hidden / class dims (unmasked stores, full MXU N).
    hidden_p = _round_up(hidden, 128)
    classes_p = _round_up(n_classes, 128)

    # Batch tiling.
    tb = min(block_b, _round_up(batch, 8))
    batch_p = _round_up(batch, tb)

    f32 = jnp.float32
    emb_p = embeddings.astype(f32)
    w1_p = jnp.zeros((flat_dim, hidden_p), f32).at[:, :hidden].set(w1.astype(f32))
    b1_p = jnp.zeros((1, hidden_p), f32).at[:, :hidden].set(
        b1.astype(f32).reshape(1, hidden))
    w2_p = jnp.zeros((hidden_p, classes_p), f32).at[:hidden, :n_classes].set(
        w2.astype(f32))
    b2_p = jnp.zeros((1, classes_p), f32).at[:, :n_classes].set(
        b2.astype(f32).reshape(1, n_classes))
    idx_p = jnp.zeros((batch_p, n_features), jnp.int32).at[:batch].set(
        t.astype(jnp.int32))

    out = pl.pallas_call(
        _webpage_kernel,
        grid=(batch_p // tb,),
        in_specs=[
            pl.BlockSpec((tb, n_features), lambda i: (i, 0)),        # ids stream
            pl.BlockSpec((vocab, embed), lambda i: (0, 0)),          # resident
            pl.BlockSpec((flat_dim, hidden_p), lambda i: (0, 0)),    # resident
            pl.BlockSpec((1, hidden_p), lambda i: (0, 0)),           # resident
            pl.BlockSpec((hidden_p, classes_p), lambda i: (0, 0)),   # resident
            pl.BlockSpec((1, classes_p), lambda i: (0, 0)),          # resident
        ],
        out_specs=pl.BlockSpec((tb, classes_p), lambda i: (i, 0)),
        out_shape=jax.ShapeDtypeStruct((batch_p, classes_p), f32),
        compiler_params=pltpu.CompilerParams(
            dimension_semantics=("parallel",)),   # megacore-shardable on v7x
    )(idx_p, emb_p, w1_p, b1_p, w2_p, b2_p)

    return out[:batch, :n_classes]


def _reference_forward(t, embeddings, w1, b1, w2, b2):
    if t.ndim == 1:
        t = t[None, :]
    hi = jax.lax.Precision.HIGHEST
    flat = embeddings[t].reshape(t.shape[0], -1)
    hidden = jnp.maximum(jnp.dot(flat, w1, precision=hi) + b1.reshape(1, -1), 0.0)
    return jnp.dot(hidden, w2, precision=hi) + b2.reshape(1, -1)


if __name__ == "__main__":
    # Small, forward-consistent shapes.
    vocab, embed_size = 32, 16
    n_features, hidden_size, n_classes = 10, 32, 5
    batch = 16
    flat_dim = n_features * embed_size

    key = jax.random.PRNGKey(0)
    k_emb, k_w1, k_b1, k_w2, k_b2, k_t = jax.random.split(key, 6)

    # Pretrained embedding table.
    embeddings = jax.random.normal(k_emb, (vocab, embed_size), dtype=jnp.float32)

    # Xavier-uniform linear weights (stored as (in, out)), small uniform biases.
    def xavier(k, fan_in, fan_out):
        lim = jnp.sqrt(6.0 / (fan_in + fan_out))
        return jax.random.uniform(k, (fan_in, fan_out), jnp.float32, -lim, lim)

    w1 = xavier(k_w1, flat_dim, hidden_size)
    b1 = jax.random.uniform(k_b1, (1, hidden_size), jnp.float32,
                            -1.0 / jnp.sqrt(flat_dim), 1.0 / jnp.sqrt(flat_dim))
    w2 = xavier(k_w2, hidden_size, n_classes)
    b2 = jax.random.uniform(k_b2, (1, n_classes), jnp.float32,
                            -1.0 / jnp.sqrt(hidden_size), 1.0 / jnp.sqrt(hidden_size))

    # Batched input: `batch` webpages x n_features token indices each.
    t = jax.random.randint(k_t, (batch, n_features), 0, vocab, dtype=jnp.int32)

    logits = webpage_classification_forward(t, embeddings, w1, b1, w2, b2,
                                            block_b=8)
    logits = jax.block_until_ready(logits)

    ref = _reference_forward(t, embeddings, w1, b1, w2, b2)
    assert logits.shape == (batch, n_classes), logits.shape
    assert jnp.allclose(logits, ref, atol=1e-4, rtol=1e-4), (logits, ref)

    # Single-example path (matches the PyTorch module's forward(t) signature).
    single = webpage_classification_forward(t[0], embeddings, w1, b1, w2, b2)
    single = jax.block_until_ready(single)
    assert single.shape == (1, n_classes)
    assert jnp.allclose(single, ref[0:1], atol=1e-4, rtol=1e-4), (single, ref[0:1])

    print("KERNEL_OK")
</pallas_src>

<mosaic_0001>
module attributes {stable_mosaic.version = 11 : i64} {
  func.func @_webpage_kernel(%arg0: i32, %arg1: memref<8x10xi32, #tpu.memory_space<vmem>>, %arg2: memref<32x16xf32, #tpu.memory_space<vmem>>, %arg3: memref<160x128xf32, #tpu.memory_space<vmem>>, %arg4: memref<1x128xf32, #tpu.memory_space<vmem>>, %arg5: memref<128x128xf32, #tpu.memory_space<vmem>>, %arg6: memref<1x128xf32, #tpu.memory_space<vmem>>, %arg7: memref<8x128xf32, #tpu.memory_space<vmem>>) attributes {dimension_semantics = [#tpu.dimension_semantics<parallel>], iteration_bounds = array<i64: 2>, scalar_prefetch = 0 : i64, scratch_operands = 0 : i64, tpu.core_type = #tpu.core_type<tc>, window_params = [{transform_indices = @transform_0, window_bounds = array<i64: 8, 10>}, {pipeline_mode = #tpu.pipeline_mode<synchronous>, transform_indices = @transform_1, window_bounds = array<i64: 32, 16>}, {pipeline_mode = #tpu.pipeline_mode<synchronous>, transform_indices = @transform_2, window_bounds = array<i64: 160, 128>}, {pipeline_mode = #tpu.pipeline_mode<synchronous>, transform_indices = @transform_3, window_bounds = array<i64: 1, 128>}, {pipeline_mode = #tpu.pipeline_mode<synchronous>, transform_indices = @transform_4, window_bounds = array<i64: 128, 128>}, {pipeline_mode = #tpu.pipeline_mode<synchronous>, transform_indices = @transform_5, window_bounds = array<i64: 1, 128>}, {transform_indices = @transform_6, window_bounds = array<i64: 8, 128>}]} {
    %c0 = arith.constant 0 : index
    %c0_0 = arith.constant 0 : index
    %0 = vector.load %arg2[%c0, %c0_0] : memref<32x16xf32, #tpu.memory_space<vmem>>, vector<32x16xf32>
    %1 = tpu.iota {dimensions = array<i32: 1>} : vector<8x32xi32>
    %cst = arith.constant 0.000000e+00 : f32
    %2 = vector.broadcast %cst : f32 to vector<8x128xf32>
    %c0_1 = arith.constant 0 : index
    %c0_2 = arith.constant 0 : index
    %3 = vector.load %arg1[%c0_1, %c0_2] : memref<8x10xi32, #tpu.memory_space<vmem>>, vector<8x1xi32>
    %4 = vector.broadcast %3 : vector<8x1xi32> to vector<8x32xi32>
    %5 = arith.cmpi eq, %4, %1 : vector<8x32xi32>
    %cst_3 = arith.constant 1.000000e+00 : f32
    %cst_4 = arith.constant 0.000000e+00 : f32
    %6 = vector.broadcast %cst_3 : f32 to vector<8x32xf32>
    %7 = vector.broadcast %cst_4 : f32 to vector<8x32xf32>
    %8 = arith.select %5, %6, %7 : vector<8x32xi1>, vector<8x32xf32>
    %cst_5 = arith.constant dense<0.000000e+00> : vector<8x16xf32>
    %9 = tpu.matmul %8, %0, %cst_5 {dimension_numbers = #tpu.dot_dimension_numbers<[1], [0], [0], [1], [0, 0, 1, 1], [], []>, precision = #tpu.contract_precision<fp32>} : vector<8x32xf32>, vector<32x16xf32>, vector<8x16xf32> -> vector<8x16xf32>
    %c0_6 = arith.constant 0 : index
    %c0_7 = arith.constant 0 : index
    %10 = vector.load %arg3[%c0_6, %c0_7] : memref<160x128xf32, #tpu.memory_space<vmem>>, vector<16x128xf32>
    %cst_8 = arith.constant dense<0.000000e+00> : vector<8x128xf32>
    %11 = tpu.matmul %9, %10, %cst_8 {dimension_numbers = #tpu.dot_dimension_numbers<[1], [0], [0], [1], [0, 0, 1, 1], [], []>, precision = #tpu.contract_precision<fp32>} : vector<8x16xf32>, vector<16x128xf32>, vector<8x128xf32> -> vector<8x128xf32>
    %12 = arith.addf %2, %11 : vector<8x128xf32>
    %c0_9 = arith.constant 0 : index
    %c1 = arith.constant 1 : index
    %13 = vector.load %arg1[%c0_9, %c1] : memref<8x10xi32, #tpu.memory_space<vmem>>, vector<8x1xi32>
    %14 = vector.broadcast %13 : vector<8x1xi32> to vector<8x32xi32>
    %15 = arith.cmpi eq, %14, %1 : vector<8x32xi32>
    %cst_10 = arith.constant 1.000000e+00 : f32
    %cst_11 = arith.constant 0.000000e+00 : f32
    %16 = vector.broadcast %cst_10 : f32 to vector<8x32xf32>
    %17 = vector.broadcast %cst_11 : f32 to vector<8x32xf32>
    %18 = arith.select %15, %16, %17 : vector<8x32xi1>, vector<8x32xf32>
    %cst_12 = arith.constant dense<0.000000e+00> : vector<8x16xf32>
    %19 = tpu.matmul %18, %0, %cst_12 {dimension_numbers = #tpu.dot_dimension_numbers<[1], [0], [0], [1], [0, 0, 1, 1], [], []>, precision = #tpu.contract_precision<fp32>} : vector<8x32xf32>, vector<32x16xf32>, vector<8x16xf32> -> vector<8x16xf32>
    %c16 = arith.constant 16 : index
    %c0_13 = arith.constant 0 : index
    %20 = vector.load %arg3[%c16, %c0_13] : memref<160x128xf32, #tpu.memory_space<vmem>>, vector<16x128xf32>
    %cst_14 = arith.constant dense<0.000000e+00> : vector<8x128xf32>
    %21 = tpu.matmul %19, %20, %cst_14 {dimension_numbers = #tpu.dot_dimension_numbers<[1], [0], [0], [1], [0, 0, 1, 1], [], []>, precision = #tpu.contract_precision<fp32>} : vector<8x16xf32>, vector<16x128xf32>, vector<8x128xf32> -> vector<8x128xf32>
    %22 = arith.addf %12, %21 : vector<8x128xf32>
    %c0_15 = arith.constant 0 : index
    %c2 = arith.constant 2 : index
    %23 = vector.load %arg1[%c0_15, %c2] : memref<8x10xi32, #tpu.memory_space<vmem>>, vector<8x1xi32>
    %24 = vector.broadcast %23 : vector<8x1xi32> to vector<8x32xi32>
    %25 = arith.cmpi eq, %24, %1 : vector<8x32xi32>
    %cst_16 = arith.constant 1.000000e+00 : f32
    %cst_17 = arith.constant 0.000000e+00 : f32
    %26 = vector.broadcast %cst_16 : f32 to vector<8x32xf32>
    %27 = vector.broadcast %cst_17 : f32 to vector<8x32xf32>
    %28 = arith.select %25, %26, %27 : vector<8x32xi1>, vector<8x32xf32>
    %cst_18 = arith.constant dense<0.000000e+00> : vector<8x16xf32>
    %29 = tpu.matmul %28, %0, %cst_18 {dimension_numbers = #tpu.dot_dimension_numbers<[1], [0], [0], [1], [0, 0, 1, 1], [], []>, precision = #tpu.contract_precision<fp32>} : vector<8x32xf32>, vector<32x16xf32>, vector<8x16xf32> -> vector<8x16xf32>
    %c32 = arith.constant 32 : index
    %c0_19 = arith.constant 0 : index
    %30 = vector.load %arg3[%c32, %c0_19] : memref<160x128xf32, #tpu.memory_space<vmem>>, vector<16x128xf32>
    %cst_20 = arith.constant dense<0.000000e+00> : vector<8x128xf32>
    %31 = tpu.matmul %29, %30, %cst_20 {dimension_numbers = #tpu.dot_dimension_numbers<[1], [0], [0], [1], [0, 0, 1, 1], [], []>, precision = #tpu.contract_precision<fp32>} : vector<8x16xf32>, vector<16x128xf32>, vector<8x128xf32> -> vector<8x128xf32>
    %32 = arith.addf %22, %31 : vector<8x128xf32>
    %c0_21 = arith.constant 0 : index
    %c3 = arith.constant 3 : index
    %33 = vector.load %arg1[%c0_21, %c3] : memref<8x10xi32, #tpu.memory_space<vmem>>, vector<8x1xi32>
    %34 = vector.broadcast %33 : vector<8x1xi32> to vector<8x32xi32>
    %35 = arith.cmpi eq, %34, %1 : vector<8x32xi32>
    %cst_22 = arith.constant 1.000000e+00 : f32
    %cst_23 = arith.constant 0.000000e+00 : f32
    %36 = vector.broadcast %cst_22 : f32 to vector<8x32xf32>
    %37 = vector.broadcast %cst_23 : f32 to vector<8x32xf32>
    %38 = arith.select %35, %36, %37 : vector<8x32xi1>, vector<8x32xf32>
    %cst_24 = arith.constant dense<0.000000e+00> : vector<8x16xf32>
    %39 = tpu.matmul %38, %0, %cst_24 {dimension_numbers = #tpu.dot_dimension_numbers<[1], [0], [0], [1], [0, 0, 1, 1], [], []>, precision = #tpu.contract_precision<fp32>} : vector<8x32xf32>, vector<32x16xf32>, vector<8x16xf32> -> vector<8x16xf32>
    %c48 = arith.constant 48 : index
    %c0_25 = arith.constant 0 : index
    %40 = vector.load %arg3[%c48, %c0_25] : memref<160x128xf32, #tpu.memory_space<vmem>>, vector<16x128xf32>
    %cst_26 = arith.constant dense<0.000000e+00> : vector<8x128xf32>
    %41 = tpu.matmul %39, %40, %cst_26 {dimension_numbers = #tpu.dot_dimension_numbers<[1], [0], [0], [1], [0, 0, 1, 1], [], []>, precision = #tpu.contract_precision<fp32>} : vector<8x16xf32>, vector<16x128xf32>, vector<8x128xf32> -> vector<8x128xf32>
    %42 = arith.addf %32, %41 : vector<8x128xf32>
    %c0_27 = arith.constant 0 : index
    %c4 = arith.constant 4 : index
    %43 = vector.load %arg1[%c0_27, %c4] : memref<8x10xi32, #tpu.memory_space<vmem>>, vector<8x1xi32>
    %44 = vector.broadcast %43 : vector<8x1xi32> to vector<8x32xi32>
    %45 = arith.cmpi eq, %44, %1 : vector<8x32xi32>
    %cst_28 = arith.constant 1.000000e+00 : f32
    %cst_29 = arith.constant 0.000000e+00 : f32
    %46 = vector.broadcast %cst_28 : f32 to vector<8x32xf32>
    %47 = vector.broadcast %cst_29 : f32 to vector<8x32xf32>
    %48 = arith.select %45, %46, %47 : vector<8x32xi1>, vector<8x32xf32>
    %cst_30 = arith.constant dense<0.000000e+00> : vector<8x16xf32>
    %49 = tpu.matmul %48, %0, %cst_30 {dimension_numbers = #tpu.dot_dimension_numbers<[1], [0], [0], [1], [0, 0, 1, 1], [], []>, precision = #tpu.contract_precision<fp32>} : vector<8x32xf32>, vector<32x16xf32>, vector<8x16xf32> -> vector<8x16xf32>
    %c64 = arith.constant 64 : index
    %c0_31 = arith.constant 0 : index
    %50 = vector.load %arg3[%c64, %c0_31] : memref<160x128xf32, #tpu.memory_space<vmem>>, vector<16x128xf32>
    %cst_32 = arith.constant dense<0.000000e+00> : vector<8x128xf32>
    %51 = tpu.matmul %49, %50, %cst_32 {dimension_numbers = #tpu.dot_dimension_numbers<[1], [0], [0], [1], [0, 0, 1, 1], [], []>, precision = #tpu.contract_precision<fp32>} : vector<8x16xf32>, vector<16x128xf32>, vector<8x128xf32> -> vector<8x128xf32>
    %52 = arith.addf %42, %51 : vector<8x128xf32>
    %c0_33 = arith.constant 0 : index
    %c5 = arith.constant 5 : index
    %53 = vector.load %arg1[%c0_33, %c5] : memref<8x10xi32, #tpu.memory_space<vmem>>, vector<8x1xi32>
    %54 = vector.broadcast %53 : vector<8x1xi32> to vector<8x32xi32>
    %55 = arith.cmpi eq, %54, %1 : vector<8x32xi32>
    %cst_34 = arith.constant 1.000000e+00 : f32
    %cst_35 = arith.constant 0.000000e+00 : f32
    %56 = vector.broadcast %cst_34 : f32 to vector<8x32xf32>
    %57 = vector.broadcast %cst_35 : f32 to vector<8x32xf32>
    %58 = arith.select %55, %56, %57 : vector<8x32xi1>, vector<8x32xf32>
    %cst_36 = arith.constant dense<0.000000e+00> : vector<8x16xf32>
    %59 = tpu.matmul %58, %0, %cst_36 {dimension_numbers = #tpu.dot_dimension_numbers<[1], [0], [0], [1], [0, 0, 1, 1], [], []>, precision = #tpu.contract_precision<fp32>} : vector<8x32xf32>, vector<32x16xf32>, vector<8x16xf32> -> vector<8x16xf32>
    %c80 = arith.constant 80 : index
    %c0_37 = arith.constant 0 : index
    %60 = vector.load %arg3[%c80, %c0_37] : memref<160x128xf32, #tpu.memory_space<vmem>>, vector<16x128xf32>
    %cst_38 = arith.constant dense<0.000000e+00> : vector<8x128xf32>
    %61 = tpu.matmul %59, %60, %cst_38 {dimension_numbers = #tpu.dot_dimension_numbers<[1], [0], [0], [1], [0, 0, 1, 1], [], []>, precision = #tpu.contract_precision<fp32>} : vector<8x16xf32>, vector<16x128xf32>, vector<8x128xf32> -> vector<8x128xf32>
    %62 = arith.addf %52, %61 : vector<8x128xf32>
    %c0_39 = arith.constant 0 : index
    %c6 = arith.constant 6 : index
    %63 = vector.load %arg1[%c0_39, %c6] : memref<8x10xi32, #tpu.memory_space<vmem>>, vector<8x1xi32>
    %64 = vector.broadcast %63 : vector<8x1xi32> to vector<8x32xi32>
    %65 = arith.cmpi eq, %64, %1 : vector<8x32xi32>
    %cst_40 = arith.constant 1.000000e+00 : f32
    %cst_41 = arith.constant 0.000000e+00 : f32
    %66 = vector.broadcast %cst_40 : f32 to vector<8x32xf32>
    %67 = vector.broadcast %cst_41 : f32 to vector<8x32xf32>
    %68 = arith.select %65, %66, %67 : vector<8x32xi1>, vector<8x32xf32>
    %cst_42 = arith.constant dense<0.000000e+00> : vector<8x16xf32>
    %69 = tpu.matmul %68, %0, %cst_42 {dimension_numbers = #tpu.dot_dimension_numbers<[1], [0], [0], [1], [0, 0, 1, 1], [], []>, precision = #tpu.contract_precision<fp32>} : vector<8x32xf32>, vector<32x16xf32>, vector<8x16xf32> -> vector<8x16xf32>
    %c96 = arith.constant 96 : index
    %c0_43 = arith.constant 0 : index
    %70 = vector.load %arg3[%c96, %c0_43] : memref<160x128xf32, #tpu.memory_space<vmem>>, vector<16x128xf32>
    %cst_44 = arith.constant dense<0.000000e+00> : vector<8x128xf32>
    %71 = tpu.matmul %69, %70, %cst_44 {dimension_numbers = #tpu.dot_dimension_numbers<[1], [0], [0], [1], [0, 0, 1, 1], [], []>, precision = #tpu.contract_precision<fp32>} : vector<8x16xf32>, vector<16x128xf32>, vector<8x128xf32> -> vector<8x128xf32>
    %72 = arith.addf %62, %71 : vector<8x128xf32>
    %c0_45 = arith.constant 0 : index
    %c7 = arith.constant 7 : index
    %73 = vector.load %arg1[%c0_45, %c7] : memref<8x10xi32, #tpu.memory_space<vmem>>, vector<8x1xi32>
    %74 = vector.broadcast %73 : vector<8x1xi32> to vector<8x32xi32>
    %75 = arith.cmpi eq, %74, %1 : vector<8x32xi32>
    %cst_46 = arith.constant 1.000000e+00 : f32
    %cst_47 = arith.constant 0.000000e+00 : f32
    %76 = vector.broadcast %cst_46 : f32 to vector<8x32xf32>
    %77 = vector.broadcast %cst_47 : f32 to vector<8x32xf32>
    %78 = arith.select %75, %76, %77 : vector<8x32xi1>, vector<8x32xf32>
    %cst_48 = arith.constant dense<0.000000e+00> : vector<8x16xf32>
    %79 = tpu.matmul %78, %0, %cst_48 {dimension_numbers = #tpu.dot_dimension_numbers<[1], [0], [0], [1], [0, 0, 1, 1], [], []>, precision = #tpu.contract_precision<fp32>} : vector<8x32xf32>, vector<32x16xf32>, vector<8x16xf32> -> vector<8x16xf32>
    %c112 = arith.constant 112 : index
    %c0_49 = arith.constant 0 : index
    %80 = vector.load %arg3[%c112, %c0_49] : memref<160x128xf32, #tpu.memory_space<vmem>>, vector<16x128xf32>
    %cst_50 = arith.constant dense<0.000000e+00> : vector<8x128xf32>
    %81 = tpu.matmul %79, %80, %cst_50 {dimension_numbers = #tpu.dot_dimension_numbers<[1], [0], [0], [1], [0, 0, 1, 1], [], []>, precision = #tpu.contract_precision<fp32>} : vector<8x16xf32>, vector<16x128xf32>, vector<8x128xf32> -> vector<8x128xf32>
    %82 = arith.addf %72, %81 : vector<8x128xf32>
    %c0_51 = arith.constant 0 : index
    %c8 = arith.constant 8 : index
    %83 = vector.load %arg1[%c0_51, %c8] : memref<8x10xi32, #tpu.memory_space<vmem>>, vector<8x1xi32>
    %84 = vector.broadcast %83 : vector<8x1xi32> to vector<8x32xi32>
    %85 = arith.cmpi eq, %84, %1 : vector<8x32xi32>
    %cst_52 = arith.constant 1.000000e+00 : f32
    %cst_53 = arith.constant 0.000000e+00 : f32
    %86 = vector.broadcast %cst_52 : f32 to vector<8x32xf32>
    %87 = vector.broadcast %cst_53 : f32 to vector<8x32xf32>
    %88 = arith.select %85, %86, %87 : vector<8x32xi1>, vector<8x32xf32>
    %cst_54 = arith.constant dense<0.000000e+00> : vector<8x16xf32>
    %89 = tpu.matmul %88, %0, %cst_54 {dimension_numbers = #tpu.dot_dimension_numbers<[1], [0], [0], [1], [0, 0, 1, 1], [], []>, precision = #tpu.contract_precision<fp32>} : vector<8x32xf32>, vector<32x16xf32>, vector<8x16xf32> -> vector<8x16xf32>
    %c128 = arith.constant 128 : index
    %c0_55 = arith.constant 0 : index
    %90 = vector.load %arg3[%c128, %c0_55] : memref<160x128xf32, #tpu.memory_space<vmem>>, vector<16x128xf32>
    %cst_56 = arith.constant dense<0.000000e+00> : vector<8x128xf32>
    %91 = tpu.matmul %89, %90, %cst_56 {dimension_numbers = #tpu.dot_dimension_numbers<[1], [0], [0], [1], [0, 0, 1, 1], [], []>, precision = #tpu.contract_precision<fp32>} : vector<8x16xf32>, vector<16x128xf32>, vector<8x128xf32> -> vector<8x128xf32>
    %92 = arith.addf %82, %91 : vector<8x128xf32>
    %c0_57 = arith.constant 0 : index
    %c9 = arith.constant 9 : index
    %93 = vector.load %arg1[%c0_57, %c9] : memref<8x10xi32, #tpu.memory_space<vmem>>, vector<8x1xi32>
    %94 = vector.broadcast %93 : vector<8x1xi32> to vector<8x32xi32>
    %95 = arith.cmpi eq, %94, %1 : vector<8x32xi32>
    %cst_58 = arith.constant 1.000000e+00 : f32
    %cst_59 = arith.constant 0.000000e+00 : f32
    %96 = vector.broadcast %cst_58 : f32 to vector<8x32xf32>
    %97 = vector.broadcast %cst_59 : f32 to vector<8x32xf32>
    %98 = arith.select %95, %96, %97 : vector<8x32xi1>, vector<8x32xf32>
    %cst_60 = arith.constant dense<0.000000e+00> : vector<8x16xf32>
    %99 = tpu.matmul %98, %0, %cst_60 {dimension_numbers = #tpu.dot_dimension_numbers<[1], [0], [0], [1], [0, 0, 1, 1], [], []>, precision = #tpu.contract_precision<fp32>} : vector<8x32xf32>, vector<32x16xf32>, vector<8x16xf32> -> vector<8x16xf32>
    %c144 = arith.constant 144 : index
    %c0_61 = arith.constant 0 : index
    %100 = vector.load %arg3[%c144, %c0_61] : memref<160x128xf32, #tpu.memory_space<vmem>>, vector<16x128xf32>
    %cst_62 = arith.constant dense<0.000000e+00> : vector<8x128xf32>
    %101 = tpu.matmul %99, %100, %cst_62 {dimension_numbers = #tpu.dot_dimension_numbers<[1], [0], [0], [1], [0, 0, 1, 1], [], []>, precision = #tpu.contract_precision<fp32>} : vector<8x16xf32>, vector<16x128xf32>, vector<8x128xf32> -> vector<8x128xf32>
    %102 = arith.addf %92, %101 : vector<8x128xf32>
    %c0_63 = arith.constant 0 : index
    %c0_64 = arith.constant 0 : index
    %103 = vector.load %arg4[%c0_63, %c0_64] : memref<1x128xf32, #tpu.memory_space<vmem>>, vector<1x128xf32>
    %104 = vector.broadcast %103 : vector<1x128xf32> to vector<8x128xf32>
    %105 = arith.addf %102, %104 : vector<8x128xf32>
    %cst_65 = arith.constant 0.000000e+00 : f32
    %106 = vector.broadcast %cst_65 : f32 to vector<8x128xf32>
    %107 = arith.maximumf %105, %106 : vector<8x128xf32>
    %c0_66 = arith.constant 0 : index
    %c0_67 = arith.constant 0 : index
    %108 = vector.load %arg5[%c0_66, %c0_67] : memref<128x128xf32, #tpu.memory_space<vmem>>, vector<128x128xf32>
    %cst_68 = arith.constant dense<0.000000e+00> : vector<8x128xf32>
    %109 = tpu.matmul %107, %108, %cst_68 {dimension_numbers = #tpu.dot_dimension_numbers<[1], [0], [0], [1], [0, 0, 1, 1], [], []>, precision = #tpu.contract_precision<fp32>} : vector<8x128xf32>, vector<128x128xf32>, vector<8x128xf32> -> vector<8x128xf32>
    %c0_69 = arith.constant 0 : index
    %c0_70 = arith.constant 0 : index
    %110 = vector.load %arg6[%c0_69, %c0_70] : memref<1x128xf32, #tpu.memory_space<vmem>>, vector<1x128xf32>
    %111 = vector.broadcast %110 : vector<1x128xf32> to vector<8x128xf32>
    %112 = arith.addf %109, %111 : vector<8x128xf32>
    %c0_71 = arith.constant 0 : index
    %c0_72 = arith.constant 0 : index
    %113 = vector.load %arg7[%c0_71, %c0_72] : memref<8x128xf32, #tpu.memory_space<vmem>>, vector<8x128xf32>
    tpu.vector_store %arg7[%c0_71, %c0_72], %112 {strides = array<i32>} : memref<8x128xf32, #tpu.memory_space<vmem>>, vector<8x128xf32>,
    return
  }
  func.func @transform_0(%arg0: i32) -> (i32, i32) {
    %c0_i32 = arith.constant 0 : i32
    %c0_i32_0 = arith.constant 0 : i32
    return %arg0, %c0_i32 : i32, i32
  }
  func.func @transform_1(%arg0: i32) -> (i32, i32) {
    %c0_i32 = arith.constant 0 : i32
    %c0_i32_0 = arith.constant 0 : i32
    %c0_i32_1 = arith.constant 0 : i32
    return %c0_i32, %c0_i32_0 : i32, i32
  }
  func.func @transform_2(%arg0: i32) -> (i32, i32) {
    %c0_i32 = arith.constant 0 : i32
    %c0_i32_0 = arith.constant 0 : i32
    %c0_i32_1 = arith.constant 0 : i32
    return %c0_i32, %c0_i32_0 : i32, i32
  }
  func.func @transform_3(%arg0: i32) -> (i32, i32) {
    %c0_i32 = arith.constant 0 : i32
    %c0_i32_0 = arith.constant 0 : i32
    %c0_i32_1 = arith.constant 0 : i32
    return %c0_i32, %c0_i32_0 : i32, i32
  }
  func.func @transform_4(%arg0: i32) -> (i32, i32) {
    %c0_i32 = arith.constant 0 : i32
    %c0_i32_0 = arith.constant 0 : i32
    %c0_i32_1 = arith.constant 0 : i32
    return %c0_i32, %c0_i32_0 : i32, i32
  }
  func.func @transform_5(%arg0: i32) -> (i32, i32) {
    %c0_i32 = arith.constant 0 : i32
    %c0_i32_0 = arith.constant 0 : i32
    %c0_i32_1 = arith.constant 0 : i32
    return %c0_i32, %c0_i32_0 : i32, i32
  }
  func.func @transform_6(%arg0: i32) -> (i32, i32) {
    %c0_i32 = arith.constant 0 : i32
    %c0_i32_0 = arith.constant 0 : i32
    return %arg0, %c0_i32 : i32, i32
  }
}

</mosaic_0001>

<llo_original>
// kernel: tpu_custom_call.1
$region0: #{tpu_custom_call.1}
  #allocation0 [shape = 'u32[]', space=smem, size = 0x4, offset = 0x4, fixed_abs, tag = 'smem constant byte address 0x4 - core index']
  #allocation1 [shape = 'u32[144,128]{1,0:T(1,128)}', space=vmem, size = 0x12000, scoped, tag = 'internal scratch']
  %s0 = inlined_call_operand.vmem [shape: s32[16,10], index: 0, kind: input, shape index: {}]
  %s1 = inlined_call_operand.vmem [shape: f32[32,16], index: 1, kind: input, shape index: {}]
  %s2 = inlined_call_operand.hbm [shape: f32[160,128], index: 2, kind: input, shape index: {}]
  %s3 = inlined_call_operand.vmem [shape: f32[1,128], index: 3, kind: input, shape index: {}]
  %s4 = inlined_call_operand.hbm [shape: f32[128,128], index: 4, kind: input, shape index: {}]
  %s5 = inlined_call_operand.vmem [shape: f32[1,128], index: 5, kind: input, shape index: {}]
  %s6 = inlined_call_operand.hbm [shape: f32[16,128], index: 6, kind: output, shape index: {}]
  %s7 = sld [smem:[#allocation0]]
  $region65: #{tpu_custom_call.1} parent=0
    _
  %s9 = ssub.s32 1, %s7
  %s10 = scalar_select 0, %s9, %s7
  $region1: #{tpu_custom_call.1} parent=0
    #allocation2 [shape = 'u8[81920]{0}', space=vmem, size = 0x14000, scoped, tag = 'input window, operand 2, single buffered']
    #allocation3 [shape = 's32[2]{0}', space=sflag, size = 0x8, scoped, tag = 'scoped memory for tpu_custom_call.1']
    #allocation4 [shape = 's32[2]{0}', space=sflag, size = 0x8, scoped, tag = 'scoped memory for tpu_custom_call.1']
    #allocation5 [shape = 'u8[65536]{0}', space=vmem, size = 0x10000, scoped, tag = 'input window, operand 4, single buffered']
    #allocation6 [shape = 's32[1]{0}', space=sflag, size = 0x4, scoped, tag = 'scoped memory for tpu_custom_call.1']
    #allocation7 [shape = 'u8[8192]{0}', space=vmem, size = 0x2000, scoped, tag = 'output window, operand 0']
    %11 = vsyncpa [#allocation3], 0
    %12 = vsyncpa [#allocation6], 0
    %13 = vsyncpa [#allocation4], 0
    %s14 = scalar_lea.sflag [#allocation4], 1
    %15 = vsyncpa %s14, 0
    loop: start=0, step=1, limit=4
    $region2: #{tpu_custom_call.1} parent=1 // loop_pre_header
      _
    $region3: #{tpu_custom_call.1} parent=1 // loop_header
      %s17 = sphi 0, %s21
      %p18 = scmp.ge.s32.totalorder %s17, 4
      %s27 = sphi 0, %s29
      %s30 = sphi 0, %s27
      %s31 = sphi 0, %s30
      %s47 = sphi 0, %s31
      %s51 = sphi 0, %s51
      %s53 = sphi 0, %s51
      %s54 = sphi 0, %s53
      %s68 = sphi 0, %s54
      %s72 = sphi 0, %s72
      %s74 = sphi 0, %s72
      %s75 = sphi 0, %s74
      %s89 = sphi 0, %s75
      %s93 = sphi 0, %s93
      %s95 = sphi 0, %s93
      %s96 = sphi 0, %s95
      %s110 = sphi 0, %s96
      %s114 = sphi 0, %s114
      %s116 = sphi 0, %s114
      %s117 = sphi 0, %s116
      %s131 = sphi 0, %s117
      %s135 = sphi 0, %s135
      %s137 = sphi 0, %s135
      %s138 = sphi 0, %s137
      %s152 = sphi 0, %s138
      %s158 = sphi 0, %s160
      %s161 = sphi 0, %s158
      %s162 = sphi 0, %s161
      %s178 = sphi 0, %s162
    $region4: #{tpu_custom_call.1} parent=1 // loop_header_branch
      %20 = sbr.rel (%p18) target = $region8
    $region5: #{tpu_custom_call.1} parent=1 // loop_body
      %s22 = ssub.s32 %s17, 1
      %s23 = ssub.s32 %s17, 2
      %s24 = sadd.s32 %s17, 1
      %s25 = ssub.s32 %s17, %s24
      %p26 = scmp.eq.s32.totalorder %s25, 0
      %s28 = sadd.s32 %s27, 1
      %s29 = scalar_select %p26, %s27, %s28
      %p32 = pneg %p26
      %p33 = scmp.eq.s32.totalorder %s17, 1
      %p34 = por %p32, %p33
      %p35 = scmp.ne.s32.totalorder %s27, %s30
      %p36 = scmp.eq.s32.totalorder %s17, 0
      %p37 = por %p35, %p36
      %p38 = scmp.ne.s32.totalorder %s27, %s30
      %p39 = scmp.eq.s32.totalorder %s22, 1
      %p40 = por %p38, %p39
      %p41 = scmp.ne.s32.totalorder %s30, %s31
      %p42 = scmp.eq.s32.totalorder %s22, 0
      %p43 = por %p41, %p42
      %p44 = scmp.ne.s32.totalorder %s30, %s31
      %p45 = scmp.eq.s32.totalorder %s23, 1
      %p46 = por %p44, %p45
      %p48 = scmp.ne.s32.totalorder %s31, %s47
      %p49 = scmp.eq.s32.totalorder %s23, 0
      %p50 = por %p48, %p49
      %s52 = sadd.s32 %s51, 1
      %p55 = scmp.eq.s32.totalorder %s17, 1
      %p56 = scmp.ne.s32.totalorder %s51, %s53
      %p57 = scmp.eq.s32.totalorder %s17, 0
      %p58 = por %p56, %p57
      %p59 = scmp.ne.s32.totalorder %s51, %s53
      %p60 = scmp.eq.s32.totalorder %s22, 1
      %p61 = por %p59, %p60
      %p62 = scmp.ne.s32.totalorder %s53, %s54
      %p63 = scmp.eq.s32.totalorder %s22, 0
      %p64 = por %p62, %p63
      %p65 = scmp.ne.s32.totalorder %s53, %s54
      %p66 = scmp.eq.s32.totalorder %s23, 1
      %p67 = por %p65, %p66
      %p69 = scmp.ne.s32.totalorder %s54, %s68
      %p70 = scmp.eq.s32.totalorder %s23, 0
      %p71 = por %p69, %p70
      %s73 = sadd.s32 %s72, 1
      %p76 = scmp.eq.s32.totalorder %s17, 1
      %p77 = scmp.ne.s32.totalorder %s72, %s74
      %p78 = scmp.eq.s32.totalorder %s17, 0
      %p79 = por %p77, %p78
      %p80 = scmp.ne.s32.totalorder %s72, %s74
      %p81 = scmp.eq.s32.totalorder %s22, 1
      %p82 = por %p80, %p81
      %p83 = scmp.ne.s32.totalorder %s74, %s75
      %p84 = scmp.eq.s32.totalorder %s22, 0
      %p85 = por %p83, %p84
      %p86 = scmp.ne.s32.totalorder %s74, %s75
      %p87 = scmp.eq.s32.totalorder %s23, 1
      %p88 = por %p86, %p87
      %p90 = scmp.ne.s32.totalorder %s75, %s89
      %p91 = scmp.eq.s32.totalorder %s23, 0
      %p92 = por %p90, %p91
      %s94 = sadd.s32 %s93, 1
      %p97 = scmp.eq.s32.totalorder %s17, 1
      %p98 = scmp.ne.s32.totalorder %s93, %s95
      %p99 = scmp.eq.s32.totalorder %s17, 0
      %p100 = por %p98, %p99
      %p101 = scmp.ne.s32.totalorder %s93, %s95
      %p102 = scmp.eq.s32.totalorder %s22, 1
      %p103 = por %p101, %p102
      %p104 = scmp.ne.s32.totalorder %s95, %s96
      %p105 = scmp.eq.s32.totalorder %s22, 0
      %p106 = por %p104, %p105
      %p107 = scmp.ne.s32.totalorder %s95, %s96
      %p108 = scmp.eq.s32.totalorder %s23, 1
      %p109 = por %p107, %p108
      %p111 = scmp.ne.s32.totalorder %s96, %s110
      %p112 = scmp.eq.s32.totalorder %s23, 0
      %p113 = por %p111, %p112
      %s115 = sadd.s32 %s114, 1
      %p118 = scmp.eq.s32.totalorder %s17, 1
      %p119 = scmp.ne.s32.totalorder %s114, %s116
      %p120 = scmp.eq.s32.totalorder %s17, 0
      %p121 = por %p119, %p120
      %p122 = scmp.ne.s32.totalorder %s114, %s116
      %p123 = scmp.eq.s32.totalorder %s22, 1
      %p124 = por %p122, %p123
      %p125 = scmp.ne.s32.totalorder %s116, %s117
      %p126 = scmp.eq.s32.totalorder %s22, 0
      %p127 = por %p125, %p126
      %p128 = scmp.ne.s32.totalorder %s116, %s117
      %p129 = scmp.eq.s32.totalorder %s23, 1
      %p130 = por %p128, %p129
      %p132 = scmp.ne.s32.totalorder %s117, %s131
      %p133 = scmp.eq.s32.totalorder %s23, 0
      %p134 = por %p132, %p133
      %s136 = sadd.s32 %s135, 1
      %p139 = scmp.eq.s32.totalorder %s17, 1
      %p140 = scmp.ne.s32.totalorder %s135, %s137
      %p141 = scmp.eq.s32.totalorder %s17, 0
      %p142 = por %p140, %p141
      %p143 = scmp.ne.s32.totalorder %s135, %s137
      %p144 = scmp.eq.s32.totalorder %s22, 1
      %p145 = por %p143, %p144
      %p146 = scmp.ne.s32.totalorder %s137, %s138
      %p147 = scmp.eq.s32.totalorder %s22, 0
      %p148 = por %p146, %p147
      %p149 = scmp.ne.s32.totalorder %s137, %s138
      %p150 = scmp.eq.s32.totalorder %s23, 1
      %p151 = por %p149, %p150
      %p153 = scmp.ne.s32.totalorder %s138, %s152
      %p154 = scmp.eq.s32.totalorder %s23, 0
      %p155 = por %p153, %p154
      %s156 = ssub.s32 %s17, %s24
      %p157 = scmp.eq.s32.totalorder %s156, 0
      %s159 = sadd.s32 %s158, 1
      %s160 = scalar_select %p157, %s158, %s159
      %p163 = pneg %p157
      %p164 = scmp.eq.s32.totalorder %s17, 1
      %p165 = por %p163, %p164
      %p166 = scmp.ne.s32.totalorder %s158, %s161
      %p167 = scmp.eq.s32.totalorder %s17, 0
      %p168 = por %p166, %p167
      %p169 = scmp.ne.s32.totalorder %s158, %s161
      %p170 = scmp.eq.s32.totalorder %s22, 1
      %p171 = por %p169, %p170
      %p172 = scmp.ne.s32.totalorder %s161, %s162
      %p173 = scmp.eq.s32.totalorder %s22, 0
      %p174 = por %p172, %p173
      %p175 = scmp.ne.s32.totalorder %s161, %s162
      %p176 = scmp.eq.s32.totalorder %s23, 1
      %p177 = por %p175, %p176
      %p179 = scmp.ne.s32.totalorder %s162, %s178
      %p180 = scmp.eq.s32.totalorder %s23, 0
      %p181 = por %p179, %p180
      %p182 = scmp.le.s32.totalorder 1, %s17
      %p183 = scmp.lt.s32.totalorder %s17, 3
      %p184 = pnand %p182, %p183
      %p185 = pneg %p184
      // Predicated region
      $region9: #{tpu_custom_call.1} parent=5 // pred_check
        _
      $region10: #{tpu_custom_call.1} parent=5 // pred_check_branch
        %187 = sbr.rel (%p184) target = $region12
      $region11: #{tpu_custom_call.1} parent=5 // pred_region
        %s188 = ssub.s32 %s17, 1
        // Predicated region
        $region13: #{tpu_custom_call.1} parent=11 // pred_check
          %p189 = pneg %p64
        $region14: #{tpu_custom_call.1} parent=11 // pred_check_branch
          %191 = sbr.rel (%p189) target = $region16
        $region15: #{tpu_custom_call.1} parent=11 // pred_region
          _
        $region16: #{tpu_custom_call.1} parent=11 // pred_fallthru
          _
        // Predicated region
        $region17: #{tpu_custom_call.1} parent=11 // pred_check
          %p192 = pneg %p85
        $region18: #{tpu_custom_call.1} parent=11 // pred_check_branch
          %194 = sbr.rel (%p192) target = $region20
        $region19: #{tpu_custom_call.1} parent=11 // pred_region
          %s196 = ssub.s32 2560, 2560
          %197 = vsyncadd [#allocation3], %s196
          %s198 = sshll.u32 [#allocation2], 4
          %s199 = int_to_ptr.vmem [resolvable:$true] %s198
          %204 = dma.hbm_to_vmem [thread:$0]  %s2, 2560, %s199, [#allocation3], 128, 128, 8
        $region20: #{tpu_custom_call.1} parent=11 // pred_fallthru
          _
        // Predicated region
        $region21: #{tpu_custom_call.1} parent=11 // pred_check
          %p205 = pneg %p106
        $region22: #{tpu_custom_call.1} parent=11 // pred_check_branch
          %207 = sbr.rel (%p205) target = $region24
        $region23: #{tpu_custom_call.1} parent=11 // pred_region
          _
        $region24: #{tpu_custom_call.1} parent=11 // pred_fallthru
          _
        // Predicated region
        $region25: #{tpu_custom_call.1} parent=11 // pred_check
          %p208 = pneg %p127
        $region26: #{tpu_custom_call.1} parent=11 // pred_check_branch
          %210 = sbr.rel (%p208) target = $region28
        $region27: #{tpu_custom_call.1} parent=11 // pred_region
          %s212 = ssub.s32 2048, 2048
          %213 = vsyncadd [#allocation6], %s212
          %s214 = sshll.u32 [#allocation5], 4
          %s215 = int_to_ptr.vmem [resolvable:$true] %s214
          %220 = dma.hbm_to_vmem [thread:$0]  %s4, 2048, %s215, [#allocation6], 128, 128, 8
        $region28: #{tpu_custom_call.1} parent=11 // pred_fallthru
          _
        // Predicated region
        $region29: #{tpu_custom_call.1} parent=11 // pred_check
          %p221 = pneg %p148
        $region30: #{tpu_custom_call.1} parent=11 // pred_check_branch
          %223 = sbr.rel (%p221) target = $region32
        $region31: #{tpu_custom_call.1} parent=11 // pred_region
          _
        $region32: #{tpu_custom_call.1} parent=11 // pred_fallthru
          _
      $region12: #{tpu_custom_call.1} parent=5 // pred_fallthru
        _
      %p224 = scmp.lt.s32.totalorder %s17, 2
      // Predicated region
      $region33: #{tpu_custom_call.1} parent=5 // pred_check
        %p225 = pneg %p224
      $region34: #{tpu_custom_call.1} parent=5 // pred_check_branch
        %227 = sbr.rel (%p225) target = $region36
      $region35: #{tpu_custom_call.1} parent=5 // pred_region
        // Predicated region
        $region37: #{tpu_custom_call.1} parent=35 // pred_check
          %p228 = pneg %p37
        $region38: #{tpu_custom_call.1} parent=35 // pred_check_branch
          %230 = sbr.rel (%p228) target = $region40
        $region39: #{tpu_custom_call.1} parent=35 // pred_region
          %p231 = scmp.lt.s32.totalorder %s17, 1
          %s232 = scalar_select %p231, %s17, 1
          %s233 = smul.addr %s232, 8
          %s234 = scalar_lea.vmem %s0, %s233
        $region40: #{tpu_custom_call.1} parent=35 // pred_fallthru
          _
      $region36: #{tpu_custom_call.1} parent=5 // pred_fallthru
        _
      %p235 = scmp.le.s32.totalorder 1, %s17
      %p236 = scmp.lt.s32.totalorder %s17, 3
      %p237 = pnand %p235, %p236
      %p238 = pneg %p237
      // Predicated region
      $region41: #{tpu_custom_call.1} parent=5 // pred_check
        _
      $region42: #{tpu_custom_call.1} parent=5 // pred_check_branch
        %240 = sbr.rel (%p237) target = $region44
      $region43: #{tpu_custom_call.1} parent=5 // pred_region
        %s241 = ssub.s32 %s17, 1
        // Predicated region
        $region45: #{tpu_custom_call.1} parent=43 // pred_check
          %p242 = pneg %p85
        $region46: #{tpu_custom_call.1} parent=43 // pred_check_branch
          %244 = sbr.rel (%p242) target = $region48
        $region47: #{tpu_custom_call.1} parent=43 // pred_region
          %245 = dma.done [#allocation3], 2560
        $region48: #{tpu_custom_call.1} parent=43 // pred_fallthru
          _
        // Predicated region
        $region49: #{tpu_custom_call.1} parent=43 // pred_check
          %p246 = pneg %p127
        $region50: #{tpu_custom_call.1} parent=43 // pred_check_branch
          %248 = sbr.rel (%p246) target = $region52
        $region51: #{tpu_custom_call.1} parent=43 // pred_region
          %249 = dma.done [#allocation6], 2048
        $region52: #{tpu_custom_call.1} parent=43 // pred_fallthru
          _
        %p250 = scmp.lt.s32.totalorder %s22, 1
        %s251 = scalar_select %p250, %s22, 1
        %s252 = smul.addr %s251, 8
        %s253 = scalar_lea.vmem %s0, %s252
        %p254 = pneg %p43
        %p255 = pneg %p40
        %p256 = pneg %p64
        %p257 = pneg %p61
        %p258 = pneg %p85
        %p259 = pneg %p82
        %p260 = pneg %p106
        %p261 = pneg %p103
        %p262 = pneg %p127
        %p263 = pneg %p124
        %p264 = pneg %p148
        %p265 = pneg %p145
        %p266 = pneg %p174
        %p267 = pneg %p171
        %s268 = sand.u32 %s161, 1
        %s269 = scalar_lea.sflag [#allocation4], %s268
        %s270 = sand.u32 %s161, 1
        %s271 = smul.addr %s270, 8
        %s272 = scalar_lea.vmem [#allocation7], %s271
        %p273 = scmp.lt.s32.totalorder %s22, 1
        %s274 = scalar_select %p273, %s22, 1
        %s275 = smul.addr %s274, 8
        %s276 = scalar_lea.vmem %s0, %s275
        %v277 = vld [vmem:[%s1] sm:$0xff]
        %v278 = vld [vmem:[%s1 + $0x8] sm:$0xff]
        %v279 = vld [vmem:[%s1 + $0x10] sm:$0xff]
        %v280 = vld [vmem:[%s1 + $0x18] sm:$0xff]
        %v281 = vlaneseq
        %v282 = vand.u32 %v281, 127
        %v283 = vld [vmem:[%s276] sm:$0xff]
        %284 = vset.pattern.permute.xlu0 0
        %285 = vperm.xlu0 %284, %v283
        %v286 = vpop.permute.xlu0 %285
        %vm287 = vcmp.eq.s32.totalorder %v286, %v282
        %v288 = vsel %vm287, 1.0, 0.0
        %vm289 = vcmask 261120
        %v291 = vsel %vm289, %v288, 0
        %293 = vmatprep.subr.mxu0 0.0
        %294 = vmatpush1.msra.mxu0 0.0
        %295 = vmatprep.subr.mxu0 0.0
        %296 = vmatpush1.msra.mxu0 0.0
        %297 = vmatprep.subr.mxu0 0.0
        %298 = vmatpush1.msra.mxu0 0.0
        %299 = vmatprep.subr.mxu0 0.0
        %300 = vmatpush1.msra.mxu0 0.0
        %301 = vmatprep.subr.mxu0 0.0
        %302 = vmatpush1.msra.mxu0 0.0
        %303 = vmatprep.subr.mxu0 0.0
        %304 = vmatpush1.msra.mxu0 0.0
        %305 = vmatprep.subr.mxu0 0.0
        %306 = vmatpush1.msra.mxu0 0.0
        %307 = vmatprep.subr.mxu0 0.0
        %308 = vmatpush1.msra.mxu0 0.0
        %309 = vmatprep.subr.mxu0 0.0
        %310 = vmatpush1.msra.mxu0 0.0
        %311 = vmatprep.subr.mxu0 0.0
        %312 = vmatpush1.msra.mxu0 0.0
        %313 = vmatprep.subr.mxu0 0.0
        %314 = vmatpush1.msra.mxu0 0.0
        %315 = vmatprep.subr.mxu0 0.0
        %316 = vmatpush1.msra.mxu0 0.0
        %317 = vmatprep.subr.mxu0 0.0
        %v318 = vand.u32 %v280, 4294901760
        %319 = vmatpush1.msra.mxu0 %v318
        %320 = vmatprep.subr.mxu0 0.0
        %v321 = vand.u32 %v279, 4294901760
        %322 = vmatpush1.msra.mxu0 %v321
        %323 = vmatprep.subr.mxu0 0.0
        %v324 = vand.u32 %v278, 4294901760
        %325 = vmatpush1.msra.mxu0 %v324
        %326 = vmatprep.subr.mxu0 0.0
        %v327 = vand.u32 %v277, 4294901760
        %328 = vmatpush1.msra.mxu0 %v327
        %329 = vmatprep.subr.mxu0 0.0
        %330 = vmatpush2.msra.mxu0 0.0
        %331 = vmatprep.subr.mxu0 0.0
        %332 = vmatpush2.msra.mxu0 0.0
        %333 = vmatprep.subr.mxu0 0.0
        %334 = vmatpush2.msra.mxu0 0.0
        %335 = vmatprep.subr.mxu0 0.0
        %336 = vmatpush2.msra.mxu0 0.0
        %337 = vmatprep.subr.mxu0 0.0
        %338 = vmatpush2.msra.mxu0 0.0
        %339 = vmatprep.subr.mxu0 0.0
        %340 = vmatpush2.msra.mxu0 0.0
        %341 = vmatprep.subr.mxu0 0.0
        %342 = vmatpush2.msra.mxu0 0.0
        %343 = vmatprep.subr.mxu0 0.0
        %344 = vmatpush2.msra.mxu0 0.0
        %345 = vmatprep.subr.mxu0 0.0
        %346 = vmatpush2.msra.mxu0 0.0
        %347 = vmatprep.subr.mxu0 0.0
        %348 = vmatpush2.msra.mxu0 0.0
        %349 = vmatprep.subr.mxu0 0.0
        %350 = vmatpush2.msra.mxu0 0.0
        %351 = vmatprep.subr.mxu0 0.0
        %352 = vmatpush2.msra.mxu0 0.0
        %353 = vmatprep.subr.mxu0 0.0
        %354 = vmatpush2.msra.mxu0 0.0
        %355 = vmatprep.subr.mxu0 0.0
        %356 = vmatpush2.msra.mxu0 0.0
        %357 = vmatprep.subr.mxu0 0.0
        %358 = vmatpush2.msra.mxu0 0.0
        %359 = vmatprep.subr.mxu0 0.0
        %360 = vmatpush2.msra.mxu0 0.0
        %361 = vmatprep.mubr.f32.mxu0 0.0
        %v362 = vand.u32 %v291, 4294901760
        %v363 = vsub.f32 %v291, %v362
        %v364 = vand.u32 %v363, 4294901760
        %v365 = vsub.f32 %v363, %v364
        %v366 = vand.u32 %v365, 4294901760
        %367 = vmatmul.mubr.f32.gmra.mxu0 %v366
        %v368 = vpop.f32.mrf.mxu0
        %v369 = vadd.f32 0.0, %v368
        %v370 = vpop.f32.mrf.mxu0
        %371 = vdwg.mxu0
        %372 = vmatprep.subr.mxu0 0.0
        %373 = vmatpush1.msra.mxu0 0.0
        %374 = vmatprep.subr.mxu0 0.0
        %375 = vmatpush1.msra.mxu0 0.0
        %376 = vmatprep.subr.mxu0 0.0
        %377 = vmatpush1.msra.mxu0 0.0
        %378 = vmatprep.subr.mxu0 0.0
        %379 = vmatpush1.msra.mxu0 0.0
        %380 = vmatprep.subr.mxu0 0.0
        %381 = vmatpush1.msra.mxu0 0.0
        %382 = vmatprep.subr.mxu0 0.0
        %383 = vmatpush1.msra.mxu0 0.0
        %384 = vmatprep.subr.mxu0 0.0
        %385 = vmatpush1.msra.mxu0 0.0
        %386 = vmatprep.subr.mxu0 0.0
        %387 = vmatpush1.msra.mxu0 0.0
        %388 = vmatprep.subr.mxu0 0.0
        %389 = vmatpush1.msra.mxu0 0.0
        %390 = vmatprep.subr.mxu0 0.0
        %391 = vmatpush1.msra.mxu0 0.0
        %392 = vmatprep.subr.mxu0 0.0
        %393 = vmatpush1.msra.mxu0 0.0
        %394 = vmatprep.subr.mxu0 0.0
        %395 = vmatpush1.msra.mxu0 0.0
        %396 = vmatprep.subr.mxu0 0.0
        %v397 = vand.u32 %v280, 4294901760
        %v398 = vsub.f32 %v280, %v397
        %v399 = vand.u32 %v398, 4294901760
        %v400 = vsub.f32 %v398, %v399
        %v401 = vand.u32 %v400, 4294901760
        %402 = vmatpush1.msra.mxu0 %v401
        %403 = vmatprep.subr.mxu0 0.0
        %v404 = vand.u32 %v279, 4294901760
        %v405 = vsub.f32 %v279, %v404
        %v406 = vand.u32 %v405, 4294901760
        %v407 = vsub.f32 %v405, %v406
        %v408 = vand.u32 %v407, 4294901760
        %409 = vmatpush1.msra.mxu0 %v408
        %410 = vmatprep.subr.mxu0 0.0
        %v411 = vand.u32 %v278, 4294901760
        %v412 = vsub.f32 %v278, %v411
        %v413 = vand.u32 %v412, 4294901760
        %v414 = vsub.f32 %v412, %v413
        %v415 = vand.u32 %v414, 4294901760
        %416 = vmatpush1.msra.mxu0 %v415
        %417 = vmatprep.subr.mxu0 0.0
        %v418 = vand.u32 %v277, 4294901760
        %v419 = vsub.f32 %v277, %v418
        %v420 = vand.u32 %v419, 4294901760
        %v421 = vsub.f32 %v419, %v420
        %v422 = vand.u32 %v421, 4294901760
        %423 = vmatpush1.msra.mxu0 %v422
        %424 = vmatprep.subr.mxu0 0.0
        %425 = vmatpush2.msra.mxu0 0.0
        %426 = vmatprep.subr.mxu0 0.0
        %427 = vmatpush2.msra.mxu0 0.0
        %428 = vmatprep.subr.mxu0 0.0
        %429 = vmatpush2.msra.mxu0 0.0
        %430 = vmatprep.subr.mxu0 0.0
        %431 = vmatpush2.msra.mxu0 0.0
        %432 = vmatprep.subr.mxu0 0.0
        %433 = vmatpush2.msra.mxu0 0.0
        %434 = vmatprep.subr.mxu0 0.0
        %435 = vmatpush2.msra.mxu0 0.0
        %436 = vmatprep.subr.mxu0 0.0
        %437 = vmatpush2.msra.mxu0 0.0
        %438 = vmatprep.subr.mxu0 0.0
        %439 = vmatpush2.msra.mxu0 0.0
        %440 = vmatprep.subr.mxu0 0.0
        %441 = vmatpush2.msra.mxu0 0.0
        %442 = vmatprep.subr.mxu0 0.0
        %443 = vmatpush2.msra.mxu0 0.0
        %444 = vmatprep.subr.mxu0 0.0
        %445 = vmatpush2.msra.mxu0 0.0
        %446 = vmatprep.subr.mxu0 0.0
        %447 = vmatpush2.msra.mxu0 0.0
        %448 = vmatprep.subr.mxu0 0.0
        %449 = vmatpush2.msra.mxu0 0.0
        %450 = vmatprep.subr.mxu0 0.0
        %451 = vmatpush2.msra.mxu0 0.0
        %452 = vmatprep.subr.mxu0 0.0
        %453 = vmatpush2.msra.mxu0 0.0
        %454 = vmatprep.subr.mxu0 0.0
        %455 = vmatpush2.msra.mxu0 0.0
        %456 = vmatprep.mubr.f32.mxu0 0.0
        %v457 = vand.u32 %v291, 4294901760
        %458 = vmatmul.mubr.f32.gmra.mxu0 %v457
        %v459 = vpop.f32.mrf.mxu0
        %v460 = vadd.f32 %v369, %v459
        %v461 = vpop.f32.mrf.mxu0
        %462 = vdwg.mxu0
        %463 = vmatprep.subr.mxu0 0.0
        %464 = vmatpush1.msra.mxu0 0.0
        %465 = vmatprep.subr.mxu0 0.0
        %466 = vmatpush1.msra.mxu0 0.0
        %467 = vmatprep.subr.mxu0 0.0
        %468 = vmatpush1.msra.mxu0 0.0
        %469 = vmatprep.subr.mxu0 0.0
        %470 = vmatpush1.msra.mxu0 0.0
        %471 = vmatprep.subr.mxu0 0.0
        %472 = vmatpush1.msra.mxu0 0.0
        %473 = vmatprep.subr.mxu0 0.0
        %474 = vmatpush1.msra.mxu0 0.0
        %475 = vmatprep.subr.mxu0 0.0
        %476 = vmatpush1.msra.mxu0 0.0
        %477 = vmatprep.subr.mxu0 0.0
        %478 = vmatpush1.msra.mxu0 0.0
        %479 = vmatprep.subr.mxu0 0.0
        %480 = vmatpush1.msra.mxu0 0.0
        %481 = vmatprep.subr.mxu0 0.0
        %482 = vmatpush1.msra.mxu0 0.0
        %483 = vmatprep.subr.mxu0 0.0
        %484 = vmatpush1.msra.mxu0 0.0
        %485 = vmatprep.subr.mxu0 0.0
        %486 = vmatpush1.msra.mxu0 0.0
        %487 = vmatprep.subr.mxu0 0.0
        %v488 = vand.u32 %v280, 4294901760
        %v489 = vsub.f32 %v280, %v488
        %490 = vmatpush1.msra.mxu0 %v489
        %491 = vmatprep.subr.mxu0 0.0
        %v492 = vand.u32 %v279, 4294901760
        %v493 = vsub.f32 %v279, %v492
        %494 = vmatpush1.msra.mxu0 %v493
        %495 = vmatprep.subr.mxu0 0.0
        %v496 = vand.u32 %v278, 4294901760
        %v497 = vsub.f32 %v278, %v496
        %498 = vmatpush1.msra.mxu0 %v497
        %499 = vmatprep.subr.mxu0 0.0
        %v500 = vand.u32 %v277, 4294901760
        %v501 = vsub.f32 %v277, %v500
        %502 = vmatpush1.msra.mxu0 %v501
        %503 = vmatprep.subr.mxu0 0.0
        %504 = vmatpush2.msra.mxu0 0.0
        %505 = vmatprep.subr.mxu0 0.0
        %506 = vmatpush2.msra.mxu0 0.0
        %507 = vmatprep.subr.mxu0 0.0
        %508 = vmatpush2.msra.mxu0 0.0
        %509 = vmatprep.subr.mxu0 0.0
        %510 = vmatpush2.msra.mxu0 0.0
        %511 = vmatprep.subr.mxu0 0.0
        %512 = vmatpush2.msra.mxu0 0.0
        %513 = vmatprep.subr.mxu0 0.0
        %514 = vmatpush2.msra.mxu0 0.0
        %515 = vmatprep.subr.mxu0 0.0
        %516 = vmatpush2.msra.mxu0 0.0
        %517 = vmatprep.subr.mxu0 0.0
        %518 = vmatpush2.msra.mxu0 0.0
        %519 = vmatprep.subr.mxu0 0.0
        %520 = vmatpush2.msra.mxu0 0.0
        %521 = vmatprep.subr.mxu0 0.0
        %522 = vmatpush2.msra.mxu0 0.0
        %523 = vmatprep.subr.mxu0 0.0
        %524 = vmatpush2.msra.mxu0 0.0
        %525 = vmatprep.subr.mxu0 0.0
        %526 = vmatpush2.msra.mxu0 0.0
        %527 = vmatprep.subr.mxu0 0.0
        %528 = vmatpush2.msra.mxu0 0.0
        %529 = vmatprep.subr.mxu0 0.0
        %530 = vmatpush2.msra.mxu0 0.0
        %531 = vmatprep.subr.mxu0 0.0
        %532 = vmatpush2.msra.mxu0 0.0
        %533 = vmatprep.subr.mxu0 0.0
        %534 = vmatpush2.msra.mxu0 0.0
        %535 = vmatprep.mubr.f32.mxu0 0.0
        %v536 = vand.u32 %v291, 4294901760
        %v537 = vsub.f32 %v291, %v536
        %538 = vmatmul.mubr.f32.gmra.mxu0 %v537
        %v539 = vpop.f32.mrf.mxu0
        %v540 = vadd.f32 %v460, %v539
        %v541 = vpop.f32.mrf.mxu0
        %542 = vdwg.mxu0
        %543 = vmatprep.subr.mxu0 0.0
        %544 = vmatpush1.msra.mxu0 0.0
        %545 = vmatprep.subr.mxu0 0.0
        %546 = vmatpush1.msra.mxu0 0.0
        %547 = vmatprep.subr.mxu0 0.0
        %548 = vmatpush1.msra.mxu0 0.0
        %549 = vmatprep.subr.mxu0 0.0
        %550 = vmatpush1.msra.mxu0 0.0
        %551 = vmatprep.subr.mxu0 0.0
        %552 = vmatpush1.msra.mxu0 0.0
        %553 = vmatprep.subr.mxu0 0.0
        %554 = vmatpush1.msra.mxu0 0.0
        %555 = vmatprep.subr.mxu0 0.0
        %556 = vmatpush1.msra.mxu0 0.0
        %557 = vmatprep.subr.mxu0 0.0
        %558 = vmatpush1.msra.mxu0 0.0
        %559 = vmatprep.subr.mxu0 0.0
        %560 = vmatpush1.msra.mxu0 0.0
        %561 = vmatprep.subr.mxu0 0.0
        %562 = vmatpush1.msra.mxu0 0.0
        %563 = vmatprep.subr.mxu0 0.0
        %564 = vmatpush1.msra.mxu0 0.0
        %565 = vmatprep.subr.mxu0 0.0
        %566 = vmatpush1.msra.mxu0 0.0
        %567 = vmatprep.subr.mxu0 0.0
        %v568 = vand.u32 %v280, 4294901760
        %569 = vmatpush1.msra.mxu0 %v568
        %570 = vmatprep.subr.mxu0 0.0
        %v571 = vand.u32 %v279, 4294901760
        %572 = vmatpush1.msra.mxu0 %v571
        %573 = vmatprep.subr.mxu0 0.0
        %v574 = vand.u32 %v278, 4294901760
        %575 = vmatpush1.msra.mxu0 %v574
        %576 = vmatprep.subr.mxu0 0.0
        %v577 = vand.u32 %v277, 4294901760
        %578 = vmatpush1.msra.mxu0 %v577
        %579 = vmatprep.subr.mxu0 0.0
        %580 = vmatpush2.msra.mxu0 0.0
        %581 = vmatprep.subr.mxu0 0.0
        %582 = vmatpush2.msra.mxu0 0.0
        %583 = vmatprep.subr.mxu0 0.0
        %584 = vmatpush2.msra.mxu0 0.0
        %585 = vmatprep.subr.mxu0 0.0
        %586 = vmatpush2.msra.mxu0 0.0
        %587 = vmatprep.subr.mxu0 0.0
        %588 = vmatpush2.msra.mxu0 0.0
        %589 = vmatprep.subr.mxu0 0.0
        %590 = vmatpush2.msra.mxu0 0.0
        %591 = vmatprep.subr.mxu0 0.0
        %592 = vmatpush2.msra.mxu0 0.0
        %593 = vmatprep.subr.mxu0 0.0
        %594 = vmatpush2.msra.mxu0 0.0
        %595 = vmatprep.subr.mxu0 0.0
        %596 = vmatpush2.msra.mxu0 0.0
        %597 = vmatprep.subr.mxu0 0.0
        %598 = vmatpush2.msra.mxu0 0.0
        %599 = vmatprep.subr.mxu0 0.0
        %600 = vmatpush2.msra.mxu0 0.0
        %601 = vmatprep.subr.mxu0 0.0
        %602 = vmatpush2.msra.mxu0 0.0
        %603 = vmatprep.subr.mxu0 0.0
        %604 = vmatpush2.msra.mxu0 0.0
        %605 = vmatprep.subr.mxu0 0.0
        %606 = vmatpush2.msra.mxu0 0.0
        %607 = vmatprep.subr.mxu0 0.0
        %608 = vmatpush2.msra.mxu0 0.0
        %609 = vmatprep.subr.mxu0 0.0
        %610 = vmatpush2.msra.mxu0 0.0
        %611 = vmatprep.mubr.f32.mxu0 0.0
        %v612 = vand.u32 %v291, 4294901760
        %v613 = vsub.f32 %v291, %v612
        %v614 = vand.u32 %v613, 4294901760
        %615 = vmatmul.mubr.f32.gmra.mxu0 %v614
        %v616 = vpop.f32.mrf.mxu0
        %v617 = vadd.f32 %v540, %v616
        %v618 = vpop.f32.mrf.mxu0
        %619 = vdwg.mxu0
        %620 = vmatprep.subr.mxu0 0.0
        %621 = vmatpush1.msra.mxu0 0.0
        %622 = vmatprep.subr.mxu0 0.0
        %623 = vmatpush1.msra.mxu0 0.0
        %624 = vmatprep.subr.mxu0 0.0
        %625 = vmatpush1.msra.mxu0 0.0
        %626 = vmatprep.subr.mxu0 0.0
        %627 = vmatpush1.msra.mxu0 0.0
        %628 = vmatprep.subr.mxu0 0.0
        %629 = vmatpush1.msra.mxu0 0.0
        %630 = vmatprep.subr.mxu0 0.0
        %631 = vmatpush1.msra.mxu0 0.0
        %632 = vmatprep.subr.mxu0 0.0
        %633 = vmatpush1.msra.mxu0 0.0
        %634 = vmatprep.subr.mxu0 0.0
        %635 = vmatpush1.msra.mxu0 0.0
        %636 = vmatprep.subr.mxu0 0.0
        %637 = vmatpush1.msra.mxu0 0.0
        %638 = vmatprep.subr.mxu0 0.0
        %639 = vmatpush1.msra.mxu0 0.0
        %640 = vmatprep.subr.mxu0 0.0
        %641 = vmatpush1.msra.mxu0 0.0
        %642 = vmatprep.subr.mxu0 0.0
        %643 = vmatpush1.msra.mxu0 0.0
        %644 = vmatprep.subr.mxu0 0.0
        %v645 = vand.u32 %v280, 4294901760
        %v646 = vsub.f32 %v280, %v645
        %v647 = vand.u32 %v646, 4294901760
        %648 = vmatpush1.msra.mxu0 %v647
        %649 = vmatprep.subr.mxu0 0.0
        %v650 = vand.u32 %v279, 4294901760
        %v651 = vsub.f32 %v279, %v650
        %v652 = vand.u32 %v651, 4294901760
        %653 = vmatpush1.msra.mxu0 %v652
        %654 = vmatprep.subr.mxu0 0.0
        %v655 = vand.u32 %v278, 4294901760
        %v656 = vsub.f32 %v278, %v655
        %v657 = vand.u32 %v656, 4294901760
        %658 = vmatpush1.msra.mxu0 %v657
        %659 = vmatprep.subr.mxu0 0.0
        %v660 = vand.u32 %v277, 4294901760
        %v661 = vsub.f32 %v277, %v660
        %v662 = vand.u32 %v661, 4294901760
        %663 = vmatpush1.msra.mxu0 %v662
        %664 = vmatprep.subr.mxu0 0.0
        %665 = vmatpush2.msra.mxu0 0.0
        %666 = vmatprep.subr.mxu0 0.0
        %667 = vmatpush2.msra.mxu0 0.0
        %668 = vmatprep.subr.mxu0 0.0
        %669 = vmatpush2.msra.mxu0 0.0
        %670 = vmatprep.subr.mxu0 0.0
        %671 = vmatpush2.msra.mxu0 0.0
        %672 = vmatprep.subr.mxu0 0.0
        %673 = vmatpush2.msra.mxu0 0.0
        %674 = vmatprep.subr.mxu0 0.0
        %675 = vmatpush2.msra.mxu0 0.0
        %676 = vmatprep.subr.mxu0 0.0
        %677 = vmatpush2.msra.mxu0 0.0
        %678 = vmatprep.subr.mxu0 0.0
        %679 = vmatpush2.msra.mxu0 0.0
        %680 = vmatprep.subr.mxu0 0.0
        %681 = vmatpush2.msra.mxu0 0.0
        %682 = vmatprep.subr.mxu0 0.0
        %683 = vmatpush2.msra.mxu0 0.0
        %684 = vmatprep.subr.mxu0 0.0
        %685 = vmatpush2.msra.mxu0 0.0
        %686 = vmatprep.subr.mxu0 0.0
        %687 = vmatpush2.msra.mxu0 0.0
        %688 = vmatprep.subr.mxu0 0.0
        %689 = vmatpush2.msra.mxu0 0.0
        %690 = vmatprep.subr.mxu0 0.0
        %691 = vmatpush2.msra.mxu0 0.0
        %692 = vmatprep.subr.mxu0 0.0
        %693 = vmatpush2.msra.mxu0 0.0
        %694 = vmatprep.subr.mxu0 0.0
        %695 = vmatpush2.msra.mxu0 0.0
        %696 = vmatprep.mubr.f32.mxu0 0.0
        %v697 = vand.u32 %v291, 4294901760
        %698 = vmatmul.mubr.f32.gmra.mxu0 %v697
        %v699 = vpop.f32.mrf.mxu0
        %v700 = vadd.f32 %v617, %v699
        %v701 = vpop.f32.mrf.mxu0
        %702 = vdwg.mxu0
        %703 = vmatprep.subr.mxu0 0.0
        %704 = vmatpush1.msra.mxu0 0.0
        %705 = vmatprep.subr.mxu0 0.0
        %706 = vmatpush1.msra.mxu0 0.0
        %707 = vmatprep.subr.mxu0 0.0
        %708 = vmatpush1.msra.mxu0 0.0
        %709 = vmatprep.subr.mxu0 0.0
        %710 = vmatpush1.msra.mxu0 0.0
        %711 = vmatprep.subr.mxu0 0.0
        %712 = vmatpush1.msra.mxu0 0.0
        %713 = vmatprep.subr.mxu0 0.0
        %714 = vmatpush1.msra.mxu0 0.0
        %715 = vmatprep.subr.mxu0 0.0
        %716 = vmatpush1.msra.mxu0 0.0
        %717 = vmatprep.subr.mxu0 0.0
        %718 = vmatpush1.msra.mxu0 0.0
        %719 = vmatprep.subr.mxu0 0.0
        %720 = vmatpush1.msra.mxu0 0.0
        %721 = vmatprep.subr.mxu0 0.0
        %722 = vmatpush1.msra.mxu0 0.0
        %723 = vmatprep.subr.mxu0 0.0
        %724 = vmatpush1.msra.mxu0 0.0
        %725 = vmatprep.subr.mxu0 0.0
        %726 = vmatpush1.msra.mxu0 0.0
        %727 = vmatprep.subr.mxu0 0.0
        %v728 = vand.u32 %v280, 4294901760
        %729 = vmatpush1.msra.mxu0 %v728
        %730 = vmatprep.subr.mxu0 0.0
        %v731 = vand.u32 %v279, 4294901760
        %732 = vmatpush1.msra.mxu0 %v731
        %733 = vmatprep.subr.mxu0 0.0
        %v734 = vand.u32 %v278, 4294901760
        %735 = vmatpush1.msra.mxu0 %v734
        %736 = vmatprep.subr.mxu0 0.0
        %v737 = vand.u32 %v277, 4294901760
        %738 = vmatpush1.msra.mxu0 %v737
        %739 = vmatprep.subr.mxu0 0.0
        %740 = vmatpush2.msra.mxu0 0.0
        %741 = vmatprep.subr.mxu0 0.0
        %742 = vmatpush2.msra.mxu0 0.0
        %743 = vmatprep.subr.mxu0 0.0
        %744 = vmatpush2.msra.mxu0 0.0
        %745 = vmatprep.subr.mxu0 0.0
        %746 = vmatpush2.msra.mxu0 0.0
        %747 = vmatprep.subr.mxu0 0.0
        %748 = vmatpush2.msra.mxu0 0.0
        %749 = vmatprep.subr.mxu0 0.0
        %750 = vmatpush2.msra.mxu0 0.0
        %751 = vmatprep.subr.mxu0 0.0
        %752 = vmatpush2.msra.mxu0 0.0
        %753 = vmatprep.subr.mxu0 0.0
        %754 = vmatpush2.msra.mxu0 0.0
        %755 = vmatprep.subr.mxu0 0.0
        %756 = vmatpush2.msra.mxu0 0.0
        %757 = vmatprep.subr.mxu0 0.0
        %758 = vmatpush2.msra.mxu0 0.0
        %759 = vmatprep.subr.mxu0 0.0
        %760 = vmatpush2.msra.mxu0 0.0
        %761 = vmatprep.subr.mxu0 0.0
        %762 = vmatpush2.msra.mxu0 0.0
        %763 = vmatprep.subr.mxu0 0.0
        %764 = vmatpush2.msra.mxu0 0.0
        %765 = vmatprep.subr.mxu0 0.0
        %766 = vmatpush2.msra.mxu0 0.0
        %767 = vmatprep.subr.mxu0 0.0
        %768 = vmatpush2.msra.mxu0 0.0
        %769 = vmatprep.subr.mxu0 0.0
        %770 = vmatpush2.msra.mxu0 0.0
        %771 = vmatprep.mubr.f32.mxu0 0.0
        %v772 = vand.u32 %v291, 4294901760
        %773 = vmatmul.mubr.f32.gmra.mxu0 %v772
        %v774 = vpop.f32.mrf.mxu0
        %v775 = vadd.f32 %v700, %v774
        %v776 = vpop.f32.mrf.mxu0
        %777 = vdwg.mxu0
        %v778 = vld [vmem:[#allocation2] sm:$0xff]
        %v779 = vld [vmem:[#allocation2 + $0x8] sm:$0xff]
        %780 = vset.pattern.permute.xlu0 1
        %781 = vperm.xlu0 %780, %v283
        %v782 = vpop.permute.xlu0 %781
        %vm783 = vcmp.eq.s32.totalorder %v782, %v282
        %v784 = vsel %vm783, 1.0, 0.0
        %v786 = vsel %vm289, %v784, 0
        %788 = vmatprep.subr.mxu0 0.0
        %789 = vmatpush1.msra.mxu0 0.0
        %790 = vmatprep.subr.mxu0 0.0
        %791 = vmatpush1.msra.mxu0 0.0
        %792 = vmatprep.subr.mxu0 0.0
        %793 = vmatpush1.msra.mxu0 0.0
        %794 = vmatprep.subr.mxu0 0.0
        %795 = vmatpush1.msra.mxu0 0.0
        %796 = vmatprep.subr.mxu0 0.0
        %797 = vmatpush1.msra.mxu0 0.0
        %798 = vmatprep.subr.mxu0 0.0
        %799 = vmatpush1.msra.mxu0 0.0
        %800 = vmatprep.subr.mxu0 0.0
        %801 = vmatpush1.msra.mxu0 0.0
        %802 = vmatprep.subr.mxu0 0.0
        %803 = vmatpush1.msra.mxu0 0.0
        %804 = vmatprep.subr.mxu0 0.0
        %805 = vmatpush1.msra.mxu0 0.0
        %806 = vmatprep.subr.mxu0 0.0
        %807 = vmatpush1.msra.mxu0 0.0
        %808 = vmatprep.subr.mxu0 0.0
        %809 = vmatpush1.msra.mxu0 0.0
        %810 = vmatprep.subr.mxu0 0.0
        %811 = vmatpush1.msra.mxu0 0.0
        %812 = vmatprep.subr.mxu0 0.0
        %v813 = vand.u32 %v280, 4294901760
        %814 = vmatpush1.msra.mxu0 %v813
        %815 = vmatprep.subr.mxu0 0.0
        %v816 = vand.u32 %v279, 4294901760
        %817 = vmatpush1.msra.mxu0 %v816
        %818 = vmatprep.subr.mxu0 0.0
        %v819 = vand.u32 %v278, 4294901760
        %820 = vmatpush1.msra.mxu0 %v819
        %821 = vmatprep.subr.mxu0 0.0
        %v822 = vand.u32 %v277, 4294901760
        %823 = vmatpush1.msra.mxu0 %v822
        %824 = vmatprep.subr.mxu0 0.0
        %825 = vmatpush2.msra.mxu0 0.0
        %826 = vmatprep.subr.mxu0 0.0
        %827 = vmatpush2.msra.mxu0 0.0
        %828 = vmatprep.subr.mxu0 0.0
        %829 = vmatpush2.msra.mxu0 0.0
        %830 = vmatprep.subr.mxu0 0.0
        %831 = vmatpush2.msra.mxu0 0.0
        %832 = vmatprep.subr.mxu0 0.0
        %833 = vmatpush2.msra.mxu0 0.0
        %834 = vmatprep.subr.mxu0 0.0
        %835 = vmatpush2.msra.mxu0 0.0
        %836 = vmatprep.subr.mxu0 0.0
        %837 = vmatpush2.msra.mxu0 0.0
        %838 = vmatprep.subr.mxu0 0.0
        %839 = vmatpush2.msra.mxu0 0.0
        %840 = vmatprep.subr.mxu0 0.0
        %841 = vmatpush2.msra.mxu0 0.0
        %842 = vmatprep.subr.mxu0 0.0
        %843 = vmatpush2.msra.mxu0 0.0
        %844 = vmatprep.subr.mxu0 0.0
        %845 = vmatpush2.msra.mxu0 0.0
        %846 = vmatprep.subr.mxu0 0.0
        %847 = vmatpush2.msra.mxu0 0.0
        %848 = vmatprep.subr.mxu0 0.0
        %849 = vmatpush2.msra.mxu0 0.0
        %850 = vmatprep.subr.mxu0 0.0
        %851 = vmatpush2.msra.mxu0 0.0
        %852 = vmatprep.subr.mxu0 0.0
        %853 = vmatpush2.msra.mxu0 0.0
        %854 = vmatprep.subr.mxu0 0.0
        %855 = vmatpush2.msra.mxu0 0.0
        %856 = vmatprep.mubr.f32.mxu0 0.0
        %v857 = vand.u32 %v786, 4294901760
        %v858 = vsub.f32 %v786, %v857
        %v859 = vand.u32 %v858, 4294901760
        %v860 = vsub.f32 %v858, %v859
        %v861 = vand.u32 %v860, 4294901760
        %862 = vmatmul.mubr.f32.gmra.mxu0 %v861
        %v863 = vpop.f32.mrf.mxu0
        %v864 = vadd.f32 0.0, %v863
        %v865 = vpop.f32.mrf.mxu0
        %866 = vdwg.mxu0
        %867 = vmatprep.subr.mxu0 0.0
        %868 = vmatpush1.msra.mxu0 0.0
        %869 = vmatprep.subr.mxu0 0.0
        %870 = vmatpush1.msra.mxu0 0.0
        %871 = vmatprep.subr.mxu0 0.0
        %872 = vmatpush1.msra.mxu0 0.0
        %873 = vmatprep.subr.mxu0 0.0
        %874 = vmatpush1.msra.mxu0 0.0
        %875 = vmatprep.subr.mxu0 0.0
        %876 = vmatpush1.msra.mxu0 0.0
        %877 = vmatprep.subr.mxu0 0.0
        %878 = vmatpush1.msra.mxu0 0.0
        %879 = vmatprep.subr.mxu0 0.0
        %880 = vmatpush1.msra.mxu0 0.0
        %881 = vmatprep.subr.mxu0 0.0
        %882 = vmatpush1.msra.mxu0 0.0
        %883 = vmatprep.subr.mxu0 0.0
        %884 = vmatpush1.msra.mxu0 0.0
        %885 = vmatprep.subr.mxu0 0.0
        %886 = vmatpush1.msra.mxu0 0.0
        %887 = vmatprep.subr.mxu0 0.0
        %888 = vmatpush1.msra.mxu0 0.0
        %889 = vmatprep.subr.mxu0 0.0
        %890 = vmatpush1.msra.mxu0 0.0
        %891 = vmatprep.subr.mxu0 0.0
        %v892 = vand.u32 %v280, 4294901760
        %v893 = vsub.f32 %v280, %v892
        %v894 = vand.u32 %v893, 4294901760
        %v895 = vsub.f32 %v893, %v894
        %v896 = vand.u32 %v895, 4294901760
        %897 = vmatpush1.msra.mxu0 %v896
        %898 = vmatprep.subr.mxu0 0.0
        %v899 = vand.u32 %v279, 4294901760
        %v900 = vsub.f32 %v279, %v899
        %v901 = vand.u32 %v900, 4294901760
        %v902 = vsub.f32 %v900, %v901
        %v903 = vand.u32 %v902, 4294901760
        %904 = vmatpush1.msra.mxu0 %v903
        %905 = vmatprep.subr.mxu0 0.0
        %v906 = vand.u32 %v278, 4294901760
        %v907 = vsub.f32 %v278, %v906
        %v908 = vand.u32 %v907, 4294901760
        %v909 = vsub.f32 %v907, %v908
        %v910 = vand.u32 %v909, 4294901760
        %911 = vmatpush1.msra.mxu0 %v910
        %912 = vmatprep.subr.mxu0 0.0
        %v913 = vand.u32 %v277, 4294901760
        %v914 = vsub.f32 %v277, %v913
        %v915 = vand.u32 %v914, 4294901760
        %v916 = vsub.f32 %v914, %v915
        %v917 = vand.u32 %v916, 4294901760
        %918 = vmatpush1.msra.mxu0 %v917
        %919 = vmatprep.subr.mxu0 0.0
        %920 = vmatpush2.msra.mxu0 0.0
        %921 = vmatprep.subr.mxu0 0.0
        %922 = vmatpush2.msra.mxu0 0.0
        %923 = vmatprep.subr.mxu0 0.0
        %924 = vmatpush2.msra.mxu0 0.0
        %925 = vmatprep.subr.mxu0 0.0
        %926 = vmatpush2.msra.mxu0 0.0
        %927 = vmatprep.subr.mxu0 0.0
        %928 = vmatpush2.msra.mxu0 0.0
        %929 = vmatprep.subr.mxu0 0.0
        %930 = vmatpush2.msra.mxu0 0.0
        %931 = vmatprep.subr.mxu0 0.0
        %932 = vmatpush2.msra.mxu0 0.0
        %933 = vmatprep.subr.mxu0 0.0
        %934 = vmatpush2.msra.mxu0 0.0
        %935 = vmatprep.subr.mxu0 0.0
        %936 = vmatpush2.msra.mxu0 0.0
        %937 = vmatprep.subr.mxu0 0.0
        %938 = vmatpush2.msra.mxu0 0.0
        %939 = vmatprep.subr.mxu0 0.0
        %940 = vmatpush2.msra.mxu0 0.0
        %941 = vmatprep.subr.mxu0 0.0
        %942 = vmatpush2.msra.mxu0 0.0
        %943 = vmatprep.subr.mxu0 0.0
        %944 = vmatpush2.msra.mxu0 0.0
        %945 = vmatprep.subr.mxu0 0.0
        %946 = vmatpush2.msra.mxu0 0.0
        %947 = vmatprep.subr.mxu0 0.0
        %948 = vmatpush2.msra.mxu0 0.0
        %949 = vmatprep.subr.mxu0 0.0
        %950 = vmatpush2.msra.mxu0 0.0
        %951 = vmatprep.mubr.f32.mxu0 0.0
        %v952 = vand.u32 %v786, 4294901760
        %953 = vmatmul.mubr.f32.gmra.mxu0 %v952
        %v954 = vpop.f32.mrf.mxu0
        %v955 = vadd.f32 %v864, %v954
        %v956 = vpop.f32.mrf.mxu0
        %957 = vdwg.mxu0
        %958 = vmatprep.subr.mxu0 0.0
        %959 = vmatpush1.msra.mxu0 0.0
        %960 = vmatprep.subr.mxu0 0.0
        %961 = vmatpush1.msra.mxu0 0.0
        %962 = vmatprep.subr.mxu0 0.0
        %963 = vmatpush1.msra.mxu0 0.0
        %964 = vmatprep.subr.mxu0 0.0
        %965 = vmatpush1.msra.mxu0 0.0
        %966 = vmatprep.subr.mxu0 0.0
        %967 = vmatpush1.msra.mxu0 0.0
        %968 = vmatprep.subr.mxu0 0.0
        %969 = vmatpush1.msra.mxu0 0.0
        %970 = vmatprep.subr.mxu0 0.0
        %971 = vmatpush1.msra.mxu0 0.0
        %972 = vmatprep.subr.mxu0 0.0
        %973 = vmatpush1.msra.mxu0 0.0
        %974 = vmatprep.subr.mxu0 0.0
        %975 = vmatpush1.msra.mxu0 0.0
        %976 = vmatprep.subr.mxu0 0.0
        %977 = vmatpush1.msra.mxu0 0.0
        %978 = vmatprep.subr.mxu0 0.0
        %979 = vmatpush1.msra.mxu0 0.0
        %980 = vmatprep.subr.mxu0 0.0
        %981 = vmatpush1.msra.mxu0 0.0
        %982 = vmatprep.subr.mxu0 0.0
        %v983 = vand.u32 %v280, 4294901760
        %v984 = vsub.f32 %v280, %v983
        %985 = vmatpush1.msra.mxu0 %v984
        %986 = vmatprep.subr.mxu0 0.0
        %v987 = vand.u32 %v279, 4294901760
        %v988 = vsub.f32 %v279, %v987
        %989 = vmatpush1.msra.mxu0 %v988
        %990 = vmatprep.subr.mxu0 0.0
        %v991 = vand.u32 %v278, 4294901760
        %v992 = vsub.f32 %v278, %v991
        %993 = vmatpush1.msra.mxu0 %v992
        %994 = vmatprep.subr.mxu0 0.0
        %v995 = vand.u32 %v277, 4294901760
        %v996 = vsub.f32 %v277, %v995
        %997 = vmatpush1.msra.mxu0 %v996
        %998 = vmatprep.subr.mxu0 0.0
        %999 = vmatpush2.msra.mxu0 0.0
        %1000 = vmatprep.subr.mxu0 0.0
        %1001 = vmatpush2.msra.mxu0 0.0
        %1002 = vmatprep.subr.mxu0 0.0
        %1003 = vmatpush2.msra.mxu0 0.0
        %1004 = vmatprep.subr.mxu0 0.0
        %1005 = vmatpush2.msra.mxu0 0.0
        %1006 = vmatprep.subr.mxu0 0.0
        %1007 = vmatpush2.msra.mxu0 0.0
        %1008 = vmatprep.subr.mxu0 0.0
        %1009 = vmatpush2.msra.mxu0 0.0
        %1010 = vmatprep.subr.mxu0 0.0
        %1011 = vmatpush2.msra.mxu0 0.0
        %1012 = vmatprep.subr.mxu0 0.0
        %1013 = vmatpush2.msra.mxu0 0.0
        %1014 = vmatprep.subr.mxu0 0.0
        %1015 = vmatpush2.msra.mxu0 0.0
        %1016 = vmatprep.subr.mxu0 0.0
        %1017 = vmatpush2.msra.mxu0 0.0
        %1018 = vmatprep.subr.mxu0 0.0
        %1019 = vmatpush2.msra.mxu0 0.0
        %1020 = vmatprep.subr.mxu0 0.0
        %1021 = vmatpush2.msra.mxu0 0.0
        %1022 = vmatprep.subr.mxu0 0.0
        %1023 = vmatpush2.msra.mxu0 0.0
        %1024 = vmatprep.subr.mxu0 0.0
        %1025 = vmatpush2.msra.mxu0 0.0
        %1026 = vmatprep.subr.mxu0 0.0
        %1027 = vmatpush2.msra.mxu0 0.0
        %1028 = vmatprep.subr.mxu0 0.0
        %1029 = vmatpush2.msra.mxu0 0.0
        %1030 = vmatprep.mubr.f32.mxu0 0.0
        %v1031 = vand.u32 %v786, 4294901760
        %v1032 = vsub.f32 %v786, %v1031
        %1033 = vmatmul.mubr.f32.gmra.mxu0 %v1032
        %v1034 = vpop.f32.mrf.mxu0
        %v1035 = vadd.f32 %v955, %v1034
        %v1036 = vpop.f32.mrf.mxu0
        %1037 = vdwg.mxu0
        %1038 = vmatprep.subr.mxu0 0.0
        %1039 = vmatpush1.msra.mxu0 0.0
        %1040 = vmatprep.subr.mxu0 0.0
        %1041 = vmatpush1.msra.mxu0 0.0
        %1042 = vmatprep.subr.mxu0 0.0
        %1043 = vmatpush1.msra.mxu0 0.0
        %1044 = vmatprep.subr.mxu0 0.0
        %1045 = vmatpush1.msra.mxu0 0.0
        %1046 = vmatprep.subr.mxu0 0.0
        %1047 = vmatpush1.msra.mxu0 0.0
        %1048 = vmatprep.subr.mxu0 0.0
        %1049 = vmatpush1.msra.mxu0 0.0
        %1050 = vmatprep.subr.mxu0 0.0
        %1051 = vmatpush1.msra.mxu0 0.0
        %1052 = vmatprep.subr.mxu0 0.0
        %1053 = vmatpush1.msra.mxu0 0.0
        %1054 = vmatprep.subr.mxu0 0.0
        %1055 = vmatpush1.msra.mxu0 0.0
        %1056 = vmatprep.subr.mxu0 0.0
        %1057 = vmatpush1.msra.mxu0 0.0
        %1058 = vmatprep.subr.mxu0 0.0
        %1059 = vmatpush1.msra.mxu0 0.0
        %1060 = vmatprep.subr.mxu0 0.0
        %1061 = vmatpush1.msra.mxu0 0.0
        %1062 = vmatprep.subr.mxu0 0.0
        %v1063 = vand.u32 %v280, 4294901760
        %1064 = vmatpush1.msra.mxu0 %v1063
        %1065 = vmatprep.subr.mxu0 0.0
        %v1066 = vand.u32 %v279, 4294901760
        %1067 = vmatpush1.msra.mxu0 %v1066
        %1068 = vmatprep.subr.mxu0 0.0
        %v1069 = vand.u32 %v278, 4294901760
        %1070 = vmatpush1.msra.mxu0 %v1069
        %1071 = vmatprep.subr.mxu0 0.0
        %v1072 = vand.u32 %v277, 4294901760
        %1073 = vmatpush1.msra.mxu0 %v1072
        %1074 = vmatprep.subr.mxu0 0.0
        %1075 = vmatpush2.msra.mxu0 0.0
        %1076 = vmatprep.subr.mxu0 0.0
        %1077 = vmatpush2.msra.mxu0 0.0
        %1078 = vmatprep.subr.mxu0 0.0
        %1079 = vmatpush2.msra.mxu0 0.0
        %1080 = vmatprep.subr.mxu0 0.0
        %1081 = vmatpush2.msra.mxu0 0.0
        %1082 = vmatprep.subr.mxu0 0.0
        %1083 = vmatpush2.msra.mxu0 0.0
        %1084 = vmatprep.subr.mxu0 0.0
        %1085 = vmatpush2.msra.mxu0 0.0
        %1086 = vmatprep.subr.mxu0 0.0
        %1087 = vmatpush2.msra.mxu0 0.0
        %1088 = vmatprep.subr.mxu0 0.0
        %1089 = vmatpush2.msra.mxu0 0.0
        %1090 = vmatprep.subr.mxu0 0.0
        %1091 = vmatpush2.msra.mxu0 0.0
        %1092 = vmatprep.subr.mxu0 0.0
        %1093 = vmatpush2.msra.mxu0 0.0
        %1094 = vmatprep.subr.mxu0 0.0
        %1095 = vmatpush2.msra.mxu0 0.0
        %1096 = vmatprep.subr.mxu0 0.0
        %1097 = vmatpush2.msra.mxu0 0.0
        %1098 = vmatprep.subr.mxu0 0.0
        %1099 = vmatpush2.msra.mxu0 0.0
        %1100 = vmatprep.subr.mxu0 0.0
        %1101 = vmatpush2.msra.mxu0 0.0
        %1102 = vmatprep.subr.mxu0 0.0
        %1103 = vmatpush2.msra.mxu0 0.0
        %1104 = vmatprep.subr.mxu0 0.0
        %1105 = vmatpush2.msra.mxu0 0.0
        %1106 = vmatprep.mubr.f32.mxu0 0.0
        %v1107 = vand.u32 %v786, 4294901760
        %v1108 = vsub.f32 %v786, %v1107
        %v1109 = vand.u32 %v1108, 4294901760
        %1110 = vmatmul.mubr.f32.gmra.mxu0 %v1109
        %v1111 = vpop.f32.mrf.mxu0
        %v1112 = vadd.f32 %v1035, %v1111
        %v1113 = vpop.f32.mrf.mxu0
        %1114 = vdwg.mxu0
        %1115 = vmatprep.subr.mxu0 0.0
        %1116 = vmatpush1.msra.mxu0 0.0
        %1117 = vmatprep.subr.mxu0 0.0
        %1118 = vmatpush1.msra.mxu0 0.0
        %1119 = vmatprep.subr.mxu0 0.0
        %1120 = vmatpush1.msra.mxu0 0.0
        %1121 = vmatprep.subr.mxu0 0.0
        %1122 = vmatpush1.msra.mxu0 0.0
        %1123 = vmatprep.subr.mxu0 0.0
        %1124 = vmatpush1.msra.mxu0 0.0
        %1125 = vmatprep.subr.mxu0 0.0
        %1126 = vmatpush1.msra.mxu0 0.0
        %1127 = vmatprep.subr.mxu0 0.0
        %1128 = vmatpush1.msra.mxu0 0.0
        %1129 = vmatprep.subr.mxu0 0.0
        %1130 = vmatpush1.msra.mxu0 0.0
        %1131 = vmatprep.subr.mxu0 0.0
        %1132 = vmatpush1.msra.mxu0 0.0
        %1133 = vmatprep.subr.mxu0 0.0
        %1134 = vmatpush1.msra.mxu0 0.0
        %1135 = vmatprep.subr.mxu0 0.0
        %1136 = vmatpush1.msra.mxu0 0.0
        %1137 = vmatprep.subr.mxu0 0.0
        %1138 = vmatpush1.msra.mxu0 0.0
        %1139 = vmatprep.subr.mxu0 0.0
        %v1140 = vand.u32 %v280, 4294901760
        %v1141 = vsub.f32 %v280, %v1140
        %v1142 = vand.u32 %v1141, 4294901760
        %1143 = vmatpush1.msra.mxu0 %v1142
        %1144 = vmatprep.subr.mxu0 0.0
        %v1145 = vand.u32 %v279, 4294901760
        %v1146 = vsub.f32 %v279, %v1145
        %v1147 = vand.u32 %v1146, 4294901760
        %1148 = vmatpush1.msra.mxu0 %v1147
        %1149 = vmatprep.subr.mxu0 0.0
        %v1150 = vand.u32 %v278, 4294901760
        %v1151 = vsub.f32 %v278, %v1150
        %v1152 = vand.u32 %v1151, 4294901760
        %1153 = vmatpush1.msra.mxu0 %v1152
        %1154 = vmatprep.subr.mxu0 0.0
        %v1155 = vand.u32 %v277, 4294901760
        %v1156 = vsub.f32 %v277, %v1155
        %v1157 = vand.u32 %v1156, 4294901760
        %1158 = vmatpush1.msra.mxu0 %v1157
        %1159 = vmatprep.subr.mxu0 0.0
        %1160 = vmatpush2.msra.mxu0 0.0
        %1161 = vmatprep.subr.mxu0 0.0
        %1162 = vmatpush2.msra.mxu0 0.0
        %1163 = vmatprep.subr.mxu0 0.0
        %1164 = vmatpush2.msra.mxu0 0.0
        %1165 = vmatprep.subr.mxu0 0.0
        %1166 = vmatpush2.msra.mxu0 0.0
        %1167 = vmatprep.subr.mxu0 0.0
        %1168 = vmatpush2.msra.mxu0 0.0
        %1169 = vmatprep.subr.mxu0 0.0
        %1170 = vmatpush2.msra.mxu0 0.0
        %1171 = vmatprep.subr.mxu0 0.0
        %1172 = vmatpush2.msra.mxu0 0.0
        %1173 = vmatprep.subr.mxu0 0.0
        %1174 = vmatpush2.msra.mxu0 0.0
        %1175 = vmatprep.subr.mxu0 0.0
        %1176 = vmatpush2.msra.mxu0 0.0
        %1177 = vmatprep.subr.mxu0 0.0
        %1178 = vmatpush2.msra.mxu0 0.0
        %1179 = vmatprep.subr.mxu0 0.0
        %1180 = vmatpush2.msra.mxu0 0.0
        %1181 = vmatprep.subr.mxu0 0.0
        %1182 = vmatpush2.msra.mxu0 0.0
        %1183 = vmatprep.subr.mxu0 0.0
        %1184 = vmatpush2.msra.mxu0 0.0
        %1185 = vmatprep.subr.mxu0 0.0
        %1186 = vmatpush2.msra.mxu0 0.0
        %1187 = vmatprep.subr.mxu0 0.0
        %1188 = vmatpush2.msra.mxu0 0.0
        %1189 = vmatprep.subr.mxu0 0.0
        %1190 = vmatpush2.msra.mxu0 0.0
        %1191 = vmatprep.mubr.f32.mxu0 0.0
        %v1192 = vand.u32 %v786, 4294901760
        %1193 = vmatmul.mubr.f32.gmra.mxu0 %v1192
        %v1194 = vpop.f32.mrf.mxu0
        %v1195 = vadd.f32 %v1112, %v1194
        %v1196 = vpop.f32.mrf.mxu0
        %1197 = vdwg.mxu0
        %1198 = vmatprep.subr.mxu0 0.0
        %1199 = vmatpush1.msra.mxu0 0.0
        %1200 = vmatprep.subr.mxu0 0.0
        %1201 = vmatpush1.msra.mxu0 0.0
        %1202 = vmatprep.subr.mxu0 0.0
        %1203 = vmatpush1.msra.mxu0 0.0
        %1204 = vmatprep.subr.mxu0 0.0
        %1205 = vmatpush1.msra.mxu0 0.0
        %1206 = vmatprep.subr.mxu0 0.0
        %1207 = vmatpush1.msra.mxu0 0.0
        %1208 = vmatprep.subr.mxu0 0.0
        %1209 = vmatpush1.msra.mxu0 0.0
        %1210 = vmatprep.subr.mxu0 0.0
        %1211 = vmatpush1.msra.mxu0 0.0
        %1212 = vmatprep.subr.mxu0 0.0
        %1213 = vmatpush1.msra.mxu0 0.0
        %1214 = vmatprep.subr.mxu0 0.0
        %1215 = vmatpush1.msra.mxu0 0.0
        %1216 = vmatprep.subr.mxu0 0.0
        %1217 = vmatpush1.msra.mxu0 0.0
        %1218 = vmatprep.subr.mxu0 0.0
        %1219 = vmatpush1.msra.mxu0 0.0
        %1220 = vmatprep.subr.mxu0 0.0
        %1221 = vmatpush1.msra.mxu0 0.0
        %1222 = vmatprep.subr.mxu0 0.0
        %v1223 = vand.u32 %v280, 4294901760
        %1224 = vmatpush1.msra.mxu0 %v1223
        %1225 = vmatprep.subr.mxu0 0.0
        %v1226 = vand.u32 %v279, 4294901760
        %1227 = vmatpush1.msra.mxu0 %v1226
        %1228 = vmatprep.subr.mxu0 0.0
        %v1229 = vand.u32 %v278, 4294901760
        %1230 = vmatpush1.msra.mxu0 %v1229
        %1231 = vmatprep.subr.mxu0 0.0
        %v1232 = vand.u32 %v277, 4294901760
        %1233 = vmatpush1.msra.mxu0 %v1232
        %1234 = vmatprep.subr.mxu0 0.0
        %1235 = vmatpush2.msra.mxu0 0.0
        %1236 = vmatprep.subr.mxu0 0.0
        %1237 = vmatpush2.msra.mxu0 0.0
        %1238 = vmatprep.subr.mxu0 0.0
        %1239 = vmatpush2.msra.mxu0 0.0
        %1240 = vmatprep.subr.mxu0 0.0
        %1241 = vmatpush2.msra.mxu0 0.0
        %1242 = vmatprep.subr.mxu0 0.0
        %1243 = vmatpush2.msra.mxu0 0.0
        %1244 = vmatprep.subr.mxu0 0.0
        %1245 = vmatpush2.msra.mxu0 0.0
        %1246 = vmatprep.subr.mxu0 0.0
        %1247 = vmatpush2.msra.mxu0 0.0
        %1248 = vmatprep.subr.mxu0 0.0
        %1249 = vmatpush2.msra.mxu0 0.0
        %1250 = vmatprep.subr.mxu0 0.0
        %1251 = vmatpush2.msra.mxu0 0.0
        %1252 = vmatprep.subr.mxu0 0.0
        %1253 = vmatpush2.msra.mxu0 0.0
        %1254 = vmatprep.subr.mxu0 0.0
        %1255 = vmatpush2.msra.mxu0 0.0
        %1256 = vmatprep.subr.mxu0 0.0
        %1257 = vmatpush2.msra.mxu0 0.0
        %1258 = vmatprep.subr.mxu0 0.0
        %1259 = vmatpush2.msra.mxu0 0.0
        %1260 = vmatprep.subr.mxu0 0.0
        %1261 = vmatpush2.msra.mxu0 0.0
        %1262 = vmatprep.subr.mxu0 0.0
        %1263 = vmatpush2.msra.mxu0 0.0
        %1264 = vmatprep.subr.mxu0 0.0
        %1265 = vmatpush2.msra.mxu0 0.0
        %1266 = vmatprep.mubr.f32.mxu0 0.0
        %v1267 = vand.u32 %v786, 4294901760
        %1268 = vmatmul.mubr.f32.gmra.mxu0 %v1267
        %v1269 = vpop.f32.mrf.mxu0
        %v1270 = vadd.f32 %v1195, %v1269
        %v1271 = vpop.f32.mrf.mxu0
        %1272 = vdwg.mxu0
        %v1273 = vld [vmem:[#allocation2 + $0x10] sm:$0xff]
        %v1274 = vld [vmem:[#allocation2 + $0x18] sm:$0xff]
        %vm1275 = vcmask 130048
        %v1277 = vsel %vm1275, %v1270, 0
        %1279 = vmatprep.subr.mxu0 0.0
        %1280 = vmatpush1.msra.mxu0 0.0
        %1281 = vmatprep.subr.mxu0 0.0
        %1282 = vmatpush1.msra.mxu0 0.0
        %1283 = vmatprep.subr.mxu0 0.0
        %1284 = vmatpush1.msra.mxu0 0.0
        %1285 = vmatprep.subr.mxu0 0.0
        %1286 = vmatpush1.msra.mxu0 0.0
        %1287 = vmatprep.subr.mxu0 0.0
        %1288 = vmatpush1.msra.mxu0 0.0
        %1289 = vmatprep.subr.mxu0 0.0
        %1290 = vmatpush1.msra.mxu0 0.0
        %1291 = vmatprep.subr.mxu0 0.0
        %1292 = vmatpush1.msra.mxu0 0.0
        %1293 = vmatprep.subr.mxu0 0.0
        %1294 = vmatpush1.msra.mxu0 0.0
        %1295 = vmatprep.subr.mxu0 0.0
        %1296 = vmatpush1.msra.mxu0 0.0
        %1297 = vmatprep.subr.mxu0 0.0
        %1298 = vmatpush1.msra.mxu0 0.0
        %1299 = vmatprep.subr.mxu0 0.0
        %1300 = vmatpush1.msra.mxu0 0.0
        %1301 = vmatprep.subr.mxu0 0.0
        %1302 = vmatpush1.msra.mxu0 0.0
        %1303 = vmatprep.subr.mxu0 0.0
        %1304 = vmatpush1.msra.mxu0 0.0
        %1305 = vmatprep.subr.mxu0 0.0
        %1306 = vmatpush1.msra.mxu0 0.0
        %1307 = vmatprep.subr.mxu0 0.0
        %v1308 = vand.u32 %v1274, 4294901760
        %1309 = vmatpush1.msra.mxu0 %v1308
        %1310 = vmatprep.subr.mxu0 0.0
        %v1311 = vand.u32 %v1273, 4294901760
        %1312 = vmatpush1.msra.mxu0 %v1311
        %1313 = vmatprep.subr.mxu0 0.0
        %1314 = vmatpush2.msra.mxu0 0.0
        %1315 = vmatprep.subr.mxu0 0.0
        %1316 = vmatpush2.msra.mxu0 0.0
        %1317 = vmatprep.subr.mxu0 0.0
        %1318 = vmatpush2.msra.mxu0 0.0
        %1319 = vmatprep.subr.mxu0 0.0
        %1320 = vmatpush2.msra.mxu0 0.0
        %1321 = vmatprep.subr.mxu0 0.0
        %1322 = vmatpush2.msra.mxu0 0.0
        %1323 = vmatprep.subr.mxu0 0.0
        %1324 = vmatpush2.msra.mxu0 0.0
        %1325 = vmatprep.subr.mxu0 0.0
        %1326 = vmatpush2.msra.mxu0 0.0
        %1327 = vmatprep.subr.mxu0 0.0
        %1328 = vmatpush2.msra.mxu0 0.0
        %1329 = vmatprep.subr.mxu0 0.0
        %1330 = vmatpush2.msra.mxu0 0.0
        %1331 = vmatprep.subr.mxu0 0.0
        %1332 = vmatpush2.msra.mxu0 0.0
        %1333 = vmatprep.subr.mxu0 0.0
        %1334 = vmatpush2.msra.mxu0 0.0
        %1335 = vmatprep.subr.mxu0 0.0
        %1336 = vmatpush2.msra.mxu0 0.0
        %1337 = vmatprep.subr.mxu0 0.0
        %1338 = vmatpush2.msra.mxu0 0.0
        %1339 = vmatprep.subr.mxu0 0.0
        %1340 = vmatpush2.msra.mxu0 0.0
        %1341 = vmatprep.subr.mxu0 0.0
        %1342 = vmatpush2.msra.mxu0 0.0
        %1343 = vmatprep.subr.mxu0 0.0
        %1344 = vmatpush2.msra.mxu0 0.0
        %1345 = vmatprep.mubr.f32.mxu0 0.0
        %v1346 = vand.u32 %v1277, 4294901760
        %v1347 = vsub.f32 %v1277, %v1346
        %v1348 = vand.u32 %v1347, 4294901760
        %v1349 = vsub.f32 %v1347, %v1348
        %v1350 = vand.u32 %v1349, 4294901760
        %1351 = vmatmul.mubr.f32.gmra.mxu0 %v1350
        %v1352 = vpop.f32.mrf.mxu0
        %v1353 = vadd.f32 0.0, %v1352
        %v1354 = vpop.f32.mrf.mxu0
        %1355 = vdwg.mxu0
        %1356 = vmatprep.subr.mxu0 0.0
        %1357 = vmatpush1.msra.mxu0 0.0
        %1358 = vmatprep.subr.mxu0 0.0
        %1359 = vmatpush1.msra.mxu0 0.0
        %1360 = vmatprep.subr.mxu0 0.0
        %1361 = vmatpush1.msra.mxu0 0.0
        %1362 = vmatprep.subr.mxu0 0.0
        %1363 = vmatpush1.msra.mxu0 0.0
        %1364 = vmatprep.subr.mxu0 0.0
        %1365 = vmatpush1.msra.mxu0 0.0
        %1366 = vmatprep.subr.mxu0 0.0
        %1367 = vmatpush1.msra.mxu0 0.0
        %1368 = vmatprep.subr.mxu0 0.0
        %1369 = vmatpush1.msra.mxu0 0.0
        %1370 = vmatprep.subr.mxu0 0.0
        %1371 = vmatpush1.msra.mxu0 0.0
        %1372 = vmatprep.subr.mxu0 0.0
        %1373 = vmatpush1.msra.mxu0 0.0
        %1374 = vmatprep.subr.mxu0 0.0
        %1375 = vmatpush1.msra.mxu0 0.0
        %1376 = vmatprep.subr.mxu0 0.0
        %1377 = vmatpush1.msra.mxu0 0.0
        %1378 = vmatprep.subr.mxu0 0.0
        %1379 = vmatpush1.msra.mxu0 0.0
        %1380 = vmatprep.subr.mxu0 0.0
        %1381 = vmatpush1.msra.mxu0 0.0
        %1382 = vmatprep.subr.mxu0 0.0
        %1383 = vmatpush1.msra.mxu0 0.0
        %1384 = vmatprep.subr.mxu0 0.0
        %v1385 = vand.u32 %v1274, 4294901760
        %v1386 = vsub.f32 %v1274, %v1385
        %v1387 = vand.u32 %v1386, 4294901760
        %v1388 = vsub.f32 %v1386, %v1387
        %v1389 = vand.u32 %v1388, 4294901760
        %1390 = vmatpush1.msra.mxu0 %v1389
        %1391 = vmatprep.subr.mxu0 0.0
        %v1392 = vand.u32 %v1273, 4294901760
        %v1393 = vsub.f32 %v1273, %v1392
        %v1394 = vand.u32 %v1393, 4294901760
        %v1395 = vsub.f32 %v1393, %v1394
        %v1396 = vand.u32 %v1395, 4294901760
        %1397 = vmatpush1.msra.mxu0 %v1396
        %1398 = vmatprep.subr.mxu0 0.0
        %1399 = vmatpush2.msra.mxu0 0.0
        %1400 = vmatprep.subr.mxu0 0.0
        %1401 = vmatpush2.msra.mxu0 0.0
        %1402 = vmatprep.subr.mxu0 0.0
        %1403 = vmatpush2.msra.mxu0 0.0
        %1404 = vmatprep.subr.mxu0 0.0
        %1405 = vmatpush2.msra.mxu0 0.0
        %1406 = vmatprep.subr.mxu0 0.0
        %1407 = vmatpush2.msra.mxu0 0.0
        %1408 = vmatprep.subr.mxu0 0.0
        %1409 = vmatpush2.msra.mxu0 0.0
        %1410 = vmatprep.subr.mxu0 0.0
        %1411 = vmatpush2.msra.mxu0 0.0
        %1412 = vmatprep.subr.mxu0 0.0
        %1413 = vmatpush2.msra.mxu0 0.0
        %1414 = vmatprep.subr.mxu0 0.0
        %1415 = vmatpush2.msra.mxu0 0.0
        %1416 = vmatprep.subr.mxu0 0.0
        %1417 = vmatpush2.msra.mxu0 0.0
        %1418 = vmatprep.subr.mxu0 0.0
        %1419 = vmatpush2.msra.mxu0 0.0
        %1420 = vmatprep.subr.mxu0 0.0
        %1421 = vmatpush2.msra.mxu0 0.0
        %1422 = vmatprep.subr.mxu0 0.0
        %1423 = vmatpush2.msra.mxu0 0.0
        %1424 = vmatprep.subr.mxu0 0.0
        %1425 = vmatpush2.msra.mxu0 0.0
        %1426 = vmatprep.subr.mxu0 0.0
        %1427 = vmatpush2.msra.mxu0 0.0
        %1428 = vmatprep.subr.mxu0 0.0
        %1429 = vmatpush2.msra.mxu0 0.0
        %1430 = vmatprep.mubr.f32.mxu0 0.0
        %v1431 = vand.u32 %v1277, 4294901760
        %1432 = vmatmul.mubr.f32.gmra.mxu0 %v1431
        %v1433 = vpop.f32.mrf.mxu0
        %v1434 = vadd.f32 %v1353, %v1433
        %v1435 = vpop.f32.mrf.mxu0
        %1436 = vdwg.mxu0
        %1437 = vmatprep.subr.mxu0 0.0
        %1438 = vmatpush1.msra.mxu0 0.0
        %1439 = vmatprep.subr.mxu0 0.0
        %1440 = vmatpush1.msra.mxu0 0.0
        %1441 = vmatprep.subr.mxu0 0.0
        %1442 = vmatpush1.msra.mxu0 0.0
        %1443 = vmatprep.subr.mxu0 0.0
        %1444 = vmatpush1.msra.mxu0 0.0
        %1445 = vmatprep.subr.mxu0 0.0
        %1446 = vmatpush1.msra.mxu0 0.0
        %1447 = vmatprep.subr.mxu0 0.0
        %1448 = vmatpush1.msra.mxu0 0.0
        %1449 = vmatprep.subr.mxu0 0.0
        %1450 = vmatpush1.msra.mxu0 0.0
        %1451 = vmatprep.subr.mxu0 0.0
        %1452 = vmatpush1.msra.mxu0 0.0
        %1453 = vmatprep.subr.mxu0 0.0
        %1454 = vmatpush1.msra.mxu0 0.0
        %1455 = vmatprep.subr.mxu0 0.0
        %1456 = vmatpush1.msra.mxu0 0.0
        %1457 = vmatprep.subr.mxu0 0.0
        %1458 = vmatpush1.msra.mxu0 0.0
        %1459 = vmatprep.subr.mxu0 0.0
        %1460 = vmatpush1.msra.mxu0 0.0
        %1461 = vmatprep.subr.mxu0 0.0
        %1462 = vmatpush1.msra.mxu0 0.0
        %1463 = vmatprep.subr.mxu0 0.0
        %1464 = vmatpush1.msra.mxu0 0.0
        %1465 = vmatprep.subr.mxu0 0.0
        %v1466 = vand.u32 %v1274, 4294901760
        %v1467 = vsub.f32 %v1274, %v1466
        %1468 = vmatpush1.msra.mxu0 %v1467
        %1469 = vmatprep.subr.mxu0 0.0
        %v1470 = vand.u32 %v1273, 4294901760
        %v1471 = vsub.f32 %v1273, %v1470
        %1472 = vmatpush1.msra.mxu0 %v1471
        %1473 = vmatprep.subr.mxu0 0.0
        %1474 = vmatpush2.msra.mxu0 0.0
        %1475 = vmatprep.subr.mxu0 0.0
        %1476 = vmatpush2.msra.mxu0 0.0
        %1477 = vmatprep.subr.mxu0 0.0
        %1478 = vmatpush2.msra.mxu0 0.0
        %1479 = vmatprep.subr.mxu0 0.0
        %1480 = vmatpush2.msra.mxu0 0.0
        %1481 = vmatprep.subr.mxu0 0.0
        %1482 = vmatpush2.msra.mxu0 0.0
        %1483 = vmatprep.subr.mxu0 0.0
        %1484 = vmatpush2.msra.mxu0 0.0
        %1485 = vmatprep.subr.mxu0 0.0
        %1486 = vmatpush2.msra.mxu0 0.0
        %1487 = vmatprep.subr.mxu0 0.0
        %1488 = vmatpush2.msra.mxu0 0.0
        %1489 = vmatprep.subr.mxu0 0.0
        %1490 = vmatpush2.msra.mxu0 0.0
        %1491 = vmatprep.subr.mxu0 0.0
        %1492 = vmatpush2.msra.mxu0 0.0
        %1493 = vmatprep.subr.mxu0 0.0
        %1494 = vmatpush2.msra.mxu0 0.0
        %1495 = vmatprep.subr.mxu0 0.0
        %1496 = vmatpush2.msra.mxu0 0.0
        %1497 = vmatprep.subr.mxu0 0.0
        %1498 = vmatpush2.msra.mxu0 0.0
        %1499 = vmatprep.subr.mxu0 0.0
        %1500 = vmatpush2.msra.mxu0 0.0
        %1501 = vmatprep.subr.mxu0 0.0
        %1502 = vmatpush2.msra.mxu0 0.0
        %1503 = vmatprep.subr.mxu0 0.0
        %1504 = vmatpush2.msra.mxu0 0.0
        %1505 = vmatprep.mubr.f32.mxu0 0.0
        %v1506 = vand.u32 %v1277, 4294901760
        %v1507 = vsub.f32 %v1277, %v1506
        %1508 = vmatmul.mubr.f32.gmra.mxu0 %v1507
        %v1509 = vpop.f32.mrf.mxu0
        %v1510 = vadd.f32 %v1434, %v1509
        %v1511 = vpop.f32.mrf.mxu0
        %1512 = vdwg.mxu0
        %1513 = vmatprep.subr.mxu0 0.0
        %1514 = vmatpush1.msra.mxu0 0.0
        %1515 = vmatprep.subr.mxu0 0.0
        %1516 = vmatpush1.msra.mxu0 0.0
        %1517 = vmatprep.subr.mxu0 0.0
        %1518 = vmatpush1.msra.mxu0 0.0
        %1519 = vmatprep.subr.mxu0 0.0
        %1520 = vmatpush1.msra.mxu0 0.0
        %1521 = vmatprep.subr.mxu0 0.0
        %1522 = vmatpush1.msra.mxu0 0.0
        %1523 = vmatprep.subr.mxu0 0.0
        %1524 = vmatpush1.msra.mxu0 0.0
        %1525 = vmatprep.subr.mxu0 0.0
        %1526 = vmatpush1.msra.mxu0 0.0
        %1527 = vmatprep.subr.mxu0 0.0
        %1528 = vmatpush1.msra.mxu0 0.0
        %1529 = vmatprep.subr.mxu0 0.0
        %1530 = vmatpush1.msra.mxu0 0.0
        %1531 = vmatprep.subr.mxu0 0.0
        %1532 = vmatpush1.msra.mxu0 0.0
        %1533 = vmatprep.subr.mxu0 0.0
        %1534 = vmatpush1.msra.mxu0 0.0
        %1535 = vmatprep.subr.mxu0 0.0
        %1536 = vmatpush1.msra.mxu0 0.0
        %1537 = vmatprep.subr.mxu0 0.0
        %1538 = vmatpush1.msra.mxu0 0.0
        %1539 = vmatprep.subr.mxu0 0.0
        %1540 = vmatpush1.msra.mxu0 0.0
        %1541 = vmatprep.subr.mxu0 0.0
        %v1542 = vand.u32 %v1274, 4294901760
        %1543 = vmatpush1.msra.mxu0 %v1542
        %1544 = vmatprep.subr.mxu0 0.0
        %v1545 = vand.u32 %v1273, 4294901760
        %1546 = vmatpush1.msra.mxu0 %v1545
        %1547 = vmatprep.subr.mxu0 0.0
        %1548 = vmatpush2.msra.mxu0 0.0
        %1549 = vmatprep.subr.mxu0 0.0
        %1550 = vmatpush2.msra.mxu0 0.0
        %1551 = vmatprep.subr.mxu0 0.0
        %1552 = vmatpush2.msra.mxu0 0.0
        %1553 = vmatprep.subr.mxu0 0.0
        %1554 = vmatpush2.msra.mxu0 0.0
        %1555 = vmatprep.subr.mxu0 0.0
        %1556 = vmatpush2.msra.mxu0 0.0
        %1557 = vmatprep.subr.mxu0 0.0
        %1558 = vmatpush2.msra.mxu0 0.0
        %1559 = vmatprep.subr.mxu0 0.0
        %1560 = vmatpush2.msra.mxu0 0.0
        %1561 = vmatprep.subr.mxu0 0.0
        %1562 = vmatpush2.msra.mxu0 0.0
        %1563 = vmatprep.subr.mxu0 0.0
        %1564 = vmatpush2.msra.mxu0 0.0
        %1565 = vmatprep.subr.mxu0 0.0
        %1566 = vmatpush2.msra.mxu0 0.0
        %1567 = vmatprep.subr.mxu0 0.0
        %1568 = vmatpush2.msra.mxu0 0.0
        %1569 = vmatprep.subr.mxu0 0.0
        %1570 = vmatpush2.msra.mxu0 0.0
        %1571 = vmatprep.subr.mxu0 0.0
        %1572 = vmatpush2.msra.mxu0 0.0
        %1573 = vmatprep.subr.mxu0 0.0
        %1574 = vmatpush2.msra.mxu0 0.0
        %1575 = vmatprep.subr.mxu0 0.0
        %1576 = vmatpush2.msra.mxu0 0.0
        %1577 = vmatprep.subr.mxu0 0.0
        %1578 = vmatpush2.msra.mxu0 0.0
        %1579 = vmatprep.mubr.f32.mxu0 0.0
        %v1580 = vand.u32 %v1277, 4294901760
        %v1581 = vsub.f32 %v1277, %v1580
        %v1582 = vand.u32 %v1581, 4294901760
        %1583 = vmatmul.mubr.f32.gmra.mxu0 %v1582
        %v1584 = vpop.f32.mrf.mxu0
        %v1585 = vadd.f32 %v1510, %v1584
        %v1586 = vpop.f32.mrf.mxu0
        %1587 = vdwg.mxu0
        %1588 = vmatprep.subr.mxu0 0.0
        %1589 = vmatpush1.msra.mxu0 0.0
        %1590 = vmatprep.subr.mxu0 0.0
        %1591 = vmatpush1.msra.mxu0 0.0
        %1592 = vmatprep.subr.mxu0 0.0
        %1593 = vmatpush1.msra.mxu0 0.0
        %1594 = vmatprep.subr.mxu0 0.0
        %1595 = vmatpush1.msra.mxu0 0.0
        %1596 = vmatprep.subr.mxu0 0.0
        %1597 = vmatpush1.msra.mxu0 0.0
        %1598 = vmatprep.subr.mxu0 0.0
        %1599 = vmatpush1.msra.mxu0 0.0
        %1600 = vmatprep.subr.mxu0 0.0
        %1601 = vmatpush1.msra.mxu0 0.0
        %1602 = vmatprep.subr.mxu0 0.0
        %1603 = vmatpush1.msra.mxu0 0.0
        %1604 = vmatprep.subr.mxu0 0.0
        %1605 = vmatpush1.msra.mxu0 0.0
        %1606 = vmatprep.subr.mxu0 0.0
        %1607 = vmatpush1.msra.mxu0 0.0
        %1608 = vmatprep.subr.mxu0 0.0
        %1609 = vmatpush1.msra.mxu0 0.0
        %1610 = vmatprep.subr.mxu0 0.0
        %1611 = vmatpush1.msra.mxu0 0.0
        %1612 = vmatprep.subr.mxu0 0.0
        %1613 = vmatpush1.msra.mxu0 0.0
        %1614 = vmatprep.subr.mxu0 0.0
        %1615 = vmatpush1.msra.mxu0 0.0
        %1616 = vmatprep.subr.mxu0 0.0
        %v1617 = vand.u32 %v1274, 4294901760
        %v1618 = vsub.f32 %v1274, %v1617
        %v1619 = vand.u32 %v1618, 4294901760
        %1620 = vmatpush1.msra.mxu0 %v1619
        %1621 = vmatprep.subr.mxu0 0.0
        %v1622 = vand.u32 %v1273, 4294901760
        %v1623 = vsub.f32 %v1273, %v1622
        %v1624 = vand.u32 %v1623, 4294901760
        %1625 = vmatpush1.msra.mxu0 %v1624
        %1626 = vmatprep.subr.mxu0 0.0
        %1627 = vmatpush2.msra.mxu0 0.0
        %1628 = vmatprep.subr.mxu0 0.0
        %1629 = vmatpush2.msra.mxu0 0.0
        %1630 = vmatprep.subr.mxu0 0.0
        %1631 = vmatpush2.msra.mxu0 0.0
        %1632 = vmatprep.subr.mxu0 0.0
        %1633 = vmatpush2.msra.mxu0 0.0
        %1634 = vmatprep.subr.mxu0 0.0
        %1635 = vmatpush2.msra.mxu0 0.0
        %1636 = vmatprep.subr.mxu0 0.0
        %1637 = vmatpush2.msra.mxu0 0.0
        %1638 = vmatprep.subr.mxu0 0.0
        %1639 = vmatpush2.msra.mxu0 0.0
        %1640 = vmatprep.subr.mxu0 0.0
        %1641 = vmatpush2.msra.mxu0 0.0
        %1642 = vmatprep.subr.mxu0 0.0
        %1643 = vmatpush2.msra.mxu0 0.0
        %1644 = vmatprep.subr.mxu0 0.0
        %1645 = vmatpush2.msra.mxu0 0.0
        %1646 = vmatprep.subr.mxu0 0.0
        %1647 = vmatpush2.msra.mxu0 0.0
        %1648 = vmatprep.subr.mxu0 0.0
        %1649 = vmatpush2.msra.mxu0 0.0
        %1650 = vmatprep.subr.mxu0 0.0
        %1651 = vmatpush2.msra.mxu0 0.0
        %1652 = vmatprep.subr.mxu0 0.0
        %1653 = vmatpush2.msra.mxu0 0.0
        %1654 = vmatprep.subr.mxu0 0.0
        %1655 = vmatpush2.msra.mxu0 0.0
        %1656 = vmatprep.subr.mxu0 0.0
        %1657 = vmatpush2.msra.mxu0 0.0
        %1658 = vmatprep.mubr.f32.mxu0 0.0
        %v1659 = vand.u32 %v1277, 4294901760
        %1660 = vmatmul.mubr.f32.gmra.mxu0 %v1659
        %v1661 = vpop.f32.mrf.mxu0
        %v1662 = vadd.f32 %v1585, %v1661
        %v1663 = vpop.f32.mrf.mxu0
        %1664 = vdwg.mxu0
        %1665 = vmatprep.subr.mxu0 0.0
        %1666 = vmatpush1.msra.mxu0 0.0
        %1667 = vmatprep.subr.mxu0 0.0
        %1668 = vmatpush1.msra.mxu0 0.0
        %1669 = vmatprep.subr.mxu0 0.0
        %1670 = vmatpush1.msra.mxu0 0.0
        %1671 = vmatprep.subr.mxu0 0.0
        %1672 = vmatpush1.msra.mxu0 0.0
        %1673 = vmatprep.subr.mxu0 0.0
        %1674 = vmatpush1.msra.mxu0 0.0
        %1675 = vmatprep.subr.mxu0 0.0
        %1676 = vmatpush1.msra.mxu0 0.0
        %1677 = vmatprep.subr.mxu0 0.0
        %1678 = vmatpush1.msra.mxu0 0.0
        %1679 = vmatprep.subr.mxu0 0.0
        %1680 = vmatpush1.msra.mxu0 0.0
        %1681 = vmatprep.subr.mxu0 0.0
        %1682 = vmatpush1.msra.mxu0 0.0
        %1683 = vmatprep.subr.mxu0 0.0
        %1684 = vmatpush1.msra.mxu0 0.0
        %1685 = vmatprep.subr.mxu0 0.0
        %1686 = vmatpush1.msra.mxu0 0.0
        %1687 = vmatprep.subr.mxu0 0.0
        %1688 = vmatpush1.msra.mxu0 0.0
        %1689 = vmatprep.subr.mxu0 0.0
        %1690 = vmatpush1.msra.mxu0 0.0
        %1691 = vmatprep.subr.mxu0 0.0
        %1692 = vmatpush1.msra.mxu0 0.0
        %1693 = vmatprep.subr.mxu0 0.0
        %v1694 = vand.u32 %v1274, 4294901760
        %1695 = vmatpush1.msra.mxu0 %v1694
        %1696 = vmatprep.subr.mxu0 0.0
        %v1697 = vand.u32 %v1273, 4294901760
        %1698 = vmatpush1.msra.mxu0 %v1697
        %1699 = vmatprep.subr.mxu0 0.0
        %1700 = vmatpush2.msra.mxu0 0.0
        %1701 = vmatprep.subr.mxu0 0.0
        %1702 = vmatpush2.msra.mxu0 0.0
        %1703 = vmatprep.subr.mxu0 0.0
        %1704 = vmatpush2.msra.mxu0 0.0
        %1705 = vmatprep.subr.mxu0 0.0
        %1706 = vmatpush2.msra.mxu0 0.0
        %1707 = vmatprep.subr.mxu0 0.0
        %1708 = vmatpush2.msra.mxu0 0.0
        %1709 = vmatprep.subr.mxu0 0.0
        %1710 = vmatpush2.msra.mxu0 0.0
        %1711 = vmatprep.subr.mxu0 0.0
        %1712 = vmatpush2.msra.mxu0 0.0
        %1713 = vmatprep.subr.mxu0 0.0
        %1714 = vmatpush2.msra.mxu0 0.0
        %1715 = vmatprep.subr.mxu0 0.0
        %1716 = vmatpush2.msra.mxu0 0.0
        %1717 = vmatprep.subr.mxu0 0.0
        %1718 = vmatpush2.msra.mxu0 0.0
        %1719 = vmatprep.subr.mxu0 0.0
        %1720 = vmatpush2.msra.mxu0 0.0
        %1721 = vmatprep.subr.mxu0 0.0
        %1722 = vmatpush2.msra.mxu0 0.0
        %1723 = vmatprep.subr.mxu0 0.0
        %1724 = vmatpush2.msra.mxu0 0.0
        %1725 = vmatprep.subr.mxu0 0.0
        %1726 = vmatpush2.msra.mxu0 0.0
        %1727 = vmatprep.subr.mxu0 0.0
        %1728 = vmatpush2.msra.mxu0 0.0
        %1729 = vmatprep.subr.mxu0 0.0
        %1730 = vmatpush2.msra.mxu0 0.0
        %1731 = vmatprep.mubr.f32.mxu0 0.0
        %v1732 = vand.u32 %v1277, 4294901760
        %1733 = vmatmul.mubr.f32.gmra.mxu0 %v1732
        %v1734 = vpop.f32.mrf.mxu0
        %v1735 = vadd.f32 %v1662, %v1734
        %v1736 = vpop.f32.mrf.mxu0
        %1737 = vdwg.mxu0
        %v1739 = vsel %vm1275, %v775, 0
        %1741 = vmatprep.subr.mxu0 0.0
        %1742 = vmatpush1.msra.mxu0 0.0
        %1743 = vmatprep.subr.mxu0 0.0
        %1744 = vmatpush1.msra.mxu0 0.0
        %1745 = vmatprep.subr.mxu0 0.0
        %1746 = vmatpush1.msra.mxu0 0.0
        %1747 = vmatprep.subr.mxu0 0.0
        %1748 = vmatpush1.msra.mxu0 0.0
        %1749 = vmatprep.subr.mxu0 0.0
        %1750 = vmatpush1.msra.mxu0 0.0
        %1751 = vmatprep.subr.mxu0 0.0
        %1752 = vmatpush1.msra.mxu0 0.0
        %1753 = vmatprep.subr.mxu0 0.0
        %1754 = vmatpush1.msra.mxu0 0.0
        %1755 = vmatprep.subr.mxu0 0.0
        %1756 = vmatpush1.msra.mxu0 0.0
        %1757 = vmatprep.subr.mxu0 0.0
        %1758 = vmatpush1.msra.mxu0 0.0
        %1759 = vmatprep.subr.mxu0 0.0
        %1760 = vmatpush1.msra.mxu0 0.0
        %1761 = vmatprep.subr.mxu0 0.0
        %1762 = vmatpush1.msra.mxu0 0.0
        %1763 = vmatprep.subr.mxu0 0.0
        %1764 = vmatpush1.msra.mxu0 0.0
        %1765 = vmatprep.subr.mxu0 0.0
        %1766 = vmatpush1.msra.mxu0 0.0
        %1767 = vmatprep.subr.mxu0 0.0
        %1768 = vmatpush1.msra.mxu0 0.0
        %1769 = vmatprep.subr.mxu0 0.0
        %v1770 = vand.u32 %v779, 4294901760
        %1771 = vmatpush1.msra.mxu0 %v1770
        %1772 = vmatprep.subr.mxu0 0.0
        %v1773 = vand.u32 %v778, 4294901760
        %1774 = vmatpush1.msra.mxu0 %v1773
        %1775 = vmatprep.subr.mxu0 0.0
        %1776 = vmatpush2.msra.mxu0 0.0
        %1777 = vmatprep.subr.mxu0 0.0
        %1778 = vmatpush2.msra.mxu0 0.0
        %1779 = vmatprep.subr.mxu0 0.0
        %1780 = vmatpush2.msra.mxu0 0.0
        %1781 = vmatprep.subr.mxu0 0.0
        %1782 = vmatpush2.msra.mxu0 0.0
        %1783 = vmatprep.subr.mxu0 0.0
        %1784 = vmatpush2.msra.mxu0 0.0
        %1785 = vmatprep.subr.mxu0 0.0
        %1786 = vmatpush2.msra.mxu0 0.0
        %1787 = vmatprep.subr.mxu0 0.0
        %1788 = vmatpush2.msra.mxu0 0.0
        %1789 = vmatprep.subr.mxu0 0.0
        %1790 = vmatpush2.msra.mxu0 0.0
        %1791 = vmatprep.subr.mxu0 0.0
        %1792 = vmatpush2.msra.mxu0 0.0
        %1793 = vmatprep.subr.mxu0 0.0
        %1794 = vmatpush2.msra.mxu0 0.0
        %1795 = vmatprep.subr.mxu0 0.0
        %1796 = vmatpush2.msra.mxu0 0.0
        %1797 = vmatprep.subr.mxu0 0.0
        %1798 = vmatpush2.msra.mxu0 0.0
        %1799 = vmatprep.subr.mxu0 0.0
        %1800 = vmatpush2.msra.mxu0 0.0
        %1801 = vmatprep.subr.mxu0 0.0
        %1802 = vmatpush2.msra.mxu0 0.0
        %1803 = vmatprep.subr.mxu0 0.0
        %1804 = vmatpush2.msra.mxu0 0.0
        %1805 = vmatprep.subr.mxu0 0.0
        %1806 = vmatpush2.msra.mxu0 0.0
        %1807 = vmatprep.mubr.f32.mxu0 0.0
        %v1808 = vand.u32 %v1739, 4294901760
        %v1809 = vsub.f32 %v1739, %v1808
        %v1810 = vand.u32 %v1809, 4294901760
        %v1811 = vsub.f32 %v1809, %v1810
        %v1812 = vand.u32 %v1811, 4294901760
        %1813 = vmatmul.mubr.f32.gmra.mxu0 %v1812
        %v1814 = vpop.f32.mrf.mxu0
        %v1815 = vadd.f32 %v1735, %v1814
        %v1816 = vpop.f32.mrf.mxu0
        %1817 = vdwg.mxu0
        %1818 = vmatprep.subr.mxu0 0.0
        %1819 = vmatpush1.msra.mxu0 0.0
        %1820 = vmatprep.subr.mxu0 0.0
        %1821 = vmatpush1.msra.mxu0 0.0
        %1822 = vmatprep.subr.mxu0 0.0
        %1823 = vmatpush1.msra.mxu0 0.0
        %1824 = vmatprep.subr.mxu0 0.0
        %1825 = vmatpush1.msra.mxu0 0.0
        %1826 = vmatprep.subr.mxu0 0.0
        %1827 = vmatpush1.msra.mxu0 0.0
        %1828 = vmatprep.subr.mxu0 0.0
        %1829 = vmatpush1.msra.mxu0 0.0
        %1830 = vmatprep.subr.mxu0 0.0
        %1831 = vmatpush1.msra.mxu0 0.0
        %1832 = vmatprep.subr.mxu0 0.0
        %1833 = vmatpush1.msra.mxu0 0.0
        %1834 = vmatprep.subr.mxu0 0.0
        %1835 = vmatpush1.msra.mxu0 0.0
        %1836 = vmatprep.subr.mxu0 0.0
        %1837 = vmatpush1.msra.mxu0 0.0
        %1838 = vmatprep.subr.mxu0 0.0
        %1839 = vmatpush1.msra.mxu0 0.0
        %1840 = vmatprep.subr.mxu0 0.0
        %1841 = vmatpush1.msra.mxu0 0.0
        %1842 = vmatprep.subr.mxu0 0.0
        %1843 = vmatpush1.msra.mxu0 0.0
        %1844 = vmatprep.subr.mxu0 0.0
        %1845 = vmatpush1.msra.mxu0 0.0
        %1846 = vmatprep.subr.mxu0 0.0
        %v1847 = vand.u32 %v779, 4294901760
        %v1848 = vsub.f32 %v779, %v1847
        %v1849 = vand.u32 %v1848, 4294901760
        %v1850 = vsub.f32 %v1848, %v1849
        %v1851 = vand.u32 %v1850, 4294901760
        %1852 = vmatpush1.msra.mxu0 %v1851
        %1853 = vmatprep.subr.mxu0 0.0
        %v1854 = vand.u32 %v778, 4294901760
        %v1855 = vsub.f32 %v778, %v1854
        %v1856 = vand.u32 %v1855, 4294901760
        %v1857 = vsub.f32 %v1855, %v1856
        %v1858 = vand.u32 %v1857, 4294901760
        %1859 = vmatpush1.msra.mxu0 %v1858
        %1860 = vmatprep.subr.mxu0 0.0
        %1861 = vmatpush2.msra.mxu0 0.0
        %1862 = vmatprep.subr.mxu0 0.0
        %1863 = vmatpush2.msra.mxu0 0.0
        %1864 = vmatprep.subr.mxu0 0.0
        %1865 = vmatpush2.msra.mxu0 0.0
        %1866 = vmatprep.subr.mxu0 0.0
        %1867 = vmatpush2.msra.mxu0 0.0
        %1868 = vmatprep.subr.mxu0 0.0
        %1869 = vmatpush2.msra.mxu0 0.0
        %1870 = vmatprep.subr.mxu0 0.0
        %1871 = vmatpush2.msra.mxu0 0.0
        %1872 = vmatprep.subr.mxu0 0.0
        %1873 = vmatpush2.msra.mxu0 0.0
        %1874 = vmatprep.subr.mxu0 0.0
        %1875 = vmatpush2.msra.mxu0 0.0
        %1876 = vmatprep.subr.mxu0 0.0
        %1877 = vmatpush2.msra.mxu0 0.0
        %1878 = vmatprep.subr.mxu0 0.0
        %1879 = vmatpush2.msra.mxu0 0.0
        %1880 = vmatprep.subr.mxu0 0.0
        %1881 = vmatpush2.msra.mxu0 0.0
        %1882 = vmatprep.subr.mxu0 0.0
        %1883 = vmatpush2.msra.mxu0 0.0
        %1884 = vmatprep.subr.mxu0 0.0
        %1885 = vmatpush2.msra.mxu0 0.0
        %1886 = vmatprep.subr.mxu0 0.0
        %1887 = vmatpush2.msra.mxu0 0.0
        %1888 = vmatprep.subr.mxu0 0.0
        %1889 = vmatpush2.msra.mxu0 0.0
        %1890 = vmatprep.subr.mxu0 0.0
        %1891 = vmatpush2.msra.mxu0 0.0
        %1892 = vmatprep.mubr.f32.mxu0 0.0
        %v1893 = vand.u32 %v1739, 4294901760
        %1894 = vmatmul.mubr.f32.gmra.mxu0 %v1893
        %v1895 = vpop.f32.mrf.mxu0
        %v1896 = vadd.f32 %v1815, %v1895
        %v1897 = vpop.f32.mrf.mxu0
        %1898 = vdwg.mxu0
        %1899 = vmatprep.subr.mxu0 0.0
        %1900 = vmatpush1.msra.mxu0 0.0
        %1901 = vmatprep.subr.mxu0 0.0
        %1902 = vmatpush1.msra.mxu0 0.0
        %1903 = vmatprep.subr.mxu0 0.0
        %1904 = vmatpush1.msra.mxu0 0.0
        %1905 = vmatprep.subr.mxu0 0.0
        %1906 = vmatpush1.msra.mxu0 0.0
        %1907 = vmatprep.subr.mxu0 0.0
        %1908 = vmatpush1.msra.mxu0 0.0
        %1909 = vmatprep.subr.mxu0 0.0
        %1910 = vmatpush1.msra.mxu0 0.0
        %1911 = vmatprep.subr.mxu0 0.0
        %1912 = vmatpush1.msra.mxu0 0.0
        %1913 = vmatprep.subr.mxu0 0.0
        %1914 = vmatpush1.msra.mxu0 0.0
        %1915 = vmatprep.subr.mxu0 0.0
        %1916 = vmatpush1.msra.mxu0 0.0
        %1917 = vmatprep.subr.mxu0 0.0
        %1918 = vmatpush1.msra.mxu0 0.0
        %1919 = vmatprep.subr.mxu0 0.0
        %1920 = vmatpush1.msra.mxu0 0.0
        %1921 = vmatprep.subr.mxu0 0.0
        %1922 = vmatpush1.msra.mxu0 0.0
        %1923 = vmatprep.subr.mxu0 0.0
        %1924 = vmatpush1.msra.mxu0 0.0
        %1925 = vmatprep.subr.mxu0 0.0
        %1926 = vmatpush1.msra.mxu0 0.0
        %1927 = vmatprep.subr.mxu0 0.0
        %v1928 = vand.u32 %v779, 4294901760
        %v1929 = vsub.f32 %v779, %v1928
        %1930 = vmatpush1.msra.mxu0 %v1929
        %1931 = vmatprep.subr.mxu0 0.0
        %v1932 = vand.u32 %v778, 4294901760
        %v1933 = vsub.f32 %v778, %v1932
        %1934 = vmatpush1.msra.mxu0 %v1933
        %1935 = vmatprep.subr.mxu0 0.0
        %1936 = vmatpush2.msra.mxu0 0.0
        %1937 = vmatprep.subr.mxu0 0.0
        %1938 = vmatpush2.msra.mxu0 0.0
        %1939 = vmatprep.subr.mxu0 0.0
        %1940 = vmatpush2.msra.mxu0 0.0
        %1941 = vmatprep.subr.mxu0 0.0
        %1942 = vmatpush2.msra.mxu0 0.0
        %1943 = vmatprep.subr.mxu0 0.0
        %1944 = vmatpush2.msra.mxu0 0.0
        %1945 = vmatprep.subr.mxu0 0.0
        %1946 = vmatpush2.msra.mxu0 0.0
        %1947 = vmatprep.subr.mxu0 0.0
        %1948 = vmatpush2.msra.mxu0 0.0
        %1949 = vmatprep.subr.mxu0 0.0
        %1950 = vmatpush2.msra.mxu0 0.0
        %1951 = vmatprep.subr.mxu0 0.0
        %1952 = vmatpush2.msra.mxu0 0.0
        %1953 = vmatprep.subr.mxu0 0.0
        %1954 = vmatpush2.msra.mxu0 0.0
        %1955 = vmatprep.subr.mxu0 0.0
        %1956 = vmatpush2.msra.mxu0 0.0
        %1957 = vmatprep.subr.mxu0 0.0
        %1958 = vmatpush2.msra.mxu0 0.0
        %1959 = vmatprep.subr.mxu0 0.0
        %1960 = vmatpush2.msra.mxu0 0.0
        %1961 = vmatprep.subr.mxu0 0.0
        %1962 = vmatpush2.msra.mxu0 0.0
        %1963 = vmatprep.subr.mxu0 0.0
        %1964 = vmatpush2.msra.mxu0 0.0
        %1965 = vmatprep.subr.mxu0 0.0
        %1966 = vmatpush2.msra.mxu0 0.0
        %1967 = vmatprep.mubr.f32.mxu0 0.0
        %v1968 = vand.u32 %v1739, 4294901760
        %v1969 = vsub.f32 %v1739, %v1968
        %1970 = vmatmul.mubr.f32.gmra.mxu0 %v1969
        %v1971 = vpop.f32.mrf.mxu0
        %v1972 = vadd.f32 %v1896, %v1971
        %v1973 = vpop.f32.mrf.mxu0
        %1974 = vdwg.mxu0
        %1975 = vmatprep.subr.mxu0 0.0
        %1976 = vmatpush1.msra.mxu0 0.0
        %1977 = vmatprep.subr.mxu0 0.0
        %1978 = vmatpush1.msra.mxu0 0.0
        %1979 = vmatprep.subr.mxu0 0.0
        %1980 = vmatpush1.msra.mxu0 0.0
        %1981 = vmatprep.subr.mxu0 0.0
        %1982 = vmatpush1.msra.mxu0 0.0
        %1983 = vmatprep.subr.mxu0 0.0
        %1984 = vmatpush1.msra.mxu0 0.0
        %1985 = vmatprep.subr.mxu0 0.0
        %1986 = vmatpush1.msra.mxu0 0.0
        %1987 = vmatprep.subr.mxu0 0.0
        %1988 = vmatpush1.msra.mxu0 0.0
        %1989 = vmatprep.subr.mxu0 0.0
        %1990 = vmatpush1.msra.mxu0 0.0
        %1991 = vmatprep.subr.mxu0 0.0
        %1992 = vmatpush1.msra.mxu0 0.0
        %1993 = vmatprep.subr.mxu0 0.0
        %1994 = vmatpush1.msra.mxu0 0.0
        %1995 = vmatprep.subr.mxu0 0.0
        %1996 = vmatpush1.msra.mxu0 0.0
        %1997 = vmatprep.subr.mxu0 0.0
        %1998 = vmatpush1.msra.mxu0 0.0
        %1999 = vmatprep.subr.mxu0 0.0
        %2000 = vmatpush1.msra.mxu0 0.0
        %2001 = vmatprep.subr.mxu0 0.0
        %2002 = vmatpush1.msra.mxu0 0.0
        %2003 = vmatprep.subr.mxu0 0.0
        %v2004 = vand.u32 %v779, 4294901760
        %2005 = vmatpush1.msra.mxu0 %v2004
        %2006 = vmatprep.subr.mxu0 0.0
        %v2007 = vand.u32 %v778, 4294901760
        %2008 = vmatpush1.msra.mxu0 %v2007
        %2009 = vmatprep.subr.mxu0 0.0
        %2010 = vmatpush2.msra.mxu0 0.0
        %2011 = vmatprep.subr.mxu0 0.0
        %2012 = vmatpush2.msra.mxu0 0.0
        %2013 = vmatprep.subr.mxu0 0.0
        %2014 = vmatpush2.msra.mxu0 0.0
        %2015 = vmatprep.subr.mxu0 0.0
        %2016 = vmatpush2.msra.mxu0 0.0
        %2017 = vmatprep.subr.mxu0 0.0
        %2018 = vmatpush2.msra.mxu0 0.0
        %2019 = vmatprep.subr.mxu0 0.0
        %2020 = vmatpush2.msra.mxu0 0.0
        %2021 = vmatprep.subr.mxu0 0.0
        %2022 = vmatpush2.msra.mxu0 0.0
        %2023 = vmatprep.subr.mxu0 0.0
        %2024 = vmatpush2.msra.mxu0 0.0
        %2025 = vmatprep.subr.mxu0 0.0
        %2026 = vmatpush2.msra.mxu0 0.0
        %2027 = vmatprep.subr.mxu0 0.0
        %2028 = vmatpush2.msra.mxu0 0.0
        %2029 = vmatprep.subr.mxu0 0.0
        %2030 = vmatpush2.msra.mxu0 0.0
        %2031 = vmatprep.subr.mxu0 0.0
        %2032 = vmatpush2.msra.mxu0 0.0
        %2033 = vmatprep.subr.mxu0 0.0
        %2034 = vmatpush2.msra.mxu0 0.0
        %2035 = vmatprep.subr.mxu0 0.0
        %2036 = vmatpush2.msra.mxu0 0.0
        %2037 = vmatprep.subr.mxu0 0.0
        %2038 = vmatpush2.msra.mxu0 0.0
        %2039 = vmatprep.subr.mxu0 0.0
        %2040 = vmatpush2.msra.mxu0 0.0
        %2041 = vmatprep.mubr.f32.mxu0 0.0
        %v2042 = vand.u32 %v1739, 4294901760
        %v2043 = vsub.f32 %v1739, %v2042
        %v2044 = vand.u32 %v2043, 4294901760
        %2045 = vmatmul.mubr.f32.gmra.mxu0 %v2044
        %v2046 = vpop.f32.mrf.mxu0
        %v2047 = vadd.f32 %v1972, %v2046
        %v2048 = vpop.f32.mrf.mxu0
        %2049 = vdwg.mxu0
        %2050 = vmatprep.subr.mxu0 0.0
        %2051 = vmatpush1.msra.mxu0 0.0
        %2052 = vmatprep.subr.mxu0 0.0
        %2053 = vmatpush1.msra.mxu0 0.0
        %2054 = vmatprep.subr.mxu0 0.0
        %2055 = vmatpush1.msra.mxu0 0.0
        %2056 = vmatprep.subr.mxu0 0.0
        %2057 = vmatpush1.msra.mxu0 0.0
        %2058 = vmatprep.subr.mxu0 0.0
        %2059 = vmatpush1.msra.mxu0 0.0
        %2060 = vmatprep.subr.mxu0 0.0
        %2061 = vmatpush1.msra.mxu0 0.0
        %2062 = vmatprep.subr.mxu0 0.0
        %2063 = vmatpush1.msra.mxu0 0.0
        %2064 = vmatprep.subr.mxu0 0.0
        %2065 = vmatpush1.msra.mxu0 0.0
        %2066 = vmatprep.subr.mxu0 0.0
        %2067 = vmatpush1.msra.mxu0 0.0
        %2068 = vmatprep.subr.mxu0 0.0
        %2069 = vmatpush1.msra.mxu0 0.0
        %2070 = vmatprep.subr.mxu0 0.0
        %2071 = vmatpush1.msra.mxu0 0.0
        %2072 = vmatprep.subr.mxu0 0.0
        %2073 = vmatpush1.msra.mxu0 0.0
        %2074 = vmatprep.subr.mxu0 0.0
        %2075 = vmatpush1.msra.mxu0 0.0
        %2076 = vmatprep.subr.mxu0 0.0
        %2077 = vmatpush1.msra.mxu0 0.0
        %2078 = vmatprep.subr.mxu0 0.0
        %v2079 = vand.u32 %v779, 4294901760
        %v2080 = vsub.f32 %v779, %v2079
        %v2081 = vand.u32 %v2080, 4294901760
        %2082 = vmatpush1.msra.mxu0 %v2081
        %2083 = vmatprep.subr.mxu0 0.0
        %v2084 = vand.u32 %v778, 4294901760
        %v2085 = vsub.f32 %v778, %v2084
        %v2086 = vand.u32 %v2085, 4294901760
        %2087 = vmatpush1.msra.mxu0 %v2086
        %2088 = vmatprep.subr.mxu0 0.0
        %2089 = vmatpush2.msra.mxu0 0.0
        %2090 = vmatprep.subr.mxu0 0.0
        %2091 = vmatpush2.msra.mxu0 0.0
        %2092 = vmatprep.subr.mxu0 0.0
        %2093 = vmatpush2.msra.mxu0 0.0
        %2094 = vmatprep.subr.mxu0 0.0
        %2095 = vmatpush2.msra.mxu0 0.0
        %2096 = vmatprep.subr.mxu0 0.0
        %2097 = vmatpush2.msra.mxu0 0.0
        %2098 = vmatprep.subr.mxu0 0.0
        %2099 = vmatpush2.msra.mxu0 0.0
        %2100 = vmatprep.subr.mxu0 0.0
        %2101 = vmatpush2.msra.mxu0 0.0
        %2102 = vmatprep.subr.mxu0 0.0
        %2103 = vmatpush2.msra.mxu0 0.0
        %2104 = vmatprep.subr.mxu0 0.0
        %2105 = vmatpush2.msra.mxu0 0.0
        %2106 = vmatprep.subr.mxu0 0.0
        %2107 = vmatpush2.msra.mxu0 0.0
        %2108 = vmatprep.subr.mxu0 0.0
        %2109 = vmatpush2.msra.mxu0 0.0
        %2110 = vmatprep.subr.mxu0 0.0
        %2111 = vmatpush2.msra.mxu0 0.0
        %2112 = vmatprep.subr.mxu0 0.0
        %2113 = vmatpush2.msra.mxu0 0.0
        %2114 = vmatprep.subr.mxu0 0.0
        %2115 = vmatpush2.msra.mxu0 0.0
        %2116 = vmatprep.subr.mxu0 0.0
        %2117 = vmatpush2.msra.mxu0 0.0
        %2118 = vmatprep.subr.mxu0 0.0
        %2119 = vmatpush2.msra.mxu0 0.0
        %2120 = vmatprep.mubr.f32.mxu0 0.0
        %v2121 = vand.u32 %v1739, 4294901760
        %2122 = vmatmul.mubr.f32.gmra.mxu0 %v2121
        %v2123 = vpop.f32.mrf.mxu0
        %v2124 = vadd.f32 %v2047, %v2123
        %v2125 = vpop.f32.mrf.mxu0
        %2126 = vdwg.mxu0
        %2127 = vmatprep.subr.mxu0 0.0
        %2128 = vmatpush1.msra.mxu0 0.0
        %2129 = vmatprep.subr.mxu0 0.0
        %2130 = vmatpush1.msra.mxu0 0.0
        %2131 = vmatprep.subr.mxu0 0.0
        %2132 = vmatpush1.msra.mxu0 0.0
        %2133 = vmatprep.subr.mxu0 0.0
        %2134 = vmatpush1.msra.mxu0 0.0
        %2135 = vmatprep.subr.mxu0 0.0
        %2136 = vmatpush1.msra.mxu0 0.0
        %2137 = vmatprep.subr.mxu0 0.0
        %2138 = vmatpush1.msra.mxu0 0.0
        %2139 = vmatprep.subr.mxu0 0.0
        %2140 = vmatpush1.msra.mxu0 0.0
        %2141 = vmatprep.subr.mxu0 0.0
        %2142 = vmatpush1.msra.mxu0 0.0
        %2143 = vmatprep.subr.mxu0 0.0
        %2144 = vmatpush1.msra.mxu0 0.0
        %2145 = vmatprep.subr.mxu0 0.0
        %2146 = vmatpush1.msra.mxu0 0.0
        %2147 = vmatprep.subr.mxu0 0.0
        %2148 = vmatpush1.msra.mxu0 0.0
        %2149 = vmatprep.subr.mxu0 0.0
        %2150 = vmatpush1.msra.mxu0 0.0
        %2151 = vmatprep.subr.mxu0 0.0
        %2152 = vmatpush1.msra.mxu0 0.0
        %2153 = vmatprep.subr.mxu0 0.0
        %2154 = vmatpush1.msra.mxu0 0.0
        %2155 = vmatprep.subr.mxu0 0.0
        %v2156 = vand.u32 %v779, 4294901760
        %2157 = vmatpush1.msra.mxu0 %v2156
        %2158 = vmatprep.subr.mxu0 0.0
        %v2159 = vand.u32 %v778, 4294901760
        %2160 = vmatpush1.msra.mxu0 %v2159
        %2161 = vmatprep.subr.mxu0 0.0
        %2162 = vmatpush2.msra.mxu0 0.0
        %2163 = vmatprep.subr.mxu0 0.0
        %2164 = vmatpush2.msra.mxu0 0.0
        %2165 = vmatprep.subr.mxu0 0.0
        %2166 = vmatpush2.msra.mxu0 0.0
        %2167 = vmatprep.subr.mxu0 0.0
        %2168 = vmatpush2.msra.mxu0 0.0
        %2169 = vmatprep.subr.mxu0 0.0
        %2170 = vmatpush2.msra.mxu0 0.0
        %2171 = vmatprep.subr.mxu0 0.0
        %2172 = vmatpush2.msra.mxu0 0.0
        %2173 = vmatprep.subr.mxu0 0.0
        %2174 = vmatpush2.msra.mxu0 0.0
        %2175 = vmatprep.subr.mxu0 0.0
        %2176 = vmatpush2.msra.mxu0 0.0
        %2177 = vmatprep.subr.mxu0 0.0
        %2178 = vmatpush2.msra.mxu0 0.0
        %2179 = vmatprep.subr.mxu0 0.0
        %2180 = vmatpush2.msra.mxu0 0.0
        %2181 = vmatprep.subr.mxu0 0.0
        %2182 = vmatpush2.msra.mxu0 0.0
        %2183 = vmatprep.subr.mxu0 0.0
        %2184 = vmatpush2.msra.mxu0 0.0
        %2185 = vmatprep.subr.mxu0 0.0
        %2186 = vmatpush2.msra.mxu0 0.0
        %2187 = vmatprep.subr.mxu0 0.0
        %2188 = vmatpush2.msra.mxu0 0.0
        %2189 = vmatprep.subr.mxu0 0.0
        %2190 = vmatpush2.msra.mxu0 0.0
        %2191 = vmatprep.subr.mxu0 0.0
        %2192 = vmatpush2.msra.mxu0 0.0
        %2193 = vmatprep.mubr.f32.mxu0 0.0
        %v2194 = vand.u32 %v1739, 4294901760
        %2195 = vmatmul.mubr.f32.gmra.mxu0 %v2194
        %v2196 = vpop.f32.mrf.mxu0
        %v2197 = vadd.f32 %v2124, %v2196
        %v2198 = vpop.f32.mrf.mxu0
        %2199 = vdwg.mxu0
        %2200 = vset.pattern.permute.xlu0 2
        %2201 = vperm.xlu0 %2200, %v283
        %v2202 = vpop.permute.xlu0 %2201
        %vm2203 = vcmp.eq.s32.totalorder %v2202, %v282
        %v2204 = vsel %vm2203, 1.0, 0.0
        %v2206 = vsel %vm289, %v2204, 0
        %2208 = vmatprep.subr.mxu0 0.0
        %2209 = vmatpush1.msra.mxu0 0.0
        %2210 = vmatprep.subr.mxu0 0.0
        %2211 = vmatpush1.msra.mxu0 0.0
        %2212 = vmatprep.subr.mxu0 0.0
        %2213 = vmatpush1.msra.mxu0 0.0
        %2214 = vmatprep.subr.mxu0 0.0
        %2215 = vmatpush1.msra.mxu0 0.0
        %2216 = vmatprep.subr.mxu0 0.0
        %2217 = vmatpush1.msra.mxu0 0.0
        %2218 = vmatprep.subr.mxu0 0.0
        %2219 = vmatpush1.msra.mxu0 0.0
        %2220 = vmatprep.subr.mxu0 0.0
        %2221 = vmatpush1.msra.mxu0 0.0
        %2222 = vmatprep.subr.mxu0 0.0
        %2223 = vmatpush1.msra.mxu0 0.0
        %2224 = vmatprep.subr.mxu0 0.0
        %2225 = vmatpush1.msra.mxu0 0.0
        %2226 = vmatprep.subr.mxu0 0.0
        %2227 = vmatpush1.msra.mxu0 0.0
        %2228 = vmatprep.subr.mxu0 0.0
        %2229 = vmatpush1.msra.mxu0 0.0
        %2230 = vmatprep.subr.mxu0 0.0
        %2231 = vmatpush1.msra.mxu0 0.0
        %2232 = vmatprep.subr.mxu0 0.0
        %v2233 = vand.u32 %v280, 4294901760
        %2234 = vmatpush1.msra.mxu0 %v2233
        %2235 = vmatprep.subr.mxu0 0.0
        %v2236 = vand.u32 %v279, 4294901760
        %2237 = vmatpush1.msra.mxu0 %v2236
        %2238 = vmatprep.subr.mxu0 0.0
        %v2239 = vand.u32 %v278, 4294901760
        %2240 = vmatpush1.msra.mxu0 %v2239
        %2241 = vmatprep.subr.mxu0 0.0
        %v2242 = vand.u32 %v277, 4294901760
        %2243 = vmatpush1.msra.mxu0 %v2242
        %2244 = vmatprep.subr.mxu0 0.0
        %2245 = vmatpush2.msra.mxu0 0.0
        %2246 = vmatprep.subr.mxu0 0.0
        %2247 = vmatpush2.msra.mxu0 0.0
        %2248 = vmatprep.subr.mxu0 0.0
        %2249 = vmatpush2.msra.mxu0 0.0
        %2250 = vmatprep.subr.mxu0 0.0
        %2251 = vmatpush2.msra.mxu0 0.0
        %2252 = vmatprep.subr.mxu0 0.0
        %2253 = vmatpush2.msra.mxu0 0.0
        %2254 = vmatprep.subr.mxu0 0.0
        %2255 = vmatpush2.msra.mxu0 0.0
        %2256 = vmatprep.subr.mxu0 0.0
        %2257 = vmatpush2.msra.mxu0 0.0
        %2258 = vmatprep.subr.mxu0 0.0
        %2259 = vmatpush2.msra.mxu0 0.0
        %2260 = vmatprep.subr.mxu0 0.0
        %2261 = vmatpush2.msra.mxu0 0.0
        %2262 = vmatprep.subr.mxu0 0.0
        %2263 = vmatpush2.msra.mxu0 0.0
        %2264 = vmatprep.subr.mxu0 0.0
        %2265 = vmatpush2.msra.mxu0 0.0
        %2266 = vmatprep.subr.mxu0 0.0
        %2267 = vmatpush2.msra.mxu0 0.0
        %2268 = vmatprep.subr.mxu0 0.0
        %2269 = vmatpush2.msra.mxu0 0.0
        %2270 = vmatprep.subr.mxu0 0.0
        %2271 = vmatpush2.msra.mxu0 0.0
        %2272 = vmatprep.subr.mxu0 0.0
        %2273 = vmatpush2.msra.mxu0 0.0
        %2274 = vmatprep.subr.mxu0 0.0
        %2275 = vmatpush2.msra.mxu0 0.0
        %2276 = vmatprep.mubr.f32.mxu0 0.0
        %v2277 = vand.u32 %v2206, 4294901760
        %v2278 = vsub.f32 %v2206, %v2277
        %v2279 = vand.u32 %v2278, 4294901760
        %v2280 = vsub.f32 %v2278, %v2279
        %v2281 = vand.u32 %v2280, 4294901760
        %2282 = vmatmul.mubr.f32.gmra.mxu0 %v2281
        %v2283 = vpop.f32.mrf.mxu0
        %v2284 = vadd.f32 0.0, %v2283
        %v2285 = vpop.f32.mrf.mxu0
        %2286 = vdwg.mxu0
        %2287 = vmatprep.subr.mxu0 0.0
        %2288 = vmatpush1.msra.mxu0 0.0
        %2289 = vmatprep.subr.mxu0 0.0
        %2290 = vmatpush1.msra.mxu0 0.0
        %2291 = vmatprep.subr.mxu0 0.0
        %2292 = vmatpush1.msra.mxu0 0.0
        %2293 = vmatprep.subr.mxu0 0.0
        %2294 = vmatpush1.msra.mxu0 0.0
        %2295 = vmatprep.subr.mxu0 0.0
        %2296 = vmatpush1.msra.mxu0 0.0
        %2297 = vmatprep.subr.mxu0 0.0
        %2298 = vmatpush1.msra.mxu0 0.0
        %2299 = vmatprep.subr.mxu0 0.0
        %2300 = vmatpush1.msra.mxu0 0.0
        %2301 = vmatprep.subr.mxu0 0.0
        %2302 = vmatpush1.msra.mxu0 0.0
        %2303 = vmatprep.subr.mxu0 0.0
        %2304 = vmatpush1.msra.mxu0 0.0
        %2305 = vmatprep.subr.mxu0 0.0
        %2306 = vmatpush1.msra.mxu0 0.0
        %2307 = vmatprep.subr.mxu0 0.0
        %2308 = vmatpush1.msra.mxu0 0.0
        %2309 = vmatprep.subr.mxu0 0.0
        %2310 = vmatpush1.msra.mxu0 0.0
        %2311 = vmatprep.subr.mxu0 0.0
        %v2312 = vand.u32 %v280, 4294901760
        %v2313 = vsub.f32 %v280, %v2312
        %v2314 = vand.u32 %v2313, 4294901760
        %v2315 = vsub.f32 %v2313, %v2314
        %v2316 = vand.u32 %v2315, 4294901760
        %2317 = vmatpush1.msra.mxu0 %v2316
        %2318 = vmatprep.subr.mxu0 0.0
        %v2319 = vand.u32 %v279, 4294901760
        %v2320 = vsub.f32 %v279, %v2319
        %v2321 = vand.u32 %v2320, 4294901760
        %v2322 = vsub.f32 %v2320, %v2321
        %v2323 = vand.u32 %v2322, 4294901760
        %2324 = vmatpush1.msra.mxu0 %v2323
        %2325 = vmatprep.subr.mxu0 0.0
        %v2326 = vand.u32 %v278, 4294901760
        %v2327 = vsub.f32 %v278, %v2326
        %v2328 = vand.u32 %v2327, 4294901760
        %v2329 = vsub.f32 %v2327, %v2328
        %v2330 = vand.u32 %v2329, 4294901760
        %2331 = vmatpush1.msra.mxu0 %v2330
        %2332 = vmatprep.subr.mxu0 0.0
        %v2333 = vand.u32 %v277, 4294901760
        %v2334 = vsub.f32 %v277, %v2333
        %v2335 = vand.u32 %v2334, 4294901760
        %v2336 = vsub.f32 %v2334, %v2335
        %v2337 = vand.u32 %v2336, 4294901760
        %2338 = vmatpush1.msra.mxu0 %v2337
        %2339 = vmatprep.subr.mxu0 0.0
        %2340 = vmatpush2.msra.mxu0 0.0
        %2341 = vmatprep.subr.mxu0 0.0
        %2342 = vmatpush2.msra.mxu0 0.0
        %2343 = vmatprep.subr.mxu0 0.0
        %2344 = vmatpush2.msra.mxu0 0.0
        %2345 = vmatprep.subr.mxu0 0.0
        %2346 = vmatpush2.msra.mxu0 0.0
        %2347 = vmatprep.subr.mxu0 0.0
        %2348 = vmatpush2.msra.mxu0 0.0
        %2349 = vmatprep.subr.mxu0 0.0
        %2350 = vmatpush2.msra.mxu0 0.0
        %2351 = vmatprep.subr.mxu0 0.0
        %2352 = vmatpush2.msra.mxu0 0.0
        %2353 = vmatprep.subr.mxu0 0.0
        %2354 = vmatpush2.msra.mxu0 0.0
        %2355 = vmatprep.subr.mxu0 0.0
        %2356 = vmatpush2.msra.mxu0 0.0
        %2357 = vmatprep.subr.mxu0 0.0
        %2358 = vmatpush2.msra.mxu0 0.0
        %2359 = vmatprep.subr.mxu0 0.0
        %2360 = vmatpush2.msra.mxu0 0.0
        %2361 = vmatprep.subr.mxu0 0.0
        %2362 = vmatpush2.msra.mxu0 0.0
        %2363 = vmatprep.subr.mxu0 0.0
        %2364 = vmatpush2.msra.mxu0 0.0
        %2365 = vmatprep.subr.mxu0 0.0
        %2366 = vmatpush2.msra.mxu0 0.0
        %2367 = vmatprep.subr.mxu0 0.0
        %2368 = vmatpush2.msra.mxu0 0.0
        %2369 = vmatprep.subr.mxu0 0.0
        %2370 = vmatpush2.msra.mxu0 0.0
        %2371 = vmatprep.mubr.f32.mxu0 0.0
        %v2372 = vand.u32 %v2206, 4294901760
        %2373 = vmatmul.mubr.f32.gmra.mxu0 %v2372
        %v2374 = vpop.f32.mrf.mxu0
        %v2375 = vadd.f32 %v2284, %v2374
        %v2376 = vpop.f32.mrf.mxu0
        %2377 = vdwg.mxu0
        %2378 = vmatprep.subr.mxu0 0.0
        %2379 = vmatpush1.msra.mxu0 0.0
        %2380 = vmatprep.subr.mxu0 0.0
        %2381 = vmatpush1.msra.mxu0 0.0
        %2382 = vmatprep.subr.mxu0 0.0
        %2383 = vmatpush1.msra.mxu0 0.0
        %2384 = vmatprep.subr.mxu0 0.0
        %2385 = vmatpush1.msra.mxu0 0.0
        %2386 = vmatprep.subr.mxu0 0.0
        %2387 = vmatpush1.msra.mxu0 0.0
        %2388 = vmatprep.subr.mxu0 0.0
        %2389 = vmatpush1.msra.mxu0 0.0
        %2390 = vmatprep.subr.mxu0 0.0
        %2391 = vmatpush1.msra.mxu0 0.0
        %2392 = vmatprep.subr.mxu0 0.0
        %2393 = vmatpush1.msra.mxu0 0.0
        %2394 = vmatprep.subr.mxu0 0.0
        %2395 = vmatpush1.msra.mxu0 0.0
        %2396 = vmatprep.subr.mxu0 0.0
        %2397 = vmatpush1.msra.mxu0 0.0
        %2398 = vmatprep.subr.mxu0 0.0
        %2399 = vmatpush1.msra.mxu0 0.0
        %2400 = vmatprep.subr.mxu0 0.0
        %2401 = vmatpush1.msra.mxu0 0.0
        %2402 = vmatprep.subr.mxu0 0.0
        %v2403 = vand.u32 %v280, 4294901760
        %v2404 = vsub.f32 %v280, %v2403
        %2405 = vmatpush1.msra.mxu0 %v2404
        %2406 = vmatprep.subr.mxu0 0.0
        %v2407 = vand.u32 %v279, 4294901760
        %v2408 = vsub.f32 %v279, %v2407
        %2409 = vmatpush1.msra.mxu0 %v2408
        %2410 = vmatprep.subr.mxu0 0.0
        %v2411 = vand.u32 %v278, 4294901760
        %v2412 = vsub.f32 %v278, %v2411
        %2413 = vmatpush1.msra.mxu0 %v2412
        %2414 = vmatprep.subr.mxu0 0.0
        %v2415 = vand.u32 %v277, 4294901760
        %v2416 = vsub.f32 %v277, %v2415
        %2417 = vmatpush1.msra.mxu0 %v2416
        %2418 = vmatprep.subr.mxu0 0.0
        %2419 = vmatpush2.msra.mxu0 0.0
        %2420 = vmatprep.subr.mxu0 0.0
        %2421 = vmatpush2.msra.mxu0 0.0
        %2422 = vmatprep.subr.mxu0 0.0
        %2423 = vmatpush2.msra.mxu0 0.0
        %2424 = vmatprep.subr.mxu0 0.0
        %2425 = vmatpush2.msra.mxu0 0.0
        %2426 = vmatprep.subr.mxu0 0.0
        %2427 = vmatpush2.msra.mxu0 0.0
        %2428 = vmatprep.subr.mxu0 0.0
        %2429 = vmatpush2.msra.mxu0 0.0
        %2430 = vmatprep.subr.mxu0 0.0
        %2431 = vmatpush2.msra.mxu0 0.0
        %2432 = vmatprep.subr.mxu0 0.0
        %2433 = vmatpush2.msra.mxu0 0.0
        %2434 = vmatprep.subr.mxu0 0.0
        %2435 = vmatpush2.msra.mxu0 0.0
        %2436 = vmatprep.subr.mxu0 0.0
        %2437 = vmatpush2.msra.mxu0 0.0
        %2438 = vmatprep.subr.mxu0 0.0
        %2439 = vmatpush2.msra.mxu0 0.0
        %2440 = vmatprep.subr.mxu0 0.0
        %2441 = vmatpush2.msra.mxu0 0.0
        %2442 = vmatprep.subr.mxu0 0.0
        %2443 = vmatpush2.msra.mxu0 0.0
        %2444 = vmatprep.subr.mxu0 0.0
        %2445 = vmatpush2.msra.mxu0 0.0
        %2446 = vmatprep.subr.mxu0 0.0
        %2447 = vmatpush2.msra.mxu0 0.0
        %2448 = vmatprep.subr.mxu0 0.0
        %2449 = vmatpush2.msra.mxu0 0.0
        %2450 = vmatprep.mubr.f32.mxu0 0.0
        %v2451 = vand.u32 %v2206, 4294901760
        %v2452 = vsub.f32 %v2206, %v2451
        %2453 = vmatmul.mubr.f32.gmra.mxu0 %v2452
        %v2454 = vpop.f32.mrf.mxu0
        %v2455 = vadd.f32 %v2375, %v2454
        %v2456 = vpop.f32.mrf.mxu0
        %2457 = vdwg.mxu0
        %2458 = vmatprep.subr.mxu0 0.0
        %2459 = vmatpush1.msra.mxu0 0.0
        %2460 = vmatprep.subr.mxu0 0.0
        %2461 = vmatpush1.msra.mxu0 0.0
        %2462 = vmatprep.subr.mxu0 0.0
        %2463 = vmatpush1.msra.mxu0 0.0
        %2464 = vmatprep.subr.mxu0 0.0
        %2465 = vmatpush1.msra.mxu0 0.0
        %2466 = vmatprep.subr.mxu0 0.0
        %2467 = vmatpush1.msra.mxu0 0.0
        %2468 = vmatprep.subr.mxu0 0.0
        %2469 = vmatpush1.msra.mxu0 0.0
        %2470 = vmatprep.subr.mxu0 0.0
        %2471 = vmatpush1.msra.mxu0 0.0
        %2472 = vmatprep.subr.mxu0 0.0
        %2473 = vmatpush1.msra.mxu0 0.0
        %2474 = vmatprep.subr.mxu0 0.0
        %2475 = vmatpush1.msra.mxu0 0.0
        %2476 = vmatprep.subr.mxu0 0.0
        %2477 = vmatpush1.msra.mxu0 0.0
        %2478 = vmatprep.subr.mxu0 0.0
        %2479 = vmatpush1.msra.mxu0 0.0
        %2480 = vmatprep.subr.mxu0 0.0
        %2481 = vmatpush1.msra.mxu0 0.0
        %2482 = vmatprep.subr.mxu0 0.0
        %v2483 = vand.u32 %v280, 4294901760
        %2484 = vmatpush1.msra.mxu0 %v2483
        %2485 = vmatprep.subr.mxu0 0.0
        %v2486 = vand.u32 %v279, 4294901760
        %2487 = vmatpush1.msra.mxu0 %v2486
        %2488 = vmatprep.subr.mxu0 0.0
        %v2489 = vand.u32 %v278, 4294901760
        %2490 = vmatpush1.msra.mxu0 %v2489
        %2491 = vmatprep.subr.mxu0 0.0
        %v2492 = vand.u32 %v277, 4294901760
        %2493 = vmatpush1.msra.mxu0 %v2492
        %2494 = vmatprep.subr.mxu0 0.0
        %2495 = vmatpush2.msra.mxu0 0.0
        %2496 = vmatprep.subr.mxu0 0.0
        %2497 = vmatpush2.msra.mxu0 0.0
        %2498 = vmatprep.subr.mxu0 0.0
        %2499 = vmatpush2.msra.mxu0 0.0
        %2500 = vmatprep.subr.mxu0 0.0
        %2501 = vmatpush2.msra.mxu0 0.0
        %2502 = vmatprep.subr.mxu0 0.0
        %2503 = vmatpush2.msra.mxu0 0.0
        %2504 = vmatprep.subr.mxu0 0.0
        %2505 = vmatpush2.msra.mxu0 0.0
        %2506 = vmatprep.subr.mxu0 0.0
        %2507 = vmatpush2.msra.mxu0 0.0
        %2508 = vmatprep.subr.mxu0 0.0
        %2509 = vmatpush2.msra.mxu0 0.0
        %2510 = vmatprep.subr.mxu0 0.0
        %2511 = vmatpush2.msra.mxu0 0.0
        %2512 = vmatprep.subr.mxu0 0.0
        %2513 = vmatpush2.msra.mxu0 0.0
        %2514 = vmatprep.subr.mxu0 0.0
        %2515 = vmatpush2.msra.mxu0 0.0
        %2516 = vmatprep.subr.mxu0 0.0
        %2517 = vmatpush2.msra.mxu0 0.0
        %2518 = vmatprep.subr.mxu0 0.0
        %2519 = vmatpush2.msra.mxu0 0.0
        %2520 = vmatprep.subr.mxu0 0.0
        %2521 = vmatpush2.msra.mxu0 0.0
        %2522 = vmatprep.subr.mxu0 0.0
        %2523 = vmatpush2.msra.mxu0 0.0
        %2524 = vmatprep.subr.mxu0 0.0
        %2525 = vmatpush2.msra.mxu0 0.0
        %2526 = vmatprep.mubr.f32.mxu0 0.0
        %v2527 = vand.u32 %v2206, 4294901760
        %v2528 = vsub.f32 %v2206, %v2527
        %v2529 = vand.u32 %v2528, 4294901760
        %2530 = vmatmul.mubr.f32.gmra.mxu0 %v2529
        %v2531 = vpop.f32.mrf.mxu0
        %v2532 = vadd.f32 %v2455, %v2531
        %v2533 = vpop.f32.mrf.mxu0
        %2534 = vdwg.mxu0
        %2535 = vmatprep.subr.mxu0 0.0
        %2536 = vmatpush1.msra.mxu0 0.0
        %2537 = vmatprep.subr.mxu0 0.0
        %2538 = vmatpush1.msra.mxu0 0.0
        %2539 = vmatprep.subr.mxu0 0.0
        %2540 = vmatpush1.msra.mxu0 0.0
        %2541 = vmatprep.subr.mxu0 0.0
        %2542 = vmatpush1.msra.mxu0 0.0
        %2543 = vmatprep.subr.mxu0 0.0
        %2544 = vmatpush1.msra.mxu0 0.0
        %2545 = vmatprep.subr.mxu0 0.0
        %2546 = vmatpush1.msra.mxu0 0.0
        %2547 = vmatprep.subr.mxu0 0.0
        %2548 = vmatpush1.msra.mxu0 0.0
        %2549 = vmatprep.subr.mxu0 0.0
        %2550 = vmatpush1.msra.mxu0 0.0
        %2551 = vmatprep.subr.mxu0 0.0
        %2552 = vmatpush1.msra.mxu0 0.0
        %2553 = vmatprep.subr.mxu0 0.0
        %2554 = vmatpush1.msra.mxu0 0.0
        %2555 = vmatprep.subr.mxu0 0.0
        %2556 = vmatpush1.msra.mxu0 0.0
        %2557 = vmatprep.subr.mxu0 0.0
        %2558 = vmatpush1.msra.mxu0 0.0
        %2559 = vmatprep.subr.mxu0 0.0
        %v2560 = vand.u32 %v280, 4294901760
        %v2561 = vsub.f32 %v280, %v2560
        %v2562 = vand.u32 %v2561, 4294901760
        %2563 = vmatpush1.msra.mxu0 %v2562
        %2564 = vmatprep.subr.mxu0 0.0
        %v2565 = vand.u32 %v279, 4294901760
        %v2566 = vsub.f32 %v279, %v2565
        %v2567 = vand.u32 %v2566, 4294901760
        %2568 = vmatpush1.msra.mxu0 %v2567
        %2569 = vmatprep.subr.mxu0 0.0
        %v2570 = vand.u32 %v278, 4294901760
        %v2571 = vsub.f32 %v278, %v2570
        %v2572 = vand.u32 %v2571, 4294901760
        %2573 = vmatpush1.msra.mxu0 %v2572
        %2574 = vmatprep.subr.mxu0 0.0
        %v2575 = vand.u32 %v277, 4294901760
        %v2576 = vsub.f32 %v277, %v2575
        %v2577 = vand.u32 %v2576, 4294901760
        %2578 = vmatpush1.msra.mxu0 %v2577
        %2579 = vmatprep.subr.mxu0 0.0
        %2580 = vmatpush2.msra.mxu0 0.0
        %2581 = vmatprep.subr.mxu0 0.0
        %2582 = vmatpush2.msra.mxu0 0.0
        %2583 = vmatprep.subr.mxu0 0.0
        %2584 = vmatpush2.msra.mxu0 0.0
        %2585 = vmatprep.subr.mxu0 0.0
        %2586 = vmatpush2.msra.mxu0 0.0
        %2587 = vmatprep.subr.mxu0 0.0
        %2588 = vmatpush2.msra.mxu0 0.0
        %2589 = vmatprep.subr.mxu0 0.0
        %2590 = vmatpush2.msra.mxu0 0.0
        %2591 = vmatprep.subr.mxu0 0.0
        %2592 = vmatpush2.msra.mxu0 0.0
        %2593 = vmatprep.subr.mxu0 0.0
        %2594 = vmatpush2.msra.mxu0 0.0
        %2595 = vmatprep.subr.mxu0 0.0
        %2596 = vmatpush2.msra.mxu0 0.0
        %2597 = vmatprep.subr.mxu0 0.0
        %2598 = vmatpush2.msra.mxu0 0.0
        %2599 = vmatprep.subr.mxu0 0.0
        %2600 = vmatpush2.msra.mxu0 0.0
        %2601 = vmatprep.subr.mxu0 0.0
        %2602 = vmatpush2.msra.mxu0 0.0
        %2603 = vmatprep.subr.mxu0 0.0
        %2604 = vmatpush2.msra.mxu0 0.0
        %2605 = vmatprep.subr.mxu0 0.0
        %2606 = vmatpush2.msra.mxu0 0.0
        %2607 = vmatprep.subr.mxu0 0.0
        %2608 = vmatpush2.msra.mxu0 0.0
        %2609 = vmatprep.subr.mxu0 0.0
        %2610 = vmatpush2.msra.mxu0 0.0
        %2611 = vmatprep.mubr.f32.mxu0 0.0
        %v2612 = vand.u32 %v2206, 4294901760
        %2613 = vmatmul.mubr.f32.gmra.mxu0 %v2612
        %v2614 = vpop.f32.mrf.mxu0
        %v2615 = vadd.f32 %v2532, %v2614
        %v2616 = vpop.f32.mrf.mxu0
        %2617 = vdwg.mxu0
        %2618 = vmatprep.subr.mxu0 0.0
        %2619 = vmatpush1.msra.mxu0 0.0
        %2620 = vmatprep.subr.mxu0 0.0
        %2621 = vmatpush1.msra.mxu0 0.0
        %2622 = vmatprep.subr.mxu0 0.0
        %2623 = vmatpush1.msra.mxu0 0.0
        %2624 = vmatprep.subr.mxu0 0.0
        %2625 = vmatpush1.msra.mxu0 0.0
        %2626 = vmatprep.subr.mxu0 0.0
        %2627 = vmatpush1.msra.mxu0 0.0
        %2628 = vmatprep.subr.mxu0 0.0
        %2629 = vmatpush1.msra.mxu0 0.0
        %2630 = vmatprep.subr.mxu0 0.0
        %2631 = vmatpush1.msra.mxu0 0.0
        %2632 = vmatprep.subr.mxu0 0.0
        %2633 = vmatpush1.msra.mxu0 0.0
        %2634 = vmatprep.subr.mxu0 0.0
        %2635 = vmatpush1.msra.mxu0 0.0
        %2636 = vmatprep.subr.mxu0 0.0
        %2637 = vmatpush1.msra.mxu0 0.0
        %2638 = vmatprep.subr.mxu0 0.0
        %2639 = vmatpush1.msra.mxu0 0.0
        %2640 = vmatprep.subr.mxu0 0.0
        %2641 = vmatpush1.msra.mxu0 0.0
        %2642 = vmatprep.subr.mxu0 0.0
        %v2643 = vand.u32 %v280, 4294901760
        %2644 = vmatpush1.msra.mxu0 %v2643
        %2645 = vmatprep.subr.mxu0 0.0
        %v2646 = vand.u32 %v279, 4294901760
        %2647 = vmatpush1.msra.mxu0 %v2646
        %2648 = vmatprep.subr.mxu0 0.0
        %v2649 = vand.u32 %v278, 4294901760
        %2650 = vmatpush1.msra.mxu0 %v2649
        %2651 = vmatprep.subr.mxu0 0.0
        %v2652 = vand.u32 %v277, 4294901760
        %2653 = vmatpush1.msra.mxu0 %v2652
        %2654 = vmatprep.subr.mxu0 0.0
        %2655 = vmatpush2.msra.mxu0 0.0
        %2656 = vmatprep.subr.mxu0 0.0
        %2657 = vmatpush2.msra.mxu0 0.0
        %2658 = vmatprep.subr.mxu0 0.0
        %2659 = vmatpush2.msra.mxu0 0.0
        %2660 = vmatprep.subr.mxu0 0.0
        %2661 = vmatpush2.msra.mxu0 0.0
        %2662 = vmatprep.subr.mxu0 0.0
        %2663 = vmatpush2.msra.mxu0 0.0
        %2664 = vmatprep.subr.mxu0 0.0
        %2665 = vmatpush2.msra.mxu0 0.0
        %2666 = vmatprep.subr.mxu0 0.0
        %2667 = vmatpush2.msra.mxu0 0.0
        %2668 = vmatprep.subr.mxu0 0.0
        %2669 = vmatpush2.msra.mxu0 0.0
        %2670 = vmatprep.subr.mxu0 0.0
        %2671 = vmatpush2.msra.mxu0 0.0
        %2672 = vmatprep.subr.mxu0 0.0
        %2673 = vmatpush2.msra.mxu0 0.0
        %2674 = vmatprep.subr.mxu0 0.0
        %2675 = vmatpush2.msra.mxu0 0.0
        %2676 = vmatprep.subr.mxu0 0.0
        %2677 = vmatpush2.msra.mxu0 0.0
        %2678 = vmatprep.subr.mxu0 0.0
        %2679 = vmatpush2.msra.mxu0 0.0
        %2680 = vmatprep.subr.mxu0 0.0
        %2681 = vmatpush2.msra.mxu0 0.0
        %2682 = vmatprep.subr.mxu0 0.0
        %2683 = vmatpush2.msra.mxu0 0.0
        %2684 = vmatprep.subr.mxu0 0.0
        %2685 = vmatpush2.msra.mxu0 0.0
        %2686 = vmatprep.mubr.f32.mxu0 0.0
        %v2687 = vand.u32 %v2206, 4294901760
        %2688 = vmatmul.mubr.f32.gmra.mxu0 %v2687
        %v2689 = vpop.f32.mrf.mxu0
        %v2690 = vadd.f32 %v2615, %v2689
        %v2691 = vpop.f32.mrf.mxu0
        %2692 = vdwg.mxu0
        %v2693 = vld [vmem:[#allocation2 + $0x20] sm:$0xff]
        %v2694 = vld [vmem:[#allocation2 + $0x28] sm:$0xff]
        %v2696 = vsel %vm1275, %v2690, 0
        %2698 = vmatprep.subr.mxu0 0.0
        %2699 = vmatpush1.msra.mxu0 0.0
        %2700 = vmatprep.subr.mxu0 0.0
        %2701 = vmatpush1.msra.mxu0 0.0
        %2702 = vmatprep.subr.mxu0 0.0
        %2703 = vmatpush1.msra.mxu0 0.0
        %2704 = vmatprep.subr.mxu0 0.0
        %2705 = vmatpush1.msra.mxu0 0.0
        %2706 = vmatprep.subr.mxu0 0.0
        %2707 = vmatpush1.msra.mxu0 0.0
        %2708 = vmatprep.subr.mxu0 0.0
        %2709 = vmatpush1.msra.mxu0 0.0
        %2710 = vmatprep.subr.mxu0 0.0
        %2711 = vmatpush1.msra.mxu0 0.0
        %2712 = vmatprep.subr.mxu0 0.0
        %2713 = vmatpush1.msra.mxu0 0.0
        %2714 = vmatprep.subr.mxu0 0.0
        %2715 = vmatpush1.msra.mxu0 0.0
        %2716 = vmatprep.subr.mxu0 0.0
        %2717 = vmatpush1.msra.mxu0 0.0
        %2718 = vmatprep.subr.mxu0 0.0
        %2719 = vmatpush1.msra.mxu0 0.0
        %2720 = vmatprep.subr.mxu0 0.0
        %2721 = vmatpush1.msra.mxu0 0.0
        %2722 = vmatprep.subr.mxu0 0.0
        %2723 = vmatpush1.msra.mxu0 0.0
        %2724 = vmatprep.subr.mxu0 0.0
        %2725 = vmatpush1.msra.mxu0 0.0
        %2726 = vmatprep.subr.mxu0 0.0
        %v2727 = vand.u32 %v2694, 4294901760
        %2728 = vmatpush1.msra.mxu0 %v2727
        %2729 = vmatprep.subr.mxu0 0.0
        %v2730 = vand.u32 %v2693, 4294901760
        %2731 = vmatpush1.msra.mxu0 %v2730
        %2732 = vmatprep.subr.mxu0 0.0
        %2733 = vmatpush2.msra.mxu0 0.0
        %2734 = vmatprep.subr.mxu0 0.0
        %2735 = vmatpush2.msra.mxu0 0.0
        %2736 = vmatprep.subr.mxu0 0.0
        %2737 = vmatpush2.msra.mxu0 0.0
        %2738 = vmatprep.subr.mxu0 0.0
        %2739 = vmatpush2.msra.mxu0 0.0
        %2740 = vmatprep.subr.mxu0 0.0
        %2741 = vmatpush2.msra.mxu0 0.0
        %2742 = vmatprep.subr.mxu0 0.0
        %2743 = vmatpush2.msra.mxu0 0.0
        %2744 = vmatprep.subr.mxu0 0.0
        %2745 = vmatpush2.msra.mxu0 0.0
        %2746 = vmatprep.subr.mxu0 0.0
        %2747 = vmatpush2.msra.mxu0 0.0
        %2748 = vmatprep.subr.mxu0 0.0
        %2749 = vmatpush2.msra.mxu0 0.0
        %2750 = vmatprep.subr.mxu0 0.0
        %2751 = vmatpush2.msra.mxu0 0.0
        %2752 = vmatprep.subr.mxu0 0.0
        %2753 = vmatpush2.msra.mxu0 0.0
        %2754 = vmatprep.subr.mxu0 0.0
        %2755 = vmatpush2.msra.mxu0 0.0
        %2756 = vmatprep.subr.mxu0 0.0
        %2757 = vmatpush2.msra.mxu0 0.0
        %2758 = vmatprep.subr.mxu0 0.0
        %2759 = vmatpush2.msra.mxu0 0.0
        %2760 = vmatprep.subr.mxu0 0.0
        %2761 = vmatpush2.msra.mxu0 0.0
        %2762 = vmatprep.subr.mxu0 0.0
        %2763 = vmatpush2.msra.mxu0 0.0
        %2764 = vmatprep.mubr.f32.mxu0 0.0
        %v2765 = vand.u32 %v2696, 4294901760
        %v2766 = vsub.f32 %v2696, %v2765
        %v2767 = vand.u32 %v2766, 4294901760
        %v2768 = vsub.f32 %v2766, %v2767
        %v2769 = vand.u32 %v2768, 4294901760
        %2770 = vmatmul.mubr.f32.gmra.mxu0 %v2769
        %v2771 = vpop.f32.mrf.mxu0
        %v2772 = vadd.f32 0.0, %v2771
        %v2773 = vpop.f32.mrf.mxu0
        %2774 = vdwg.mxu0
        %2775 = vmatprep.subr.mxu0 0.0
        %2776 = vmatpush1.msra.mxu0 0.0
        %2777 = vmatprep.subr.mxu0 0.0
        %2778 = vmatpush1.msra.mxu0 0.0
        %2779 = vmatprep.subr.mxu0 0.0
        %2780 = vmatpush1.msra.mxu0 0.0
        %2781 = vmatprep.subr.mxu0 0.0
        %2782 = vmatpush1.msra.mxu0 0.0
        %2783 = vmatprep.subr.mxu0 0.0
        %2784 = vmatpush1.msra.mxu0 0.0
        %2785 = vmatprep.subr.mxu0 0.0
        %2786 = vmatpush1.msra.mxu0 0.0
        %2787 = vmatprep.subr.mxu0 0.0
        %2788 = vmatpush1.msra.mxu0 0.0
        %2789 = vmatprep.subr.mxu0 0.0
        %2790 = vmatpush1.msra.mxu0 0.0
        %2791 = vmatprep.subr.mxu0 0.0
        %2792 = vmatpush1.msra.mxu0 0.0
        %2793 = vmatprep.subr.mxu0 0.0
        %2794 = vmatpush1.msra.mxu0 0.0
        %2795 = vmatprep.subr.mxu0 0.0
        %2796 = vmatpush1.msra.mxu0 0.0
        %2797 = vmatprep.subr.mxu0 0.0
        %2798 = vmatpush1.msra.mxu0 0.0
        %2799 = vmatprep.subr.mxu0 0.0
        %2800 = vmatpush1.msra.mxu0 0.0
        %2801 = vmatprep.subr.mxu0 0.0
        %2802 = vmatpush1.msra.mxu0 0.0
        %2803 = vmatprep.subr.mxu0 0.0
        %v2804 = vand.u32 %v2694, 4294901760
        %v2805 = vsub.f32 %v2694, %v2804
        %v2806 = vand.u32 %v2805, 4294901760
        %v2807 = vsub.f32 %v2805, %v2806
        %v2808 = vand.u32 %v2807, 4294901760
        %2809 = vmatpush1.msra.mxu0 %v2808
        %2810 = vmatprep.subr.mxu0 0.0
        %v2811 = vand.u32 %v2693, 4294901760
        %v2812 = vsub.f32 %v2693, %v2811
        %v2813 = vand.u32 %v2812, 4294901760
        %v2814 = vsub.f32 %v2812, %v2813
        %v2815 = vand.u32 %v2814, 4294901760
        %2816 = vmatpush1.msra.mxu0 %v2815
        %2817 = vmatprep.subr.mxu0 0.0
        %2818 = vmatpush2.msra.mxu0 0.0
        %2819 = vmatprep.subr.mxu0 0.0
        %2820 = vmatpush2.msra.mxu0 0.0
        %2821 = vmatprep.subr.mxu0 0.0
        %2822 = vmatpush2.msra.mxu0 0.0
        %2823 = vmatprep.subr.mxu0 0.0
        %2824 = vmatpush2.msra.mxu0 0.0
        %2825 = vmatprep.subr.mxu0 0.0
        %2826 = vmatpush2.msra.mxu0 0.0
        %2827 = vmatprep.subr.mxu0 0.0
        %2828 = vmatpush2.msra.mxu0 0.0
        %2829 = vmatprep.subr.mxu0 0.0
        %2830 = vmatpush2.msra.mxu0 0.0
        %2831 = vmatprep.subr.mxu0 0.0
        %2832 = vmatpush2.msra.mxu0 0.0
        %2833 = vmatprep.subr.mxu0 0.0
        %2834 = vmatpush2.msra.mxu0 0.0
        %2835 = vmatprep.subr.mxu0 0.0
        %2836 = vmatpush2.msra.mxu0 0.0
        %2837 = vmatprep.subr.mxu0 0.0
        %2838 = vmatpush2.msra.mxu0 0.0
        %2839 = vmatprep.subr.mxu0 0.0
        %2840 = vmatpush2.msra.mxu0 0.0
        %2841 = vmatprep.subr.mxu0 0.0
        %2842 = vmatpush2.msra.mxu0 0.0
        %2843 = vmatprep.subr.mxu0 0.0
        %2844 = vmatpush2.msra.mxu0 0.0
        %2845 = vmatprep.subr.mxu0 0.0
        %2846 = vmatpush2.msra.mxu0 0.0
        %2847 = vmatprep.subr.mxu0 0.0
        %2848 = vmatpush2.msra.mxu0 0.0
        %2849 = vmatprep.mubr.f32.mxu0 0.0
        %v2850 = vand.u32 %v2696, 4294901760
        %2851 = vmatmul.mubr.f32.gmra.mxu0 %v2850
        %v2852 = vpop.f32.mrf.mxu0
        %v2853 = vadd.f32 %v2772, %v2852
        %v2854 = vpop.f32.mrf.mxu0
        %2855 = vdwg.mxu0
        %2856 = vmatprep.subr.mxu0 0.0
        %2857 = vmatpush1.msra.mxu0 0.0
        %2858 = vmatprep.subr.mxu0 0.0
        %2859 = vmatpush1.msra.mxu0 0.0
        %2860 = vmatprep.subr.mxu0 0.0
        %2861 = vmatpush1.msra.mxu0 0.0
        %2862 = vmatprep.subr.mxu0 0.0
        %2863 = vmatpush1.msra.mxu0 0.0
        %2864 = vmatprep.subr.mxu0 0.0
        %2865 = vmatpush1.msra.mxu0 0.0
        %2866 = vmatprep.subr.mxu0 0.0
        %2867 = vmatpush1.msra.mxu0 0.0
        %2868 = vmatprep.subr.mxu0 0.0
        %2869 = vmatpush1.msra.mxu0 0.0
        %2870 = vmatprep.subr.mxu0 0.0
        %2871 = vmatpush1.msra.mxu0 0.0
        %2872 = vmatprep.subr.mxu0 0.0
        %2873 = vmatpush1.msra.mxu0 0.0
        %2874 = vmatprep.subr.mxu0 0.0
        %2875 = vmatpush1.msra.mxu0 0.0
        %2876 = vmatprep.subr.mxu0 0.0
        %2877 = vmatpush1.msra.mxu0 0.0
        %2878 = vmatprep.subr.mxu0 0.0
        %2879 = vmatpush1.msra.mxu0 0.0
        %2880 = vmatprep.subr.mxu0 0.0
        %2881 = vmatpush1.msra.mxu0 0.0
        %2882 = vmatprep.subr.mxu0 0.0
        %2883 = vmatpush1.msra.mxu0 0.0
        %2884 = vmatprep.subr.mxu0 0.0
        %v2885 = vand.u32 %v2694, 4294901760
        %v2886 = vsub.f32 %v2694, %v2885
        %2887 = vmatpush1.msra.mxu0 %v2886
        %2888 = vmatprep.subr.mxu0 0.0
        %v2889 = vand.u32 %v2693, 4294901760
        %v2890 = vsub.f32 %v2693, %v2889
        %2891 = vmatpush1.msra.mxu0 %v2890
        %2892 = vmatprep.subr.mxu0 0.0
        %2893 = vmatpush2.msra.mxu0 0.0
        %2894 = vmatprep.subr.mxu0 0.0
        %2895 = vmatpush2.msra.mxu0 0.0
        %2896 = vmatprep.subr.mxu0 0.0
        %2897 = vmatpush2.msra.mxu0 0.0
        %2898 = vmatprep.subr.mxu0 0.0
        %2899 = vmatpush2.msra.mxu0 0.0
        %2900 = vmatprep.subr.mxu0 0.0
        %2901 = vmatpush2.msra.mxu0 0.0
        %2902 = vmatprep.subr.mxu0 0.0
        %2903 = vmatpush2.msra.mxu0 0.0
        %2904 = vmatprep.subr.mxu0 0.0
        %2905 = vmatpush2.msra.mxu0 0.0
        %2906 = vmatprep.subr.mxu0 0.0
        %2907 = vmatpush2.msra.mxu0 0.0
        %2908 = vmatprep.subr.mxu0 0.0
        %2909 = vmatpush2.msra.mxu0 0.0
        %2910 = vmatprep.subr.mxu0 0.0
        %2911 = vmatpush2.msra.mxu0 0.0
        %2912 = vmatprep.subr.mxu0 0.0
        %2913 = vmatpush2.msra.mxu0 0.0
        %2914 = vmatprep.subr.mxu0 0.0
        %2915 = vmatpush2.msra.mxu0 0.0
        %2916 = vmatprep.subr.mxu0 0.0
        %2917 = vmatpush2.msra.mxu0 0.0
        %2918 = vmatprep.subr.mxu0 0.0
        %2919 = vmatpush2.msra.mxu0 0.0
        %2920 = vmatprep.subr.mxu0 0.0
        %2921 = vmatpush2.msra.mxu0 0.0
        %2922 = vmatprep.subr.mxu0 0.0
        %2923 = vmatpush2.msra.mxu0 0.0
        %2924 = vmatprep.mubr.f32.mxu0 0.0
        %v2925 = vand.u32 %v2696, 4294901760
        %v2926 = vsub.f32 %v2696, %v2925
        %2927 = vmatmul.mubr.f32.gmra.mxu0 %v2926
        %v2928 = vpop.f32.mrf.mxu0
        %v2929 = vadd.f32 %v2853, %v2928
        %v2930 = vpop.f32.mrf.mxu0
        %2931 = vdwg.mxu0
        %2932 = vmatprep.subr.mxu0 0.0
        %2933 = vmatpush1.msra.mxu0 0.0
        %2934 = vmatprep.subr.mxu0 0.0
        %2935 = vmatpush1.msra.mxu0 0.0
        %2936 = vmatprep.subr.mxu0 0.0
        %2937 = vmatpush1.msra.mxu0 0.0
        %2938 = vmatprep.subr.mxu0 0.0
        %2939 = vmatpush1.msra.mxu0 0.0
        %2940 = vmatprep.subr.mxu0 0.0
        %2941 = vmatpush1.msra.mxu0 0.0
        %2942 = vmatprep.subr.mxu0 0.0
        %2943 = vmatpush1.msra.mxu0 0.0
        %2944 = vmatprep.subr.mxu0 0.0
        %2945 = vmatpush1.msra.mxu0 0.0
        %2946 = vmatprep.subr.mxu0 0.0
        %2947 = vmatpush1.msra.mxu0 0.0
        %2948 = vmatprep.subr.mxu0 0.0
        %2949 = vmatpush1.msra.mxu0 0.0
        %2950 = vmatprep.subr.mxu0 0.0
        %2951 = vmatpush1.msra.mxu0 0.0
        %2952 = vmatprep.subr.mxu0 0.0
        %2953 = vmatpush1.msra.mxu0 0.0
        %2954 = vmatprep.subr.mxu0 0.0
        %2955 = vmatpush1.msra.mxu0 0.0
        %2956 = vmatprep.subr.mxu0 0.0
        %2957 = vmatpush1.msra.mxu0 0.0
        %2958 = vmatprep.subr.mxu0 0.0
        %2959 = vmatpush1.msra.mxu0 0.0
        %2960 = vmatprep.subr.mxu0 0.0
        %v2961 = vand.u32 %v2694, 4294901760
        %2962 = vmatpush1.msra.mxu0 %v2961
        %2963 = vmatprep.subr.mxu0 0.0
        %v2964 = vand.u32 %v2693, 4294901760
        %2965 = vmatpush1.msra.mxu0 %v2964
        %2966 = vmatprep.subr.mxu0 0.0
        %2967 = vmatpush2.msra.mxu0 0.0
        %2968 = vmatprep.subr.mxu0 0.0
        %2969 = vmatpush2.msra.mxu0 0.0
        %2970 = vmatprep.subr.mxu0 0.0
        %2971 = vmatpush2.msra.mxu0 0.0
        %2972 = vmatprep.subr.mxu0 0.0
        %2973 = vmatpush2.msra.mxu0 0.0
        %2974 = vmatprep.subr.mxu0 0.0
        %2975 = vmatpush2.msra.mxu0 0.0
        %2976 = vmatprep.subr.mxu0 0.0
        %2977 = vmatpush2.msra.mxu0 0.0
        %2978 = vmatprep.subr.mxu0 0.0
        %2979 = vmatpush2.msra.mxu0 0.0
        %2980 = vmatprep.subr.mxu0 0.0
        %2981 = vmatpush2.msra.mxu0 0.0
        %2982 = vmatprep.subr.mxu0 0.0
        %2983 = vmatpush2.msra.mxu0 0.0
        %2984 = vmatprep.subr.mxu0 0.0
        %2985 = vmatpush2.msra.mxu0 0.0
        %2986 = vmatprep.subr.mxu0 0.0
        %2987 = vmatpush2.msra.mxu0 0.0
        %2988 = vmatprep.subr.mxu0 0.0
        %2989 = vmatpush2.msra.mxu0 0.0
        %2990 = vmatprep.subr.mxu0 0.0
        %2991 = vmatpush2.msra.mxu0 0.0
        %2992 = vmatprep.subr.mxu0 0.0
        %2993 = vmatpush2.msra.mxu0 0.0
        %2994 = vmatprep.subr.mxu0 0.0
        %2995 = vmatpush2.msra.mxu0 0.0
        %2996 = vmatprep.subr.mxu0 0.0
        %2997 = vmatpush2.msra.mxu0 0.0
        %2998 = vmatprep.mubr.f32.mxu0 0.0
        %v2999 = vand.u32 %v2696, 4294901760
        %v3000 = vsub.f32 %v2696, %v2999
        %v3001 = vand.u32 %v3000, 4294901760
        %3002 = vmatmul.mubr.f32.gmra.mxu0 %v3001
        %v3003 = vpop.f32.mrf.mxu0
        %v3004 = vadd.f32 %v2929, %v3003
        %v3005 = vpop.f32.mrf.mxu0
        %3006 = vdwg.mxu0
        %3007 = vmatprep.subr.mxu0 0.0
        %3008 = vmatpush1.msra.mxu0 0.0
        %3009 = vmatprep.subr.mxu0 0.0
        %3010 = vmatpush1.msra.mxu0 0.0
        %3011 = vmatprep.subr.mxu0 0.0
        %3012 = vmatpush1.msra.mxu0 0.0
        %3013 = vmatprep.subr.mxu0 0.0
        %3014 = vmatpush1.msra.mxu0 0.0
        %3015 = vmatprep.subr.mxu0 0.0
        %3016 = vmatpush1.msra.mxu0 0.0
        %3017 = vmatprep.subr.mxu0 0.0
        %3018 = vmatpush1.msra.mxu0 0.0
        %3019 = vmatprep.subr.mxu0 0.0
        %3020 = vmatpush1.msra.mxu0 0.0
        %3021 = vmatprep.subr.mxu0 0.0
        %3022 = vmatpush1.msra.mxu0 0.0
        %3023 = vmatprep.subr.mxu0 0.0
        %3024 = vmatpush1.msra.mxu0 0.0
        %3025 = vmatprep.subr.mxu0 0.0
        %3026 = vmatpush1.msra.mxu0 0.0
        %3027 = vmatprep.subr.mxu0 0.0
        %3028 = vmatpush1.msra.mxu0 0.0
        %3029 = vmatprep.subr.mxu0 0.0
        %3030 = vmatpush1.msra.mxu0 0.0
        %3031 = vmatprep.subr.mxu0 0.0
        %3032 = vmatpush1.msra.mxu0 0.0
        %3033 = vmatprep.subr.mxu0 0.0
        %3034 = vmatpush1.msra.mxu0 0.0
        %3035 = vmatprep.subr.mxu0 0.0
        %v3036 = vand.u32 %v2694, 4294901760
        %v3037 = vsub.f32 %v2694, %v3036
        %v3038 = vand.u32 %v3037, 4294901760
        %3039 = vmatpush1.msra.mxu0 %v3038
        %3040 = vmatprep.subr.mxu0 0.0
        %v3041 = vand.u32 %v2693, 4294901760
        %v3042 = vsub.f32 %v2693, %v3041
        %v3043 = vand.u32 %v3042, 4294901760
        %3044 = vmatpush1.msra.mxu0 %v3043
        %3045 = vmatprep.subr.mxu0 0.0
        %3046 = vmatpush2.msra.mxu0 0.0
        %3047 = vmatprep.subr.mxu0 0.0
        %3048 = vmatpush2.msra.mxu0 0.0
        %3049 = vmatprep.subr.mxu0 0.0
        %3050 = vmatpush2.msra.mxu0 0.0
        %3051 = vmatprep.subr.mxu0 0.0
        %3052 = vmatpush2.msra.mxu0 0.0
        %3053 = vmatprep.subr.mxu0 0.0
        %3054 = vmatpush2.msra.mxu0 0.0
        %3055 = vmatprep.subr.mxu0 0.0
        %3056 = vmatpush2.msra.mxu0 0.0
        %3057 = vmatprep.subr.mxu0 0.0
        %3058 = vmatpush2.msra.mxu0 0.0
        %3059 = vmatprep.subr.mxu0 0.0
        %3060 = vmatpush2.msra.mxu0 0.0
        %3061 = vmatprep.subr.mxu0 0.0
        %3062 = vmatpush2.msra.mxu0 0.0
        %3063 = vmatprep.subr.mxu0 0.0
        %3064 = vmatpush2.msra.mxu0 0.0
        %3065 = vmatprep.subr.mxu0 0.0
        %3066 = vmatpush2.msra.mxu0 0.0
        %3067 = vmatprep.subr.mxu0 0.0
        %3068 = vmatpush2.msra.mxu0 0.0
        %3069 = vmatprep.subr.mxu0 0.0
        %3070 = vmatpush2.msra.mxu0 0.0
        %3071 = vmatprep.subr.mxu0 0.0
        %3072 = vmatpush2.msra.mxu0 0.0
        %3073 = vmatprep.subr.mxu0 0.0
        %3074 = vmatpush2.msra.mxu0 0.0
        %3075 = vmatprep.subr.mxu0 0.0
        %3076 = vmatpush2.msra.mxu0 0.0
        %3077 = vmatprep.mubr.f32.mxu0 0.0
        %v3078 = vand.u32 %v2696, 4294901760
        %3079 = vmatmul.mubr.f32.gmra.mxu0 %v3078
        %v3080 = vpop.f32.mrf.mxu0
        %v3081 = vadd.f32 %v3004, %v3080
        %v3082 = vpop.f32.mrf.mxu0
        %3083 = vdwg.mxu0
        %3084 = vmatprep.subr.mxu0 0.0
        %3085 = vmatpush1.msra.mxu0 0.0
        %3086 = vmatprep.subr.mxu0 0.0
        %3087 = vmatpush1.msra.mxu0 0.0
        %3088 = vmatprep.subr.mxu0 0.0
        %3089 = vmatpush1.msra.mxu0 0.0
        %3090 = vmatprep.subr.mxu0 0.0
        %3091 = vmatpush1.msra.mxu0 0.0
        %3092 = vmatprep.subr.mxu0 0.0
        %3093 = vmatpush1.msra.mxu0 0.0
        %3094 = vmatprep.subr.mxu0 0.0
        %3095 = vmatpush1.msra.mxu0 0.0
        %3096 = vmatprep.subr.mxu0 0.0
        %3097 = vmatpush1.msra.mxu0 0.0
        %3098 = vmatprep.subr.mxu0 0.0
        %3099 = vmatpush1.msra.mxu0 0.0
        %3100 = vmatprep.subr.mxu0 0.0
        %3101 = vmatpush1.msra.mxu0 0.0
        %3102 = vmatprep.subr.mxu0 0.0
        %3103 = vmatpush1.msra.mxu0 0.0
        %3104 = vmatprep.subr.mxu0 0.0
        %3105 = vmatpush1.msra.mxu0 0.0
        %3106 = vmatprep.subr.mxu0 0.0
        %3107 = vmatpush1.msra.mxu0 0.0
        %3108 = vmatprep.subr.mxu0 0.0
        %3109 = vmatpush1.msra.mxu0 0.0
        %3110 = vmatprep.subr.mxu0 0.0
        %3111 = vmatpush1.msra.mxu0 0.0
        %3112 = vmatprep.subr.mxu0 0.0
        %v3113 = vand.u32 %v2694, 4294901760
        %3114 = vmatpush1.msra.mxu0 %v3113
        %3115 = vmatprep.subr.mxu0 0.0
        %v3116 = vand.u32 %v2693, 4294901760
        %3117 = vmatpush1.msra.mxu0 %v3116
        %3118 = vmatprep.subr.mxu0 0.0
        %3119 = vmatpush2.msra.mxu0 0.0
        %3120 = vmatprep.subr.mxu0 0.0
        %3121 = vmatpush2.msra.mxu0 0.0
        %3122 = vmatprep.subr.mxu0 0.0
        %3123 = vmatpush2.msra.mxu0 0.0
        %3124 = vmatprep.subr.mxu0 0.0
        %3125 = vmatpush2.msra.mxu0 0.0
        %3126 = vmatprep.subr.mxu0 0.0
        %3127 = vmatpush2.msra.mxu0 0.0
        %3128 = vmatprep.subr.mxu0 0.0
        %3129 = vmatpush2.msra.mxu0 0.0
        %3130 = vmatprep.subr.mxu0 0.0
        %3131 = vmatpush2.msra.mxu0 0.0
        %3132 = vmatprep.subr.mxu0 0.0
        %3133 = vmatpush2.msra.mxu0 0.0
        %3134 = vmatprep.subr.mxu0 0.0
        %3135 = vmatpush2.msra.mxu0 0.0
        %3136 = vmatprep.subr.mxu0 0.0
        %3137 = vmatpush2.msra.mxu0 0.0
        %3138 = vmatprep.subr.mxu0 0.0
        %3139 = vmatpush2.msra.mxu0 0.0
        %3140 = vmatprep.subr.mxu0 0.0
        %3141 = vmatpush2.msra.mxu0 0.0
        %3142 = vmatprep.subr.mxu0 0.0
        %3143 = vmatpush2.msra.mxu0 0.0
        %3144 = vmatprep.subr.mxu0 0.0
        %3145 = vmatpush2.msra.mxu0 0.0
        %3146 = vmatprep.subr.mxu0 0.0
        %3147 = vmatpush2.msra.mxu0 0.0
        %3148 = vmatprep.subr.mxu0 0.0
        %3149 = vmatpush2.msra.mxu0 0.0
        %3150 = vmatprep.mubr.f32.mxu0 0.0
        %v3151 = vand.u32 %v2696, 4294901760
        %3152 = vmatmul.mubr.f32.gmra.mxu0 %v3151
        %v3153 = vpop.f32.mrf.mxu0
        %v3154 = vadd.f32 %v3081, %v3153
        %v3155 = vpop.f32.mrf.mxu0
        %3156 = vdwg.mxu0
        %v3157 = vadd.f32 %v2197, %v3154
        %3158 = vset.pattern.permute.xlu0 3
        %3159 = vperm.xlu0 %3158, %v283
        %v3160 = vpop.permute.xlu0 %3159
        %vm3161 = vcmp.eq.s32.totalorder %v3160, %v282
        %v3162 = vsel %vm3161, 1.0, 0.0
        %v3164 = vsel %vm289, %v3162, 0
        %3166 = vmatprep.subr.mxu0 0.0
        %3167 = vmatpush1.msra.mxu0 0.0
        %3168 = vmatprep.subr.mxu0 0.0
        %3169 = vmatpush1.msra.mxu0 0.0
        %3170 = vmatprep.subr.mxu0 0.0
        %3171 = vmatpush1.msra.mxu0 0.0
        %3172 = vmatprep.subr.mxu0 0.0
        %3173 = vmatpush1.msra.mxu0 0.0
        %3174 = vmatprep.subr.mxu0 0.0
        %3175 = vmatpush1.msra.mxu0 0.0
        %3176 = vmatprep.subr.mxu0 0.0
        %3177 = vmatpush1.msra.mxu0 0.0
        %3178 = vmatprep.subr.mxu0 0.0
        %3179 = vmatpush1.msra.mxu0 0.0
        %3180 = vmatprep.subr.mxu0 0.0
        %3181 = vmatpush1.msra.mxu0 0.0
        %3182 = vmatprep.subr.mxu0 0.0
        %3183 = vmatpush1.msra.mxu0 0.0
        %3184 = vmatprep.subr.mxu0 0.0
        %3185 = vmatpush1.msra.mxu0 0.0
        %3186 = vmatprep.subr.mxu0 0.0
        %3187 = vmatpush1.msra.mxu0 0.0
        %3188 = vmatprep.subr.mxu0 0.0
        %3189 = vmatpush1.msra.mxu0 0.0
        %3190 = vmatprep.subr.mxu0 0.0
        %v3191 = vand.u32 %v280, 4294901760
        %3192 = vmatpush1.msra.mxu0 %v3191
        %3193 = vmatprep.subr.mxu0 0.0
        %v3194 = vand.u32 %v279, 4294901760
        %3195 = vmatpush1.msra.mxu0 %v3194
        %3196 = vmatprep.subr.mxu0 0.0
        %v3197 = vand.u32 %v278, 4294901760
        %3198 = vmatpush1.msra.mxu0 %v3197
        %3199 = vmatprep.subr.mxu0 0.0
        %v3200 = vand.u32 %v277, 4294901760
        %3201 = vmatpush1.msra.mxu0 %v3200
        %3202 = vmatprep.subr.mxu0 0.0
        %3203 = vmatpush2.msra.mxu0 0.0
        %3204 = vmatprep.subr.mxu0 0.0
        %3205 = vmatpush2.msra.mxu0 0.0
        %3206 = vmatprep.subr.mxu0 0.0
        %3207 = vmatpush2.msra.mxu0 0.0
        %3208 = vmatprep.subr.mxu0 0.0
        %3209 = vmatpush2.msra.mxu0 0.0
        %3210 = vmatprep.subr.mxu0 0.0
        %3211 = vmatpush2.msra.mxu0 0.0
        %3212 = vmatprep.subr.mxu0 0.0
        %3213 = vmatpush2.msra.mxu0 0.0
        %3214 = vmatprep.subr.mxu0 0.0
        %3215 = vmatpush2.msra.mxu0 0.0
        %3216 = vmatprep.subr.mxu0 0.0
        %3217 = vmatpush2.msra.mxu0 0.0
        %3218 = vmatprep.subr.mxu0 0.0
        %3219 = vmatpush2.msra.mxu0 0.0
        %3220 = vmatprep.subr.mxu0 0.0
        %3221 = vmatpush2.msra.mxu0 0.0
        %3222 = vmatprep.subr.mxu0 0.0
        %3223 = vmatpush2.msra.mxu0 0.0
        %3224 = vmatprep.subr.mxu0 0.0
        %3225 = vmatpush2.msra.mxu0 0.0
        %3226 = vmatprep.subr.mxu0 0.0
        %3227 = vmatpush2.msra.mxu0 0.0
        %3228 = vmatprep.subr.mxu0 0.0
        %3229 = vmatpush2.msra.mxu0 0.0
        %3230 = vmatprep.subr.mxu0 0.0
        %3231 = vmatpush2.msra.mxu0 0.0
        %3232 = vmatprep.subr.mxu0 0.0
        %3233 = vmatpush2.msra.mxu0 0.0
        %3234 = vmatprep.mubr.f32.mxu0 0.0
        %v3235 = vand.u32 %v3164, 4294901760
        %v3236 = vsub.f32 %v3164, %v3235
        %v3237 = vand.u32 %v3236, 4294901760
        %v3238 = vsub.f32 %v3236, %v3237
        %v3239 = vand.u32 %v3238, 4294901760
        %3240 = vmatmul.mubr.f32.gmra.mxu0 %v3239
        %v3241 = vpop.f32.mrf.mxu0
        %v3242 = vadd.f32 0.0, %v3241
        %v3243 = vpop.f32.mrf.mxu0
        %3244 = vdwg.mxu0
        %3245 = vmatprep.subr.mxu0 0.0
        %3246 = vmatpush1.msra.mxu0 0.0
        %3247 = vmatprep.subr.mxu0 0.0
        %3248 = vmatpush1.msra.mxu0 0.0
        %3249 = vmatprep.subr.mxu0 0.0
        %3250 = vmatpush1.msra.mxu0 0.0
        %3251 = vmatprep.subr.mxu0 0.0
        %3252 = vmatpush1.msra.mxu0 0.0
        %3253 = vmatprep.subr.mxu0 0.0
        %3254 = vmatpush1.msra.mxu0 0.0
        %3255 = vmatprep.subr.mxu0 0.0
        %3256 = vmatpush1.msra.mxu0 0.0
        %3257 = vmatprep.subr.mxu0 0.0
        %3258 = vmatpush1.msra.mxu0 0.0
        %3259 = vmatprep.subr.mxu0 0.0
        %3260 = vmatpush1.msra.mxu0 0.0
        %3261 = vmatprep.subr.mxu0 0.0
        %3262 = vmatpush1.msra.mxu0 0.0
        %3263 = vmatprep.subr.mxu0 0.0
        %3264 = vmatpush1.msra.mxu0 0.0
        %3265 = vmatprep.subr.mxu0 0.0
        %3266 = vmatpush1.msra.mxu0 0.0
        %3267 = vmatprep.subr.mxu0 0.0
        %3268 = vmatpush1.msra.mxu0 0.0
        %3269 = vmatprep.subr.mxu0 0.0
        %v3270 = vand.u32 %v280, 4294901760
        %v3271 = vsub.f32 %v280, %v3270
        %v3272 = vand.u32 %v3271, 4294901760
        %v3273 = vsub.f32 %v3271, %v3272
        %v3274 = vand.u32 %v3273, 4294901760
        %3275 = vmatpush1.msra.mxu0 %v3274
        %3276 = vmatprep.subr.mxu0 0.0
        %v3277 = vand.u32 %v279, 4294901760
        %v3278 = vsub.f32 %v279, %v3277
        %v3279 = vand.u32 %v3278, 4294901760
        %v3280 = vsub.f32 %v3278, %v3279
        %v3281 = vand.u32 %v3280, 4294901760
        %3282 = vmatpush1.msra.mxu0 %v3281
        %3283 = vmatprep.subr.mxu0 0.0
        %v3284 = vand.u32 %v278, 4294901760
        %v3285 = vsub.f32 %v278, %v3284
        %v3286 = vand.u32 %v3285, 4294901760
        %v3287 = vsub.f32 %v3285, %v3286
        %v3288 = vand.u32 %v3287, 4294901760
        %3289 = vmatpush1.msra.mxu0 %v3288
        %3290 = vmatprep.subr.mxu0 0.0
        %v3291 = vand.u32 %v277, 4294901760
        %v3292 = vsub.f32 %v277, %v3291
        %v3293 = vand.u32 %v3292, 4294901760
        %v3294 = vsub.f32 %v3292, %v3293
        %v3295 = vand.u32 %v3294, 4294901760
        %3296 = vmatpush1.msra.mxu0 %v3295
        %3297 = vmatprep.subr.mxu0 0.0
        %3298 = vmatpush2.msra.mxu0 0.0
        %3299 = vmatprep.subr.mxu0 0.0
        %3300 = vmatpush2.msra.mxu0 0.0
        %3301 = vmatprep.subr.mxu0 0.0
        %3302 = vmatpush2.msra.mxu0 0.0
        %3303 = vmatprep.subr.mxu0 0.0
        %3304 = vmatpush2.msra.mxu0 0.0
        %3305 = vmatprep.subr.mxu0 0.0
        %3306 = vmatpush2.msra.mxu0 0.0
        %3307 = vmatprep.subr.mxu0 0.0
        %3308 = vmatpush2.msra.mxu0 0.0
        %3309 = vmatprep.subr.mxu0 0.0
        %3310 = vmatpush2.msra.mxu0 0.0
        %3311 = vmatprep.subr.mxu0 0.0
        %3312 = vmatpush2.msra.mxu0 0.0
        %3313 = vmatprep.subr.mxu0 0.0
        %3314 = vmatpush2.msra.mxu0 0.0
        %3315 = vmatprep.subr.mxu0 0.0
        %3316 = vmatpush2.msra.mxu0 0.0
        %3317 = vmatprep.subr.mxu0 0.0
        %3318 = vmatpush2.msra.mxu0 0.0
        %3319 = vmatprep.subr.mxu0 0.0
        %3320 = vmatpush2.msra.mxu0 0.0
        %3321 = vmatprep.subr.mxu0 0.0
        %3322 = vmatpush2.msra.mxu0 0.0
        %3323 = vmatprep.subr.mxu0 0.0
        %3324 = vmatpush2.msra.mxu0 0.0
        %3325 = vmatprep.subr.mxu0 0.0
        %3326 = vmatpush2.msra.mxu0 0.0
        %3327 = vmatprep.subr.mxu0 0.0
        %3328 = vmatpush2.msra.mxu0 0.0
        %3329 = vmatprep.mubr.f32.mxu0 0.0
        %v3330 = vand.u32 %v3164, 4294901760
        %3331 = vmatmul.mubr.f32.gmra.mxu0 %v3330
        %v3332 = vpop.f32.mrf.mxu0
        %v3333 = vadd.f32 %v3242, %v3332
        %v3334 = vpop.f32.mrf.mxu0
        %3335 = vdwg.mxu0
        %3336 = vmatprep.subr.mxu0 0.0
        %3337 = vmatpush1.msra.mxu0 0.0
        %3338 = vmatprep.subr.mxu0 0.0
        %3339 = vmatpush1.msra.mxu0 0.0
        %3340 = vmatprep.subr.mxu0 0.0
        %3341 = vmatpush1.msra.mxu0 0.0
        %3342 = vmatprep.subr.mxu0 0.0
        %3343 = vmatpush1.msra.mxu0 0.0
        %3344 = vmatprep.subr.mxu0 0.0
        %3345 = vmatpush1.msra.mxu0 0.0
        %3346 = vmatprep.subr.mxu0 0.0
        %3347 = vmatpush1.msra.mxu0 0.0
        %3348 = vmatprep.subr.mxu0 0.0
        %3349 = vmatpush1.msra.mxu0 0.0
        %3350 = vmatprep.subr.mxu0 0.0
        %3351 = vmatpush1.msra.mxu0 0.0
        %3352 = vmatprep.subr.mxu0 0.0
        %3353 = vmatpush1.msra.mxu0 0.0
        %3354 = vmatprep.subr.mxu0 0.0
        %3355 = vmatpush1.msra.mxu0 0.0
        %3356 = vmatprep.subr.mxu0 0.0
        %3357 = vmatpush1.msra.mxu0 0.0
        %3358 = vmatprep.subr.mxu0 0.0
        %3359 = vmatpush1.msra.mxu0 0.0
        %3360 = vmatprep.subr.mxu0 0.0
        %v3361 = vand.u32 %v280, 4294901760
        %v3362 = vsub.f32 %v280, %v3361
        %3363 = vmatpush1.msra.mxu0 %v3362
        %3364 = vmatprep.subr.mxu0 0.0
        %v3365 = vand.u32 %v279, 4294901760
        %v3366 = vsub.f32 %v279, %v3365
        %3367 = vmatpush1.msra.mxu0 %v3366
        %3368 = vmatprep.subr.mxu0 0.0
        %v3369 = vand.u32 %v278, 4294901760
        %v3370 = vsub.f32 %v278, %v3369
        %3371 = vmatpush1.msra.mxu0 %v3370
        %3372 = vmatprep.subr.mxu0 0.0
        %v3373 = vand.u32 %v277, 4294901760
        %v3374 = vsub.f32 %v277, %v3373
        %3375 = vmatpush1.msra.mxu0 %v3374
        %3376 = vmatprep.subr.mxu0 0.0
        %3377 = vmatpush2.msra.mxu0 0.0
        %3378 = vmatprep.subr.mxu0 0.0
        %3379 = vmatpush2.msra.mxu0 0.0
        %3380 = vmatprep.subr.mxu0 0.0
        %3381 = vmatpush2.msra.mxu0 0.0
        %3382 = vmatprep.subr.mxu0 0.0
        %3383 = vmatpush2.msra.mxu0 0.0
        %3384 = vmatprep.subr.mxu0 0.0
        %3385 = vmatpush2.msra.mxu0 0.0
        %3386 = vmatprep.subr.mxu0 0.0
        %3387 = vmatpush2.msra.mxu0 0.0
        %3388 = vmatprep.subr.mxu0 0.0
        %3389 = vmatpush2.msra.mxu0 0.0
        %3390 = vmatprep.subr.mxu0 0.0
        %3391 = vmatpush2.msra.mxu0 0.0
        %3392 = vmatprep.subr.mxu0 0.0
        %3393 = vmatpush2.msra.mxu0 0.0
        %3394 = vmatprep.subr.mxu0 0.0
        %3395 = vmatpush2.msra.mxu0 0.0
        %3396 = vmatprep.subr.mxu0 0.0
        %3397 = vmatpush2.msra.mxu0 0.0
        %3398 = vmatprep.subr.mxu0 0.0
        %3399 = vmatpush2.msra.mxu0 0.0
        %3400 = vmatprep.subr.mxu0 0.0
        %3401 = vmatpush2.msra.mxu0 0.0
        %3402 = vmatprep.subr.mxu0 0.0
        %3403 = vmatpush2.msra.mxu0 0.0
        %3404 = vmatprep.subr.mxu0 0.0
        %3405 = vmatpush2.msra.mxu0 0.0
        %3406 = vmatprep.subr.mxu0 0.0
        %3407 = vmatpush2.msra.mxu0 0.0
        %3408 = vmatprep.mubr.f32.mxu0 0.0
        %v3409 = vand.u32 %v3164, 4294901760
        %v3410 = vsub.f32 %v3164, %v3409
        %3411 = vmatmul.mubr.f32.gmra.mxu0 %v3410
        %v3412 = vpop.f32.mrf.mxu0
        %v3413 = vadd.f32 %v3333, %v3412
        %v3414 = vpop.f32.mrf.mxu0
        %3415 = vdwg.mxu0
        %3416 = vmatprep.subr.mxu0 0.0
        %3417 = vmatpush1.msra.mxu0 0.0
        %3418 = vmatprep.subr.mxu0 0.0
        %3419 = vmatpush1.msra.mxu0 0.0
        %3420 = vmatprep.subr.mxu0 0.0
        %3421 = vmatpush1.msra.mxu0 0.0
        %3422 = vmatprep.subr.mxu0 0.0
        %3423 = vmatpush1.msra.mxu0 0.0
        %3424 = vmatprep.subr.mxu0 0.0
        %3425 = vmatpush1.msra.mxu0 0.0
        %3426 = vmatprep.subr.mxu0 0.0
        %3427 = vmatpush1.msra.mxu0 0.0
        %3428 = vmatprep.subr.mxu0 0.0
        %3429 = vmatpush1.msra.mxu0 0.0
        %3430 = vmatprep.subr.mxu0 0.0
        %3431 = vmatpush1.msra.mxu0 0.0
        %3432 = vmatprep.subr.mxu0 0.0
        %3433 = vmatpush1.msra.mxu0 0.0
        %3434 = vmatprep.subr.mxu0 0.0
        %3435 = vmatpush1.msra.mxu0 0.0
        %3436 = vmatprep.subr.mxu0 0.0
        %3437 = vmatpush1.msra.mxu0 0.0
        %3438 = vmatprep.subr.mxu0 0.0
        %3439 = vmatpush1.msra.mxu0 0.0
        %3440 = vmatprep.subr.mxu0 0.0
        %v3441 = vand.u32 %v280, 4294901760
        %3442 = vmatpush1.msra.mxu0 %v3441
        %3443 = vmatprep.subr.mxu0 0.0
        %v3444 = vand.u32 %v279, 4294901760
        %3445 = vmatpush1.msra.mxu0 %v3444
        %3446 = vmatprep.subr.mxu0 0.0
        %v3447 = vand.u32 %v278, 4294901760
        %3448 = vmatpush1.msra.mxu0 %v3447
        %3449 = vmatprep.subr.mxu0 0.0
        %v3450 = vand.u32 %v277, 4294901760
        %3451 = vmatpush1.msra.mxu0 %v3450
        %3452 = vmatprep.subr.mxu0 0.0
        %3453 = vmatpush2.msra.mxu0 0.0
        %3454 = vmatprep.subr.mxu0 0.0
        %3455 = vmatpush2.msra.mxu0 0.0
        %3456 = vmatprep.subr.mxu0 0.0
        %3457 = vmatpush2.msra.mxu0 0.0
        %3458 = vmatprep.subr.mxu0 0.0
        %3459 = vmatpush2.msra.mxu0 0.0
        %3460 = vmatprep.subr.mxu0 0.0
        %3461 = vmatpush2.msra.mxu0 0.0
        %3462 = vmatprep.subr.mxu0 0.0
        %3463 = vmatpush2.msra.mxu0 0.0
        %3464 = vmatprep.subr.mxu0 0.0
        %3465 = vmatpush2.msra.mxu0 0.0
        %3466 = vmatprep.subr.mxu0 0.0
        %3467 = vmatpush2.msra.mxu0 0.0
        %3468 = vmatprep.subr.mxu0 0.0
        %3469 = vmatpush2.msra.mxu0 0.0
        %3470 = vmatprep.subr.mxu0 0.0
        %3471 = vmatpush2.msra.mxu0 0.0
        %3472 = vmatprep.subr.mxu0 0.0
        %3473 = vmatpush2.msra.mxu0 0.0
        %3474 = vmatprep.subr.mxu0 0.0
        %3475 = vmatpush2.msra.mxu0 0.0
        %3476 = vmatprep.subr.mxu0 0.0
        %3477 = vmatpush2.msra.mxu0 0.0
        %3478 = vmatprep.subr.mxu0 0.0
        %3479 = vmatpush2.msra.mxu0 0.0
        %3480 = vmatprep.subr.mxu0 0.0
        %3481 = vmatpush2.msra.mxu0 0.0
        %3482 = vmatprep.subr.mxu0 0.0
        %3483 = vmatpush2.msra.mxu0 0.0
        %3484 = vmatprep.mubr.f32.mxu0 0.0
        %v3485 = vand.u32 %v3164, 4294901760
        %v3486 = vsub.f32 %v3164, %v3485
        %v3487 = vand.u32 %v3486, 4294901760
        %3488 = vmatmul.mubr.f32.gmra.mxu0 %v3487
        %v3489 = vpop.f32.mrf.mxu0
        %v3490 = vadd.f32 %v3413, %v3489
        %v3491 = vpop.f32.mrf.mxu0
        %3492 = vdwg.mxu0
        %3493 = vmatprep.subr.mxu0 0.0
        %3494 = vmatpush1.msra.mxu0 0.0
        %3495 = vmatprep.subr.mxu0 0.0
        %3496 = vmatpush1.msra.mxu0 0.0
        %3497 = vmatprep.subr.mxu0 0.0
        %3498 = vmatpush1.msra.mxu0 0.0
        %3499 = vmatprep.subr.mxu0 0.0
        %3500 = vmatpush1.msra.mxu0 0.0
        %3501 = vmatprep.subr.mxu0 0.0
        %3502 = vmatpush1.msra.mxu0 0.0
        %3503 = vmatprep.subr.mxu0 0.0
        %3504 = vmatpush1.msra.mxu0 0.0
        %3505 = vmatprep.subr.mxu0 0.0
        %3506 = vmatpush1.msra.mxu0 0.0
        %3507 = vmatprep.subr.mxu0 0.0
        %3508 = vmatpush1.msra.mxu0 0.0
        %3509 = vmatprep.subr.mxu0 0.0
        %3510 = vmatpush1.msra.mxu0 0.0
        %3511 = vmatprep.subr.mxu0 0.0
        %3512 = vmatpush1.msra.mxu0 0.0
        %3513 = vmatprep.subr.mxu0 0.0
        %3514 = vmatpush1.msra.mxu0 0.0
        %3515 = vmatprep.subr.mxu0 0.0
        %3516 = vmatpush1.msra.mxu0 0.0
        %3517 = vmatprep.subr.mxu0 0.0
        %v3518 = vand.u32 %v280, 4294901760
        %v3519 = vsub.f32 %v280, %v3518
        %v3520 = vand.u32 %v3519, 4294901760
        %3521 = vmatpush1.msra.mxu0 %v3520
        %3522 = vmatprep.subr.mxu0 0.0
        %v3523 = vand.u32 %v279, 4294901760
        %v3524 = vsub.f32 %v279, %v3523
        %v3525 = vand.u32 %v3524, 4294901760
        %3526 = vmatpush1.msra.mxu0 %v3525
        %3527 = vmatprep.subr.mxu0 0.0
        %v3528 = vand.u32 %v278, 4294901760
        %v3529 = vsub.f32 %v278, %v3528
        %v3530 = vand.u32 %v3529, 4294901760
        %3531 = vmatpush1.msra.mxu0 %v3530
        %3532 = vmatprep.subr.mxu0 0.0
        %v3533 = vand.u32 %v277, 4294901760
        %v3534 = vsub.f32 %v277, %v3533
        %v3535 = vand.u32 %v3534, 4294901760
        %3536 = vmatpush1.msra.mxu0 %v3535
        %3537 = vmatprep.subr.mxu0 0.0
        %3538 = vmatpush2.msra.mxu0 0.0
        %3539 = vmatprep.subr.mxu0 0.0
        %3540 = vmatpush2.msra.mxu0 0.0
        %3541 = vmatprep.subr.mxu0 0.0
        %3542 = vmatpush2.msra.mxu0 0.0
        %3543 = vmatprep.subr.mxu0 0.0
        %3544 = vmatpush2.msra.mxu0 0.0
        %3545 = vmatprep.subr.mxu0 0.0
        %3546 = vmatpush2.msra.mxu0 0.0
        %3547 = vmatprep.subr.mxu0 0.0
        %3548 = vmatpush2.msra.mxu0 0.0
        %3549 = vmatprep.subr.mxu0 0.0
        %3550 = vmatpush2.msra.mxu0 0.0
        %3551 = vmatprep.subr.mxu0 0.0
        %3552 = vmatpush2.msra.mxu0 0.0
        %3553 = vmatprep.subr.mxu0 0.0
        %3554 = vmatpush2.msra.mxu0 0.0
        %3555 = vmatprep.subr.mxu0 0.0
        %3556 = vmatpush2.msra.mxu0 0.0
        %3557 = vmatprep.subr.mxu0 0.0
        %3558 = vmatpush2.msra.mxu0 0.0
        %3559 = vmatprep.subr.mxu0 0.0
        %3560 = vmatpush2.msra.mxu0 0.0
        %3561 = vmatprep.subr.mxu0 0.0
        %3562 = vmatpush2.msra.mxu0 0.0
        %3563 = vmatprep.subr.mxu0 0.0
        %3564 = vmatpush2.msra.mxu0 0.0
        %3565 = vmatprep.subr.mxu0 0.0
        %3566 = vmatpush2.msra.mxu0 0.0
        %3567 = vmatprep.subr.mxu0 0.0
        %3568 = vmatpush2.msra.mxu0 0.0
        %3569 = vmatprep.mubr.f32.mxu0 0.0
        %v3570 = vand.u32 %v3164, 4294901760
        %3571 = vmatmul.mubr.f32.gmra.mxu0 %v3570
        %v3572 = vpop.f32.mrf.mxu0
        %v3573 = vadd.f32 %v3490, %v3572
        %v3574 = vpop.f32.mrf.mxu0
        %3575 = vdwg.mxu0
        %3576 = vmatprep.subr.mxu0 0.0
        %3577 = vmatpush1.msra.mxu0 0.0
        %3578 = vmatprep.subr.mxu0 0.0
        %3579 = vmatpush1.msra.mxu0 0.0
        %3580 = vmatprep.subr.mxu0 0.0
        %3581 = vmatpush1.msra.mxu0 0.0
        %3582 = vmatprep.subr.mxu0 0.0
        %3583 = vmatpush1.msra.mxu0 0.0
        %3584 = vmatprep.subr.mxu0 0.0
        %3585 = vmatpush1.msra.mxu0 0.0
        %3586 = vmatprep.subr.mxu0 0.0
        %3587 = vmatpush1.msra.mxu0 0.0
        %3588 = vmatprep.subr.mxu0 0.0
        %3589 = vmatpush1.msra.mxu0 0.0
        %3590 = vmatprep.subr.mxu0 0.0
        %3591 = vmatpush1.msra.mxu0 0.0
        %3592 = vmatprep.subr.mxu0 0.0
        %3593 = vmatpush1.msra.mxu0 0.0
        %3594 = vmatprep.subr.mxu0 0.0
        %3595 = vmatpush1.msra.mxu0 0.0
        %3596 = vmatprep.subr.mxu0 0.0
        %3597 = vmatpush1.msra.mxu0 0.0
        %3598 = vmatprep.subr.mxu0 0.0
        %3599 = vmatpush1.msra.mxu0 0.0
        %3600 = vmatprep.subr.mxu0 0.0
        %v3601 = vand.u32 %v280, 4294901760
        %3602 = vmatpush1.msra.mxu0 %v3601
        %3603 = vmatprep.subr.mxu0 0.0
        %v3604 = vand.u32 %v279, 4294901760
        %3605 = vmatpush1.msra.mxu0 %v3604
        %3606 = vmatprep.subr.mxu0 0.0
        %v3607 = vand.u32 %v278, 4294901760
        %3608 = vmatpush1.msra.mxu0 %v3607
        %3609 = vmatprep.subr.mxu0 0.0
        %v3610 = vand.u32 %v277, 4294901760
        %3611 = vmatpush1.msra.mxu0 %v3610
        %3612 = vmatprep.subr.mxu0 0.0
        %3613 = vmatpush2.msra.mxu0 0.0
        %3614 = vmatprep.subr.mxu0 0.0
        %3615 = vmatpush2.msra.mxu0 0.0
        %3616 = vmatprep.subr.mxu0 0.0
        %3617 = vmatpush2.msra.mxu0 0.0
        %3618 = vmatprep.subr.mxu0 0.0
        %3619 = vmatpush2.msra.mxu0 0.0
        %3620 = vmatprep.subr.mxu0 0.0
        %3621 = vmatpush2.msra.mxu0 0.0
        %3622 = vmatprep.subr.mxu0 0.0
        %3623 = vmatpush2.msra.mxu0 0.0
        %3624 = vmatprep.subr.mxu0 0.0
        %3625 = vmatpush2.msra.mxu0 0.0
        %3626 = vmatprep.subr.mxu0 0.0
        %3627 = vmatpush2.msra.mxu0 0.0
        %3628 = vmatprep.subr.mxu0 0.0
        %3629 = vmatpush2.msra.mxu0 0.0
        %3630 = vmatprep.subr.mxu0 0.0
        %3631 = vmatpush2.msra.mxu0 0.0
        %3632 = vmatprep.subr.mxu0 0.0
        %3633 = vmatpush2.msra.mxu0 0.0
        %3634 = vmatprep.subr.mxu0 0.0
        %3635 = vmatpush2.msra.mxu0 0.0
        %3636 = vmatprep.subr.mxu0 0.0
        %3637 = vmatpush2.msra.mxu0 0.0
        %3638 = vmatprep.subr.mxu0 0.0
        %3639 = vmatpush2.msra.mxu0 0.0
        %3640 = vmatprep.subr.mxu0 0.0
        %3641 = vmatpush2.msra.mxu0 0.0
        %3642 = vmatprep.subr.mxu0 0.0
        %3643 = vmatpush2.msra.mxu0 0.0
        %3644 = vmatprep.mubr.f32.mxu0 0.0
        %v3645 = vand.u32 %v3164, 4294901760
        %3646 = vmatmul.mubr.f32.gmra.mxu0 %v3645
        %v3647 = vpop.f32.mrf.mxu0
        %v3648 = vadd.f32 %v3573, %v3647
        %v3649 = vpop.f32.mrf.mxu0
        %3650 = vdwg.mxu0
        %v3651 = vld [vmem:[#allocation2 + $0x30] sm:$0xff]
        %v3652 = vld [vmem:[#allocation2 + $0x38] sm:$0xff]
        %v3654 = vsel %vm1275, %v3648, 0
        %3656 = vmatprep.subr.mxu0 0.0
        %3657 = vmatpush1.msra.mxu0 0.0
        %3658 = vmatprep.subr.mxu0 0.0
        %3659 = vmatpush1.msra.mxu0 0.0
        %3660 = vmatprep.subr.mxu0 0.0
        %3661 = vmatpush1.msra.mxu0 0.0
        %3662 = vmatprep.subr.mxu0 0.0
        %3663 = vmatpush1.msra.mxu0 0.0
        %3664 = vmatprep.subr.mxu0 0.0
        %3665 = vmatpush1.msra.mxu0 0.0
        %3666 = vmatprep.subr.mxu0 0.0
        %3667 = vmatpush1.msra.mxu0 0.0
        %3668 = vmatprep.subr.mxu0 0.0
        %3669 = vmatpush1.msra.mxu0 0.0
        %3670 = vmatprep.subr.mxu0 0.0
        %3671 = vmatpush1.msra.mxu0 0.0
        %3672 = vmatprep.subr.mxu0 0.0
        %3673 = vmatpush1.msra.mxu0 0.0
        %3674 = vmatprep.subr.mxu0 0.0
        %3675 = vmatpush1.msra.mxu0 0.0
        %3676 = vmatprep.subr.mxu0 0.0
        %3677 = vmatpush1.msra.mxu0 0.0
        %3678 = vmatprep.subr.mxu0 0.0
        %3679 = vmatpush1.msra.mxu0 0.0
        %3680 = vmatprep.subr.mxu0 0.0
        %3681 = vmatpush1.msra.mxu0 0.0
        %3682 = vmatprep.subr.mxu0 0.0
        %3683 = vmatpush1.msra.mxu0 0.0
        %3684 = vmatprep.subr.mxu0 0.0
        %v3685 = vand.u32 %v3652, 4294901760
        %3686 = vmatpush1.msra.mxu0 %v3685
        %3687 = vmatprep.subr.mxu0 0.0
        %v3688 = vand.u32 %v3651, 4294901760
        %3689 = vmatpush1.msra.mxu0 %v3688
        %3690 = vmatprep.subr.mxu0 0.0
        %3691 = vmatpush2.msra.mxu0 0.0
        %3692 = vmatprep.subr.mxu0 0.0
        %3693 = vmatpush2.msra.mxu0 0.0
        %3694 = vmatprep.subr.mxu0 0.0
        %3695 = vmatpush2.msra.mxu0 0.0
        %3696 = vmatprep.subr.mxu0 0.0
        %3697 = vmatpush2.msra.mxu0 0.0
        %3698 = vmatprep.subr.mxu0 0.0
        %3699 = vmatpush2.msra.mxu0 0.0
        %3700 = vmatprep.subr.mxu0 0.0
        %3701 = vmatpush2.msra.mxu0 0.0
        %3702 = vmatprep.subr.mxu0 0.0
        %3703 = vmatpush2.msra.mxu0 0.0
        %3704 = vmatprep.subr.mxu0 0.0
        %3705 = vmatpush2.msra.mxu0 0.0
        %3706 = vmatprep.subr.mxu0 0.0
        %3707 = vmatpush2.msra.mxu0 0.0
        %3708 = vmatprep.subr.mxu0 0.0
        %3709 = vmatpush2.msra.mxu0 0.0
        %3710 = vmatprep.subr.mxu0 0.0
        %3711 = vmatpush2.msra.mxu0 0.0
        %3712 = vmatprep.subr.mxu0 0.0
        %3713 = vmatpush2.msra.mxu0 0.0
        %3714 = vmatprep.subr.mxu0 0.0
        %3715 = vmatpush2.msra.mxu0 0.0
        %3716 = vmatprep.subr.mxu0 0.0
        %3717 = vmatpush2.msra.mxu0 0.0
        %3718 = vmatprep.subr.mxu0 0.0
        %3719 = vmatpush2.msra.mxu0 0.0
        %3720 = vmatprep.subr.mxu0 0.0
        %3721 = vmatpush2.msra.mxu0 0.0
        %3722 = vmatprep.mubr.f32.mxu0 0.0
        %v3723 = vand.u32 %v3654, 4294901760
        %v3724 = vsub.f32 %v3654, %v3723
        %v3725 = vand.u32 %v3724, 4294901760
        %v3726 = vsub.f32 %v3724, %v3725
        %v3727 = vand.u32 %v3726, 4294901760
        %3728 = vmatmul.mubr.f32.gmra.mxu0 %v3727
        %v3729 = vpop.f32.mrf.mxu0
        %v3730 = vadd.f32 0.0, %v3729
        %v3731 = vpop.f32.mrf.mxu0
        %3732 = vdwg.mxu0
        %3733 = vmatprep.subr.mxu0 0.0
        %3734 = vmatpush1.msra.mxu0 0.0
        %3735 = vmatprep.subr.mxu0 0.0
        %3736 = vmatpush1.msra.mxu0 0.0
        %3737 = vmatprep.subr.mxu0 0.0
        %3738 = vmatpush1.msra.mxu0 0.0
        %3739 = vmatprep.subr.mxu0 0.0
        %3740 = vmatpush1.msra.mxu0 0.0
        %3741 = vmatprep.subr.mxu0 0.0
        %3742 = vmatpush1.msra.mxu0 0.0
        %3743 = vmatprep.subr.mxu0 0.0
        %3744 = vmatpush1.msra.mxu0 0.0
        %3745 = vmatprep.subr.mxu0 0.0
        %3746 = vmatpush1.msra.mxu0 0.0
        %3747 = vmatprep.subr.mxu0 0.0
        %3748 = vmatpush1.msra.mxu0 0.0
        %3749 = vmatprep.subr.mxu0 0.0
        %3750 = vmatpush1.msra.mxu0 0.0
        %3751 = vmatprep.subr.mxu0 0.0
        %3752 = vmatpush1.msra.mxu0 0.0
        %3753 = vmatprep.subr.mxu0 0.0
        %3754 = vmatpush1.msra.mxu0 0.0
        %3755 = vmatprep.subr.mxu0 0.0
        %3756 = vmatpush1.msra.mxu0 0.0
        %3757 = vmatprep.subr.mxu0 0.0
        %3758 = vmatpush1.msra.mxu0 0.0
        %3759 = vmatprep.subr.mxu0 0.0
        %3760 = vmatpush1.msra.mxu0 0.0
        %3761 = vmatprep.subr.mxu0 0.0
        %v3762 = vand.u32 %v3652, 4294901760
        %v3763 = vsub.f32 %v3652, %v3762
        %v3764 = vand.u32 %v3763, 4294901760
        %v3765 = vsub.f32 %v3763, %v3764
        %v3766 = vand.u32 %v3765, 4294901760
        %3767 = vmatpush1.msra.mxu0 %v3766
        %3768 = vmatprep.subr.mxu0 0.0
        %v3769 = vand.u32 %v3651, 4294901760
        %v3770 = vsub.f32 %v3651, %v3769
        %v3771 = vand.u32 %v3770, 4294901760
        %v3772 = vsub.f32 %v3770, %v3771
        %v3773 = vand.u32 %v3772, 4294901760
        %3774 = vmatpush1.msra.mxu0 %v3773
        %3775 = vmatprep.subr.mxu0 0.0
        %3776 = vmatpush2.msra.mxu0 0.0
        %3777 = vmatprep.subr.mxu0 0.0
        %3778 = vmatpush2.msra.mxu0 0.0
        %3779 = vmatprep.subr.mxu0 0.0
        %3780 = vmatpush2.msra.mxu0 0.0
        %3781 = vmatprep.subr.mxu0 0.0
        %3782 = vmatpush2.msra.mxu0 0.0
        %3783 = vmatprep.subr.mxu0 0.0
        %3784 = vmatpush2.msra.mxu0 0.0
        %3785 = vmatprep.subr.mxu0 0.0
        %3786 = vmatpush2.msra.mxu0 0.0
        %3787 = vmatprep.subr.mxu0 0.0
        %3788 = vmatpush2.msra.mxu0 0.0
        %3789 = vmatprep.subr.mxu0 0.0
        %3790 = vmatpush2.msra.mxu0 0.0
        %3791 = vmatprep.subr.mxu0 0.0
        %3792 = vmatpush2.msra.mxu0 0.0
        %3793 = vmatprep.subr.mxu0 0.0
        %3794 = vmatpush2.msra.mxu0 0.0
        %3795 = vmatprep.subr.mxu0 0.0
        %3796 = vmatpush2.msra.mxu0 0.0
        %3797 = vmatprep.subr.mxu0 0.0
        %3798 = vmatpush2.msra.mxu0 0.0
        %3799 = vmatprep.subr.mxu0 0.0
        %3800 = vmatpush2.msra.mxu0 0.0
        %3801 = vmatprep.subr.mxu0 0.0
        %3802 = vmatpush2.msra.mxu0 0.0
        %3803 = vmatprep.subr.mxu0 0.0
        %3804 = vmatpush2.msra.mxu0 0.0
        %3805 = vmatprep.subr.mxu0 0.0
        %3806 = vmatpush2.msra.mxu0 0.0
        %3807 = vmatprep.mubr.f32.mxu0 0.0
        %v3808 = vand.u32 %v3654, 4294901760
        %3809 = vmatmul.mubr.f32.gmra.mxu0 %v3808
        %v3810 = vpop.f32.mrf.mxu0
        %v3811 = vadd.f32 %v3730, %v3810
        %v3812 = vpop.f32.mrf.mxu0
        %3813 = vdwg.mxu0
        %3814 = vmatprep.subr.mxu0 0.0
        %3815 = vmatpush1.msra.mxu0 0.0
        %3816 = vmatprep.subr.mxu0 0.0
        %3817 = vmatpush1.msra.mxu0 0.0
        %3818 = vmatprep.subr.mxu0 0.0
        %3819 = vmatpush1.msra.mxu0 0.0
        %3820 = vmatprep.subr.mxu0 0.0
        %3821 = vmatpush1.msra.mxu0 0.0
        %3822 = vmatprep.subr.mxu0 0.0
        %3823 = vmatpush1.msra.mxu0 0.0
        %3824 = vmatprep.subr.mxu0 0.0
        %3825 = vmatpush1.msra.mxu0 0.0
        %3826 = vmatprep.subr.mxu0 0.0
        %3827 = vmatpush1.msra.mxu0 0.0
        %3828 = vmatprep.subr.mxu0 0.0
        %3829 = vmatpush1.msra.mxu0 0.0
        %3830 = vmatprep.subr.mxu0 0.0
        %3831 = vmatpush1.msra.mxu0 0.0
        %3832 = vmatprep.subr.mxu0 0.0
        %3833 = vmatpush1.msra.mxu0 0.0
        %3834 = vmatprep.subr.mxu0 0.0
        %3835 = vmatpush1.msra.mxu0 0.0
        %3836 = vmatprep.subr.mxu0 0.0
        %3837 = vmatpush1.msra.mxu0 0.0
        %3838 = vmatprep.subr.mxu0 0.0
        %3839 = vmatpush1.msra.mxu0 0.0
        %3840 = vmatprep.subr.mxu0 0.0
        %3841 = vmatpush1.msra.mxu0 0.0
        %3842 = vmatprep.subr.mxu0 0.0
        %v3843 = vand.u32 %v3652, 4294901760
        %v3844 = vsub.f32 %v3652, %v3843
        %3845 = vmatpush1.msra.mxu0 %v3844
        %3846 = vmatprep.subr.mxu0 0.0
        %v3847 = vand.u32 %v3651, 4294901760
        %v3848 = vsub.f32 %v3651, %v3847
        %3849 = vmatpush1.msra.mxu0 %v3848
        %3850 = vmatprep.subr.mxu0 0.0
        %3851 = vmatpush2.msra.mxu0 0.0
        %3852 = vmatprep.subr.mxu0 0.0
        %3853 = vmatpush2.msra.mxu0 0.0
        %3854 = vmatprep.subr.mxu0 0.0
        %3855 = vmatpush2.msra.mxu0 0.0
        %3856 = vmatprep.subr.mxu0 0.0
        %3857 = vmatpush2.msra.mxu0 0.0
        %3858 = vmatprep.subr.mxu0 0.0
        %3859 = vmatpush2.msra.mxu0 0.0
        %3860 = vmatprep.subr.mxu0 0.0
        %3861 = vmatpush2.msra.mxu0 0.0
        %3862 = vmatprep.subr.mxu0 0.0
        %3863 = vmatpush2.msra.mxu0 0.0
        %3864 = vmatprep.subr.mxu0 0.0
        %3865 = vmatpush2.msra.mxu0 0.0
        %3866 = vmatprep.subr.mxu0 0.0
        %3867 = vmatpush2.msra.mxu0 0.0
        %3868 = vmatprep.subr.mxu0 0.0
        %3869 = vmatpush2.msra.mxu0 0.0
        %3870 = vmatprep.subr.mxu0 0.0
        %3871 = vmatpush2.msra.mxu0 0.0
        %3872 = vmatprep.subr.mxu0 0.0
        %3873 = vmatpush2.msra.mxu0 0.0
        %3874 = vmatprep.subr.mxu0 0.0
        %3875 = vmatpush2.msra.mxu0 0.0
        %3876 = vmatprep.subr.mxu0 0.0
        %3877 = vmatpush2.msra.mxu0 0.0
        %3878 = vmatprep.subr.mxu0 0.0
        %3879 = vmatpush2.msra.mxu0 0.0
        %3880 = vmatprep.subr.mxu0 0.0
        %3881 = vmatpush2.msra.mxu0 0.0
        %3882 = vmatprep.mubr.f32.mxu0 0.0
        %v3883 = vand.u32 %v3654, 4294901760
        %v3884 = vsub.f32 %v3654, %v3883
        %3885 = vmatmul.mubr.f32.gmra.mxu0 %v3884
        %v3886 = vpop.f32.mrf.mxu0
        %v3887 = vadd.f32 %v3811, %v3886
        %v3888 = vpop.f32.mrf.mxu0
        %3889 = vdwg.mxu0
        %3890 = vmatprep.subr.mxu0 0.0
        %3891 = vmatpush1.msra.mxu0 0.0
        %3892 = vmatprep.subr.mxu0 0.0
        %3893 = vmatpush1.msra.mxu0 0.0
        %3894 = vmatprep.subr.mxu0 0.0
        %3895 = vmatpush1.msra.mxu0 0.0
        %3896 = vmatprep.subr.mxu0 0.0
        %3897 = vmatpush1.msra.mxu0 0.0
        %3898 = vmatprep.subr.mxu0 0.0
        %3899 = vmatpush1.msra.mxu0 0.0
        %3900 = vmatprep.subr.mxu0 0.0
        %3901 = vmatpush1.msra.mxu0 0.0
        %3902 = vmatprep.subr.mxu0 0.0
        %3903 = vmatpush1.msra.mxu0 0.0
        %3904 = vmatprep.subr.mxu0 0.0
        %3905 = vmatpush1.msra.mxu0 0.0
        %3906 = vmatprep.subr.mxu0 0.0
        %3907 = vmatpush1.msra.mxu0 0.0
        %3908 = vmatprep.subr.mxu0 0.0
        %3909 = vmatpush1.msra.mxu0 0.0
        %3910 = vmatprep.subr.mxu0 0.0
        %3911 = vmatpush1.msra.mxu0 0.0
        %3912 = vmatprep.subr.mxu0 0.0
        %3913 = vmatpush1.msra.mxu0 0.0
        %3914 = vmatprep.subr.mxu0 0.0
        %3915 = vmatpush1.msra.mxu0 0.0
        %3916 = vmatprep.subr.mxu0 0.0
        %3917 = vmatpush1.msra.mxu0 0.0
        %3918 = vmatprep.subr.mxu0 0.0
        %v3919 = vand.u32 %v3652, 4294901760
        %3920 = vmatpush1.msra.mxu0 %v3919
        %3921 = vmatprep.subr.mxu0 0.0
        %v3922 = vand.u32 %v3651, 4294901760
        %3923 = vmatpush1.msra.mxu0 %v3922
        %3924 = vmatprep.subr.mxu0 0.0
        %3925 = vmatpush2.msra.mxu0 0.0
        %3926 = vmatprep.subr.mxu0 0.0
        %3927 = vmatpush2.msra.mxu0 0.0
        %3928 = vmatprep.subr.mxu0 0.0
        %3929 = vmatpush2.msra.mxu0 0.0
        %3930 = vmatprep.subr.mxu0 0.0
        %3931 = vmatpush2.msra.mxu0 0.0
        %3932 = vmatprep.subr.mxu0 0.0
        %3933 = vmatpush2.msra.mxu0 0.0
        %3934 = vmatprep.subr.mxu0 0.0
        %3935 = vmatpush2.msra.mxu0 0.0
        %3936 = vmatprep.subr.mxu0 0.0
        %3937 = vmatpush2.msra.mxu0 0.0
        %3938 = vmatprep.subr.mxu0 0.0
        %3939 = vmatpush2.msra.mxu0 0.0
        %3940 = vmatprep.subr.mxu0 0.0
        %3941 = vmatpush2.msra.mxu0 0.0
        %3942 = vmatprep.subr.mxu0 0.0
        %3943 = vmatpush2.msra.mxu0 0.0
        %3944 = vmatprep.subr.mxu0 0.0
        %3945 = vmatpush2.msra.mxu0 0.0
        %3946 = vmatprep.subr.mxu0 0.0
        %3947 = vmatpush2.msra.mxu0 0.0
        %3948 = vmatprep.subr.mxu0 0.0
        %3949 = vmatpush2.msra.mxu0 0.0
        %3950 = vmatprep.subr.mxu0 0.0
        %3951 = vmatpush2.msra.mxu0 0.0
        %3952 = vmatprep.subr.mxu0 0.0
        %3953 = vmatpush2.msra.mxu0 0.0
        %3954 = vmatprep.subr.mxu0 0.0
        %3955 = vmatpush2.msra.mxu0 0.0
        %3956 = vmatprep.mubr.f32.mxu0 0.0
        %v3957 = vand.u32 %v3654, 4294901760
        %v3958 = vsub.f32 %v3654, %v3957
        %v3959 = vand.u32 %v3958, 4294901760
        %3960 = vmatmul.mubr.f32.gmra.mxu0 %v3959
        %v3961 = vpop.f32.mrf.mxu0
        %v3962 = vadd.f32 %v3887, %v3961
        %v3963 = vpop.f32.mrf.mxu0
        %3964 = vdwg.mxu0
        %3965 = vmatprep.subr.mxu0 0.0
        %3966 = vmatpush1.msra.mxu0 0.0
        %3967 = vmatprep.subr.mxu0 0.0
        %3968 = vmatpush1.msra.mxu0 0.0
        %3969 = vmatprep.subr.mxu0 0.0
        %3970 = vmatpush1.msra.mxu0 0.0
        %3971 = vmatprep.subr.mxu0 0.0
        %3972 = vmatpush1.msra.mxu0 0.0
        %3973 = vmatprep.subr.mxu0 0.0
        %3974 = vmatpush1.msra.mxu0 0.0
        %3975 = vmatprep.subr.mxu0 0.0
        %3976 = vmatpush1.msra.mxu0 0.0
        %3977 = vmatprep.subr.mxu0 0.0
        %3978 = vmatpush1.msra.mxu0 0.0
        %3979 = vmatprep.subr.mxu0 0.0
        %3980 = vmatpush1.msra.mxu0 0.0
        %3981 = vmatprep.subr.mxu0 0.0
        %3982 = vmatpush1.msra.mxu0 0.0
        %3983 = vmatprep.subr.mxu0 0.0
        %3984 = vmatpush1.msra.mxu0 0.0
        %3985 = vmatprep.subr.mxu0 0.0
        %3986 = vmatpush1.msra.mxu0 0.0
        %3987 = vmatprep.subr.mxu0 0.0
        %3988 = vmatpush1.msra.mxu0 0.0
        %3989 = vmatprep.subr.mxu0 0.0
        %3990 = vmatpush1.msra.mxu0 0.0
        %3991 = vmatprep.subr.mxu0 0.0
        %3992 = vmatpush1.msra.mxu0 0.0
        %3993 = vmatprep.subr.mxu0 0.0
        %v3994 = vand.u32 %v3652, 4294901760
        %v3995 = vsub.f32 %v3652, %v3994
        %v3996 = vand.u32 %v3995, 4294901760
        %3997 = vmatpush1.msra.mxu0 %v3996
        %3998 = vmatprep.subr.mxu0 0.0
        %v3999 = vand.u32 %v3651, 4294901760
        %v4000 = vsub.f32 %v3651, %v3999
        %v4001 = vand.u32 %v4000, 4294901760
        %4002 = vmatpush1.msra.mxu0 %v4001
        %4003 = vmatprep.subr.mxu0 0.0
        %4004 = vmatpush2.msra.mxu0 0.0
        %4005 = vmatprep.subr.mxu0 0.0
        %4006 = vmatpush2.msra.mxu0 0.0
        %4007 = vmatprep.subr.mxu0 0.0
        %4008 = vmatpush2.msra.mxu0 0.0
        %4009 = vmatprep.subr.mxu0 0.0
        %4010 = vmatpush2.msra.mxu0 0.0
        %4011 = vmatprep.subr.mxu0 0.0
        %4012 = vmatpush2.msra.mxu0 0.0
        %4013 = vmatprep.subr.mxu0 0.0
        %4014 = vmatpush2.msra.mxu0 0.0
        %4015 = vmatprep.subr.mxu0 0.0
        %4016 = vmatpush2.msra.mxu0 0.0
        %4017 = vmatprep.subr.mxu0 0.0
        %4018 = vmatpush2.msra.mxu0 0.0
        %4019 = vmatprep.subr.mxu0 0.0
        %4020 = vmatpush2.msra.mxu0 0.0
        %4021 = vmatprep.subr.mxu0 0.0
        %4022 = vmatpush2.msra.mxu0 0.0
        %4023 = vmatprep.subr.mxu0 0.0
        %4024 = vmatpush2.msra.mxu0 0.0
        %4025 = vmatprep.subr.mxu0 0.0
        %4026 = vmatpush2.msra.mxu0 0.0
        %4027 = vmatprep.subr.mxu0 0.0
        %4028 = vmatpush2.msra.mxu0 0.0
        %4029 = vmatprep.subr.mxu0 0.0
        %4030 = vmatpush2.msra.mxu0 0.0
        %4031 = vmatprep.subr.mxu0 0.0
        %4032 = vmatpush2.msra.mxu0 0.0
        %4033 = vmatprep.subr.mxu0 0.0
        %4034 = vmatpush2.msra.mxu0 0.0
        %4035 = vmatprep.mubr.f32.mxu0 0.0
        %v4036 = vand.u32 %v3654, 4294901760
        %4037 = vmatmul.mubr.f32.gmra.mxu0 %v4036
        %v4038 = vpop.f32.mrf.mxu0
        %v4039 = vadd.f32 %v3962, %v4038
        %v4040 = vpop.f32.mrf.mxu0
        %4041 = vdwg.mxu0
        %4042 = vmatprep.subr.mxu0 0.0
        %4043 = vmatpush1.msra.mxu0 0.0
        %4044 = vmatprep.subr.mxu0 0.0
        %4045 = vmatpush1.msra.mxu0 0.0
        %4046 = vmatprep.subr.mxu0 0.0
        %4047 = vmatpush1.msra.mxu0 0.0
        %4048 = vmatprep.subr.mxu0 0.0
        %4049 = vmatpush1.msra.mxu0 0.0
        %4050 = vmatprep.subr.mxu0 0.0
        %4051 = vmatpush1.msra.mxu0 0.0
        %4052 = vmatprep.subr.mxu0 0.0
        %4053 = vmatpush1.msra.mxu0 0.0
        %4054 = vmatprep.subr.mxu0 0.0
        %4055 = vmatpush1.msra.mxu0 0.0
        %4056 = vmatprep.subr.mxu0 0.0
        %4057 = vmatpush1.msra.mxu0 0.0
        %4058 = vmatprep.subr.mxu0 0.0
        %4059 = vmatpush1.msra.mxu0 0.0
        %4060 = vmatprep.subr.mxu0 0.0
        %4061 = vmatpush1.msra.mxu0 0.0
        %4062 = vmatprep.subr.mxu0 0.0
        %4063 = vmatpush1.msra.mxu0 0.0
        %4064 = vmatprep.subr.mxu0 0.0
        %4065 = vmatpush1.msra.mxu0 0.0
        %4066 = vmatprep.subr.mxu0 0.0
        %4067 = vmatpush1.msra.mxu0 0.0
        %4068 = vmatprep.subr.mxu0 0.0
        %4069 = vmatpush1.msra.mxu0 0.0
        %4070 = vmatprep.subr.mxu0 0.0
        %v4071 = vand.u32 %v3652, 4294901760
        %4072 = vmatpush1.msra.mxu0 %v4071
        %4073 = vmatprep.subr.mxu0 0.0
        %v4074 = vand.u32 %v3651, 4294901760
        %4075 = vmatpush1.msra.mxu0 %v4074
        %4076 = vmatprep.subr.mxu0 0.0
        %4077 = vmatpush2.msra.mxu0 0.0
        %4078 = vmatprep.subr.mxu0 0.0
        %4079 = vmatpush2.msra.mxu0 0.0
        %4080 = vmatprep.subr.mxu0 0.0
        %4081 = vmatpush2.msra.mxu0 0.0
        %4082 = vmatprep.subr.mxu0 0.0
        %4083 = vmatpush2.msra.mxu0 0.0
        %4084 = vmatprep.subr.mxu0 0.0
        %4085 = vmatpush2.msra.mxu0 0.0
        %4086 = vmatprep.subr.mxu0 0.0
        %4087 = vmatpush2.msra.mxu0 0.0
        %4088 = vmatprep.subr.mxu0 0.0
        %4089 = vmatpush2.msra.mxu0 0.0
        %4090 = vmatprep.subr.mxu0 0.0
        %4091 = vmatpush2.msra.mxu0 0.0
        %4092 = vmatprep.subr.mxu0 0.0
        %4093 = vmatpush2.msra.mxu0 0.0
        %4094 = vmatprep.subr.mxu0 0.0
        %4095 = vmatpush2.msra.mxu0 0.0
        %4096 = vmatprep.subr.mxu0 0.0
        %4097 = vmatpush2.msra.mxu0 0.0
        %4098 = vmatprep.subr.mxu0 0.0
        %4099 = vmatpush2.msra.mxu0 0.0
        %4100 = vmatprep.subr.mxu0 0.0
        %4101 = vmatpush2.msra.mxu0 0.0
        %4102 = vmatprep.subr.mxu0 0.0
        %4103 = vmatpush2.msra.mxu0 0.0
        %4104 = vmatprep.subr.mxu0 0.0
        %4105 = vmatpush2.msra.mxu0 0.0
        %4106 = vmatprep.subr.mxu0 0.0
        %4107 = vmatpush2.msra.mxu0 0.0
        %4108 = vmatprep.mubr.f32.mxu0 0.0
        %v4109 = vand.u32 %v3654, 4294901760
        %4110 = vmatmul.mubr.f32.gmra.mxu0 %v4109
        %v4111 = vpop.f32.mrf.mxu0
        %v4112 = vadd.f32 %v4039, %v4111
        %v4113 = vpop.f32.mrf.mxu0
        %4114 = vdwg.mxu0
        %v4115 = vadd.f32 %v3157, %v4112
        %4116 = vset.pattern.permute.xlu0 4
        %4117 = vperm.xlu0 %4116, %v283
        %v4118 = vpop.permute.xlu0 %4117
        %vm4119 = vcmp.eq.s32.totalorder %v4118, %v282
        %v4120 = vsel %vm4119, 1.0, 0.0
        %v4122 = vsel %vm289, %v4120, 0
        %4124 = vmatprep.subr.mxu0 0.0
        %4125 = vmatpush1.msra.mxu0 0.0
        %4126 = vmatprep.subr.mxu0 0.0
        %4127 = vmatpush1.msra.mxu0 0.0
        %4128 = vmatprep.subr.mxu0 0.0
        %4129 = vmatpush1.msra.mxu0 0.0
        %4130 = vmatprep.subr.mxu0 0.0
        %4131 = vmatpush1.msra.mxu0 0.0
        %4132 = vmatprep.subr.mxu0 0.0
        %4133 = vmatpush1.msra.mxu0 0.0
        %4134 = vmatprep.subr.mxu0 0.0
        %4135 = vmatpush1.msra.mxu0 0.0
        %4136 = vmatprep.subr.mxu0 0.0
        %4137 = vmatpush1.msra.mxu0 0.0
        %4138 = vmatprep.subr.mxu0 0.0
        %4139 = vmatpush1.msra.mxu0 0.0
        %4140 = vmatprep.subr.mxu0 0.0
        %4141 = vmatpush1.msra.mxu0 0.0
        %4142 = vmatprep.subr.mxu0 0.0
        %4143 = vmatpush1.msra.mxu0 0.0
        %4144 = vmatprep.subr.mxu0 0.0
        %4145 = vmatpush1.msra.mxu0 0.0
        %4146 = vmatprep.subr.mxu0 0.0
        %4147 = vmatpush1.msra.mxu0 0.0
        %4148 = vmatprep.subr.mxu0 0.0
        %v4149 = vand.u32 %v280, 4294901760
        %4150 = vmatpush1.msra.mxu0 %v4149
        %4151 = vmatprep.subr.mxu0 0.0
        %v4152 = vand.u32 %v279, 4294901760
        %4153 = vmatpush1.msra.mxu0 %v4152
        %4154 = vmatprep.subr.mxu0 0.0
        %v4155 = vand.u32 %v278, 4294901760
        %4156 = vmatpush1.msra.mxu0 %v4155
        %4157 = vmatprep.subr.mxu0 0.0
        %v4158 = vand.u32 %v277, 4294901760
        %4159 = vmatpush1.msra.mxu0 %v4158
        %4160 = vmatprep.subr.mxu0 0.0
        %4161 = vmatpush2.msra.mxu0 0.0
        %4162 = vmatprep.subr.mxu0 0.0
        %4163 = vmatpush2.msra.mxu0 0.0
        %4164 = vmatprep.subr.mxu0 0.0
        %4165 = vmatpush2.msra.mxu0 0.0
        %4166 = vmatprep.subr.mxu0 0.0
        %4167 = vmatpush2.msra.mxu0 0.0
        %4168 = vmatprep.subr.mxu0 0.0
        %4169 = vmatpush2.msra.mxu0 0.0
        %4170 = vmatprep.subr.mxu0 0.0
        %4171 = vmatpush2.msra.mxu0 0.0
        %4172 = vmatprep.subr.mxu0 0.0
        %4173 = vmatpush2.msra.mxu0 0.0
        %4174 = vmatprep.subr.mxu0 0.0
        %4175 = vmatpush2.msra.mxu0 0.0
        %4176 = vmatprep.subr.mxu0 0.0
        %4177 = vmatpush2.msra.mxu0 0.0
        %4178 = vmatprep.subr.mxu0 0.0
        %4179 = vmatpush2.msra.mxu0 0.0
        %4180 = vmatprep.subr.mxu0 0.0
        %4181 = vmatpush2.msra.mxu0 0.0
        %4182 = vmatprep.subr.mxu0 0.0
        %4183 = vmatpush2.msra.mxu0 0.0
        %4184 = vmatprep.subr.mxu0 0.0
        %4185 = vmatpush2.msra.mxu0 0.0
        %4186 = vmatprep.subr.mxu0 0.0
        %4187 = vmatpush2.msra.mxu0 0.0
        %4188 = vmatprep.subr.mxu0 0.0
        %4189 = vmatpush2.msra.mxu0 0.0
        %4190 = vmatprep.subr.mxu0 0.0
        %4191 = vmatpush2.msra.mxu0 0.0
        %4192 = vmatprep.mubr.f32.mxu0 0.0
        %v4193 = vand.u32 %v4122, 4294901760
        %v4194 = vsub.f32 %v4122, %v4193
        %v4195 = vand.u32 %v4194, 4294901760
        %v4196 = vsub.f32 %v4194, %v4195
        %v4197 = vand.u32 %v4196, 4294901760
        %4198 = vmatmul.mubr.f32.gmra.mxu0 %v4197
        %v4199 = vpop.f32.mrf.mxu0
        %v4200 = vadd.f32 0.0, %v4199
        %v4201 = vpop.f32.mrf.mxu0
        %4202 = vdwg.mxu0
        %4203 = vmatprep.subr.mxu0 0.0
        %4204 = vmatpush1.msra.mxu0 0.0
        %4205 = vmatprep.subr.mxu0 0.0
        %4206 = vmatpush1.msra.mxu0 0.0
        %4207 = vmatprep.subr.mxu0 0.0
        %4208 = vmatpush1.msra.mxu0 0.0
        %4209 = vmatprep.subr.mxu0 0.0
        %4210 = vmatpush1.msra.mxu0 0.0
        %4211 = vmatprep.subr.mxu0 0.0
        %4212 = vmatpush1.msra.mxu0 0.0
        %4213 = vmatprep.subr.mxu0 0.0
        %4214 = vmatpush1.msra.mxu0 0.0
        %4215 = vmatprep.subr.mxu0 0.0
        %4216 = vmatpush1.msra.mxu0 0.0
        %4217 = vmatprep.subr.mxu0 0.0
        %4218 = vmatpush1.msra.mxu0 0.0
        %4219 = vmatprep.subr.mxu0 0.0
        %4220 = vmatpush1.msra.mxu0 0.0
        %4221 = vmatprep.subr.mxu0 0.0
        %4222 = vmatpush1.msra.mxu0 0.0
        %4223 = vmatprep.subr.mxu0 0.0
        %4224 = vmatpush1.msra.mxu0 0.0
        %4225 = vmatprep.subr.mxu0 0.0
        %4226 = vmatpush1.msra.mxu0 0.0
        %4227 = vmatprep.subr.mxu0 0.0
        %v4228 = vand.u32 %v280, 4294901760
        %v4229 = vsub.f32 %v280, %v4228
        %v4230 = vand.u32 %v4229, 4294901760
        %v4231 = vsub.f32 %v4229, %v4230
        %v4232 = vand.u32 %v4231, 4294901760
        %4233 = vmatpush1.msra.mxu0 %v4232
        %4234 = vmatprep.subr.mxu0 0.0
        %v4235 = vand.u32 %v279, 4294901760
        %v4236 = vsub.f32 %v279, %v4235
        %v4237 = vand.u32 %v4236, 4294901760
        %v4238 = vsub.f32 %v4236, %v4237
        %v4239 = vand.u32 %v4238, 4294901760
        %4240 = vmatpush1.msra.mxu0 %v4239
        %4241 = vmatprep.subr.mxu0 0.0
        %v4242 = vand.u32 %v278, 4294901760
        %v4243 = vsub.f32 %v278, %v4242
        %v4244 = vand.u32 %v4243, 4294901760
        %v4245 = vsub.f32 %v4243, %v4244
        %v4246 = vand.u32 %v4245, 4294901760
        %4247 = vmatpush1.msra.mxu0 %v4246
        %4248 = vmatprep.subr.mxu0 0.0
        %v4249 = vand.u32 %v277, 4294901760
        %v4250 = vsub.f32 %v277, %v4249
        %v4251 = vand.u32 %v4250, 4294901760
        %v4252 = vsub.f32 %v4250, %v4251
        %v4253 = vand.u32 %v4252, 4294901760
        %4254 = vmatpush1.msra.mxu0 %v4253
        %4255 = vmatprep.subr.mxu0 0.0
        %4256 = vmatpush2.msra.mxu0 0.0
        %4257 = vmatprep.subr.mxu0 0.0
        %4258 = vmatpush2.msra.mxu0 0.0
        %4259 = vmatprep.subr.mxu0 0.0
        %4260 = vmatpush2.msra.mxu0 0.0
        %4261 = vmatprep.subr.mxu0 0.0
        %4262 = vmatpush2.msra.mxu0 0.0
        %4263 = vmatprep.subr.mxu0 0.0
        %4264 = vmatpush2.msra.mxu0 0.0
        %4265 = vmatprep.subr.mxu0 0.0
        %4266 = vmatpush2.msra.mxu0 0.0
        %4267 = vmatprep.subr.mxu0 0.0
        %4268 = vmatpush2.msra.mxu0 0.0
        %4269 = vmatprep.subr.mxu0 0.0
        %4270 = vmatpush2.msra.mxu0 0.0
        %4271 = vmatprep.subr.mxu0 0.0
        %4272 = vmatpush2.msra.mxu0 0.0
        %4273 = vmatprep.subr.mxu0 0.0
        %4274 = vmatpush2.msra.mxu0 0.0
        %4275 = vmatprep.subr.mxu0 0.0
        %4276 = vmatpush2.msra.mxu0 0.0
        %4277 = vmatprep.subr.mxu0 0.0
        %4278 = vmatpush2.msra.mxu0 0.0
        %4279 = vmatprep.subr.mxu0 0.0
        %4280 = vmatpush2.msra.mxu0 0.0
        %4281 = vmatprep.subr.mxu0 0.0
        %4282 = vmatpush2.msra.mxu0 0.0
        %4283 = vmatprep.subr.mxu0 0.0
        %4284 = vmatpush2.msra.mxu0 0.0
        %4285 = vmatprep.subr.mxu0 0.0
        %4286 = vmatpush2.msra.mxu0 0.0
        %4287 = vmatprep.mubr.f32.mxu0 0.0
        %v4288 = vand.u32 %v4122, 4294901760
        %4289 = vmatmul.mubr.f32.gmra.mxu0 %v4288
        %v4290 = vpop.f32.mrf.mxu0
        %v4291 = vadd.f32 %v4200, %v4290
        %v4292 = vpop.f32.mrf.mxu0
        %4293 = vdwg.mxu0
        %4294 = vmatprep.subr.mxu0 0.0
        %4295 = vmatpush1.msra.mxu0 0.0
        %4296 = vmatprep.subr.mxu0 0.0
        %4297 = vmatpush1.msra.mxu0 0.0
        %4298 = vmatprep.subr.mxu0 0.0
        %4299 = vmatpush1.msra.mxu0 0.0
        %4300 = vmatprep.subr.mxu0 0.0
        %4301 = vmatpush1.msra.mxu0 0.0
        %4302 = vmatprep.subr.mxu0 0.0
        %4303 = vmatpush1.msra.mxu0 0.0
        %4304 = vmatprep.subr.mxu0 0.0
        %4305 = vmatpush1.msra.mxu0 0.0
        %4306 = vmatprep.subr.mxu0 0.0
        %4307 = vmatpush1.msra.mxu0 0.0
        %4308 = vmatprep.subr.mxu0 0.0
        %4309 = vmatpush1.msra.mxu0 0.0
        %4310 = vmatprep.subr.mxu0 0.0
        %4311 = vmatpush1.msra.mxu0 0.0
        %4312 = vmatprep.subr.mxu0 0.0
        %4313 = vmatpush1.msra.mxu0 0.0
        %4314 = vmatprep.subr.mxu0 0.0
        %4315 = vmatpush1.msra.mxu0 0.0
        %4316 = vmatprep.subr.mxu0 0.0
        %4317 = vmatpush1.msra.mxu0 0.0
        %4318 = vmatprep.subr.mxu0 0.0
        %v4319 = vand.u32 %v280, 4294901760
        %v4320 = vsub.f32 %v280, %v4319
        %4321 = vmatpush1.msra.mxu0 %v4320
        %4322 = vmatprep.subr.mxu0 0.0
        %v4323 = vand.u32 %v279, 4294901760
        %v4324 = vsub.f32 %v279, %v4323
        %4325 = vmatpush1.msra.mxu0 %v4324
        %4326 = vmatprep.subr.mxu0 0.0
        %v4327 = vand.u32 %v278, 4294901760
        %v4328 = vsub.f32 %v278, %v4327
        %4329 = vmatpush1.msra.mxu0 %v4328
        %4330 = vmatprep.subr.mxu0 0.0
        %v4331 = vand.u32 %v277, 4294901760
        %v4332 = vsub.f32 %v277, %v4331
        %4333 = vmatpush1.msra.mxu0 %v4332
        %4334 = vmatprep.subr.mxu0 0.0
        %4335 = vmatpush2.msra.mxu0 0.0
        %4336 = vmatprep.subr.mxu0 0.0
        %4337 = vmatpush2.msra.mxu0 0.0
        %4338 = vmatprep.subr.mxu0 0.0
        %4339 = vmatpush2.msra.mxu0 0.0
        %4340 = vmatprep.subr.mxu0 0.0
        %4341 = vmatpush2.msra.mxu0 0.0
        %4342 = vmatprep.subr.mxu0 0.0
        %4343 = vmatpush2.msra.mxu0 0.0
        %4344 = vmatprep.subr.mxu0 0.0
        %4345 = vmatpush2.msra.mxu0 0.0
        %4346 = vmatprep.subr.mxu0 0.0
        %4347 = vmatpush2.msra.mxu0 0.0
        %4348 = vmatprep.subr.mxu0 0.0
        %4349 = vmatpush2.msra.mxu0 0.0
        %4350 = vmatprep.subr.mxu0 0.0
        %4351 = vmatpush2.msra.mxu0 0.0
        %4352 = vmatprep.subr.mxu0 0.0
        %4353 = vmatpush2.msra.mxu0 0.0
        %4354 = vmatprep.subr.mxu0 0.0
        %4355 = vmatpush2.msra.mxu0 0.0
        %4356 = vmatprep.subr.mxu0 0.0
        %4357 = vmatpush2.msra.mxu0 0.0
        %4358 = vmatprep.subr.mxu0 0.0
        %4359 = vmatpush2.msra.mxu0 0.0
        %4360 = vmatprep.subr.mxu0 0.0
        %4361 = vmatpush2.msra.mxu0 0.0
        %4362 = vmatprep.subr.mxu0 0.0
        %4363 = vmatpush2.msra.mxu0 0.0
        %4364 = vmatprep.subr.mxu0 0.0
        %4365 = vmatpush2.msra.mxu0 0.0
        %4366 = vmatprep.mubr.f32.mxu0 0.0
        %v4367 = vand.u32 %v4122, 4294901760
        %v4368 = vsub.f32 %v4122, %v4367
        %4369 = vmatmul.mubr.f32.gmra.mxu0 %v4368
        %v4370 = vpop.f32.mrf.mxu0
        %v4371 = vadd.f32 %v4291, %v4370
        %v4372 = vpop.f32.mrf.mxu0
        %4373 = vdwg.mxu0
        %4374 = vmatprep.subr.mxu0 0.0
        %4375 = vmatpush1.msra.mxu0 0.0
        %4376 = vmatprep.subr.mxu0 0.0
        %4377 = vmatpush1.msra.mxu0 0.0
        %4378 = vmatprep.subr.mxu0 0.0
        %4379 = vmatpush1.msra.mxu0 0.0
        %4380 = vmatprep.subr.mxu0 0.0
        %4381 = vmatpush1.msra.mxu0 0.0
        %4382 = vmatprep.subr.mxu0 0.0
        %4383 = vmatpush1.msra.mxu0 0.0
        %4384 = vmatprep.subr.mxu0 0.0
        %4385 = vmatpush1.msra.mxu0 0.0
        %4386 = vmatprep.subr.mxu0 0.0
        %4387 = vmatpush1.msra.mxu0 0.0
        %4388 = vmatprep.subr.mxu0 0.0
        %4389 = vmatpush1.msra.mxu0 0.0
        %4390 = vmatprep.subr.mxu0 0.0
        %4391 = vmatpush1.msra.mxu0 0.0
        %4392 = vmatprep.subr.mxu0 0.0
        %4393 = vmatpush1.msra.mxu0 0.0
        %4394 = vmatprep.subr.mxu0 0.0
        %4395 = vmatpush1.msra.mxu0 0.0
        %4396 = vmatprep.subr.mxu0 0.0
        %4397 = vmatpush1.msra.mxu0 0.0
        %4398 = vmatprep.subr.mxu0 0.0
        %v4399 = vand.u32 %v280, 4294901760
        %4400 = vmatpush1.msra.mxu0 %v4399
        %4401 = vmatprep.subr.mxu0 0.0
        %v4402 = vand.u32 %v279, 4294901760
        %4403 = vmatpush1.msra.mxu0 %v4402
        %4404 = vmatprep.subr.mxu0 0.0
        %v4405 = vand.u32 %v278, 4294901760
        %4406 = vmatpush1.msra.mxu0 %v4405
        %4407 = vmatprep.subr.mxu0 0.0
        %v4408 = vand.u32 %v277, 4294901760
        %4409 = vmatpush1.msra.mxu0 %v4408
        %4410 = vmatprep.subr.mxu0 0.0
        %4411 = vmatpush2.msra.mxu0 0.0
        %4412 = vmatprep.subr.mxu0 0.0
        %4413 = vmatpush2.msra.mxu0 0.0
        %4414 = vmatprep.subr.mxu0 0.0
        %4415 = vmatpush2.msra.mxu0 0.0
        %4416 = vmatprep.subr.mxu0 0.0
        %4417 = vmatpush2.msra.mxu0 0.0
        %4418 = vmatprep.subr.mxu0 0.0
        %4419 = vmatpush2.msra.mxu0 0.0
        %4420 = vmatprep.subr.mxu0 0.0
        %4421 = vmatpush2.msra.mxu0 0.0
        %4422 = vmatprep.subr.mxu0 0.0
        %4423 = vmatpush2.msra.mxu0 0.0
        %4424 = vmatprep.subr.mxu0 0.0
        %4425 = vmatpush2.msra.mxu0 0.0
        %4426 = vmatprep.subr.mxu0 0.0
        %4427 = vmatpush2.msra.mxu0 0.0
        %4428 = vmatprep.subr.mxu0 0.0
        %4429 = vmatpush2.msra.mxu0 0.0
        %4430 = vmatprep.subr.mxu0 0.0
        %4431 = vmatpush2.msra.mxu0 0.0
        %4432 = vmatprep.subr.mxu0 0.0
        %4433 = vmatpush2.msra.mxu0 0.0
        %4434 = vmatprep.subr.mxu0 0.0
        %4435 = vmatpush2.msra.mxu0 0.0
        %4436 = vmatprep.subr.mxu0 0.0
        %4437 = vmatpush2.msra.mxu0 0.0
        %4438 = vmatprep.subr.mxu0 0.0
        %4439 = vmatpush2.msra.mxu0 0.0
        %4440 = vmatprep.subr.mxu0 0.0
        %4441 = vmatpush2.msra.mxu0 0.0
        %4442 = vmatprep.mubr.f32.mxu0 0.0
        %v4443 = vand.u32 %v4122, 4294901760
        %v4444 = vsub.f32 %v4122, %v4443
        %v4445 = vand.u32 %v4444, 4294901760
        %4446 = vmatmul.mubr.f32.gmra.mxu0 %v4445
        %v4447 = vpop.f32.mrf.mxu0
        %v4448 = vadd.f32 %v4371, %v4447
        %v4449 = vpop.f32.mrf.mxu0
        %4450 = vdwg.mxu0
        %4451 = vmatprep.subr.mxu0 0.0
        %4452 = vmatpush1.msra.mxu0 0.0
        %4453 = vmatprep.subr.mxu0 0.0
        %4454 = vmatpush1.msra.mxu0 0.0
        %4455 = vmatprep.subr.mxu0 0.0
        %4456 = vmatpush1.msra.mxu0 0.0
        %4457 = vmatprep.subr.mxu0 0.0
        %4458 = vmatpush1.msra.mxu0 0.0
        %4459 = vmatprep.subr.mxu0 0.0
        %4460 = vmatpush1.msra.mxu0 0.0
        %4461 = vmatprep.subr.mxu0 0.0
        %4462 = vmatpush1.msra.mxu0 0.0
        %4463 = vmatprep.subr.mxu0 0.0
        %4464 = vmatpush1.msra.mxu0 0.0
        %4465 = vmatprep.subr.mxu0 0.0
        %4466 = vmatpush1.msra.mxu0 0.0
        %4467 = vmatprep.subr.mxu0 0.0
        %4468 = vmatpush1.msra.mxu0 0.0
        %4469 = vmatprep.subr.mxu0 0.0
        %4470 = vmatpush1.msra.mxu0 0.0
        %4471 = vmatprep.subr.mxu0 0.0
        %4472 = vmatpush1.msra.mxu0 0.0
        %4473 = vmatprep.subr.mxu0 0.0
        %4474 = vmatpush1.msra.mxu0 0.0
        %4475 = vmatprep.subr.mxu0 0.0
        %v4476 = vand.u32 %v280, 4294901760
        %v4477 = vsub.f32 %v280, %v4476
        %v4478 = vand.u32 %v4477, 4294901760
        %4479 = vmatpush1.msra.mxu0 %v4478
        %4480 = vmatprep.subr.mxu0 0.0
        %v4481 = vand.u32 %v279, 4294901760
        %v4482 = vsub.f32 %v279, %v4481
        %v4483 = vand.u32 %v4482, 4294901760
        %4484 = vmatpush1.msra.mxu0 %v4483
        %4485 = vmatprep.subr.mxu0 0.0
        %v4486 = vand.u32 %v278, 4294901760
        %v4487 = vsub.f32 %v278, %v4486
        %v4488 = vand.u32 %v4487, 4294901760
        %4489 = vmatpush1.msra.mxu0 %v4488
        %4490 = vmatprep.subr.mxu0 0.0
        %v4491 = vand.u32 %v277, 4294901760
        %v4492 = vsub.f32 %v277, %v4491
        %v4493 = vand.u32 %v4492, 4294901760
        %4494 = vmatpush1.msra.mxu0 %v4493
        %4495 = vmatprep.subr.mxu0 0.0
        %4496 = vmatpush2.msra.mxu0 0.0
        %4497 = vmatprep.subr.mxu0 0.0
        %4498 = vmatpush2.msra.mxu0 0.0
        %4499 = vmatprep.subr.mxu0 0.0
        %4500 = vmatpush2.msra.mxu0 0.0
        %4501 = vmatprep.subr.mxu0 0.0
        %4502 = vmatpush2.msra.mxu0 0.0
        %4503 = vmatprep.subr.mxu0 0.0
        %4504 = vmatpush2.msra.mxu0 0.0
        %4505 = vmatprep.subr.mxu0 0.0
        %4506 = vmatpush2.msra.mxu0 0.0
        %4507 = vmatprep.subr.mxu0 0.0
        %4508 = vmatpush2.msra.mxu0 0.0
        %4509 = vmatprep.subr.mxu0 0.0
        %4510 = vmatpush2.msra.mxu0 0.0
        %4511 = vmatprep.subr.mxu0 0.0
        %4512 = vmatpush2.msra.mxu0 0.0
        %4513 = vmatprep.subr.mxu0 0.0
        %4514 = vmatpush2.msra.mxu0 0.0
        %4515 = vmatprep.subr.mxu0 0.0
        %4516 = vmatpush2.msra.mxu0 0.0
        %4517 = vmatprep.subr.mxu0 0.0
        %4518 = vmatpush2.msra.mxu0 0.0
        %4519 = vmatprep.subr.mxu0 0.0
        %4520 = vmatpush2.msra.mxu0 0.0
        %4521 = vmatprep.subr.mxu0 0.0
        %4522 = vmatpush2.msra.mxu0 0.0
        %4523 = vmatprep.subr.mxu0 0.0
        %4524 = vmatpush2.msra.mxu0 0.0
        %4525 = vmatprep.subr.mxu0 0.0
        %4526 = vmatpush2.msra.mxu0 0.0
        %4527 = vmatprep.mubr.f32.mxu0 0.0
        %v4528 = vand.u32 %v4122, 4294901760
        %4529 = vmatmul.mubr.f32.gmra.mxu0 %v4528
        %v4530 = vpop.f32.mrf.mxu0
        %v4531 = vadd.f32 %v4448, %v4530
        %v4532 = vpop.f32.mrf.mxu0
        %4533 = vdwg.mxu0
        %4534 = vmatprep.subr.mxu0 0.0
        %4535 = vmatpush1.msra.mxu0 0.0
        %4536 = vmatprep.subr.mxu0 0.0
        %4537 = vmatpush1.msra.mxu0 0.0
        %4538 = vmatprep.subr.mxu0 0.0
        %4539 = vmatpush1.msra.mxu0 0.0
        %4540 = vmatprep.subr.mxu0 0.0
        %4541 = vmatpush1.msra.mxu0 0.0
        %4542 = vmatprep.subr.mxu0 0.0
        %4543 = vmatpush1.msra.mxu0 0.0
        %4544 = vmatprep.subr.mxu0 0.0
        %4545 = vmatpush1.msra.mxu0 0.0
        %4546 = vmatprep.subr.mxu0 0.0
        %4547 = vmatpush1.msra.mxu0 0.0
        %4548 = vmatprep.subr.mxu0 0.0
        %4549 = vmatpush1.msra.mxu0 0.0
        %4550 = vmatprep.subr.mxu0 0.0
        %4551 = vmatpush1.msra.mxu0 0.0
        %4552 = vmatprep.subr.mxu0 0.0
        %4553 = vmatpush1.msra.mxu0 0.0
        %4554 = vmatprep.subr.mxu0 0.0
        %4555 = vmatpush1.msra.mxu0 0.0
        %4556 = vmatprep.subr.mxu0 0.0
        %4557 = vmatpush1.msra.mxu0 0.0
        %4558 = vmatprep.subr.mxu0 0.0
        %v4559 = vand.u32 %v280, 4294901760
        %4560 = vmatpush1.msra.mxu0 %v4559
        %4561 = vmatprep.subr.mxu0 0.0
        %v4562 = vand.u32 %v279, 4294901760
        %4563 = vmatpush1.msra.mxu0 %v4562
        %4564 = vmatprep.subr.mxu0 0.0
        %v4565 = vand.u32 %v278, 4294901760
        %4566 = vmatpush1.msra.mxu0 %v4565
        %4567 = vmatprep.subr.mxu0 0.0
        %v4568 = vand.u32 %v277, 4294901760
        %4569 = vmatpush1.msra.mxu0 %v4568
        %4570 = vmatprep.subr.mxu0 0.0
        %4571 = vmatpush2.msra.mxu0 0.0
        %4572 = vmatprep.subr.mxu0 0.0
        %4573 = vmatpush2.msra.mxu0 0.0
        %4574 = vmatprep.subr.mxu0 0.0
        %4575 = vmatpush2.msra.mxu0 0.0
        %4576 = vmatprep.subr.mxu0 0.0
        %4577 = vmatpush2.msra.mxu0 0.0
        %4578 = vmatprep.subr.mxu0 0.0
        %4579 = vmatpush2.msra.mxu0 0.0
        %4580 = vmatprep.subr.mxu0 0.0
        %4581 = vmatpush2.msra.mxu0 0.0
        %4582 = vmatprep.subr.mxu0 0.0
        %4583 = vmatpush2.msra.mxu0 0.0
        %4584 = vmatprep.subr.mxu0 0.0
        %4585 = vmatpush2.msra.mxu0 0.0
        %4586 = vmatprep.subr.mxu0 0.0
        %4587 = vmatpush2.msra.mxu0 0.0
        %4588 = vmatprep.subr.mxu0 0.0
        %4589 = vmatpush2.msra.mxu0 0.0
        %4590 = vmatprep.subr.mxu0 0.0
        %4591 = vmatpush2.msra.mxu0 0.0
        %4592 = vmatprep.subr.mxu0 0.0
        %4593 = vmatpush2.msra.mxu0 0.0
        %4594 = vmatprep.subr.mxu0 0.0
        %4595 = vmatpush2.msra.mxu0 0.0
        %4596 = vmatprep.subr.mxu0 0.0
        %4597 = vmatpush2.msra.mxu0 0.0
        %4598 = vmatprep.subr.mxu0 0.0
        %4599 = vmatpush2.msra.mxu0 0.0
        %4600 = vmatprep.subr.mxu0 0.0
        %4601 = vmatpush2.msra.mxu0 0.0
        %4602 = vmatprep.mubr.f32.mxu0 0.0
        %v4603 = vand.u32 %v4122, 4294901760
        %4604 = vmatmul.mubr.f32.gmra.mxu0 %v4603
        %v4605 = vpop.f32.mrf.mxu0
        %v4606 = vadd.f32 %v4531, %v4605
        %v4607 = vpop.f32.mrf.mxu0
        %4608 = vdwg.mxu0
        %v4609 = vld [vmem:[#allocation2 + $0x40] sm:$0xff]
        %v4610 = vld [vmem:[#allocation2 + $0x48] sm:$0xff]
        %v4612 = vsel %vm1275, %v4606, 0
        %4614 = vmatprep.subr.mxu0 0.0
        %4615 = vmatpush1.msra.mxu0 0.0
        %4616 = vmatprep.subr.mxu0 0.0
        %4617 = vmatpush1.msra.mxu0 0.0
        %4618 = vmatprep.subr.mxu0 0.0
        %4619 = vmatpush1.msra.mxu0 0.0
        %4620 = vmatprep.subr.mxu0 0.0
        %4621 = vmatpush1.msra.mxu0 0.0
        %4622 = vmatprep.subr.mxu0 0.0
        %4623 = vmatpush1.msra.mxu0 0.0
        %4624 = vmatprep.subr.mxu0 0.0
        %4625 = vmatpush1.msra.mxu0 0.0
        %4626 = vmatprep.subr.mxu0 0.0
        %4627 = vmatpush1.msra.mxu0 0.0
        %4628 = vmatprep.subr.mxu0 0.0
        %4629 = vmatpush1.msra.mxu0 0.0
        %4630 = vmatprep.subr.mxu0 0.0
        %4631 = vmatpush1.msra.mxu0 0.0
        %4632 = vmatprep.subr.mxu0 0.0
        %4633 = vmatpush1.msra.mxu0 0.0
        %4634 = vmatprep.subr.mxu0 0.0
        %4635 = vmatpush1.msra.mxu0 0.0
        %4636 = vmatprep.subr.mxu0 0.0
        %4637 = vmatpush1.msra.mxu0 0.0
        %4638 = vmatprep.subr.mxu0 0.0
        %4639 = vmatpush1.msra.mxu0 0.0
        %4640 = vmatprep.subr.mxu0 0.0
        %4641 = vmatpush1.msra.mxu0 0.0
        %4642 = vmatprep.subr.mxu0 0.0
        %v4643 = vand.u32 %v4610, 4294901760
        %4644 = vmatpush1.msra.mxu0 %v4643
        %4645 = vmatprep.subr.mxu0 0.0
        %v4646 = vand.u32 %v4609, 4294901760
        %4647 = vmatpush1.msra.mxu0 %v4646
        %4648 = vmatprep.subr.mxu0 0.0
        %4649 = vmatpush2.msra.mxu0 0.0
        %4650 = vmatprep.subr.mxu0 0.0
        %4651 = vmatpush2.msra.mxu0 0.0
        %4652 = vmatprep.subr.mxu0 0.0
        %4653 = vmatpush2.msra.mxu0 0.0
        %4654 = vmatprep.subr.mxu0 0.0
        %4655 = vmatpush2.msra.mxu0 0.0
        %4656 = vmatprep.subr.mxu0 0.0
        %4657 = vmatpush2.msra.mxu0 0.0
        %4658 = vmatprep.subr.mxu0 0.0
        %4659 = vmatpush2.msra.mxu0 0.0
        %4660 = vmatprep.subr.mxu0 0.0
        %4661 = vmatpush2.msra.mxu0 0.0
        %4662 = vmatprep.subr.mxu0 0.0
        %4663 = vmatpush2.msra.mxu0 0.0
        %4664 = vmatprep.subr.mxu0 0.0
        %4665 = vmatpush2.msra.mxu0 0.0
        %4666 = vmatprep.subr.mxu0 0.0
        %4667 = vmatpush2.msra.mxu0 0.0
        %4668 = vmatprep.subr.mxu0 0.0
        %4669 = vmatpush2.msra.mxu0 0.0
        %4670 = vmatprep.subr.mxu0 0.0
        %4671 = vmatpush2.msra.mxu0 0.0
        %4672 = vmatprep.subr.mxu0 0.0
        %4673 = vmatpush2.msra.mxu0 0.0
        %4674 = vmatprep.subr.mxu0 0.0
        %4675 = vmatpush2.msra.mxu0 0.0
        %4676 = vmatprep.subr.mxu0 0.0
        %4677 = vmatpush2.msra.mxu0 0.0
        %4678 = vmatprep.subr.mxu0 0.0
        %4679 = vmatpush2.msra.mxu0 0.0
        %4680 = vmatprep.mubr.f32.mxu0 0.0
        %v4681 = vand.u32 %v4612, 4294901760
        %v4682 = vsub.f32 %v4612, %v4681
        %v4683 = vand.u32 %v4682, 4294901760
        %v4684 = vsub.f32 %v4682, %v4683
        %v4685 = vand.u32 %v4684, 4294901760
        %4686 = vmatmul.mubr.f32.gmra.mxu0 %v4685
        %v4687 = vpop.f32.mrf.mxu0
        %v4688 = vadd.f32 0.0, %v4687
        %v4689 = vpop.f32.mrf.mxu0
        %4690 = vdwg.mxu0
        %4691 = vmatprep.subr.mxu0 0.0
        %4692 = vmatpush1.msra.mxu0 0.0
        %4693 = vmatprep.subr.mxu0 0.0
        %4694 = vmatpush1.msra.mxu0 0.0
        %4695 = vmatprep.subr.mxu0 0.0
        %4696 = vmatpush1.msra.mxu0 0.0
        %4697 = vmatprep.subr.mxu0 0.0
        %4698 = vmatpush1.msra.mxu0 0.0
        %4699 = vmatprep.subr.mxu0 0.0
        %4700 = vmatpush1.msra.mxu0 0.0
        %4701 = vmatprep.subr.mxu0 0.0
        %4702 = vmatpush1.msra.mxu0 0.0
        %4703 = vmatprep.subr.mxu0 0.0
        %4704 = vmatpush1.msra.mxu0 0.0
        %4705 = vmatprep.subr.mxu0 0.0
        %4706 = vmatpush1.msra.mxu0 0.0
        %4707 = vmatprep.subr.mxu0 0.0
        %4708 = vmatpush1.msra.mxu0 0.0
        %4709 = vmatprep.subr.mxu0 0.0
        %4710 = vmatpush1.msra.mxu0 0.0
        %4711 = vmatprep.subr.mxu0 0.0
        %4712 = vmatpush1.msra.mxu0 0.0
        %4713 = vmatprep.subr.mxu0 0.0
        %4714 = vmatpush1.msra.mxu0 0.0
        %4715 = vmatprep.subr.mxu0 0.0
        %4716 = vmatpush1.msra.mxu0 0.0
        %4717 = vmatprep.subr.mxu0 0.0
        %4718 = vmatpush1.msra.mxu0 0.0
        %4719 = vmatprep.subr.mxu0 0.0
        %v4720 = vand.u32 %v4610, 4294901760
        %v4721 = vsub.f32 %v4610, %v4720
        %v4722 = vand.u32 %v4721, 4294901760
        %v4723 = vsub.f32 %v4721, %v4722
        %v4724 = vand.u32 %v4723, 4294901760
        %4725 = vmatpush1.msra.mxu0 %v4724
        %4726 = vmatprep.subr.mxu0 0.0
        %v4727 = vand.u32 %v4609, 4294901760
        %v4728 = vsub.f32 %v4609, %v4727
        %v4729 = vand.u32 %v4728, 4294901760
        %v4730 = vsub.f32 %v4728, %v4729
        %v4731 = vand.u32 %v4730, 4294901760
        %4732 = vmatpush1.msra.mxu0 %v4731
        %4733 = vmatprep.subr.mxu0 0.0
        %4734 = vmatpush2.msra.mxu0 0.0
        %4735 = vmatprep.subr.mxu0 0.0
        %4736 = vmatpush2.msra.mxu0 0.0
        %4737 = vmatprep.subr.mxu0 0.0
        %4738 = vmatpush2.msra.mxu0 0.0
        %4739 = vmatprep.subr.mxu0 0.0
        %4740 = vmatpush2.msra.mxu0 0.0
        %4741 = vmatprep.subr.mxu0 0.0
        %4742 = vmatpush2.msra.mxu0 0.0
        %4743 = vmatprep.subr.mxu0 0.0
        %4744 = vmatpush2.msra.mxu0 0.0
        %4745 = vmatprep.subr.mxu0 0.0
        %4746 = vmatpush2.msra.mxu0 0.0
        %4747 = vmatprep.subr.mxu0 0.0
        %4748 = vmatpush2.msra.mxu0 0.0
        %4749 = vmatprep.subr.mxu0 0.0
        %4750 = vmatpush2.msra.mxu0 0.0
        %4751 = vmatprep.subr.mxu0 0.0
        %4752 = vmatpush2.msra.mxu0 0.0
        %4753 = vmatprep.subr.mxu0 0.0
        %4754 = vmatpush2.msra.mxu0 0.0
        %4755 = vmatprep.subr.mxu0 0.0
        %4756 = vmatpush2.msra.mxu0 0.0
        %4757 = vmatprep.subr.mxu0 0.0
        %4758 = vmatpush2.msra.mxu0 0.0
        %4759 = vmatprep.subr.mxu0 0.0
        %4760 = vmatpush2.msra.mxu0 0.0
        %4761 = vmatprep.subr.mxu0 0.0
        %4762 = vmatpush2.msra.mxu0 0.0
        %4763 = vmatprep.subr.mxu0 0.0
        %4764 = vmatpush2.msra.mxu0 0.0
        %4765 = vmatprep.mubr.f32.mxu0 0.0
        %v4766 = vand.u32 %v4612, 4294901760
        %4767 = vmatmul.mubr.f32.gmra.mxu0 %v4766
        %v4768 = vpop.f32.mrf.mxu0
        %v4769 = vadd.f32 %v4688, %v4768
        %v4770 = vpop.f32.mrf.mxu0
        %4771 = vdwg.mxu0
        %4772 = vmatprep.subr.mxu0 0.0
        %4773 = vmatpush1.msra.mxu0 0.0
        %4774 = vmatprep.subr.mxu0 0.0
        %4775 = vmatpush1.msra.mxu0 0.0
        %4776 = vmatprep.subr.mxu0 0.0
        %4777 = vmatpush1.msra.mxu0 0.0
        %4778 = vmatprep.subr.mxu0 0.0
        %4779 = vmatpush1.msra.mxu0 0.0
        %4780 = vmatprep.subr.mxu0 0.0
        %4781 = vmatpush1.msra.mxu0 0.0
        %4782 = vmatprep.subr.mxu0 0.0
        %4783 = vmatpush1.msra.mxu0 0.0
        %4784 = vmatprep.subr.mxu0 0.0
        %4785 = vmatpush1.msra.mxu0 0.0
        %4786 = vmatprep.subr.mxu0 0.0
        %4787 = vmatpush1.msra.mxu0 0.0
        %4788 = vmatprep.subr.mxu0 0.0
        %4789 = vmatpush1.msra.mxu0 0.0
        %4790 = vmatprep.subr.mxu0 0.0
        %4791 = vmatpush1.msra.mxu0 0.0
        %4792 = vmatprep.subr.mxu0 0.0
        %4793 = vmatpush1.msra.mxu0 0.0
        %4794 = vmatprep.subr.mxu0 0.0
        %4795 = vmatpush1.msra.mxu0 0.0
        %4796 = vmatprep.subr.mxu0 0.0
        %4797 = vmatpush1.msra.mxu0 0.0
        %4798 = vmatprep.subr.mxu0 0.0
        %4799 = vmatpush1.msra.mxu0 0.0
        %4800 = vmatprep.subr.mxu0 0.0
        %v4801 = vand.u32 %v4610, 4294901760
        %v4802 = vsub.f32 %v4610, %v4801
        %4803 = vmatpush1.msra.mxu0 %v4802
        %4804 = vmatprep.subr.mxu0 0.0
        %v4805 = vand.u32 %v4609, 4294901760
        %v4806 = vsub.f32 %v4609, %v4805
        %4807 = vmatpush1.msra.mxu0 %v4806
        %4808 = vmatprep.subr.mxu0 0.0
        %4809 = vmatpush2.msra.mxu0 0.0
        %4810 = vmatprep.subr.mxu0 0.0
        %4811 = vmatpush2.msra.mxu0 0.0
        %4812 = vmatprep.subr.mxu0 0.0
        %4813 = vmatpush2.msra.mxu0 0.0
        %4814 = vmatprep.subr.mxu0 0.0
        %4815 = vmatpush2.msra.mxu0 0.0
        %4816 = vmatprep.subr.mxu0 0.0
        %4817 = vmatpush2.msra.mxu0 0.0
        %4818 = vmatprep.subr.mxu0 0.0
        %4819 = vmatpush2.msra.mxu0 0.0
        %4820 = vmatprep.subr.mxu0 0.0
        %4821 = vmatpush2.msra.mxu0 0.0
        %4822 = vmatprep.subr.mxu0 0.0
        %4823 = vmatpush2.msra.mxu0 0.0
        %4824 = vmatprep.subr.mxu0 0.0
        %4825 = vmatpush2.msra.mxu0 0.0
        %4826 = vmatprep.subr.mxu0 0.0
        %4827 = vmatpush2.msra.mxu0 0.0
        %4828 = vmatprep.subr.mxu0 0.0
        %4829 = vmatpush2.msra.mxu0 0.0
        %4830 = vmatprep.subr.mxu0 0.0
        %4831 = vmatpush2.msra.mxu0 0.0
        %4832 = vmatprep.subr.mxu0 0.0
        %4833 = vmatpush2.msra.mxu0 0.0
        %4834 = vmatprep.subr.mxu0 0.0
        %4835 = vmatpush2.msra.mxu0 0.0
        %4836 = vmatprep.subr.mxu0 0.0
        %4837 = vmatpush2.msra.mxu0 0.0
        %4838 = vmatprep.subr.mxu0 0.0
        %4839 = vmatpush2.msra.mxu0 0.0
        %4840 = vmatprep.mubr.f32.mxu0 0.0
        %v4841 = vand.u32 %v4612, 4294901760
        %v4842 = vsub.f32 %v4612, %v4841
        %4843 = vmatmul.mubr.f32.gmra.mxu0 %v4842
        %v4844 = vpop.f32.mrf.mxu0
        %v4845 = vadd.f32 %v4769, %v4844
        %v4846 = vpop.f32.mrf.mxu0
        %4847 = vdwg.mxu0
        %4848 = vmatprep.subr.mxu0 0.0
        %4849 = vmatpush1.msra.mxu0 0.0
        %4850 = vmatprep.subr.mxu0 0.0
        %4851 = vmatpush1.msra.mxu0 0.0
        %4852 = vmatprep.subr.mxu0 0.0
        %4853 = vmatpush1.msra.mxu0 0.0
        %4854 = vmatprep.subr.mxu0 0.0
        %4855 = vmatpush1.msra.mxu0 0.0
        %4856 = vmatprep.subr.mxu0 0.0
        %4857 = vmatpush1.msra.mxu0 0.0
        %4858 = vmatprep.subr.mxu0 0.0
        %4859 = vmatpush1.msra.mxu0 0.0
        %4860 = vmatprep.subr.mxu0 0.0
        %4861 = vmatpush1.msra.mxu0 0.0
        %4862 = vmatprep.subr.mxu0 0.0
        %4863 = vmatpush1.msra.mxu0 0.0
        %4864 = vmatprep.subr.mxu0 0.0
        %4865 = vmatpush1.msra.mxu0 0.0
        %4866 = vmatprep.subr.mxu0 0.0
        %4867 = vmatpush1.msra.mxu0 0.0
        %4868 = vmatprep.subr.mxu0 0.0
        %4869 = vmatpush1.msra.mxu0 0.0
        %4870 = vmatprep.subr.mxu0 0.0
        %4871 = vmatpush1.msra.mxu0 0.0
        %4872 = vmatprep.subr.mxu0 0.0
        %4873 = vmatpush1.msra.mxu0 0.0
        %4874 = vmatprep.subr.mxu0 0.0
        %4875 = vmatpush1.msra.mxu0 0.0
        %4876 = vmatprep.subr.mxu0 0.0
        %v4877 = vand.u32 %v4610, 4294901760
        %4878 = vmatpush1.msra.mxu0 %v4877
        %4879 = vmatprep.subr.mxu0 0.0
        %v4880 = vand.u32 %v4609, 4294901760
        %4881 = vmatpush1.msra.mxu0 %v4880
        %4882 = vmatprep.subr.mxu0 0.0
        %4883 = vmatpush2.msra.mxu0 0.0
        %4884 = vmatprep.subr.mxu0 0.0
        %4885 = vmatpush2.msra.mxu0 0.0
        %4886 = vmatprep.subr.mxu0 0.0
        %4887 = vmatpush2.msra.mxu0 0.0
        %4888 = vmatprep.subr.mxu0 0.0
        %4889 = vmatpush2.msra.mxu0 0.0
        %4890 = vmatprep.subr.mxu0 0.0
        %4891 = vmatpush2.msra.mxu0 0.0
        %4892 = vmatprep.subr.mxu0 0.0
        %4893 = vmatpush2.msra.mxu0 0.0
        %4894 = vmatprep.subr.mxu0 0.0
        %4895 = vmatpush2.msra.mxu0 0.0
        %4896 = vmatprep.subr.mxu0 0.0
        %4897 = vmatpush2.msra.mxu0 0.0
        %4898 = vmatprep.subr.mxu0 0.0
        %4899 = vmatpush2.msra.mxu0 0.0
        %4900 = vmatprep.subr.mxu0 0.0
        %4901 = vmatpush2.msra.mxu0 0.0
        %4902 = vmatprep.subr.mxu0 0.0
        %4903 = vmatpush2.msra.mxu0 0.0
        %4904 = vmatprep.subr.mxu0 0.0
        %4905 = vmatpush2.msra.mxu0 0.0
        %4906 = vmatprep.subr.mxu0 0.0
        %4907 = vmatpush2.msra.mxu0 0.0
        %4908 = vmatprep.subr.mxu0 0.0
        %4909 = vmatpush2.msra.mxu0 0.0
        %4910 = vmatprep.subr.mxu0 0.0
        %4911 = vmatpush2.msra.mxu0 0.0
        %4912 = vmatprep.subr.mxu0 0.0
        %4913 = vmatpush2.msra.mxu0 0.0
        %4914 = vmatprep.mubr.f32.mxu0 0.0
        %v4915 = vand.u32 %v4612, 4294901760
        %v4916 = vsub.f32 %v4612, %v4915
        %v4917 = vand.u32 %v4916, 4294901760
        %4918 = vmatmul.mubr.f32.gmra.mxu0 %v4917
        %v4919 = vpop.f32.mrf.mxu0
        %v4920 = vadd.f32 %v4845, %v4919
        %v4921 = vpop.f32.mrf.mxu0
        %4922 = vdwg.mxu0
        %4923 = vmatprep.subr.mxu0 0.0
        %4924 = vmatpush1.msra.mxu0 0.0
        %4925 = vmatprep.subr.mxu0 0.0
        %4926 = vmatpush1.msra.mxu0 0.0
        %4927 = vmatprep.subr.mxu0 0.0
        %4928 = vmatpush1.msra.mxu0 0.0
        %4929 = vmatprep.subr.mxu0 0.0
        %4930 = vmatpush1.msra.mxu0 0.0
        %4931 = vmatprep.subr.mxu0 0.0
        %4932 = vmatpush1.msra.mxu0 0.0
        %4933 = vmatprep.subr.mxu0 0.0
        %4934 = vmatpush1.msra.mxu0 0.0
        %4935 = vmatprep.subr.mxu0 0.0
        %4936 = vmatpush1.msra.mxu0 0.0
        %4937 = vmatprep.subr.mxu0 0.0
        %4938 = vmatpush1.msra.mxu0 0.0
        %4939 = vmatprep.subr.mxu0 0.0
        %4940 = vmatpush1.msra.mxu0 0.0
        %4941 = vmatprep.subr.mxu0 0.0
        %4942 = vmatpush1.msra.mxu0 0.0
        %4943 = vmatprep.subr.mxu0 0.0
        %4944 = vmatpush1.msra.mxu0 0.0
        %4945 = vmatprep.subr.mxu0 0.0
        %4946 = vmatpush1.msra.mxu0 0.0
        %4947 = vmatprep.subr.mxu0 0.0
        %4948 = vmatpush1.msra.mxu0 0.0
        %4949 = vmatprep.subr.mxu0 0.0
        %4950 = vmatpush1.msra.mxu0 0.0
        %4951 = vmatprep.subr.mxu0 0.0
        %v4952 = vand.u32 %v4610, 4294901760
        %v4953 = vsub.f32 %v4610, %v4952
        %v4954 = vand.u32 %v4953, 4294901760
        %4955 = vmatpush1.msra.mxu0 %v4954
        %4956 = vmatprep.subr.mxu0 0.0
        %v4957 = vand.u32 %v4609, 4294901760
        %v4958 = vsub.f32 %v4609, %v4957
        %v4959 = vand.u32 %v4958, 4294901760
        %4960 = vmatpush1.msra.mxu0 %v4959
        %4961 = vmatprep.subr.mxu0 0.0
        %4962 = vmatpush2.msra.mxu0 0.0
        %4963 = vmatprep.subr.mxu0 0.0
        %4964 = vmatpush2.msra.mxu0 0.0
        %4965 = vmatprep.subr.mxu0 0.0
        %4966 = vmatpush2.msra.mxu0 0.0
        %4967 = vmatprep.subr.mxu0 0.0
        %4968 = vmatpush2.msra.mxu0 0.0
        %4969 = vmatprep.subr.mxu0 0.0
        %4970 = vmatpush2.msra.mxu0 0.0
        %4971 = vmatprep.subr.mxu0 0.0
        %4972 = vmatpush2.msra.mxu0 0.0
        %4973 = vmatprep.subr.mxu0 0.0
        %4974 = vmatpush2.msra.mxu0 0.0
        %4975 = vmatprep.subr.mxu0 0.0
        %4976 = vmatpush2.msra.mxu0 0.0
        %4977 = vmatprep.subr.mxu0 0.0
        %4978 = vmatpush2.msra.mxu0 0.0
        %4979 = vmatprep.subr.mxu0 0.0
        %4980 = vmatpush2.msra.mxu0 0.0
        %4981 = vmatprep.subr.mxu0 0.0
        %4982 = vmatpush2.msra.mxu0 0.0
        %4983 = vmatprep.subr.mxu0 0.0
        %4984 = vmatpush2.msra.mxu0 0.0
        %4985 = vmatprep.subr.mxu0 0.0
        %4986 = vmatpush2.msra.mxu0 0.0
        %4987 = vmatprep.subr.mxu0 0.0
        %4988 = vmatpush2.msra.mxu0 0.0
        %4989 = vmatprep.subr.mxu0 0.0
        %4990 = vmatpush2.msra.mxu0 0.0
        %4991 = vmatprep.subr.mxu0 0.0
        %4992 = vmatpush2.msra.mxu0 0.0
        %4993 = vmatprep.mubr.f32.mxu0 0.0
        %v4994 = vand.u32 %v4612, 4294901760
        %4995 = vmatmul.mubr.f32.gmra.mxu0 %v4994
        %v4996 = vpop.f32.mrf.mxu0
        %v4997 = vadd.f32 %v4920, %v4996
        %v4998 = vpop.f32.mrf.mxu0
        %4999 = vdwg.mxu0
        %5000 = vmatprep.subr.mxu0 0.0
        %5001 = vmatpush1.msra.mxu0 0.0
        %5002 = vmatprep.subr.mxu0 0.0
        %5003 = vmatpush1.msra.mxu0 0.0
        %5004 = vmatprep.subr.mxu0 0.0
        %5005 = vmatpush1.msra.mxu0 0.0
        %5006 = vmatprep.subr.mxu0 0.0
        %5007 = vmatpush1.msra.mxu0 0.0
        %5008 = vmatprep.subr.mxu0 0.0
        %5009 = vmatpush1.msra.mxu0 0.0
        %5010 = vmatprep.subr.mxu0 0.0
        %5011 = vmatpush1.msra.mxu0 0.0
        %5012 = vmatprep.subr.mxu0 0.0
        %5013 = vmatpush1.msra.mxu0 0.0
        %5014 = vmatprep.subr.mxu0 0.0
        %5015 = vmatpush1.msra.mxu0 0.0
        %5016 = vmatprep.subr.mxu0 0.0
        %5017 = vmatpush1.msra.mxu0 0.0
        %5018 = vmatprep.subr.mxu0 0.0
        %5019 = vmatpush1.msra.mxu0 0.0
        %5020 = vmatprep.subr.mxu0 0.0
        %5021 = vmatpush1.msra.mxu0 0.0
        %5022 = vmatprep.subr.mxu0 0.0
        %5023 = vmatpush1.msra.mxu0 0.0
        %5024 = vmatprep.subr.mxu0 0.0
        %5025 = vmatpush1.msra.mxu0 0.0
        %5026 = vmatprep.subr.mxu0 0.0
        %5027 = vmatpush1.msra.mxu0 0.0
        %5028 = vmatprep.subr.mxu0 0.0
        %v5029 = vand.u32 %v4610, 4294901760
        %5030 = vmatpush1.msra.mxu0 %v5029
        %5031 = vmatprep.subr.mxu0 0.0
        %v5032 = vand.u32 %v4609, 4294901760
        %5033 = vmatpush1.msra.mxu0 %v5032
        %5034 = vmatprep.subr.mxu0 0.0
        %5035 = vmatpush2.msra.mxu0 0.0
        %5036 = vmatprep.subr.mxu0 0.0
        %5037 = vmatpush2.msra.mxu0 0.0
        %5038 = vmatprep.subr.mxu0 0.0
        %5039 = vmatpush2.msra.mxu0 0.0
        %5040 = vmatprep.subr.mxu0 0.0
        %5041 = vmatpush2.msra.mxu0 0.0
        %5042 = vmatprep.subr.mxu0 0.0
        %5043 = vmatpush2.msra.mxu0 0.0
        %5044 = vmatprep.subr.mxu0 0.0
        %5045 = vmatpush2.msra.mxu0 0.0
        %5046 = vmatprep.subr.mxu0 0.0
        %5047 = vmatpush2.msra.mxu0 0.0
        %5048 = vmatprep.subr.mxu0 0.0
        %5049 = vmatpush2.msra.mxu0 0.0
        %5050 = vmatprep.subr.mxu0 0.0
        %5051 = vmatpush2.msra.mxu0 0.0
        %5052 = vmatprep.subr.mxu0 0.0
        %5053 = vmatpush2.msra.mxu0 0.0
        %5054 = vmatprep.subr.mxu0 0.0
        %5055 = vmatpush2.msra.mxu0 0.0
        %5056 = vmatprep.subr.mxu0 0.0
        %5057 = vmatpush2.msra.mxu0 0.0
        %5058 = vmatprep.subr.mxu0 0.0
        %5059 = vmatpush2.msra.mxu0 0.0
        %5060 = vmatprep.subr.mxu0 0.0
        %5061 = vmatpush2.msra.mxu0 0.0
        %5062 = vmatprep.subr.mxu0 0.0
        %5063 = vmatpush2.msra.mxu0 0.0
        %5064 = vmatprep.subr.mxu0 0.0
        %5065 = vmatpush2.msra.mxu0 0.0
        %5066 = vmatprep.mubr.f32.mxu0 0.0
        %v5067 = vand.u32 %v4612, 4294901760
        %5068 = vmatmul.mubr.f32.gmra.mxu0 %v5067
        %v5069 = vpop.f32.mrf.mxu0
        %v5070 = vadd.f32 %v4997, %v5069
        %v5071 = vpop.f32.mrf.mxu0
        %5072 = vdwg.mxu0
        %v5073 = vadd.f32 %v4115, %v5070
        %5074 = vset.pattern.permute.xlu0 5
        %5075 = vperm.xlu0 %5074, %v283
        %v5076 = vpop.permute.xlu0 %5075
        %vm5077 = vcmp.eq.s32.totalorder %v5076, %v282
        %v5078 = vsel %vm5077, 1.0, 0.0
        %v5080 = vsel %vm289, %v5078, 0
        %5082 = vmatprep.subr.mxu0 0.0
        %5083 = vmatpush1.msra.mxu0 0.0
        %5084 = vmatprep.subr.mxu0 0.0
        %5085 = vmatpush1.msra.mxu0 0.0
        %5086 = vmatprep.subr.mxu0 0.0
        %5087 = vmatpush1.msra.mxu0 0.0
        %5088 = vmatprep.subr.mxu0 0.0
        %5089 = vmatpush1.msra.mxu0 0.0
        %5090 = vmatprep.subr.mxu0 0.0
        %5091 = vmatpush1.msra.mxu0 0.0
        %5092 = vmatprep.subr.mxu0 0.0
        %5093 = vmatpush1.msra.mxu0 0.0
        %5094 = vmatprep.subr.mxu0 0.0
        %5095 = vmatpush1.msra.mxu0 0.0
        %5096 = vmatprep.subr.mxu0 0.0
        %5097 = vmatpush1.msra.mxu0 0.0
        %5098 = vmatprep.subr.mxu0 0.0
        %5099 = vmatpush1.msra.mxu0 0.0
        %5100 = vmatprep.subr.mxu0 0.0
        %5101 = vmatpush1.msra.mxu0 0.0
        %5102 = vmatprep.subr.mxu0 0.0
        %5103 = vmatpush1.msra.mxu0 0.0
        %5104 = vmatprep.subr.mxu0 0.0
        %5105 = vmatpush1.msra.mxu0 0.0
        %5106 = vmatprep.subr.mxu0 0.0
        %v5107 = vand.u32 %v280, 4294901760
        %5108 = vmatpush1.msra.mxu0 %v5107
        %5109 = vmatprep.subr.mxu0 0.0
        %v5110 = vand.u32 %v279, 4294901760
        %5111 = vmatpush1.msra.mxu0 %v5110
        %5112 = vmatprep.subr.mxu0 0.0
        %v5113 = vand.u32 %v278, 4294901760
        %5114 = vmatpush1.msra.mxu0 %v5113
        %5115 = vmatprep.subr.mxu0 0.0
        %v5116 = vand.u32 %v277, 4294901760
        %5117 = vmatpush1.msra.mxu0 %v5116
        %5118 = vmatprep.subr.mxu0 0.0
        %5119 = vmatpush2.msra.mxu0 0.0
        %5120 = vmatprep.subr.mxu0 0.0
        %5121 = vmatpush2.msra.mxu0 0.0
        %5122 = vmatprep.subr.mxu0 0.0
        %5123 = vmatpush2.msra.mxu0 0.0
        %5124 = vmatprep.subr.mxu0 0.0
        %5125 = vmatpush2.msra.mxu0 0.0
        %5126 = vmatprep.subr.mxu0 0.0
        %5127 = vmatpush2.msra.mxu0 0.0
        %5128 = vmatprep.subr.mxu0 0.0
        %5129 = vmatpush2.msra.mxu0 0.0
        %5130 = vmatprep.subr.mxu0 0.0
        %5131 = vmatpush2.msra.mxu0 0.0
        %5132 = vmatprep.subr.mxu0 0.0
        %5133 = vmatpush2.msra.mxu0 0.0
        %5134 = vmatprep.subr.mxu0 0.0
        %5135 = vmatpush2.msra.mxu0 0.0
        %5136 = vmatprep.subr.mxu0 0.0
        %5137 = vmatpush2.msra.mxu0 0.0
        %5138 = vmatprep.subr.mxu0 0.0
        %5139 = vmatpush2.msra.mxu0 0.0
        %5140 = vmatprep.subr.mxu0 0.0
        %5141 = vmatpush2.msra.mxu0 0.0
        %5142 = vmatprep.subr.mxu0 0.0
        %5143 = vmatpush2.msra.mxu0 0.0
        %5144 = vmatprep.subr.mxu0 0.0
        %5145 = vmatpush2.msra.mxu0 0.0
        %5146 = vmatprep.subr.mxu0 0.0
        %5147 = vmatpush2.msra.mxu0 0.0
        %5148 = vmatprep.subr.mxu0 0.0
        %5149 = vmatpush2.msra.mxu0 0.0
        %5150 = vmatprep.mubr.f32.mxu0 0.0
        %v5151 = vand.u32 %v5080, 4294901760
        %v5152 = vsub.f32 %v5080, %v5151
        %v5153 = vand.u32 %v5152, 4294901760
        %v5154 = vsub.f32 %v5152, %v5153
        %v5155 = vand.u32 %v5154, 4294901760
        %5156 = vmatmul.mubr.f32.gmra.mxu0 %v5155
        %v5157 = vpop.f32.mrf.mxu0
        %v5158 = vadd.f32 0.0, %v5157
        %v5159 = vpop.f32.mrf.mxu0
        %5160 = vdwg.mxu0
        %5161 = vmatprep.subr.mxu0 0.0
        %5162 = vmatpush1.msra.mxu0 0.0
        %5163 = vmatprep.subr.mxu0 0.0
        %5164 = vmatpush1.msra.mxu0 0.0
        %5165 = vmatprep.subr.mxu0 0.0
        %5166 = vmatpush1.msra.mxu0 0.0
        %5167 = vmatprep.subr.mxu0 0.0
        %5168 = vmatpush1.msra.mxu0 0.0
        %5169 = vmatprep.subr.mxu0 0.0
        %5170 = vmatpush1.msra.mxu0 0.0
        %5171 = vmatprep.subr.mxu0 0.0
        %5172 = vmatpush1.msra.mxu0 0.0
        %5173 = vmatprep.subr.mxu0 0.0
        %5174 = vmatpush1.msra.mxu0 0.0
        %5175 = vmatprep.subr.mxu0 0.0
        %5176 = vmatpush1.msra.mxu0 0.0
        %5177 = vmatprep.subr.mxu0 0.0
        %5178 = vmatpush1.msra.mxu0 0.0
        %5179 = vmatprep.subr.mxu0 0.0
        %5180 = vmatpush1.msra.mxu0 0.0
        %5181 = vmatprep.subr.mxu0 0.0
        %5182 = vmatpush1.msra.mxu0 0.0
        %5183 = vmatprep.subr.mxu0 0.0
        %5184 = vmatpush1.msra.mxu0 0.0
        %5185 = vmatprep.subr.mxu0 0.0
        %v5186 = vand.u32 %v280, 4294901760
        %v5187 = vsub.f32 %v280, %v5186
        %v5188 = vand.u32 %v5187, 4294901760
        %v5189 = vsub.f32 %v5187, %v5188
        %v5190 = vand.u32 %v5189, 4294901760
        %5191 = vmatpush1.msra.mxu0 %v5190
        %5192 = vmatprep.subr.mxu0 0.0
        %v5193 = vand.u32 %v279, 4294901760
        %v5194 = vsub.f32 %v279, %v5193
        %v5195 = vand.u32 %v5194, 4294901760
        %v5196 = vsub.f32 %v5194, %v5195
        %v5197 = vand.u32 %v5196, 4294901760
        %5198 = vmatpush1.msra.mxu0 %v5197
        %5199 = vmatprep.subr.mxu0 0.0
        %v5200 = vand.u32 %v278, 4294901760
        %v5201 = vsub.f32 %v278, %v5200
        %v5202 = vand.u32 %v5201, 4294901760
        %v5203 = vsub.f32 %v5201, %v5202
        %v5204 = vand.u32 %v5203, 4294901760
        %5205 = vmatpush1.msra.mxu0 %v5204
        %5206 = vmatprep.subr.mxu0 0.0
        %v5207 = vand.u32 %v277, 4294901760
        %v5208 = vsub.f32 %v277, %v5207
        %v5209 = vand.u32 %v5208, 4294901760
        %v5210 = vsub.f32 %v5208, %v5209
        %v5211 = vand.u32 %v5210, 4294901760
        %5212 = vmatpush1.msra.mxu0 %v5211
        %5213 = vmatprep.subr.mxu0 0.0
        %5214 = vmatpush2.msra.mxu0 0.0
        %5215 = vmatprep.subr.mxu0 0.0
        %5216 = vmatpush2.msra.mxu0 0.0
        %5217 = vmatprep.subr.mxu0 0.0
        %5218 = vmatpush2.msra.mxu0 0.0
        %5219 = vmatprep.subr.mxu0 0.0
        %5220 = vmatpush2.msra.mxu0 0.0
        %5221 = vmatprep.subr.mxu0 0.0
        %5222 = vmatpush2.msra.mxu0 0.0
        %5223 = vmatprep.subr.mxu0 0.0
        %5224 = vmatpush2.msra.mxu0 0.0
        %5225 = vmatprep.subr.mxu0 0.0
        %5226 = vmatpush2.msra.mxu0 0.0
        %5227 = vmatprep.subr.mxu0 0.0
        %5228 = vmatpush2.msra.mxu0 0.0
        %5229 = vmatprep.subr.mxu0 0.0
        %5230 = vmatpush2.msra.mxu0 0.0
        %5231 = vmatprep.subr.mxu0 0.0
        %5232 = vmatpush2.msra.mxu0 0.0
        %5233 = vmatprep.subr.mxu0 0.0
        %5234 = vmatpush2.msra.mxu0 0.0
        %5235 = vmatprep.subr.mxu0 0.0
        %5236 = vmatpush2.msra.mxu0 0.0
        %5237 = vmatprep.subr.mxu0 0.0
        %5238 = vmatpush2.msra.mxu0 0.0
        %5239 = vmatprep.subr.mxu0 0.0
        %5240 = vmatpush2.msra.mxu0 0.0
        %5241 = vmatprep.subr.mxu0 0.0
        %5242 = vmatpush2.msra.mxu0 0.0
        %5243 = vmatprep.subr.mxu0 0.0
        %5244 = vmatpush2.msra.mxu0 0.0
        %5245 = vmatprep.mubr.f32.mxu0 0.0
        %v5246 = vand.u32 %v5080, 4294901760
        %5247 = vmatmul.mubr.f32.gmra.mxu0 %v5246
        %v5248 = vpop.f32.mrf.mxu0
        %v5249 = vadd.f32 %v5158, %v5248
        %v5250 = vpop.f32.mrf.mxu0
        %5251 = vdwg.mxu0
        %5252 = vmatprep.subr.mxu0 0.0
        %5253 = vmatpush1.msra.mxu0 0.0
        %5254 = vmatprep.subr.mxu0 0.0
        %5255 = vmatpush1.msra.mxu0 0.0
        %5256 = vmatprep.subr.mxu0 0.0
        %5257 = vmatpush1.msra.mxu0 0.0
        %5258 = vmatprep.subr.mxu0 0.0
        %5259 = vmatpush1.msra.mxu0 0.0
        %5260 = vmatprep.subr.mxu0 0.0
        %5261 = vmatpush1.msra.mxu0 0.0
        %5262 = vmatprep.subr.mxu0 0.0
        %5263 = vmatpush1.msra.mxu0 0.0
        %5264 = vmatprep.subr.mxu0 0.0
        %5265 = vmatpush1.msra.mxu0 0.0
        %5266 = vmatprep.subr.mxu0 0.0
        %5267 = vmatpush1.msra.mxu0 0.0
        %5268 = vmatprep.subr.mxu0 0.0
        %5269 = vmatpush1.msra.mxu0 0.0
        %5270 = vmatprep.subr.mxu0 0.0
        %5271 = vmatpush1.msra.mxu0 0.0
        %5272 = vmatprep.subr.mxu0 0.0
        %5273 = vmatpush1.msra.mxu0 0.0
        %5274 = vmatprep.subr.mxu0 0.0
        %5275 = vmatpush1.msra.mxu0 0.0
        %5276 = vmatprep.subr.mxu0 0.0
        %v5277 = vand.u32 %v280, 4294901760
        %v5278 = vsub.f32 %v280, %v5277
        %5279 = vmatpush1.msra.mxu0 %v5278
        %5280 = vmatprep.subr.mxu0 0.0
        %v5281 = vand.u32 %v279, 4294901760
        %v5282 = vsub.f32 %v279, %v5281
        %5283 = vmatpush1.msra.mxu0 %v5282
        %5284 = vmatprep.subr.mxu0 0.0
        %v5285 = vand.u32 %v278, 4294901760
        %v5286 = vsub.f32 %v278, %v5285
        %5287 = vmatpush1.msra.mxu0 %v5286
        %5288 = vmatprep.subr.mxu0 0.0
        %v5289 = vand.u32 %v277, 4294901760
        %v5290 = vsub.f32 %v277, %v5289
        %5291 = vmatpush1.msra.mxu0 %v5290
        %5292 = vmatprep.subr.mxu0 0.0
        %5293 = vmatpush2.msra.mxu0 0.0
        %5294 = vmatprep.subr.mxu0 0.0
        %5295 = vmatpush2.msra.mxu0 0.0
        %5296 = vmatprep.subr.mxu0 0.0
        %5297 = vmatpush2.msra.mxu0 0.0
        %5298 = vmatprep.subr.mxu0 0.0
        %5299 = vmatpush2.msra.mxu0 0.0
        %5300 = vmatprep.subr.mxu0 0.0
        %5301 = vmatpush2.msra.mxu0 0.0
        %5302 = vmatprep.subr.mxu0 0.0
        %5303 = vmatpush2.msra.mxu0 0.0
        %5304 = vmatprep.subr.mxu0 0.0
        %5305 = vmatpush2.msra.mxu0 0.0
        %5306 = vmatprep.subr.mxu0 0.0
        %5307 = vmatpush2.msra.mxu0 0.0
        %5308 = vmatprep.subr.mxu0 0.0
        %5309 = vmatpush2.msra.mxu0 0.0
        %5310 = vmatprep.subr.mxu0 0.0
        %5311 = vmatpush2.msra.mxu0 0.0
        %5312 = vmatprep.subr.mxu0 0.0
        %5313 = vmatpush2.msra.mxu0 0.0
        %5314 = vmatprep.subr.mxu0 0.0
        %5315 = vmatpush2.msra.mxu0 0.0
        %5316 = vmatprep.subr.mxu0 0.0
        %5317 = vmatpush2.msra.mxu0 0.0
        %5318 = vmatprep.subr.mxu0 0.0
        %5319 = vmatpush2.msra.mxu0 0.0
        %5320 = vmatprep.subr.mxu0 0.0
        %5321 = vmatpush2.msra.mxu0 0.0
        %5322 = vmatprep.subr.mxu0 0.0
        %5323 = vmatpush2.msra.mxu0 0.0
        %5324 = vmatprep.mubr.f32.mxu0 0.0
        %v5325 = vand.u32 %v5080, 4294901760
        %v5326 = vsub.f32 %v5080, %v5325
        %5327 = vmatmul.mubr.f32.gmra.mxu0 %v5326
        %v5328 = vpop.f32.mrf.mxu0
        %v5329 = vadd.f32 %v5249, %v5328
        %v5330 = vpop.f32.mrf.mxu0
        %5331 = vdwg.mxu0
        %5332 = vmatprep.subr.mxu0 0.0
        %5333 = vmatpush1.msra.mxu0 0.0
        %5334 = vmatprep.subr.mxu0 0.0
        %5335 = vmatpush1.msra.mxu0 0.0
        %5336 = vmatprep.subr.mxu0 0.0
        %5337 = vmatpush1.msra.mxu0 0.0
        %5338 = vmatprep.subr.mxu0 0.0
        %5339 = vmatpush1.msra.mxu0 0.0
        %5340 = vmatprep.subr.mxu0 0.0
        %5341 = vmatpush1.msra.mxu0 0.0
        %5342 = vmatprep.subr.mxu0 0.0
        %5343 = vmatpush1.msra.mxu0 0.0
        %5344 = vmatprep.subr.mxu0 0.0
        %5345 = vmatpush1.msra.mxu0 0.0
        %5346 = vmatprep.subr.mxu0 0.0
        %5347 = vmatpush1.msra.mxu0 0.0
        %5348 = vmatprep.subr.mxu0 0.0
        %5349 = vmatpush1.msra.mxu0 0.0
        %5350 = vmatprep.subr.mxu0 0.0
        %5351 = vmatpush1.msra.mxu0 0.0
        %5352 = vmatprep.subr.mxu0 0.0
        %5353 = vmatpush1.msra.mxu0 0.0
        %5354 = vmatprep.subr.mxu0 0.0
        %5355 = vmatpush1.msra.mxu0 0.0
        %5356 = vmatprep.subr.mxu0 0.0
        %v5357 = vand.u32 %v280, 4294901760
        %5358 = vmatpush1.msra.mxu0 %v5357
        %5359 = vmatprep.subr.mxu0 0.0
        %v5360 = vand.u32 %v279, 4294901760
        %5361 = vmatpush1.msra.mxu0 %v5360
        %5362 = vmatprep.subr.mxu0 0.0
        %v5363 = vand.u32 %v278, 4294901760
        %5364 = vmatpush1.msra.mxu0 %v5363
        %5365 = vmatprep.subr.mxu0 0.0
        %v5366 = vand.u32 %v277, 4294901760
        %5367 = vmatpush1.msra.mxu0 %v5366
        %5368 = vmatprep.subr.mxu0 0.0
        %5369 = vmatpush2.msra.mxu0 0.0
        %5370 = vmatprep.subr.mxu0 0.0
        %5371 = vmatpush2.msra.mxu0 0.0
        %5372 = vmatprep.subr.mxu0 0.0
        %5373 = vmatpush2.msra.mxu0 0.0
        %5374 = vmatprep.subr.mxu0 0.0
        %5375 = vmatpush2.msra.mxu0 0.0
        %5376 = vmatprep.subr.mxu0 0.0
        %5377 = vmatpush2.msra.mxu0 0.0
        %5378 = vmatprep.subr.mxu0 0.0
        %5379 = vmatpush2.msra.mxu0 0.0
        %5380 = vmatprep.subr.mxu0 0.0
        %5381 = vmatpush2.msra.mxu0 0.0
        %5382 = vmatprep.subr.mxu0 0.0
        %5383 = vmatpush2.msra.mxu0 0.0
        %5384 = vmatprep.subr.mxu0 0.0
        %5385 = vmatpush2.msra.mxu0 0.0
        %5386 = vmatprep.subr.mxu0 0.0
        %5387 = vmatpush2.msra.mxu0 0.0
        %5388 = vmatprep.subr.mxu0 0.0
        %5389 = vmatpush2.msra.mxu0 0.0
        %5390 = vmatprep.subr.mxu0 0.0
        %5391 = vmatpush2.msra.mxu0 0.0
        %5392 = vmatprep.subr.mxu0 0.0
        %5393 = vmatpush2.msra.mxu0 0.0
        %5394 = vmatprep.subr.mxu0 0.0
        %5395 = vmatpush2.msra.mxu0 0.0
        %5396 = vmatprep.subr.mxu0 0.0
        %5397 = vmatpush2.msra.mxu0 0.0
        %5398 = vmatprep.subr.mxu0 0.0
        %5399 = vmatpush2.msra.mxu0 0.0
        %5400 = vmatprep.mubr.f32.mxu0 0.0
        %v5401 = vand.u32 %v5080, 4294901760
        %v5402 = vsub.f32 %v5080, %v5401
        %v5403 = vand.u32 %v5402, 4294901760
        %5404 = vmatmul.mubr.f32.gmra.mxu0 %v5403
        %v5405 = vpop.f32.mrf.mxu0
        %v5406 = vadd.f32 %v5329, %v5405
        %v5407 = vpop.f32.mrf.mxu0
        %5408 = vdwg.mxu0
        %5409 = vmatprep.subr.mxu0 0.0
        %5410 = vmatpush1.msra.mxu0 0.0
        %5411 = vmatprep.subr.mxu0 0.0
        %5412 = vmatpush1.msra.mxu0 0.0
        %5413 = vmatprep.subr.mxu0 0.0
        %5414 = vmatpush1.msra.mxu0 0.0
        %5415 = vmatprep.subr.mxu0 0.0
        %5416 = vmatpush1.msra.mxu0 0.0
        %5417 = vmatprep.subr.mxu0 0.0
        %5418 = vmatpush1.msra.mxu0 0.0
        %5419 = vmatprep.subr.mxu0 0.0
        %5420 = vmatpush1.msra.mxu0 0.0
        %5421 = vmatprep.subr.mxu0 0.0
        %5422 = vmatpush1.msra.mxu0 0.0
        %5423 = vmatprep.subr.mxu0 0.0
        %5424 = vmatpush1.msra.mxu0 0.0
        %5425 = vmatprep.subr.mxu0 0.0
        %5426 = vmatpush1.msra.mxu0 0.0
        %5427 = vmatprep.subr.mxu0 0.0
        %5428 = vmatpush1.msra.mxu0 0.0
        %5429 = vmatprep.subr.mxu0 0.0
        %5430 = vmatpush1.msra.mxu0 0.0
        %5431 = vmatprep.subr.mxu0 0.0
        %5432 = vmatpush1.msra.mxu0 0.0
        %5433 = vmatprep.subr.mxu0 0.0
        %v5434 = vand.u32 %v280, 4294901760
        %v5435 = vsub.f32 %v280, %v5434
        %v5436 = vand.u32 %v5435, 4294901760
        %5437 = vmatpush1.msra.mxu0 %v5436
        %5438 = vmatprep.subr.mxu0 0.0
        %v5439 = vand.u32 %v279, 4294901760
        %v5440 = vsub.f32 %v279, %v5439
        %v5441 = vand.u32 %v5440, 4294901760
        %5442 = vmatpush1.msra.mxu0 %v5441
        %5443 = vmatprep.subr.mxu0 0.0
        %v5444 = vand.u32 %v278, 4294901760
        %v5445 = vsub.f32 %v278, %v5444
        %v5446 = vand.u32 %v5445, 4294901760
        %5447 = vmatpush1.msra.mxu0 %v5446
        %5448 = vmatprep.subr.mxu0 0.0
        %v5449 = vand.u32 %v277, 4294901760
        %v5450 = vsub.f32 %v277, %v5449
        %v5451 = vand.u32 %v5450, 4294901760
        %5452 = vmatpush1.msra.mxu0 %v5451
        %5453 = vmatprep.subr.mxu0 0.0
        %5454 = vmatpush2.msra.mxu0 0.0
        %5455 = vmatprep.subr.mxu0 0.0
        %5456 = vmatpush2.msra.mxu0 0.0
        %5457 = vmatprep.subr.mxu0 0.0
        %5458 = vmatpush2.msra.mxu0 0.0
        %5459 = vmatprep.subr.mxu0 0.0
        %5460 = vmatpush2.msra.mxu0 0.0
        %5461 = vmatprep.subr.mxu0 0.0
        %5462 = vmatpush2.msra.mxu0 0.0
        %5463 = vmatprep.subr.mxu0 0.0
        %5464 = vmatpush2.msra.mxu0 0.0
        %5465 = vmatprep.subr.mxu0 0.0
        %5466 = vmatpush2.msra.mxu0 0.0
        %5467 = vmatprep.subr.mxu0 0.0
        %5468 = vmatpush2.msra.mxu0 0.0
        %5469 = vmatprep.subr.mxu0 0.0
        %5470 = vmatpush2.msra.mxu0 0.0
        %5471 = vmatprep.subr.mxu0 0.0
        %5472 = vmatpush2.msra.mxu0 0.0
        %5473 = vmatprep.subr.mxu0 0.0
        %5474 = vmatpush2.msra.mxu0 0.0
        %5475 = vmatprep.subr.mxu0 0.0
        %5476 = vmatpush2.msra.mxu0 0.0
        %5477 = vmatprep.subr.mxu0 0.0
        %5478 = vmatpush2.msra.mxu0 0.0
        %5479 = vmatprep.subr.mxu0 0.0
        %5480 = vmatpush2.msra.mxu0 0.0
        %5481 = vmatprep.subr.mxu0 0.0
        %5482 = vmatpush2.msra.mxu0 0.0
        %5483 = vmatprep.subr.mxu0 0.0
        %5484 = vmatpush2.msra.mxu0 0.0
        %5485 = vmatprep.mubr.f32.mxu0 0.0
        %v5486 = vand.u32 %v5080, 4294901760
        %5487 = vmatmul.mubr.f32.gmra.mxu0 %v5486
        %v5488 = vpop.f32.mrf.mxu0
        %v5489 = vadd.f32 %v5406, %v5488
        %v5490 = vpop.f32.mrf.mxu0
        %5491 = vdwg.mxu0
        %5492 = vmatprep.subr.mxu0 0.0
        %5493 = vmatpush1.msra.mxu0 0.0
        %5494 = vmatprep.subr.mxu0 0.0
        %5495 = vmatpush1.msra.mxu0 0.0
        %5496 = vmatprep.subr.mxu0 0.0
        %5497 = vmatpush1.msra.mxu0 0.0
        %5498 = vmatprep.subr.mxu0 0.0
        %5499 = vmatpush1.msra.mxu0 0.0
        %5500 = vmatprep.subr.mxu0 0.0
        %5501 = vmatpush1.msra.mxu0 0.0
        %5502 = vmatprep.subr.mxu0 0.0
        %5503 = vmatpush1.msra.mxu0 0.0
        %5504 = vmatprep.subr.mxu0 0.0
        %5505 = vmatpush1.msra.mxu0 0.0
        %5506 = vmatprep.subr.mxu0 0.0
        %5507 = vmatpush1.msra.mxu0 0.0
        %5508 = vmatprep.subr.mxu0 0.0
        %5509 = vmatpush1.msra.mxu0 0.0
        %5510 = vmatprep.subr.mxu0 0.0
        %5511 = vmatpush1.msra.mxu0 0.0
        %5512 = vmatprep.subr.mxu0 0.0
        %5513 = vmatpush1.msra.mxu0 0.0
        %5514 = vmatprep.subr.mxu0 0.0
        %5515 = vmatpush1.msra.mxu0 0.0
        %5516 = vmatprep.subr.mxu0 0.0
        %v5517 = vand.u32 %v280, 4294901760
        %5518 = vmatpush1.msra.mxu0 %v5517
        %5519 = vmatprep.subr.mxu0 0.0
        %v5520 = vand.u32 %v279, 4294901760
        %5521 = vmatpush1.msra.mxu0 %v5520
        %5522 = vmatprep.subr.mxu0 0.0
        %v5523 = vand.u32 %v278, 4294901760
        %5524 = vmatpush1.msra.mxu0 %v5523
        %5525 = vmatprep.subr.mxu0 0.0
        %v5526 = vand.u32 %v277, 4294901760
        %5527 = vmatpush1.msra.mxu0 %v5526
        %5528 = vmatprep.subr.mxu0 0.0
        %5529 = vmatpush2.msra.mxu0 0.0
        %5530 = vmatprep.subr.mxu0 0.0
        %5531 = vmatpush2.msra.mxu0 0.0
        %5532 = vmatprep.subr.mxu0 0.0
        %5533 = vmatpush2.msra.mxu0 0.0
        %5534 = vmatprep.subr.mxu0 0.0
        %5535 = vmatpush2.msra.mxu0 0.0
        %5536 = vmatprep.subr.mxu0 0.0
        %5537 = vmatpush2.msra.mxu0 0.0
        %5538 = vmatprep.subr.mxu0 0.0
        %5539 = vmatpush2.msra.mxu0 0.0
        %5540 = vmatprep.subr.mxu0 0.0
        %5541 = vmatpush2.msra.mxu0 0.0
        %5542 = vmatprep.subr.mxu0 0.0
        %5543 = vmatpush2.msra.mxu0 0.0
        %5544 = vmatprep.subr.mxu0 0.0
        %5545 = vmatpush2.msra.mxu0 0.0
        %5546 = vmatprep.subr.mxu0 0.0
        %5547 = vmatpush2.msra.mxu0 0.0
        %5548 = vmatprep.subr.mxu0 0.0
        %5549 = vmatpush2.msra.mxu0 0.0
        %5550 = vmatprep.subr.mxu0 0.0
        %5551 = vmatpush2.msra.mxu0 0.0
        %5552 = vmatprep.subr.mxu0 0.0
        %5553 = vmatpush2.msra.mxu0 0.0
        %5554 = vmatprep.subr.mxu0 0.0
        %5555 = vmatpush2.msra.mxu0 0.0
        %5556 = vmatprep.subr.mxu0 0.0
        %5557 = vmatpush2.msra.mxu0 0.0
        %5558 = vmatprep.subr.mxu0 0.0
        %5559 = vmatpush2.msra.mxu0 0.0
        %5560 = vmatprep.mubr.f32.mxu0 0.0
        %v5561 = vand.u32 %v5080, 4294901760
        %5562 = vmatmul.mubr.f32.gmra.mxu0 %v5561
        %v5563 = vpop.f32.mrf.mxu0
        %v5564 = vadd.f32 %v5489, %v5563
        %v5565 = vpop.f32.mrf.mxu0
        %5566 = vdwg.mxu0
        %v5567 = vld [vmem:[#allocation2 + $0x50] sm:$0xff]
        %v5568 = vld [vmem:[#allocation2 + $0x58] sm:$0xff]
        %v5570 = vsel %vm1275, %v5564, 0
        %5572 = vmatprep.subr.mxu0 0.0
        %5573 = vmatpush1.msra.mxu0 0.0
        %5574 = vmatprep.subr.mxu0 0.0
        %5575 = vmatpush1.msra.mxu0 0.0
        %5576 = vmatprep.subr.mxu0 0.0
        %5577 = vmatpush1.msra.mxu0 0.0
        %5578 = vmatprep.subr.mxu0 0.0
        %5579 = vmatpush1.msra.mxu0 0.0
        %5580 = vmatprep.subr.mxu0 0.0
        %5581 = vmatpush1.msra.mxu0 0.0
        %5582 = vmatprep.subr.mxu0 0.0
        %5583 = vmatpush1.msra.mxu0 0.0
        %5584 = vmatprep.subr.mxu0 0.0
        %5585 = vmatpush1.msra.mxu0 0.0
        %5586 = vmatprep.subr.mxu0 0.0
        %5587 = vmatpush1.msra.mxu0 0.0
        %5588 = vmatprep.subr.mxu0 0.0
        %5589 = vmatpush1.msra.mxu0 0.0
        %5590 = vmatprep.subr.mxu0 0.0
        %5591 = vmatpush1.msra.mxu0 0.0
        %5592 = vmatprep.subr.mxu0 0.0
        %5593 = vmatpush1.msra.mxu0 0.0
        %5594 = vmatprep.subr.mxu0 0.0
        %5595 = vmatpush1.msra.mxu0 0.0
        %5596 = vmatprep.subr.mxu0 0.0
        %5597 = vmatpush1.msra.mxu0 0.0
        %5598 = vmatprep.subr.mxu0 0.0
        %5599 = vmatpush1.msra.mxu0 0.0
        %5600 = vmatprep.subr.mxu0 0.0
        %v5601 = vand.u32 %v5568, 4294901760
        %5602 = vmatpush1.msra.mxu0 %v5601
        %5603 = vmatprep.subr.mxu0 0.0
        %v5604 = vand.u32 %v5567, 4294901760
        %5605 = vmatpush1.msra.mxu0 %v5604
        %5606 = vmatprep.subr.mxu0 0.0
        %5607 = vmatpush2.msra.mxu0 0.0
        %5608 = vmatprep.subr.mxu0 0.0
        %5609 = vmatpush2.msra.mxu0 0.0
        %5610 = vmatprep.subr.mxu0 0.0
        %5611 = vmatpush2.msra.mxu0 0.0
        %5612 = vmatprep.subr.mxu0 0.0
        %5613 = vmatpush2.msra.mxu0 0.0
        %5614 = vmatprep.subr.mxu0 0.0
        %5615 = vmatpush2.msra.mxu0 0.0
        %5616 = vmatprep.subr.mxu0 0.0
        %5617 = vmatpush2.msra.mxu0 0.0
        %5618 = vmatprep.subr.mxu0 0.0
        %5619 = vmatpush2.msra.mxu0 0.0
        %5620 = vmatprep.subr.mxu0 0.0
        %5621 = vmatpush2.msra.mxu0 0.0
        %5622 = vmatprep.subr.mxu0 0.0
        %5623 = vmatpush2.msra.mxu0 0.0
        %5624 = vmatprep.subr.mxu0 0.0
        %5625 = vmatpush2.msra.mxu0 0.0
        %5626 = vmatprep.subr.mxu0 0.0
        %5627 = vmatpush2.msra.mxu0 0.0
        %5628 = vmatprep.subr.mxu0 0.0
        %5629 = vmatpush2.msra.mxu0 0.0
        %5630 = vmatprep.subr.mxu0 0.0
        %5631 = vmatpush2.msra.mxu0 0.0
        %5632 = vmatprep.subr.mxu0 0.0
        %5633 = vmatpush2.msra.mxu0 0.0
        %5634 = vmatprep.subr.mxu0 0.0
        %5635 = vmatpush2.msra.mxu0 0.0
        %5636 = vmatprep.subr.mxu0 0.0
        %5637 = vmatpush2.msra.mxu0 0.0
        %5638 = vmatprep.mubr.f32.mxu0 0.0
        %v5639 = vand.u32 %v5570, 4294901760
        %v5640 = vsub.f32 %v5570, %v5639
        %v5641 = vand.u32 %v5640, 4294901760
        %v5642 = vsub.f32 %v5640, %v5641
        %v5643 = vand.u32 %v5642, 4294901760
        %5644 = vmatmul.mubr.f32.gmra.mxu0 %v5643
        %v5645 = vpop.f32.mrf.mxu0
        %v5646 = vadd.f32 0.0, %v5645
        %v5647 = vpop.f32.mrf.mxu0
        %5648 = vdwg.mxu0
        %5649 = vmatprep.subr.mxu0 0.0
        %5650 = vmatpush1.msra.mxu0 0.0
        %5651 = vmatprep.subr.mxu0 0.0
        %5652 = vmatpush1.msra.mxu0 0.0
        %5653 = vmatprep.subr.mxu0 0.0
        %5654 = vmatpush1.msra.mxu0 0.0
        %5655 = vmatprep.subr.mxu0 0.0
        %5656 = vmatpush1.msra.mxu0 0.0
        %5657 = vmatprep.subr.mxu0 0.0
        %5658 = vmatpush1.msra.mxu0 0.0
        %5659 = vmatprep.subr.mxu0 0.0
        %5660 = vmatpush1.msra.mxu0 0.0
        %5661 = vmatprep.subr.mxu0 0.0
        %5662 = vmatpush1.msra.mxu0 0.0
        %5663 = vmatprep.subr.mxu0 0.0
        %5664 = vmatpush1.msra.mxu0 0.0
        %5665 = vmatprep.subr.mxu0 0.0
        %5666 = vmatpush1.msra.mxu0 0.0
        %5667 = vmatprep.subr.mxu0 0.0
        %5668 = vmatpush1.msra.mxu0 0.0
        %5669 = vmatprep.subr.mxu0 0.0
        %5670 = vmatpush1.msra.mxu0 0.0
        %5671 = vmatprep.subr.mxu0 0.0
        %5672 = vmatpush1.msra.mxu0 0.0
        %5673 = vmatprep.subr.mxu0 0.0
        %5674 = vmatpush1.msra.mxu0 0.0
        %5675 = vmatprep.subr.mxu0 0.0
        %5676 = vmatpush1.msra.mxu0 0.0
        %5677 = vmatprep.subr.mxu0 0.0
        %v5678 = vand.u32 %v5568, 4294901760
        %v5679 = vsub.f32 %v5568, %v5678
        %v5680 = vand.u32 %v5679, 4294901760
        %v5681 = vsub.f32 %v5679, %v5680
        %v5682 = vand.u32 %v5681, 4294901760
        %5683 = vmatpush1.msra.mxu0 %v5682
        %5684 = vmatprep.subr.mxu0 0.0
        %v5685 = vand.u32 %v5567, 4294901760
        %v5686 = vsub.f32 %v5567, %v5685
        %v5687 = vand.u32 %v5686, 4294901760
        %v5688 = vsub.f32 %v5686, %v5687
        %v5689 = vand.u32 %v5688, 4294901760
        %5690 = vmatpush1.msra.mxu0 %v5689
        %5691 = vmatprep.subr.mxu0 0.0
        %5692 = vmatpush2.msra.mxu0 0.0
        %5693 = vmatprep.subr.mxu0 0.0
        %5694 = vmatpush2.msra.mxu0 0.0
        %5695 = vmatprep.subr.mxu0 0.0
        %5696 = vmatpush2.msra.mxu0 0.0
        %5697 = vmatprep.subr.mxu0 0.0
        %5698 = vmatpush2.msra.mxu0 0.0
        %5699 = vmatprep.subr.mxu0 0.0
        %5700 = vmatpush2.msra.mxu0 0.0
        %5701 = vmatprep.subr.mxu0 0.0
        %5702 = vmatpush2.msra.mxu0 0.0
        %5703 = vmatprep.subr.mxu0 0.0
        %5704 = vmatpush2.msra.mxu0 0.0
        %5705 = vmatprep.subr.mxu0 0.0
        %5706 = vmatpush2.msra.mxu0 0.0
        %5707 = vmatprep.subr.mxu0 0.0
        %5708 = vmatpush2.msra.mxu0 0.0
        %5709 = vmatprep.subr.mxu0 0.0
        %5710 = vmatpush2.msra.mxu0 0.0
        %5711 = vmatprep.subr.mxu0 0.0
        %5712 = vmatpush2.msra.mxu0 0.0
        %5713 = vmatprep.subr.mxu0 0.0
        %5714 = vmatpush2.msra.mxu0 0.0
        %5715 = vmatprep.subr.mxu0 0.0
        %5716 = vmatpush2.msra.mxu0 0.0
        %5717 = vmatprep.subr.mxu0 0.0
        %5718 = vmatpush2.msra.mxu0 0.0
        %5719 = vmatprep.subr.mxu0 0.0
        %5720 = vmatpush2.msra.mxu0 0.0
        %5721 = vmatprep.subr.mxu0 0.0
        %5722 = vmatpush2.msra.mxu0 0.0
        %5723 = vmatprep.mubr.f32.mxu0 0.0
        %v5724 = vand.u32 %v5570, 4294901760
        %5725 = vmatmul.mubr.f32.gmra.mxu0 %v5724
        %v5726 = vpop.f32.mrf.mxu0
        %v5727 = vadd.f32 %v5646, %v5726
        %v5728 = vpop.f32.mrf.mxu0
        %5729 = vdwg.mxu0
        %5730 = vmatprep.subr.mxu0 0.0
        %5731 = vmatpush1.msra.mxu0 0.0
        %5732 = vmatprep.subr.mxu0 0.0
        %5733 = vmatpush1.msra.mxu0 0.0
        %5734 = vmatprep.subr.mxu0 0.0
        %5735 = vmatpush1.msra.mxu0 0.0
        %5736 = vmatprep.subr.mxu0 0.0
        %5737 = vmatpush1.msra.mxu0 0.0
        %5738 = vmatprep.subr.mxu0 0.0
        %5739 = vmatpush1.msra.mxu0 0.0
        %5740 = vmatprep.subr.mxu0 0.0
        %5741 = vmatpush1.msra.mxu0 0.0
        %5742 = vmatprep.subr.mxu0 0.0
        %5743 = vmatpush1.msra.mxu0 0.0
        %5744 = vmatprep.subr.mxu0 0.0
        %5745 = vmatpush1.msra.mxu0 0.0
        %5746 = vmatprep.subr.mxu0 0.0
        %5747 = vmatpush1.msra.mxu0 0.0
        %5748 = vmatprep.subr.mxu0 0.0
        %5749 = vmatpush1.msra.mxu0 0.0
        %5750 = vmatprep.subr.mxu0 0.0
        %5751 = vmatpush1.msra.mxu0 0.0
        %5752 = vmatprep.subr.mxu0 0.0
        %5753 = vmatpush1.msra.mxu0 0.0
        %5754 = vmatprep.subr.mxu0 0.0
        %5755 = vmatpush1.msra.mxu0 0.0
        %5756 = vmatprep.subr.mxu0 0.0
        %5757 = vmatpush1.msra.mxu0 0.0
        %5758 = vmatprep.subr.mxu0 0.0
        %v5759 = vand.u32 %v5568, 4294901760
        %v5760 = vsub.f32 %v5568, %v5759
        %5761 = vmatpush1.msra.mxu0 %v5760
        %5762 = vmatprep.subr.mxu0 0.0
        %v5763 = vand.u32 %v5567, 4294901760
        %v5764 = vsub.f32 %v5567, %v5763
        %5765 = vmatpush1.msra.mxu0 %v5764
        %5766 = vmatprep.subr.mxu0 0.0
        %5767 = vmatpush2.msra.mxu0 0.0
        %5768 = vmatprep.subr.mxu0 0.0
        %5769 = vmatpush2.msra.mxu0 0.0
        %5770 = vmatprep.subr.mxu0 0.0
        %5771 = vmatpush2.msra.mxu0 0.0
        %5772 = vmatprep.subr.mxu0 0.0
        %5773 = vmatpush2.msra.mxu0 0.0
        %5774 = vmatprep.subr.mxu0 0.0
        %5775 = vmatpush2.msra.mxu0 0.0
        %5776 = vmatprep.subr.mxu0 0.0
        %5777 = vmatpush2.msra.mxu0 0.0
        %5778 = vmatprep.subr.mxu0 0.0
        %5779 = vmatpush2.msra.mxu0 0.0
        %5780 = vmatprep.subr.mxu0 0.0
        %5781 = vmatpush2.msra.mxu0 0.0
        %5782 = vmatprep.subr.mxu0 0.0
        %5783 = vmatpush2.msra.mxu0 0.0
        %5784 = vmatprep.subr.mxu0 0.0
        %5785 = vmatpush2.msra.mxu0 0.0
        %5786 = vmatprep.subr.mxu0 0.0
        %5787 = vmatpush2.msra.mxu0 0.0
        %5788 = vmatprep.subr.mxu0 0.0
        %5789 = vmatpush2.msra.mxu0 0.0
        %5790 = vmatprep.subr.mxu0 0.0
        %5791 = vmatpush2.msra.mxu0 0.0
        %5792 = vmatprep.subr.mxu0 0.0
        %5793 = vmatpush2.msra.mxu0 0.0
        %5794 = vmatprep.subr.mxu0 0.0
        %5795 = vmatpush2.msra.mxu0 0.0
        %5796 = vmatprep.subr.mxu0 0.0
        %5797 = vmatpush2.msra.mxu0 0.0
        %5798 = vmatprep.mubr.f32.mxu0 0.0
        %v5799 = vand.u32 %v5570, 4294901760
        %v5800 = vsub.f32 %v5570, %v5799
        %5801 = vmatmul.mubr.f32.gmra.mxu0 %v5800
        %v5802 = vpop.f32.mrf.mxu0
        %v5803 = vadd.f32 %v5727, %v5802
        %v5804 = vpop.f32.mrf.mxu0
        %5805 = vdwg.mxu0
        %5806 = vmatprep.subr.mxu0 0.0
        %5807 = vmatpush1.msra.mxu0 0.0
        %5808 = vmatprep.subr.mxu0 0.0
        %5809 = vmatpush1.msra.mxu0 0.0
        %5810 = vmatprep.subr.mxu0 0.0
        %5811 = vmatpush1.msra.mxu0 0.0
        %5812 = vmatprep.subr.mxu0 0.0
        %5813 = vmatpush1.msra.mxu0 0.0
        %5814 = vmatprep.subr.mxu0 0.0
        %5815 = vmatpush1.msra.mxu0 0.0
        %5816 = vmatprep.subr.mxu0 0.0
        %5817 = vmatpush1.msra.mxu0 0.0
        %5818 = vmatprep.subr.mxu0 0.0
        %5819 = vmatpush1.msra.mxu0 0.0
        %5820 = vmatprep.subr.mxu0 0.0
        %5821 = vmatpush1.msra.mxu0 0.0
        %5822 = vmatprep.subr.mxu0 0.0
        %5823 = vmatpush1.msra.mxu0 0.0
        %5824 = vmatprep.subr.mxu0 0.0
        %5825 = vmatpush1.msra.mxu0 0.0
        %5826 = vmatprep.subr.mxu0 0.0
        %5827 = vmatpush1.msra.mxu0 0.0
        %5828 = vmatprep.subr.mxu0 0.0
        %5829 = vmatpush1.msra.mxu0 0.0
        %5830 = vmatprep.subr.mxu0 0.0
        %5831 = vmatpush1.msra.mxu0 0.0
        %5832 = vmatprep.subr.mxu0 0.0
        %5833 = vmatpush1.msra.mxu0 0.0
        %5834 = vmatprep.subr.mxu0 0.0
        %v5835 = vand.u32 %v5568, 4294901760
        %5836 = vmatpush1.msra.mxu0 %v5835
        %5837 = vmatprep.subr.mxu0 0.0
        %v5838 = vand.u32 %v5567, 4294901760
        %5839 = vmatpush1.msra.mxu0 %v5838
        %5840 = vmatprep.subr.mxu0 0.0
        %5841 = vmatpush2.msra.mxu0 0.0
        %5842 = vmatprep.subr.mxu0 0.0
        %5843 = vmatpush2.msra.mxu0 0.0
        %5844 = vmatprep.subr.mxu0 0.0
        %5845 = vmatpush2.msra.mxu0 0.0
        %5846 = vmatprep.subr.mxu0 0.0
        %5847 = vmatpush2.msra.mxu0 0.0
        %5848 = vmatprep.subr.mxu0 0.0
        %5849 = vmatpush2.msra.mxu0 0.0
        %5850 = vmatprep.subr.mxu0 0.0
        %5851 = vmatpush2.msra.mxu0 0.0
        %5852 = vmatprep.subr.mxu0 0.0
        %5853 = vmatpush2.msra.mxu0 0.0
        %5854 = vmatprep.subr.mxu0 0.0
        %5855 = vmatpush2.msra.mxu0 0.0
        %5856 = vmatprep.subr.mxu0 0.0
        %5857 = vmatpush2.msra.mxu0 0.0
        %5858 = vmatprep.subr.mxu0 0.0
        %5859 = vmatpush2.msra.mxu0 0.0
        %5860 = vmatprep.subr.mxu0 0.0
        %5861 = vmatpush2.msra.mxu0 0.0
        %5862 = vmatprep.subr.mxu0 0.0
        %5863 = vmatpush2.msra.mxu0 0.0
        %5864 = vmatprep.subr.mxu0 0.0
        %5865 = vmatpush2.msra.mxu0 0.0
        %5866 = vmatprep.subr.mxu0 0.0
        %5867 = vmatpush2.msra.mxu0 0.0
        %5868 = vmatprep.subr.mxu0 0.0
        %5869 = vmatpush2.msra.mxu0 0.0
        %5870 = vmatprep.subr.mxu0 0.0
        %5871 = vmatpush2.msra.mxu0 0.0
        %5872 = vmatprep.mubr.f32.mxu0 0.0
        %v5873 = vand.u32 %v5570, 4294901760
        %v5874 = vsub.f32 %v5570, %v5873
        %v5875 = vand.u32 %v5874, 4294901760
        %5876 = vmatmul.mubr.f32.gmra.mxu0 %v5875
        %v5877 = vpop.f32.mrf.mxu0
        %v5878 = vadd.f32 %v5803, %v5877
        %v5879 = vpop.f32.mrf.mxu0
        %5880 = vdwg.mxu0
        %5881 = vmatprep.subr.mxu0 0.0
        %5882 = vmatpush1.msra.mxu0 0.0
        %5883 = vmatprep.subr.mxu0 0.0
        %5884 = vmatpush1.msra.mxu0 0.0
        %5885 = vmatprep.subr.mxu0 0.0
        %5886 = vmatpush1.msra.mxu0 0.0
        %5887 = vmatprep.subr.mxu0 0.0
        %5888 = vmatpush1.msra.mxu0 0.0
        %5889 = vmatprep.subr.mxu0 0.0
        %5890 = vmatpush1.msra.mxu0 0.0
        %5891 = vmatprep.subr.mxu0 0.0
        %5892 = vmatpush1.msra.mxu0 0.0
        %5893 = vmatprep.subr.mxu0 0.0
        %5894 = vmatpush1.msra.mxu0 0.0
        %5895 = vmatprep.subr.mxu0 0.0
        %5896 = vmatpush1.msra.mxu0 0.0
        %5897 = vmatprep.subr.mxu0 0.0
        %5898 = vmatpush1.msra.mxu0 0.0
        %5899 = vmatprep.subr.mxu0 0.0
        %5900 = vmatpush1.msra.mxu0 0.0
        %5901 = vmatprep.subr.mxu0 0.0
        %5902 = vmatpush1.msra.mxu0 0.0
        %5903 = vmatprep.subr.mxu0 0.0
        %5904 = vmatpush1.msra.mxu0 0.0
        %5905 = vmatprep.subr.mxu0 0.0
        %5906 = vmatpush1.msra.mxu0 0.0
        %5907 = vmatprep.subr.mxu0 0.0
        %5908 = vmatpush1.msra.mxu0 0.0
        %5909 = vmatprep.subr.mxu0 0.0
        %v5910 = vand.u32 %v5568, 4294901760
        %v5911 = vsub.f32 %v5568, %v5910
        %v5912 = vand.u32 %v5911, 4294901760
        %5913 = vmatpush1.msra.mxu0 %v5912
        %5914 = vmatprep.subr.mxu0 0.0
        %v5915 = vand.u32 %v5567, 4294901760
        %v5916 = vsub.f32 %v5567, %v5915
        %v5917 = vand.u32 %v5916, 4294901760
        %5918 = vmatpush1.msra.mxu0 %v5917
        %5919 = vmatprep.subr.mxu0 0.0
        %5920 = vmatpush2.msra.mxu0 0.0
        %5921 = vmatprep.subr.mxu0 0.0
        %5922 = vmatpush2.msra.mxu0 0.0
        %5923 = vmatprep.subr.mxu0 0.0
        %5924 = vmatpush2.msra.mxu0 0.0
        %5925 = vmatprep.subr.mxu0 0.0
        %5926 = vmatpush2.msra.mxu0 0.0
        %5927 = vmatprep.subr.mxu0 0.0
        %5928 = vmatpush2.msra.mxu0 0.0
        %5929 = vmatprep.subr.mxu0 0.0
        %5930 = vmatpush2.msra.mxu0 0.0
        %5931 = vmatprep.subr.mxu0 0.0
        %5932 = vmatpush2.msra.mxu0 0.0
        %5933 = vmatprep.subr.mxu0 0.0
        %5934 = vmatpush2.msra.mxu0 0.0
        %5935 = vmatprep.subr.mxu0 0.0
        %5936 = vmatpush2.msra.mxu0 0.0
        %5937 = vmatprep.subr.mxu0 0.0
        %5938 = vmatpush2.msra.mxu0 0.0
        %5939 = vmatprep.subr.mxu0 0.0
        %5940 = vmatpush2.msra.mxu0 0.0
        %5941 = vmatprep.subr.mxu0 0.0
        %5942 = vmatpush2.msra.mxu0 0.0
        %5943 = vmatprep.subr.mxu0 0.0
        %5944 = vmatpush2.msra.mxu0 0.0
        %5945 = vmatprep.subr.mxu0 0.0
        %5946 = vmatpush2.msra.mxu0 0.0
        %5947 = vmatprep.subr.mxu0 0.0
        %5948 = vmatpush2.msra.mxu0 0.0
        %5949 = vmatprep.subr.mxu0 0.0
        %5950 = vmatpush2.msra.mxu0 0.0
        %5951 = vmatprep.mubr.f32.mxu0 0.0
        %v5952 = vand.u32 %v5570, 4294901760
        %5953 = vmatmul.mubr.f32.gmra.mxu0 %v5952
        %v5954 = vpop.f32.mrf.mxu0
        %v5955 = vadd.f32 %v5878, %v5954
        %v5956 = vpop.f32.mrf.mxu0
        %5957 = vdwg.mxu0
        %5958 = vmatprep.subr.mxu0 0.0
        %5959 = vmatpush1.msra.mxu0 0.0
        %5960 = vmatprep.subr.mxu0 0.0
        %5961 = vmatpush1.msra.mxu0 0.0
        %5962 = vmatprep.subr.mxu0 0.0
        %5963 = vmatpush1.msra.mxu0 0.0
        %5964 = vmatprep.subr.mxu0 0.0
        %5965 = vmatpush1.msra.mxu0 0.0
        %5966 = vmatprep.subr.mxu0 0.0
        %5967 = vmatpush1.msra.mxu0 0.0
        %5968 = vmatprep.subr.mxu0 0.0
        %5969 = vmatpush1.msra.mxu0 0.0
        %5970 = vmatprep.subr.mxu0 0.0
        %5971 = vmatpush1.msra.mxu0 0.0
        %5972 = vmatprep.subr.mxu0 0.0
        %5973 = vmatpush1.msra.mxu0 0.0
        %5974 = vmatprep.subr.mxu0 0.0
        %5975 = vmatpush1.msra.mxu0 0.0
        %5976 = vmatprep.subr.mxu0 0.0
        %5977 = vmatpush1.msra.mxu0 0.0
        %5978 = vmatprep.subr.mxu0 0.0
        %5979 = vmatpush1.msra.mxu0 0.0
        %5980 = vmatprep.subr.mxu0 0.0
        %5981 = vmatpush1.msra.mxu0 0.0
        %5982 = vmatprep.subr.mxu0 0.0
        %5983 = vmatpush1.msra.mxu0 0.0
        %5984 = vmatprep.subr.mxu0 0.0
        %5985 = vmatpush1.msra.mxu0 0.0
        %5986 = vmatprep.subr.mxu0 0.0
        %v5987 = vand.u32 %v5568, 4294901760
        %5988 = vmatpush1.msra.mxu0 %v5987
        %5989 = vmatprep.subr.mxu0 0.0
        %v5990 = vand.u32 %v5567, 4294901760
        %5991 = vmatpush1.msra.mxu0 %v5990
        %5992 = vmatprep.subr.mxu0 0.0
        %5993 = vmatpush2.msra.mxu0 0.0
        %5994 = vmatprep.subr.mxu0 0.0
        %5995 = vmatpush2.msra.mxu0 0.0
        %5996 = vmatprep.subr.mxu0 0.0
        %5997 = vmatpush2.msra.mxu0 0.0
        %5998 = vmatprep.subr.mxu0 0.0
        %5999 = vmatpush2.msra.mxu0 0.0
        %6000 = vmatprep.subr.mxu0 0.0
        %6001 = vmatpush2.msra.mxu0 0.0
        %6002 = vmatprep.subr.mxu0 0.0
        %6003 = vmatpush2.msra.mxu0 0.0
        %6004 = vmatprep.subr.mxu0 0.0
        %6005 = vmatpush2.msra.mxu0 0.0
        %6006 = vmatprep.subr.mxu0 0.0
        %6007 = vmatpush2.msra.mxu0 0.0
        %6008 = vmatprep.subr.mxu0 0.0
        %6009 = vmatpush2.msra.mxu0 0.0
        %6010 = vmatprep.subr.mxu0 0.0
        %6011 = vmatpush2.msra.mxu0 0.0
        %6012 = vmatprep.subr.mxu0 0.0
        %6013 = vmatpush2.msra.mxu0 0.0
        %6014 = vmatprep.subr.mxu0 0.0
        %6015 = vmatpush2.msra.mxu0 0.0
        %6016 = vmatprep.subr.mxu0 0.0
        %6017 = vmatpush2.msra.mxu0 0.0
        %6018 = vmatprep.subr.mxu0 0.0
        %6019 = vmatpush2.msra.mxu0 0.0
        %6020 = vmatprep.subr.mxu0 0.0
        %6021 = vmatpush2.msra.mxu0 0.0
        %6022 = vmatprep.subr.mxu0 0.0
        %6023 = vmatpush2.msra.mxu0 0.0
        %6024 = vmatprep.mubr.f32.mxu0 0.0
        %v6025 = vand.u32 %v5570, 4294901760
        %6026 = vmatmul.mubr.f32.gmra.mxu0 %v6025
        %v6027 = vpop.f32.mrf.mxu0
        %v6028 = vadd.f32 %v5955, %v6027
        %v6029 = vpop.f32.mrf.mxu0
        %6030 = vdwg.mxu0
        %v6031 = vadd.f32 %v5073, %v6028
        %6032 = vset.pattern.permute.xlu0 6
        %6033 = vperm.xlu0 %6032, %v283
        %v6034 = vpop.permute.xlu0 %6033
        %vm6035 = vcmp.eq.s32.totalorder %v6034, %v282
        %v6036 = vsel %vm6035, 1.0, 0.0
        %v6038 = vsel %vm289, %v6036, 0
        %6040 = vmatprep.subr.mxu0 0.0
        %6041 = vmatpush1.msra.mxu0 0.0
        %6042 = vmatprep.subr.mxu0 0.0
        %6043 = vmatpush1.msra.mxu0 0.0
        %6044 = vmatprep.subr.mxu0 0.0
        %6045 = vmatpush1.msra.mxu0 0.0
        %6046 = vmatprep.subr.mxu0 0.0
        %6047 = vmatpush1.msra.mxu0 0.0
        %6048 = vmatprep.subr.mxu0 0.0
        %6049 = vmatpush1.msra.mxu0 0.0
        %6050 = vmatprep.subr.mxu0 0.0
        %6051 = vmatpush1.msra.mxu0 0.0
        %6052 = vmatprep.subr.mxu0 0.0
        %6053 = vmatpush1.msra.mxu0 0.0
        %6054 = vmatprep.subr.mxu0 0.0
        %6055 = vmatpush1.msra.mxu0 0.0
        %6056 = vmatprep.subr.mxu0 0.0
        %6057 = vmatpush1.msra.mxu0 0.0
        %6058 = vmatprep.subr.mxu0 0.0
        %6059 = vmatpush1.msra.mxu0 0.0
        %6060 = vmatprep.subr.mxu0 0.0
        %6061 = vmatpush1.msra.mxu0 0.0
        %6062 = vmatprep.subr.mxu0 0.0
        %6063 = vmatpush1.msra.mxu0 0.0
        %6064 = vmatprep.subr.mxu0 0.0
        %v6065 = vand.u32 %v280, 4294901760
        %6066 = vmatpush1.msra.mxu0 %v6065
        %6067 = vmatprep.subr.mxu0 0.0
        %v6068 = vand.u32 %v279, 4294901760
        %6069 = vmatpush1.msra.mxu0 %v6068
        %6070 = vmatprep.subr.mxu0 0.0
        %v6071 = vand.u32 %v278, 4294901760
        %6072 = vmatpush1.msra.mxu0 %v6071
        %6073 = vmatprep.subr.mxu0 0.0
        %v6074 = vand.u32 %v277, 4294901760
        %6075 = vmatpush1.msra.mxu0 %v6074
        %6076 = vmatprep.subr.mxu0 0.0
        %6077 = vmatpush2.msra.mxu0 0.0
        %6078 = vmatprep.subr.mxu0 0.0
        %6079 = vmatpush2.msra.mxu0 0.0
        %6080 = vmatprep.subr.mxu0 0.0
        %6081 = vmatpush2.msra.mxu0 0.0
        %6082 = vmatprep.subr.mxu0 0.0
        %6083 = vmatpush2.msra.mxu0 0.0
        %6084 = vmatprep.subr.mxu0 0.0
        %6085 = vmatpush2.msra.mxu0 0.0
        %6086 = vmatprep.subr.mxu0 0.0
        %6087 = vmatpush2.msra.mxu0 0.0
        %6088 = vmatprep.subr.mxu0 0.0
        %6089 = vmatpush2.msra.mxu0 0.0
        %6090 = vmatprep.subr.mxu0 0.0
        %6091 = vmatpush2.msra.mxu0 0.0
        %6092 = vmatprep.subr.mxu0 0.0
        %6093 = vmatpush2.msra.mxu0 0.0
        %6094 = vmatprep.subr.mxu0 0.0
        %6095 = vmatpush2.msra.mxu0 0.0
        %6096 = vmatprep.subr.mxu0 0.0
        %6097 = vmatpush2.msra.mxu0 0.0
        %6098 = vmatprep.subr.mxu0 0.0
        %6099 = vmatpush2.msra.mxu0 0.0
        %6100 = vmatprep.subr.mxu0 0.0
        %6101 = vmatpush2.msra.mxu0 0.0
        %6102 = vmatprep.subr.mxu0 0.0
        %6103 = vmatpush2.msra.mxu0 0.0
        %6104 = vmatprep.subr.mxu0 0.0
        %6105 = vmatpush2.msra.mxu0 0.0
        %6106 = vmatprep.subr.mxu0 0.0
        %6107 = vmatpush2.msra.mxu0 0.0
        %6108 = vmatprep.mubr.f32.mxu0 0.0
        %v6109 = vand.u32 %v6038, 4294901760
        %v6110 = vsub.f32 %v6038, %v6109
        %v6111 = vand.u32 %v6110, 4294901760
        %v6112 = vsub.f32 %v6110, %v6111
        %v6113 = vand.u32 %v6112, 4294901760
        %6114 = vmatmul.mubr.f32.gmra.mxu0 %v6113
        %v6115 = vpop.f32.mrf.mxu0
        %v6116 = vadd.f32 0.0, %v6115
        %v6117 = vpop.f32.mrf.mxu0
        %6118 = vdwg.mxu0
        %6119 = vmatprep.subr.mxu0 0.0
        %6120 = vmatpush1.msra.mxu0 0.0
        %6121 = vmatprep.subr.mxu0 0.0
        %6122 = vmatpush1.msra.mxu0 0.0
        %6123 = vmatprep.subr.mxu0 0.0
        %6124 = vmatpush1.msra.mxu0 0.0
        %6125 = vmatprep.subr.mxu0 0.0
        %6126 = vmatpush1.msra.mxu0 0.0
        %6127 = vmatprep.subr.mxu0 0.0
        %6128 = vmatpush1.msra.mxu0 0.0
        %6129 = vmatprep.subr.mxu0 0.0
        %6130 = vmatpush1.msra.mxu0 0.0
        %6131 = vmatprep.subr.mxu0 0.0
        %6132 = vmatpush1.msra.mxu0 0.0
        %6133 = vmatprep.subr.mxu0 0.0
        %6134 = vmatpush1.msra.mxu0 0.0
        %6135 = vmatprep.subr.mxu0 0.0
        %6136 = vmatpush1.msra.mxu0 0.0
        %6137 = vmatprep.subr.mxu0 0.0
        %6138 = vmatpush1.msra.mxu0 0.0
        %6139 = vmatprep.subr.mxu0 0.0
        %6140 = vmatpush1.msra.mxu0 0.0
        %6141 = vmatprep.subr.mxu0 0.0
        %6142 = vmatpush1.msra.mxu0 0.0
        %6143 = vmatprep.subr.mxu0 0.0
        %v6144 = vand.u32 %v280, 4294901760
        %v6145 = vsub.f32 %v280, %v6144
        %v6146 = vand.u32 %v6145, 4294901760
        %v6147 = vsub.f32 %v6145, %v6146
        %v6148 = vand.u32 %v6147, 4294901760
        %6149 = vmatpush1.msra.mxu0 %v6148
        %6150 = vmatprep.subr.mxu0 0.0
        %v6151 = vand.u32 %v279, 4294901760
        %v6152 = vsub.f32 %v279, %v6151
        %v6153 = vand.u32 %v6152, 4294901760
        %v6154 = vsub.f32 %v6152, %v6153
        %v6155 = vand.u32 %v6154, 4294901760
        %6156 = vmatpush1.msra.mxu0 %v6155
        %6157 = vmatprep.subr.mxu0 0.0
        %v6158 = vand.u32 %v278, 4294901760
        %v6159 = vsub.f32 %v278, %v6158
        %v6160 = vand.u32 %v6159, 4294901760
        %v6161 = vsub.f32 %v6159, %v6160
        %v6162 = vand.u32 %v6161, 4294901760
        %6163 = vmatpush1.msra.mxu0 %v6162
        %6164 = vmatprep.subr.mxu0 0.0
        %v6165 = vand.u32 %v277, 4294901760
        %v6166 = vsub.f32 %v277, %v6165
        %v6167 = vand.u32 %v6166, 4294901760
        %v6168 = vsub.f32 %v6166, %v6167
        %v6169 = vand.u32 %v6168, 4294901760
        %6170 = vmatpush1.msra.mxu0 %v6169
        %6171 = vmatprep.subr.mxu0 0.0
        %6172 = vmatpush2.msra.mxu0 0.0
        %6173 = vmatprep.subr.mxu0 0.0
        %6174 = vmatpush2.msra.mxu0 0.0
        %6175 = vmatprep.subr.mxu0 0.0
        %6176 = vmatpush2.msra.mxu0 0.0
        %6177 = vmatprep.subr.mxu0 0.0
        %6178 = vmatpush2.msra.mxu0 0.0
        %6179 = vmatprep.subr.mxu0 0.0
        %6180 = vmatpush2.msra.mxu0 0.0
        %6181 = vmatprep.subr.mxu0 0.0
        %6182 = vmatpush2.msra.mxu0 0.0
        %6183 = vmatprep.subr.mxu0 0.0
        %6184 = vmatpush2.msra.mxu0 0.0
        %6185 = vmatprep.subr.mxu0 0.0
        %6186 = vmatpush2.msra.mxu0 0.0
        %6187 = vmatprep.subr.mxu0 0.0
        %6188 = vmatpush2.msra.mxu0 0.0
        %6189 = vmatprep.subr.mxu0 0.0
        %6190 = vmatpush2.msra.mxu0 0.0
        %6191 = vmatprep.subr.mxu0 0.0
        %6192 = vmatpush2.msra.mxu0 0.0
        %6193 = vmatprep.subr.mxu0 0.0
        %6194 = vmatpush2.msra.mxu0 0.0
        %6195 = vmatprep.subr.mxu0 0.0
        %6196 = vmatpush2.msra.mxu0 0.0
        %6197 = vmatprep.subr.mxu0 0.0
        %6198 = vmatpush2.msra.mxu0 0.0
        %6199 = vmatprep.subr.mxu0 0.0
        %6200 = vmatpush2.msra.mxu0 0.0
        %6201 = vmatprep.subr.mxu0 0.0
        %6202 = vmatpush2.msra.mxu0 0.0
        %6203 = vmatprep.mubr.f32.mxu0 0.0
        %v6204 = vand.u32 %v6038, 4294901760
        %6205 = vmatmul.mubr.f32.gmra.mxu0 %v6204
        %v6206 = vpop.f32.mrf.mxu0
        %v6207 = vadd.f32 %v6116, %v6206
        %v6208 = vpop.f32.mrf.mxu0
        %6209 = vdwg.mxu0
        %6210 = vmatprep.subr.mxu0 0.0
        %6211 = vmatpush1.msra.mxu0 0.0
        %6212 = vmatprep.subr.mxu0 0.0
        %6213 = vmatpush1.msra.mxu0 0.0
        %6214 = vmatprep.subr.mxu0 0.0
        %6215 = vmatpush1.msra.mxu0 0.0
        %6216 = vmatprep.subr.mxu0 0.0
        %6217 = vmatpush1.msra.mxu0 0.0
        %6218 = vmatprep.subr.mxu0 0.0
        %6219 = vmatpush1.msra.mxu0 0.0
        %6220 = vmatprep.subr.mxu0 0.0
        %6221 = vmatpush1.msra.mxu0 0.0
        %6222 = vmatprep.subr.mxu0 0.0
        %6223 = vmatpush1.msra.mxu0 0.0
        %6224 = vmatprep.subr.mxu0 0.0
        %6225 = vmatpush1.msra.mxu0 0.0
        %6226 = vmatprep.subr.mxu0 0.0
        %6227 = vmatpush1.msra.mxu0 0.0
        %6228 = vmatprep.subr.mxu0 0.0
        %6229 = vmatpush1.msra.mxu0 0.0
        %6230 = vmatprep.subr.mxu0 0.0
        %6231 = vmatpush1.msra.mxu0 0.0
        %6232 = vmatprep.subr.mxu0 0.0
        %6233 = vmatpush1.msra.mxu0 0.0
        %6234 = vmatprep.subr.mxu0 0.0
        %v6235 = vand.u32 %v280, 4294901760
        %v6236 = vsub.f32 %v280, %v6235
        %6237 = vmatpush1.msra.mxu0 %v6236
        %6238 = vmatprep.subr.mxu0 0.0
        %v6239 = vand.u32 %v279, 4294901760
        %v6240 = vsub.f32 %v279, %v6239
        %6241 = vmatpush1.msra.mxu0 %v6240
        %6242 = vmatprep.subr.mxu0 0.0
        %v6243 = vand.u32 %v278, 4294901760
        %v6244 = vsub.f32 %v278, %v6243
        %6245 = vmatpush1.msra.mxu0 %v6244
        %6246 = vmatprep.subr.mxu0 0.0
        %v6247 = vand.u32 %v277, 4294901760
        %v6248 = vsub.f32 %v277, %v6247
        %6249 = vmatpush1.msra.mxu0 %v6248
        %6250 = vmatprep.subr.mxu0 0.0
        %6251 = vmatpush2.msra.mxu0 0.0
        %6252 = vmatprep.subr.mxu0 0.0
        %6253 = vmatpush2.msra.mxu0 0.0
        %6254 = vmatprep.subr.mxu0 0.0
        %6255 = vmatpush2.msra.mxu0 0.0
        %6256 = vmatprep.subr.mxu0 0.0
        %6257 = vmatpush2.msra.mxu0 0.0
        %6258 = vmatprep.subr.mxu0 0.0
        %6259 = vmatpush2.msra.mxu0 0.0
        %6260 = vmatprep.subr.mxu0 0.0
        %6261 = vmatpush2.msra.mxu0 0.0
        %6262 = vmatprep.subr.mxu0 0.0
        %6263 = vmatpush2.msra.mxu0 0.0
        %6264 = vmatprep.subr.mxu0 0.0
        %6265 = vmatpush2.msra.mxu0 0.0
        %6266 = vmatprep.subr.mxu0 0.0
        %6267 = vmatpush2.msra.mxu0 0.0
        %6268 = vmatprep.subr.mxu0 0.0
        %6269 = vmatpush2.msra.mxu0 0.0
        %6270 = vmatprep.subr.mxu0 0.0
        %6271 = vmatpush2.msra.mxu0 0.0
        %6272 = vmatprep.subr.mxu0 0.0
        %6273 = vmatpush2.msra.mxu0 0.0
        %6274 = vmatprep.subr.mxu0 0.0
        %6275 = vmatpush2.msra.mxu0 0.0
        %6276 = vmatprep.subr.mxu0 0.0
        %6277 = vmatpush2.msra.mxu0 0.0
        %6278 = vmatprep.subr.mxu0 0.0
        %6279 = vmatpush2.msra.mxu0 0.0
        %6280 = vmatprep.subr.mxu0 0.0
        %6281 = vmatpush2.msra.mxu0 0.0
        %6282 = vmatprep.mubr.f32.mxu0 0.0
        %v6283 = vand.u32 %v6038, 4294901760
        %v6284 = vsub.f32 %v6038, %v6283
        %6285 = vmatmul.mubr.f32.gmra.mxu0 %v6284
        %v6286 = vpop.f32.mrf.mxu0
        %v6287 = vadd.f32 %v6207, %v6286
        %v6288 = vpop.f32.mrf.mxu0
        %6289 = vdwg.mxu0
        %6290 = vmatprep.subr.mxu0 0.0
        %6291 = vmatpush1.msra.mxu0 0.0
        %6292 = vmatprep.subr.mxu0 0.0
        %6293 = vmatpush1.msra.mxu0 0.0
        %6294 = vmatprep.subr.mxu0 0.0
        %6295 = vmatpush1.msra.mxu0 0.0
        %6296 = vmatprep.subr.mxu0 0.0
        %6297 = vmatpush1.msra.mxu0 0.0
        %6298 = vmatprep.subr.mxu0 0.0
        %6299 = vmatpush1.msra.mxu0 0.0
        %6300 = vmatprep.subr.mxu0 0.0
        %6301 = vmatpush1.msra.mxu0 0.0
        %6302 = vmatprep.subr.mxu0 0.0
        %6303 = vmatpush1.msra.mxu0 0.0
        %6304 = vmatprep.subr.mxu0 0.0
        %6305 = vmatpush1.msra.mxu0 0.0
        %6306 = vmatprep.subr.mxu0 0.0
        %6307 = vmatpush1.msra.mxu0 0.0
        %6308 = vmatprep.subr.mxu0 0.0
        %6309 = vmatpush1.msra.mxu0 0.0
        %6310 = vmatprep.subr.mxu0 0.0
        %6311 = vmatpush1.msra.mxu0 0.0
        %6312 = vmatprep.subr.mxu0 0.0
        %6313 = vmatpush1.msra.mxu0 0.0
        %6314 = vmatprep.subr.mxu0 0.0
        %v6315 = vand.u32 %v280, 4294901760
        %6316 = vmatpush1.msra.mxu0 %v6315
        %6317 = vmatprep.subr.mxu0 0.0
        %v6318 = vand.u32 %v279, 4294901760
        %6319 = vmatpush1.msra.mxu0 %v6318
        %6320 = vmatprep.subr.mxu0 0.0
        %v6321 = vand.u32 %v278, 4294901760
        %6322 = vmatpush1.msra.mxu0 %v6321
        %6323 = vmatprep.subr.mxu0 0.0
        %v6324 = vand.u32 %v277, 4294901760
        %6325 = vmatpush1.msra.mxu0 %v6324
        %6326 = vmatprep.subr.mxu0 0.0
        %6327 = vmatpush2.msra.mxu0 0.0
        %6328 = vmatprep.subr.mxu0 0.0
        %6329 = vmatpush2.msra.mxu0 0.0
        %6330 = vmatprep.subr.mxu0 0.0
        %6331 = vmatpush2.msra.mxu0 0.0
        %6332 = vmatprep.subr.mxu0 0.0
        %6333 = vmatpush2.msra.mxu0 0.0
        %6334 = vmatprep.subr.mxu0 0.0
        %6335 = vmatpush2.msra.mxu0 0.0
        %6336 = vmatprep.subr.mxu0 0.0
        %6337 = vmatpush2.msra.mxu0 0.0
        %6338 = vmatprep.subr.mxu0 0.0
        %6339 = vmatpush2.msra.mxu0 0.0
        %6340 = vmatprep.subr.mxu0 0.0
        %6341 = vmatpush2.msra.mxu0 0.0
        %6342 = vmatprep.subr.mxu0 0.0
        %6343 = vmatpush2.msra.mxu0 0.0
        %6344 = vmatprep.subr.mxu0 0.0
        %6345 = vmatpush2.msra.mxu0 0.0
        %6346 = vmatprep.subr.mxu0 0.0
        %6347 = vmatpush2.msra.mxu0 0.0
        %6348 = vmatprep.subr.mxu0 0.0
        %6349 = vmatpush2.msra.mxu0 0.0
        %6350 = vmatprep.subr.mxu0 0.0
        %6351 = vmatpush2.msra.mxu0 0.0
        %6352 = vmatprep.subr.mxu0 0.0
        %6353 = vmatpush2.msra.mxu0 0.0
        %6354 = vmatprep.subr.mxu0 0.0
        %6355 = vmatpush2.msra.mxu0 0.0
        %6356 = vmatprep.subr.mxu0 0.0
        %6357 = vmatpush2.msra.mxu0 0.0
        %6358 = vmatprep.mubr.f32.mxu0 0.0
        %v6359 = vand.u32 %v6038, 4294901760
        %v6360 = vsub.f32 %v6038, %v6359
        %v6361 = vand.u32 %v6360, 4294901760
        %6362 = vmatmul.mubr.f32.gmra.mxu0 %v6361
        %v6363 = vpop.f32.mrf.mxu0
        %v6364 = vadd.f32 %v6287, %v6363
        %v6365 = vpop.f32.mrf.mxu0
        %6366 = vdwg.mxu0
        %6367 = vmatprep.subr.mxu0 0.0
        %6368 = vmatpush1.msra.mxu0 0.0
        %6369 = vmatprep.subr.mxu0 0.0
        %6370 = vmatpush1.msra.mxu0 0.0
        %6371 = vmatprep.subr.mxu0 0.0
        %6372 = vmatpush1.msra.mxu0 0.0
        %6373 = vmatprep.subr.mxu0 0.0
        %6374 = vmatpush1.msra.mxu0 0.0
        %6375 = vmatprep.subr.mxu0 0.0
        %6376 = vmatpush1.msra.mxu0 0.0
        %6377 = vmatprep.subr.mxu0 0.0
        %6378 = vmatpush1.msra.mxu0 0.0
        %6379 = vmatprep.subr.mxu0 0.0
        %6380 = vmatpush1.msra.mxu0 0.0
        %6381 = vmatprep.subr.mxu0 0.0
        %6382 = vmatpush1.msra.mxu0 0.0
        %6383 = vmatprep.subr.mxu0 0.0
        %6384 = vmatpush1.msra.mxu0 0.0
        %6385 = vmatprep.subr.mxu0 0.0
        %6386 = vmatpush1.msra.mxu0 0.0
        %6387 = vmatprep.subr.mxu0 0.0
        %6388 = vmatpush1.msra.mxu0 0.0
        %6389 = vmatprep.subr.mxu0 0.0
        %6390 = vmatpush1.msra.mxu0 0.0
        %6391 = vmatprep.subr.mxu0 0.0
        %v6392 = vand.u32 %v280, 4294901760
        %v6393 = vsub.f32 %v280, %v6392
        %v6394 = vand.u32 %v6393, 4294901760
        %6395 = vmatpush1.msra.mxu0 %v6394
        %6396 = vmatprep.subr.mxu0 0.0
        %v6397 = vand.u32 %v279, 4294901760
        %v6398 = vsub.f32 %v279, %v6397
        %v6399 = vand.u32 %v6398, 4294901760
        %6400 = vmatpush1.msra.mxu0 %v6399
        %6401 = vmatprep.subr.mxu0 0.0
        %v6402 = vand.u32 %v278, 4294901760
        %v6403 = vsub.f32 %v278, %v6402
        %v6404 = vand.u32 %v6403, 4294901760
        %6405 = vmatpush1.msra.mxu0 %v6404
        %6406 = vmatprep.subr.mxu0 0.0
        %v6407 = vand.u32 %v277, 4294901760
        %v6408 = vsub.f32 %v277, %v6407
        %v6409 = vand.u32 %v6408, 4294901760
        %6410 = vmatpush1.msra.mxu0 %v6409
        %6411 = vmatprep.subr.mxu0 0.0
        %6412 = vmatpush2.msra.mxu0 0.0
        %6413 = vmatprep.subr.mxu0 0.0
        %6414 = vmatpush2.msra.mxu0 0.0
        %6415 = vmatprep.subr.mxu0 0.0
        %6416 = vmatpush2.msra.mxu0 0.0
        %6417 = vmatprep.subr.mxu0 0.0
        %6418 = vmatpush2.msra.mxu0 0.0
        %6419 = vmatprep.subr.mxu0 0.0
        %6420 = vmatpush2.msra.mxu0 0.0
        %6421 = vmatprep.subr.mxu0 0.0
        %6422 = vmatpush2.msra.mxu0 0.0
        %6423 = vmatprep.subr.mxu0 0.0
        %6424 = vmatpush2.msra.mxu0 0.0
        %6425 = vmatprep.subr.mxu0 0.0
        %6426 = vmatpush2.msra.mxu0 0.0
        %6427 = vmatprep.subr.mxu0 0.0
        %6428 = vmatpush2.msra.mxu0 0.0
        %6429 = vmatprep.subr.mxu0 0.0
        %6430 = vmatpush2.msra.mxu0 0.0
        %6431 = vmatprep.subr.mxu0 0.0
        %6432 = vmatpush2.msra.mxu0 0.0
        %6433 = vmatprep.subr.mxu0 0.0
        %6434 = vmatpush2.msra.mxu0 0.0
        %6435 = vmatprep.subr.mxu0 0.0
        %6436 = vmatpush2.msra.mxu0 0.0
        %6437 = vmatprep.subr.mxu0 0.0
        %6438 = vmatpush2.msra.mxu0 0.0
        %6439 = vmatprep.subr.mxu0 0.0
        %6440 = vmatpush2.msra.mxu0 0.0
        %6441 = vmatprep.subr.mxu0 0.0
        %6442 = vmatpush2.msra.mxu0 0.0
        %6443 = vmatprep.mubr.f32.mxu0 0.0
        %v6444 = vand.u32 %v6038, 4294901760
        %6445 = vmatmul.mubr.f32.gmra.mxu0 %v6444
        %v6446 = vpop.f32.mrf.mxu0
        %v6447 = vadd.f32 %v6364, %v6446
        %v6448 = vpop.f32.mrf.mxu0
        %6449 = vdwg.mxu0
        %6450 = vmatprep.subr.mxu0 0.0
        %6451 = vmatpush1.msra.mxu0 0.0
        %6452 = vmatprep.subr.mxu0 0.0
        %6453 = vmatpush1.msra.mxu0 0.0
        %6454 = vmatprep.subr.mxu0 0.0
        %6455 = vmatpush1.msra.mxu0 0.0
        %6456 = vmatprep.subr.mxu0 0.0
        %6457 = vmatpush1.msra.mxu0 0.0
        %6458 = vmatprep.subr.mxu0 0.0
        %6459 = vmatpush1.msra.mxu0 0.0
        %6460 = vmatprep.subr.mxu0 0.0
        %6461 = vmatpush1.msra.mxu0 0.0
        %6462 = vmatprep.subr.mxu0 0.0
        %6463 = vmatpush1.msra.mxu0 0.0
        %6464 = vmatprep.subr.mxu0 0.0
        %6465 = vmatpush1.msra.mxu0 0.0
        %6466 = vmatprep.subr.mxu0 0.0
        %6467 = vmatpush1.msra.mxu0 0.0
        %6468 = vmatprep.subr.mxu0 0.0
        %6469 = vmatpush1.msra.mxu0 0.0
        %6470 = vmatprep.subr.mxu0 0.0
        %6471 = vmatpush1.msra.mxu0 0.0
        %6472 = vmatprep.subr.mxu0 0.0
        %6473 = vmatpush1.msra.mxu0 0.0
        %6474 = vmatprep.subr.mxu0 0.0
        %v6475 = vand.u32 %v280, 4294901760
        %6476 = vmatpush1.msra.mxu0 %v6475
        %6477 = vmatprep.subr.mxu0 0.0
        %v6478 = vand.u32 %v279, 4294901760
        %6479 = vmatpush1.msra.mxu0 %v6478
        %6480 = vmatprep.subr.mxu0 0.0
        %v6481 = vand.u32 %v278, 4294901760
        %6482 = vmatpush1.msra.mxu0 %v6481
        %6483 = vmatprep.subr.mxu0 0.0
        %v6484 = vand.u32 %v277, 4294901760
        %6485 = vmatpush1.msra.mxu0 %v6484
        %6486 = vmatprep.subr.mxu0 0.0
        %6487 = vmatpush2.msra.mxu0 0.0
        %6488 = vmatprep.subr.mxu0 0.0
        %6489 = vmatpush2.msra.mxu0 0.0
        %6490 = vmatprep.subr.mxu0 0.0
        %6491 = vmatpush2.msra.mxu0 0.0
        %6492 = vmatprep.subr.mxu0 0.0
        %6493 = vmatpush2.msra.mxu0 0.0
        %6494 = vmatprep.subr.mxu0 0.0
        %6495 = vmatpush2.msra.mxu0 0.0
        %6496 = vmatprep.subr.mxu0 0.0
        %6497 = vmatpush2.msra.mxu0 0.0
        %6498 = vmatprep.subr.mxu0 0.0
        %6499 = vmatpush2.msra.mxu0 0.0
        %6500 = vmatprep.subr.mxu0 0.0
        %6501 = vmatpush2.msra.mxu0 0.0
        %6502 = vmatprep.subr.mxu0 0.0
        %6503 = vmatpush2.msra.mxu0 0.0
        %6504 = vmatprep.subr.mxu0 0.0
        %6505 = vmatpush2.msra.mxu0 0.0
        %6506 = vmatprep.subr.mxu0 0.0
        %6507 = vmatpush2.msra.mxu0 0.0
        %6508 = vmatprep.subr.mxu0 0.0
        %6509 = vmatpush2.msra.mxu0 0.0
        %6510 = vmatprep.subr.mxu0 0.0
        %6511 = vmatpush2.msra.mxu0 0.0
        %6512 = vmatprep.subr.mxu0 0.0
        %6513 = vmatpush2.msra.mxu0 0.0
        %6514 = vmatprep.subr.mxu0 0.0
        %6515 = vmatpush2.msra.mxu0 0.0
        %6516 = vmatprep.subr.mxu0 0.0
        %6517 = vmatpush2.msra.mxu0 0.0
        %6518 = vmatprep.mubr.f32.mxu0 0.0
        %v6519 = vand.u32 %v6038, 4294901760
        %6520 = vmatmul.mubr.f32.gmra.mxu0 %v6519
        %v6521 = vpop.f32.mrf.mxu0
        %v6522 = vadd.f32 %v6447, %v6521
        %v6523 = vpop.f32.mrf.mxu0
        %6524 = vdwg.mxu0
        %v6525 = vld [vmem:[#allocation2 + $0x60] sm:$0xff]
        %v6526 = vld [vmem:[#allocation2 + $0x68] sm:$0xff]
        %v6528 = vsel %vm1275, %v6522, 0
        %6530 = vmatprep.subr.mxu0 0.0
        %6531 = vmatpush1.msra.mxu0 0.0
        %6532 = vmatprep.subr.mxu0 0.0
        %6533 = vmatpush1.msra.mxu0 0.0
        %6534 = vmatprep.subr.mxu0 0.0
        %6535 = vmatpush1.msra.mxu0 0.0
        %6536 = vmatprep.subr.mxu0 0.0
        %6537 = vmatpush1.msra.mxu0 0.0
        %6538 = vmatprep.subr.mxu0 0.0
        %6539 = vmatpush1.msra.mxu0 0.0
        %6540 = vmatprep.subr.mxu0 0.0
        %6541 = vmatpush1.msra.mxu0 0.0
        %6542 = vmatprep.subr.mxu0 0.0
        %6543 = vmatpush1.msra.mxu0 0.0
        %6544 = vmatprep.subr.mxu0 0.0
        %6545 = vmatpush1.msra.mxu0 0.0
        %6546 = vmatprep.subr.mxu0 0.0
        %6547 = vmatpush1.msra.mxu0 0.0
        %6548 = vmatprep.subr.mxu0 0.0
        %6549 = vmatpush1.msra.mxu0 0.0
        %6550 = vmatprep.subr.mxu0 0.0
        %6551 = vmatpush1.msra.mxu0 0.0
        %6552 = vmatprep.subr.mxu0 0.0
        %6553 = vmatpush1.msra.mxu0 0.0
        %6554 = vmatprep.subr.mxu0 0.0
        %6555 = vmatpush1.msra.mxu0 0.0
        %6556 = vmatprep.subr.mxu0 0.0
        %6557 = vmatpush1.msra.mxu0 0.0
        %6558 = vmatprep.subr.mxu0 0.0
        %v6559 = vand.u32 %v6526, 4294901760
        %6560 = vmatpush1.msra.mxu0 %v6559
        %6561 = vmatprep.subr.mxu0 0.0
        %v6562 = vand.u32 %v6525, 4294901760
        %6563 = vmatpush1.msra.mxu0 %v6562
        %6564 = vmatprep.subr.mxu0 0.0
        %6565 = vmatpush2.msra.mxu0 0.0
        %6566 = vmatprep.subr.mxu0 0.0
        %6567 = vmatpush2.msra.mxu0 0.0
        %6568 = vmatprep.subr.mxu0 0.0
        %6569 = vmatpush2.msra.mxu0 0.0
        %6570 = vmatprep.subr.mxu0 0.0
        %6571 = vmatpush2.msra.mxu0 0.0
        %6572 = vmatprep.subr.mxu0 0.0
        %6573 = vmatpush2.msra.mxu0 0.0
        %6574 = vmatprep.subr.mxu0 0.0
        %6575 = vmatpush2.msra.mxu0 0.0
        %6576 = vmatprep.subr.mxu0 0.0
        %6577 = vmatpush2.msra.mxu0 0.0
        %6578 = vmatprep.subr.mxu0 0.0
        %6579 = vmatpush2.msra.mxu0 0.0
        %6580 = vmatprep.subr.mxu0 0.0
        %6581 = vmatpush2.msra.mxu0 0.0
        %6582 = vmatprep.subr.mxu0 0.0
        %6583 = vmatpush2.msra.mxu0 0.0
        %6584 = vmatprep.subr.mxu0 0.0
        %6585 = vmatpush2.msra.mxu0 0.0
        %6586 = vmatprep.subr.mxu0 0.0
        %6587 = vmatpush2.msra.mxu0 0.0
        %6588 = vmatprep.subr.mxu0 0.0
        %6589 = vmatpush2.msra.mxu0 0.0
        %6590 = vmatprep.subr.mxu0 0.0
        %6591 = vmatpush2.msra.mxu0 0.0
        %6592 = vmatprep.subr.mxu0 0.0
        %6593 = vmatpush2.msra.mxu0 0.0
        %6594 = vmatprep.subr.mxu0 0.0
        %6595 = vmatpush2.msra.mxu0 0.0
        %6596 = vmatprep.mubr.f32.mxu0 0.0
        %v6597 = vand.u32 %v6528, 4294901760
        %v6598 = vsub.f32 %v6528, %v6597
        %v6599 = vand.u32 %v6598, 4294901760
        %v6600 = vsub.f32 %v6598, %v6599
        %v6601 = vand.u32 %v6600, 4294901760
        %6602 = vmatmul.mubr.f32.gmra.mxu0 %v6601
        %v6603 = vpop.f32.mrf.mxu0
        %v6604 = vadd.f32 0.0, %v6603
        %v6605 = vpop.f32.mrf.mxu0
        %6606 = vdwg.mxu0
        %6607 = vmatprep.subr.mxu0 0.0
        %6608 = vmatpush1.msra.mxu0 0.0
        %6609 = vmatprep.subr.mxu0 0.0
        %6610 = vmatpush1.msra.mxu0 0.0
        %6611 = vmatprep.subr.mxu0 0.0
        %6612 = vmatpush1.msra.mxu0 0.0
        %6613 = vmatprep.subr.mxu0 0.0
        %6614 = vmatpush1.msra.mxu0 0.0
        %6615 = vmatprep.subr.mxu0 0.0
        %6616 = vmatpush1.msra.mxu0 0.0
        %6617 = vmatprep.subr.mxu0 0.0
        %6618 = vmatpush1.msra.mxu0 0.0
        %6619 = vmatprep.subr.mxu0 0.0
        %6620 = vmatpush1.msra.mxu0 0.0
        %6621 = vmatprep.subr.mxu0 0.0
        %6622 = vmatpush1.msra.mxu0 0.0
        %6623 = vmatprep.subr.mxu0 0.0
        %6624 = vmatpush1.msra.mxu0 0.0
        %6625 = vmatprep.subr.mxu0 0.0
        %6626 = vmatpush1.msra.mxu0 0.0
        %6627 = vmatprep.subr.mxu0 0.0
        %6628 = vmatpush1.msra.mxu0 0.0
        %6629 = vmatprep.subr.mxu0 0.0
        %6630 = vmatpush1.msra.mxu0 0.0
        %6631 = vmatprep.subr.mxu0 0.0
        %6632 = vmatpush1.msra.mxu0 0.0
        %6633 = vmatprep.subr.mxu0 0.0
        %6634 = vmatpush1.msra.mxu0 0.0
        %6635 = vmatprep.subr.mxu0 0.0
        %v6636 = vand.u32 %v6526, 4294901760
        %v6637 = vsub.f32 %v6526, %v6636
        %v6638 = vand.u32 %v6637, 4294901760
        %v6639 = vsub.f32 %v6637, %v6638
        %v6640 = vand.u32 %v6639, 4294901760
        %6641 = vmatpush1.msra.mxu0 %v6640
        %6642 = vmatprep.subr.mxu0 0.0
        %v6643 = vand.u32 %v6525, 4294901760
        %v6644 = vsub.f32 %v6525, %v6643
        %v6645 = vand.u32 %v6644, 4294901760
        %v6646 = vsub.f32 %v6644, %v6645
        %v6647 = vand.u32 %v6646, 4294901760
        %6648 = vmatpush1.msra.mxu0 %v6647
        %6649 = vmatprep.subr.mxu0 0.0
        %6650 = vmatpush2.msra.mxu0 0.0
        %6651 = vmatprep.subr.mxu0 0.0
        %6652 = vmatpush2.msra.mxu0 0.0
        %6653 = vmatprep.subr.mxu0 0.0
        %6654 = vmatpush2.msra.mxu0 0.0
        %6655 = vmatprep.subr.mxu0 0.0
        %6656 = vmatpush2.msra.mxu0 0.0
        %6657 = vmatprep.subr.mxu0 0.0
        %6658 = vmatpush2.msra.mxu0 0.0
        %6659 = vmatprep.subr.mxu0 0.0
        %6660 = vmatpush2.msra.mxu0 0.0
        %6661 = vmatprep.subr.mxu0 0.0
        %6662 = vmatpush2.msra.mxu0 0.0
        %6663 = vmatprep.subr.mxu0 0.0
        %6664 = vmatpush2.msra.mxu0 0.0
        %6665 = vmatprep.subr.mxu0 0.0
        %6666 = vmatpush2.msra.mxu0 0.0
        %6667 = vmatprep.subr.mxu0 0.0
        %6668 = vmatpush2.msra.mxu0 0.0
        %6669 = vmatprep.subr.mxu0 0.0
        %6670 = vmatpush2.msra.mxu0 0.0
        %6671 = vmatprep.subr.mxu0 0.0
        %6672 = vmatpush2.msra.mxu0 0.0
        %6673 = vmatprep.subr.mxu0 0.0
        %6674 = vmatpush2.msra.mxu0 0.0
        %6675 = vmatprep.subr.mxu0 0.0
        %6676 = vmatpush2.msra.mxu0 0.0
        %6677 = vmatprep.subr.mxu0 0.0
        %6678 = vmatpush2.msra.mxu0 0.0
        %6679 = vmatprep.subr.mxu0 0.0
        %6680 = vmatpush2.msra.mxu0 0.0
        %6681 = vmatprep.mubr.f32.mxu0 0.0
        %v6682 = vand.u32 %v6528, 4294901760
        %6683 = vmatmul.mubr.f32.gmra.mxu0 %v6682
        %v6684 = vpop.f32.mrf.mxu0
        %v6685 = vadd.f32 %v6604, %v6684
        %v6686 = vpop.f32.mrf.mxu0
        %6687 = vdwg.mxu0
        %6688 = vmatprep.subr.mxu0 0.0
        %6689 = vmatpush1.msra.mxu0 0.0
        %6690 = vmatprep.subr.mxu0 0.0
        %6691 = vmatpush1.msra.mxu0 0.0
        %6692 = vmatprep.subr.mxu0 0.0
        %6693 = vmatpush1.msra.mxu0 0.0
        %6694 = vmatprep.subr.mxu0 0.0
        %6695 = vmatpush1.msra.mxu0 0.0
        %6696 = vmatprep.subr.mxu0 0.0
        %6697 = vmatpush1.msra.mxu0 0.0
        %6698 = vmatprep.subr.mxu0 0.0
        %6699 = vmatpush1.msra.mxu0 0.0
        %6700 = vmatprep.subr.mxu0 0.0
        %6701 = vmatpush1.msra.mxu0 0.0
        %6702 = vmatprep.subr.mxu0 0.0
        %6703 = vmatpush1.msra.mxu0 0.0
        %6704 = vmatprep.subr.mxu0 0.0
        %6705 = vmatpush1.msra.mxu0 0.0
        %6706 = vmatprep.subr.mxu0 0.0
        %6707 = vmatpush1.msra.mxu0 0.0
        %6708 = vmatprep.subr.mxu0 0.0
        %6709 = vmatpush1.msra.mxu0 0.0
        %6710 = vmatprep.subr.mxu0 0.0
        %6711 = vmatpush1.msra.mxu0 0.0
        %6712 = vmatprep.subr.mxu0 0.0
        %6713 = vmatpush1.msra.mxu0 0.0
        %6714 = vmatprep.subr.mxu0 0.0
        %6715 = vmatpush1.msra.mxu0 0.0
        %6716 = vmatprep.subr.mxu0 0.0
        %v6717 = vand.u32 %v6526, 4294901760
        %v6718 = vsub.f32 %v6526, %v6717
        %6719 = vmatpush1.msra.mxu0 %v6718
        %6720 = vmatprep.subr.mxu0 0.0
        %v6721 = vand.u32 %v6525, 4294901760
        %v6722 = vsub.f32 %v6525, %v6721
        %6723 = vmatpush1.msra.mxu0 %v6722
        %6724 = vmatprep.subr.mxu0 0.0
        %6725 = vmatpush2.msra.mxu0 0.0
        %6726 = vmatprep.subr.mxu0 0.0
        %6727 = vmatpush2.msra.mxu0 0.0
        %6728 = vmatprep.subr.mxu0 0.0
        %6729 = vmatpush2.msra.mxu0 0.0
        %6730 = vmatprep.subr.mxu0 0.0
        %6731 = vmatpush2.msra.mxu0 0.0
        %6732 = vmatprep.subr.mxu0 0.0
        %6733 = vmatpush2.msra.mxu0 0.0
        %6734 = vmatprep.subr.mxu0 0.0
        %6735 = vmatpush2.msra.mxu0 0.0
        %6736 = vmatprep.subr.mxu0 0.0
        %6737 = vmatpush2.msra.mxu0 0.0
        %6738 = vmatprep.subr.mxu0 0.0
        %6739 = vmatpush2.msra.mxu0 0.0
        %6740 = vmatprep.subr.mxu0 0.0
        %6741 = vmatpush2.msra.mxu0 0.0
        %6742 = vmatprep.subr.mxu0 0.0
        %6743 = vmatpush2.msra.mxu0 0.0
        %6744 = vmatprep.subr.mxu0 0.0
        %6745 = vmatpush2.msra.mxu0 0.0
        %6746 = vmatprep.subr.mxu0 0.0
        %6747 = vmatpush2.msra.mxu0 0.0
        %6748 = vmatprep.subr.mxu0 0.0
        %6749 = vmatpush2.msra.mxu0 0.0
        %6750 = vmatprep.subr.mxu0 0.0
        %6751 = vmatpush2.msra.mxu0 0.0
        %6752 = vmatprep.subr.mxu0 0.0
        %6753 = vmatpush2.msra.mxu0 0.0
        %6754 = vmatprep.subr.mxu0 0.0
        %6755 = vmatpush2.msra.mxu0 0.0
        %6756 = vmatprep.mubr.f32.mxu0 0.0
        %v6757 = vand.u32 %v6528, 4294901760
        %v6758 = vsub.f32 %v6528, %v6757
        %6759 = vmatmul.mubr.f32.gmra.mxu0 %v6758
        %v6760 = vpop.f32.mrf.mxu0
        %v6761 = vadd.f32 %v6685, %v6760
        %v6762 = vpop.f32.mrf.mxu0
        %6763 = vdwg.mxu0
        %6764 = vmatprep.subr.mxu0 0.0
        %6765 = vmatpush1.msra.mxu0 0.0
        %6766 = vmatprep.subr.mxu0 0.0
        %6767 = vmatpush1.msra.mxu0 0.0
        %6768 = vmatprep.subr.mxu0 0.0
        %6769 = vmatpush1.msra.mxu0 0.0
        %6770 = vmatprep.subr.mxu0 0.0
        %6771 = vmatpush1.msra.mxu0 0.0
        %6772 = vmatprep.subr.mxu0 0.0
        %6773 = vmatpush1.msra.mxu0 0.0
        %6774 = vmatprep.subr.mxu0 0.0
        %6775 = vmatpush1.msra.mxu0 0.0
        %6776 = vmatprep.subr.mxu0 0.0
        %6777 = vmatpush1.msra.mxu0 0.0
        %6778 = vmatprep.subr.mxu0 0.0
        %6779 = vmatpush1.msra.mxu0 0.0
        %6780 = vmatprep.subr.mxu0 0.0
        %6781 = vmatpush1.msra.mxu0 0.0
        %6782 = vmatprep.subr.mxu0 0.0
        %6783 = vmatpush1.msra.mxu0 0.0
        %6784 = vmatprep.subr.mxu0 0.0
        %6785 = vmatpush1.msra.mxu0 0.0
        %6786 = vmatprep.subr.mxu0 0.0
        %6787 = vmatpush1.msra.mxu0 0.0
        %6788 = vmatprep.subr.mxu0 0.0
        %6789 = vmatpush1.msra.mxu0 0.0
        %6790 = vmatprep.subr.mxu0 0.0
        %6791 = vmatpush1.msra.mxu0 0.0
        %6792 = vmatprep.subr.mxu0 0.0
        %v6793 = vand.u32 %v6526, 4294901760
        %6794 = vmatpush1.msra.mxu0 %v6793
        %6795 = vmatprep.subr.mxu0 0.0
        %v6796 = vand.u32 %v6525, 4294901760
        %6797 = vmatpush1.msra.mxu0 %v6796
        %6798 = vmatprep.subr.mxu0 0.0
        %6799 = vmatpush2.msra.mxu0 0.0
        %6800 = vmatprep.subr.mxu0 0.0
        %6801 = vmatpush2.msra.mxu0 0.0
        %6802 = vmatprep.subr.mxu0 0.0
        %6803 = vmatpush2.msra.mxu0 0.0
        %6804 = vmatprep.subr.mxu0 0.0
        %6805 = vmatpush2.msra.mxu0 0.0
        %6806 = vmatprep.subr.mxu0 0.0
        %6807 = vmatpush2.msra.mxu0 0.0
        %6808 = vmatprep.subr.mxu0 0.0
        %6809 = vmatpush2.msra.mxu0 0.0
        %6810 = vmatprep.subr.mxu0 0.0
        %6811 = vmatpush2.msra.mxu0 0.0
        %6812 = vmatprep.subr.mxu0 0.0
        %6813 = vmatpush2.msra.mxu0 0.0
        %6814 = vmatprep.subr.mxu0 0.0
        %6815 = vmatpush2.msra.mxu0 0.0
        %6816 = vmatprep.subr.mxu0 0.0
        %6817 = vmatpush2.msra.mxu0 0.0
        %6818 = vmatprep.subr.mxu0 0.0
        %6819 = vmatpush2.msra.mxu0 0.0
        %6820 = vmatprep.subr.mxu0 0.0
        %6821 = vmatpush2.msra.mxu0 0.0
        %6822 = vmatprep.subr.mxu0 0.0
        %6823 = vmatpush2.msra.mxu0 0.0
        %6824 = vmatprep.subr.mxu0 0.0
        %6825 = vmatpush2.msra.mxu0 0.0
        %6826 = vmatprep.subr.mxu0 0.0
        %6827 = vmatpush2.msra.mxu0 0.0
        %6828 = vmatprep.subr.mxu0 0.0
        %6829 = vmatpush2.msra.mxu0 0.0
        %6830 = vmatprep.mubr.f32.mxu0 0.0
        %v6831 = vand.u32 %v6528, 4294901760
        %v6832 = vsub.f32 %v6528, %v6831
        %v6833 = vand.u32 %v6832, 4294901760
        %6834 = vmatmul.mubr.f32.gmra.mxu0 %v6833
        %v6835 = vpop.f32.mrf.mxu0
        %v6836 = vadd.f32 %v6761, %v6835
        %v6837 = vpop.f32.mrf.mxu0
        %6838 = vdwg.mxu0
        %6839 = vmatprep.subr.mxu0 0.0
        %6840 = vmatpush1.msra.mxu0 0.0
        %6841 = vmatprep.subr.mxu0 0.0
        %6842 = vmatpush1.msra.mxu0 0.0
        %6843 = vmatprep.subr.mxu0 0.0
        %6844 = vmatpush1.msra.mxu0 0.0
        %6845 = vmatprep.subr.mxu0 0.0
        %6846 = vmatpush1.msra.mxu0 0.0
        %6847 = vmatprep.subr.mxu0 0.0
        %6848 = vmatpush1.msra.mxu0 0.0
        %6849 = vmatprep.subr.mxu0 0.0
        %6850 = vmatpush1.msra.mxu0 0.0
        %6851 = vmatprep.subr.mxu0 0.0
        %6852 = vmatpush1.msra.mxu0 0.0
        %6853 = vmatprep.subr.mxu0 0.0
        %6854 = vmatpush1.msra.mxu0 0.0
        %6855 = vmatprep.subr.mxu0 0.0
        %6856 = vmatpush1.msra.mxu0 0.0
        %6857 = vmatprep.subr.mxu0 0.0
        %6858 = vmatpush1.msra.mxu0 0.0
        %6859 = vmatprep.subr.mxu0 0.0
        %6860 = vmatpush1.msra.mxu0 0.0
        %6861 = vmatprep.subr.mxu0 0.0
        %6862 = vmatpush1.msra.mxu0 0.0
        %6863 = vmatprep.subr.mxu0 0.0
        %6864 = vmatpush1.msra.mxu0 0.0
        %6865 = vmatprep.subr.mxu0 0.0
        %6866 = vmatpush1.msra.mxu0 0.0
        %6867 = vmatprep.subr.mxu0 0.0
        %v6868 = vand.u32 %v6526, 4294901760
        %v6869 = vsub.f32 %v6526, %v6868
        %v6870 = vand.u32 %v6869, 4294901760
        %6871 = vmatpush1.msra.mxu0 %v6870
        %6872 = vmatprep.subr.mxu0 0.0
        %v6873 = vand.u32 %v6525, 4294901760
        %v6874 = vsub.f32 %v6525, %v6873
        %v6875 = vand.u32 %v6874, 4294901760
        %6876 = vmatpush1.msra.mxu0 %v6875
        %6877 = vmatprep.subr.mxu0 0.0
        %6878 = vmatpush2.msra.mxu0 0.0
        %6879 = vmatprep.subr.mxu0 0.0
        %6880 = vmatpush2.msra.mxu0 0.0
        %6881 = vmatprep.subr.mxu0 0.0
        %6882 = vmatpush2.msra.mxu0 0.0
        %6883 = vmatprep.subr.mxu0 0.0
        %6884 = vmatpush2.msra.mxu0 0.0
        %6885 = vmatprep.subr.mxu0 0.0
        %6886 = vmatpush2.msra.mxu0 0.0
        %6887 = vmatprep.subr.mxu0 0.0
        %6888 = vmatpush2.msra.mxu0 0.0
        %6889 = vmatprep.subr.mxu0 0.0
        %6890 = vmatpush2.msra.mxu0 0.0
        %6891 = vmatprep.subr.mxu0 0.0
        %6892 = vmatpush2.msra.mxu0 0.0
        %6893 = vmatprep.subr.mxu0 0.0
        %6894 = vmatpush2.msra.mxu0 0.0
        %6895 = vmatprep.subr.mxu0 0.0
        %6896 = vmatpush2.msra.mxu0 0.0
        %6897 = vmatprep.subr.mxu0 0.0
        %6898 = vmatpush2.msra.mxu0 0.0
        %6899 = vmatprep.subr.mxu0 0.0
        %6900 = vmatpush2.msra.mxu0 0.0
        %6901 = vmatprep.subr.mxu0 0.0
        %6902 = vmatpush2.msra.mxu0 0.0
        %6903 = vmatprep.subr.mxu0 0.0
        %6904 = vmatpush2.msra.mxu0 0.0
        %6905 = vmatprep.subr.mxu0 0.0
        %6906 = vmatpush2.msra.mxu0 0.0
        %6907 = vmatprep.subr.mxu0 0.0
        %6908 = vmatpush2.msra.mxu0 0.0
        %6909 = vmatprep.mubr.f32.mxu0 0.0
        %v6910 = vand.u32 %v6528, 4294901760
        %6911 = vmatmul.mubr.f32.gmra.mxu0 %v6910
        %v6912 = vpop.f32.mrf.mxu0
        %v6913 = vadd.f32 %v6836, %v6912
        %v6914 = vpop.f32.mrf.mxu0
        %6915 = vdwg.mxu0
        %6916 = vmatprep.subr.mxu0 0.0
        %6917 = vmatpush1.msra.mxu0 0.0
        %6918 = vmatprep.subr.mxu0 0.0
        %6919 = vmatpush1.msra.mxu0 0.0
        %6920 = vmatprep.subr.mxu0 0.0
        %6921 = vmatpush1.msra.mxu0 0.0
        %6922 = vmatprep.subr.mxu0 0.0
        %6923 = vmatpush1.msra.mxu0 0.0
        %6924 = vmatprep.subr.mxu0 0.0
        %6925 = vmatpush1.msra.mxu0 0.0
        %6926 = vmatprep.subr.mxu0 0.0
        %6927 = vmatpush1.msra.mxu0 0.0
        %6928 = vmatprep.subr.mxu0 0.0
        %6929 = vmatpush1.msra.mxu0 0.0
        %6930 = vmatprep.subr.mxu0 0.0
        %6931 = vmatpush1.msra.mxu0 0.0
        %6932 = vmatprep.subr.mxu0 0.0
        %6933 = vmatpush1.msra.mxu0 0.0
        %6934 = vmatprep.subr.mxu0 0.0
        %6935 = vmatpush1.msra.mxu0 0.0
        %6936 = vmatprep.subr.mxu0 0.0
        %6937 = vmatpush1.msra.mxu0 0.0
        %6938 = vmatprep.subr.mxu0 0.0
        %6939 = vmatpush1.msra.mxu0 0.0
        %6940 = vmatprep.subr.mxu0 0.0
        %6941 = vmatpush1.msra.mxu0 0.0
        %6942 = vmatprep.subr.mxu0 0.0
        %6943 = vmatpush1.msra.mxu0 0.0
        %6944 = vmatprep.subr.mxu0 0.0
        %v6945 = vand.u32 %v6526, 4294901760
        %6946 = vmatpush1.msra.mxu0 %v6945
        %6947 = vmatprep.subr.mxu0 0.0
        %v6948 = vand.u32 %v6525, 4294901760
        %6949 = vmatpush1.msra.mxu0 %v6948
        %6950 = vmatprep.subr.mxu0 0.0
        %6951 = vmatpush2.msra.mxu0 0.0
        %6952 = vmatprep.subr.mxu0 0.0
        %6953 = vmatpush2.msra.mxu0 0.0
        %6954 = vmatprep.subr.mxu0 0.0
        %6955 = vmatpush2.msra.mxu0 0.0
        %6956 = vmatprep.subr.mxu0 0.0
        %6957 = vmatpush2.msra.mxu0 0.0
        %6958 = vmatprep.subr.mxu0 0.0
        %6959 = vmatpush2.msra.mxu0 0.0
        %6960 = vmatprep.subr.mxu0 0.0
        %6961 = vmatpush2.msra.mxu0 0.0
        %6962 = vmatprep.subr.mxu0 0.0
        %6963 = vmatpush2.msra.mxu0 0.0
        %6964 = vmatprep.subr.mxu0 0.0
        %6965 = vmatpush2.msra.mxu0 0.0
        %6966 = vmatprep.subr.mxu0 0.0
        %6967 = vmatpush2.msra.mxu0 0.0
        %6968 = vmatprep.subr.mxu0 0.0
        %6969 = vmatpush2.msra.mxu0 0.0
        %6970 = vmatprep.subr.mxu0 0.0
        %6971 = vmatpush2.msra.mxu0 0.0
        %6972 = vmatprep.subr.mxu0 0.0
        %6973 = vmatpush2.msra.mxu0 0.0
        %6974 = vmatprep.subr.mxu0 0.0
        %6975 = vmatpush2.msra.mxu0 0.0
        %6976 = vmatprep.subr.mxu0 0.0
        %6977 = vmatpush2.msra.mxu0 0.0
        %6978 = vmatprep.subr.mxu0 0.0
        %6979 = vmatpush2.msra.mxu0 0.0
        %6980 = vmatprep.subr.mxu0 0.0
        %6981 = vmatpush2.msra.mxu0 0.0
        %6982 = vmatprep.mubr.f32.mxu0 0.0
        %v6983 = vand.u32 %v6528, 4294901760
        %6984 = vmatmul.mubr.f32.gmra.mxu0 %v6983
        %v6985 = vpop.f32.mrf.mxu0
        %v6986 = vadd.f32 %v6913, %v6985
        %v6987 = vpop.f32.mrf.mxu0
        %6988 = vdwg.mxu0
        %v6989 = vadd.f32 %v6031, %v6986
        %6990 = vset.pattern.permute.xlu0 7
        %6991 = vperm.xlu0 %6990, %v283
        %v6992 = vpop.permute.xlu0 %6991
        %vm6993 = vcmp.eq.s32.totalorder %v6992, %v282
        %v6994 = vsel %vm6993, 1.0, 0.0
        %v6996 = vsel %vm289, %v6994, 0
        %6998 = vmatprep.subr.mxu0 0.0
        %6999 = vmatpush1.msra.mxu0 0.0
        %7000 = vmatprep.subr.mxu0 0.0
        %7001 = vmatpush1.msra.mxu0 0.0
        %7002 = vmatprep.subr.mxu0 0.0
        %7003 = vmatpush1.msra.mxu0 0.0
        %7004 = vmatprep.subr.mxu0 0.0
        %7005 = vmatpush1.msra.mxu0 0.0
        %7006 = vmatprep.subr.mxu0 0.0
        %7007 = vmatpush1.msra.mxu0 0.0
        %7008 = vmatprep.subr.mxu0 0.0
        %7009 = vmatpush1.msra.mxu0 0.0
        %7010 = vmatprep.subr.mxu0 0.0
        %7011 = vmatpush1.msra.mxu0 0.0
        %7012 = vmatprep.subr.mxu0 0.0
        %7013 = vmatpush1.msra.mxu0 0.0
        %7014 = vmatprep.subr.mxu0 0.0
        %7015 = vmatpush1.msra.mxu0 0.0
        %7016 = vmatprep.subr.mxu0 0.0
        %7017 = vmatpush1.msra.mxu0 0.0
        %7018 = vmatprep.subr.mxu0 0.0
        %7019 = vmatpush1.msra.mxu0 0.0
        %7020 = vmatprep.subr.mxu0 0.0
        %7021 = vmatpush1.msra.mxu0 0.0
        %7022 = vmatprep.subr.mxu0 0.0
        %v7023 = vand.u32 %v280, 4294901760
        %7024 = vmatpush1.msra.mxu0 %v7023
        %7025 = vmatprep.subr.mxu0 0.0
        %v7026 = vand.u32 %v279, 4294901760
        %7027 = vmatpush1.msra.mxu0 %v7026
        %7028 = vmatprep.subr.mxu0 0.0
        %v7029 = vand.u32 %v278, 4294901760
        %7030 = vmatpush1.msra.mxu0 %v7029
        %7031 = vmatprep.subr.mxu0 0.0
        %v7032 = vand.u32 %v277, 4294901760
        %7033 = vmatpush1.msra.mxu0 %v7032
        %7034 = vmatprep.subr.mxu0 0.0
        %7035 = vmatpush2.msra.mxu0 0.0
        %7036 = vmatprep.subr.mxu0 0.0
        %7037 = vmatpush2.msra.mxu0 0.0
        %7038 = vmatprep.subr.mxu0 0.0
        %7039 = vmatpush2.msra.mxu0 0.0
        %7040 = vmatprep.subr.mxu0 0.0
        %7041 = vmatpush2.msra.mxu0 0.0
        %7042 = vmatprep.subr.mxu0 0.0
        %7043 = vmatpush2.msra.mxu0 0.0
        %7044 = vmatprep.subr.mxu0 0.0
        %7045 = vmatpush2.msra.mxu0 0.0
        %7046 = vmatprep.subr.mxu0 0.0
        %7047 = vmatpush2.msra.mxu0 0.0
        %7048 = vmatprep.subr.mxu0 0.0
        %7049 = vmatpush2.msra.mxu0 0.0
        %7050 = vmatprep.subr.mxu0 0.0
        %7051 = vmatpush2.msra.mxu0 0.0
        %7052 = vmatprep.subr.mxu0 0.0
        %7053 = vmatpush2.msra.mxu0 0.0
        %7054 = vmatprep.subr.mxu0 0.0
        %7055 = vmatpush2.msra.mxu0 0.0
        %7056 = vmatprep.subr.mxu0 0.0
        %7057 = vmatpush2.msra.mxu0 0.0
        %7058 = vmatprep.subr.mxu0 0.0
        %7059 = vmatpush2.msra.mxu0 0.0
        %7060 = vmatprep.subr.mxu0 0.0
        %7061 = vmatpush2.msra.mxu0 0.0
        %7062 = vmatprep.subr.mxu0 0.0
        %7063 = vmatpush2.msra.mxu0 0.0
        %7064 = vmatprep.subr.mxu0 0.0
        %7065 = vmatpush2.msra.mxu0 0.0
        %7066 = vmatprep.mubr.f32.mxu0 0.0
        %v7067 = vand.u32 %v6996, 4294901760
        %v7068 = vsub.f32 %v6996, %v7067
        %v7069 = vand.u32 %v7068, 4294901760
        %v7070 = vsub.f32 %v7068, %v7069
        %v7071 = vand.u32 %v7070, 4294901760
        %7072 = vmatmul.mubr.f32.gmra.mxu0 %v7071
        %v7073 = vpop.f32.mrf.mxu0
        %v7074 = vadd.f32 0.0, %v7073
        %v7075 = vpop.f32.mrf.mxu0
        %7076 = vdwg.mxu0
        %7077 = vmatprep.subr.mxu0 0.0
        %7078 = vmatpush1.msra.mxu0 0.0
        %7079 = vmatprep.subr.mxu0 0.0
        %7080 = vmatpush1.msra.mxu0 0.0
        %7081 = vmatprep.subr.mxu0 0.0
        %7082 = vmatpush1.msra.mxu0 0.0
        %7083 = vmatprep.subr.mxu0 0.0
        %7084 = vmatpush1.msra.mxu0 0.0
        %7085 = vmatprep.subr.mxu0 0.0
        %7086 = vmatpush1.msra.mxu0 0.0
        %7087 = vmatprep.subr.mxu0 0.0
        %7088 = vmatpush1.msra.mxu0 0.0
        %7089 = vmatprep.subr.mxu0 0.0
        %7090 = vmatpush1.msra.mxu0 0.0
        %7091 = vmatprep.subr.mxu0 0.0
        %7092 = vmatpush1.msra.mxu0 0.0
        %7093 = vmatprep.subr.mxu0 0.0
        %7094 = vmatpush1.msra.mxu0 0.0
        %7095 = vmatprep.subr.mxu0 0.0
        %7096 = vmatpush1.msra.mxu0 0.0
        %7097 = vmatprep.subr.mxu0 0.0
        %7098 = vmatpush1.msra.mxu0 0.0
        %7099 = vmatprep.subr.mxu0 0.0
        %7100 = vmatpush1.msra.mxu0 0.0
        %7101 = vmatprep.subr.mxu0 0.0
        %v7102 = vand.u32 %v280, 4294901760
        %v7103 = vsub.f32 %v280, %v7102
        %v7104 = vand.u32 %v7103, 4294901760
        %v7105 = vsub.f32 %v7103, %v7104
        %v7106 = vand.u32 %v7105, 4294901760
        %7107 = vmatpush1.msra.mxu0 %v7106
        %7108 = vmatprep.subr.mxu0 0.0
        %v7109 = vand.u32 %v279, 4294901760
        %v7110 = vsub.f32 %v279, %v7109
        %v7111 = vand.u32 %v7110, 4294901760
        %v7112 = vsub.f32 %v7110, %v7111
        %v7113 = vand.u32 %v7112, 4294901760
        %7114 = vmatpush1.msra.mxu0 %v7113
        %7115 = vmatprep.subr.mxu0 0.0
        %v7116 = vand.u32 %v278, 4294901760
        %v7117 = vsub.f32 %v278, %v7116
        %v7118 = vand.u32 %v7117, 4294901760
        %v7119 = vsub.f32 %v7117, %v7118
        %v7120 = vand.u32 %v7119, 4294901760
        %7121 = vmatpush1.msra.mxu0 %v7120
        %7122 = vmatprep.subr.mxu0 0.0
        %v7123 = vand.u32 %v277, 4294901760
        %v7124 = vsub.f32 %v277, %v7123
        %v7125 = vand.u32 %v7124, 4294901760
        %v7126 = vsub.f32 %v7124, %v7125
        %v7127 = vand.u32 %v7126, 4294901760
        %7128 = vmatpush1.msra.mxu0 %v7127
        %7129 = vmatprep.subr.mxu0 0.0
        %7130 = vmatpush2.msra.mxu0 0.0
        %7131 = vmatprep.subr.mxu0 0.0
        %7132 = vmatpush2.msra.mxu0 0.0
        %7133 = vmatprep.subr.mxu0 0.0
        %7134 = vmatpush2.msra.mxu0 0.0
        %7135 = vmatprep.subr.mxu0 0.0
        %7136 = vmatpush2.msra.mxu0 0.0
        %7137 = vmatprep.subr.mxu0 0.0
        %7138 = vmatpush2.msra.mxu0 0.0
        %7139 = vmatprep.subr.mxu0 0.0
        %7140 = vmatpush2.msra.mxu0 0.0
        %7141 = vmatprep.subr.mxu0 0.0
        %7142 = vmatpush2.msra.mxu0 0.0
        %7143 = vmatprep.subr.mxu0 0.0
        %7144 = vmatpush2.msra.mxu0 0.0
        %7145 = vmatprep.subr.mxu0 0.0
        %7146 = vmatpush2.msra.mxu0 0.0
        %7147 = vmatprep.subr.mxu0 0.0
        %7148 = vmatpush2.msra.mxu0 0.0
        %7149 = vmatprep.subr.mxu0 0.0
        %7150 = vmatpush2.msra.mxu0 0.0
        %7151 = vmatprep.subr.mxu0 0.0
        %7152 = vmatpush2.msra.mxu0 0.0
        %7153 = vmatprep.subr.mxu0 0.0
        %7154 = vmatpush2.msra.mxu0 0.0
        %7155 = vmatprep.subr.mxu0 0.0
        %7156 = vmatpush2.msra.mxu0 0.0
        %7157 = vmatprep.subr.mxu0 0.0
        %7158 = vmatpush2.msra.mxu0 0.0
        %7159 = vmatprep.subr.mxu0 0.0
        %7160 = vmatpush2.msra.mxu0 0.0
        %7161 = vmatprep.mubr.f32.mxu0 0.0
        %v7162 = vand.u32 %v6996, 4294901760
        %7163 = vmatmul.mubr.f32.gmra.mxu0 %v7162
        %v7164 = vpop.f32.mrf.mxu0
        %v7165 = vadd.f32 %v7074, %v7164
        %v7166 = vpop.f32.mrf.mxu0
        %7167 = vdwg.mxu0
        %7168 = vmatprep.subr.mxu0 0.0
        %7169 = vmatpush1.msra.mxu0 0.0
        %7170 = vmatprep.subr.mxu0 0.0
        %7171 = vmatpush1.msra.mxu0 0.0
        %7172 = vmatprep.subr.mxu0 0.0
        %7173 = vmatpush1.msra.mxu0 0.0
        %7174 = vmatprep.subr.mxu0 0.0
        %7175 = vmatpush1.msra.mxu0 0.0
        %7176 = vmatprep.subr.mxu0 0.0
        %7177 = vmatpush1.msra.mxu0 0.0
        %7178 = vmatprep.subr.mxu0 0.0
        %7179 = vmatpush1.msra.mxu0 0.0
        %7180 = vmatprep.subr.mxu0 0.0
        %7181 = vmatpush1.msra.mxu0 0.0
        %7182 = vmatprep.subr.mxu0 0.0
        %7183 = vmatpush1.msra.mxu0 0.0
        %7184 = vmatprep.subr.mxu0 0.0
        %7185 = vmatpush1.msra.mxu0 0.0
        %7186 = vmatprep.subr.mxu0 0.0
        %7187 = vmatpush1.msra.mxu0 0.0
        %7188 = vmatprep.subr.mxu0 0.0
        %7189 = vmatpush1.msra.mxu0 0.0
        %7190 = vmatprep.subr.mxu0 0.0
        %7191 = vmatpush1.msra.mxu0 0.0
        %7192 = vmatprep.subr.mxu0 0.0
        %v7193 = vand.u32 %v280, 4294901760
        %v7194 = vsub.f32 %v280, %v7193
        %7195 = vmatpush1.msra.mxu0 %v7194
        %7196 = vmatprep.subr.mxu0 0.0
        %v7197 = vand.u32 %v279, 4294901760
        %v7198 = vsub.f32 %v279, %v7197
        %7199 = vmatpush1.msra.mxu0 %v7198
        %7200 = vmatprep.subr.mxu0 0.0
        %v7201 = vand.u32 %v278, 4294901760
        %v7202 = vsub.f32 %v278, %v7201
        %7203 = vmatpush1.msra.mxu0 %v7202
        %7204 = vmatprep.subr.mxu0 0.0
        %v7205 = vand.u32 %v277, 4294901760
        %v7206 = vsub.f32 %v277, %v7205
        %7207 = vmatpush1.msra.mxu0 %v7206
        %7208 = vmatprep.subr.mxu0 0.0
        %7209 = vmatpush2.msra.mxu0 0.0
        %7210 = vmatprep.subr.mxu0 0.0
        %7211 = vmatpush2.msra.mxu0 0.0
        %7212 = vmatprep.subr.mxu0 0.0
        %7213 = vmatpush2.msra.mxu0 0.0
        %7214 = vmatprep.subr.mxu0 0.0
        %7215 = vmatpush2.msra.mxu0 0.0
        %7216 = vmatprep.subr.mxu0 0.0
        %7217 = vmatpush2.msra.mxu0 0.0
        %7218 = vmatprep.subr.mxu0 0.0
        %7219 = vmatpush2.msra.mxu0 0.0
        %7220 = vmatprep.subr.mxu0 0.0
        %7221 = vmatpush2.msra.mxu0 0.0
        %7222 = vmatprep.subr.mxu0 0.0
        %7223 = vmatpush2.msra.mxu0 0.0
        %7224 = vmatprep.subr.mxu0 0.0
        %7225 = vmatpush2.msra.mxu0 0.0
        %7226 = vmatprep.subr.mxu0 0.0
        %7227 = vmatpush2.msra.mxu0 0.0
        %7228 = vmatprep.subr.mxu0 0.0
        %7229 = vmatpush2.msra.mxu0 0.0
        %7230 = vmatprep.subr.mxu0 0.0
        %7231 = vmatpush2.msra.mxu0 0.0
        %7232 = vmatprep.subr.mxu0 0.0
        %7233 = vmatpush2.msra.mxu0 0.0
        %7234 = vmatprep.subr.mxu0 0.0
        %7235 = vmatpush2.msra.mxu0 0.0
        %7236 = vmatprep.subr.mxu0 0.0
        %7237 = vmatpush2.msra.mxu0 0.0
        %7238 = vmatprep.subr.mxu0 0.0
        %7239 = vmatpush2.msra.mxu0 0.0
        %7240 = vmatprep.mubr.f32.mxu0 0.0
        %v7241 = vand.u32 %v6996, 4294901760
        %v7242 = vsub.f32 %v6996, %v7241
        %7243 = vmatmul.mubr.f32.gmra.mxu0 %v7242
        %v7244 = vpop.f32.mrf.mxu0
        %v7245 = vadd.f32 %v7165, %v7244
        %v7246 = vpop.f32.mrf.mxu0
        %7247 = vdwg.mxu0
        %7248 = vmatprep.subr.mxu0 0.0
        %7249 = vmatpush1.msra.mxu0 0.0
        %7250 = vmatprep.subr.mxu0 0.0
        %7251 = vmatpush1.msra.mxu0 0.0
        %7252 = vmatprep.subr.mxu0 0.0
        %7253 = vmatpush1.msra.mxu0 0.0
        %7254 = vmatprep.subr.mxu0 0.0
        %7255 = vmatpush1.msra.mxu0 0.0
        %7256 = vmatprep.subr.mxu0 0.0
        %7257 = vmatpush1.msra.mxu0 0.0
        %7258 = vmatprep.subr.mxu0 0.0
        %7259 = vmatpush1.msra.mxu0 0.0
        %7260 = vmatprep.subr.mxu0 0.0
        %7261 = vmatpush1.msra.mxu0 0.0
        %7262 = vmatprep.subr.mxu0 0.0
        %7263 = vmatpush1.msra.mxu0 0.0
        %7264 = vmatprep.subr.mxu0 0.0
        %7265 = vmatpush1.msra.mxu0 0.0
        %7266 = vmatprep.subr.mxu0 0.0
        %7267 = vmatpush1.msra.mxu0 0.0
        %7268 = vmatprep.subr.mxu0 0.0
        %7269 = vmatpush1.msra.mxu0 0.0
        %7270 = vmatprep.subr.mxu0 0.0
        %7271 = vmatpush1.msra.mxu0 0.0
        %7272 = vmatprep.subr.mxu0 0.0
        %v7273 = vand.u32 %v280, 4294901760
        %7274 = vmatpush1.msra.mxu0 %v7273
        %7275 = vmatprep.subr.mxu0 0.0
        %v7276 = vand.u32 %v279, 4294901760
        %7277 = vmatpush1.msra.mxu0 %v7276
        %7278 = vmatprep.subr.mxu0 0.0
        %v7279 = vand.u32 %v278, 4294901760
        %7280 = vmatpush1.msra.mxu0 %v7279
        %7281 = vmatprep.subr.mxu0 0.0
        %v7282 = vand.u32 %v277, 4294901760
        %7283 = vmatpush1.msra.mxu0 %v7282
        %7284 = vmatprep.subr.mxu0 0.0
        %7285 = vmatpush2.msra.mxu0 0.0
        %7286 = vmatprep.subr.mxu0 0.0
        %7287 = vmatpush2.msra.mxu0 0.0
        %7288 = vmatprep.subr.mxu0 0.0
        %7289 = vmatpush2.msra.mxu0 0.0
        %7290 = vmatprep.subr.mxu0 0.0
        %7291 = vmatpush2.msra.mxu0 0.0
        %7292 = vmatprep.subr.mxu0 0.0
        %7293 = vmatpush2.msra.mxu0 0.0
        %7294 = vmatprep.subr.mxu0 0.0
        %7295 = vmatpush2.msra.mxu0 0.0
        %7296 = vmatprep.subr.mxu0 0.0
        %7297 = vmatpush2.msra.mxu0 0.0
        %7298 = vmatprep.subr.mxu0 0.0
        %7299 = vmatpush2.msra.mxu0 0.0
        %7300 = vmatprep.subr.mxu0 0.0
        %7301 = vmatpush2.msra.mxu0 0.0
        %7302 = vmatprep.subr.mxu0 0.0
        %7303 = vmatpush2.msra.mxu0 0.0
        %7304 = vmatprep.subr.mxu0 0.0
        %7305 = vmatpush2.msra.mxu0 0.0
        %7306 = vmatprep.subr.mxu0 0.0
        %7307 = vmatpush2.msra.mxu0 0.0
        %7308 = vmatprep.subr.mxu0 0.0
        %7309 = vmatpush2.msra.mxu0 0.0
        %7310 = vmatprep.subr.mxu0 0.0
        %7311 = vmatpush2.msra.mxu0 0.0
        %7312 = vmatprep.subr.mxu0 0.0
        %7313 = vmatpush2.msra.mxu0 0.0
        %7314 = vmatprep.subr.mxu0 0.0
        %7315 = vmatpush2.msra.mxu0 0.0
        %7316 = vmatprep.mubr.f32.mxu0 0.0
        %v7317 = vand.u32 %v6996, 4294901760
        %v7318 = vsub.f32 %v6996, %v7317
        %v7319 = vand.u32 %v7318, 4294901760
        %7320 = vmatmul.mubr.f32.gmra.mxu0 %v7319
        %v7321 = vpop.f32.mrf.mxu0
        %v7322 = vadd.f32 %v7245, %v7321
        %v7323 = vpop.f32.mrf.mxu0
        %7324 = vdwg.mxu0
        %7325 = vmatprep.subr.mxu0 0.0
        %7326 = vmatpush1.msra.mxu0 0.0
        %7327 = vmatprep.subr.mxu0 0.0
        %7328 = vmatpush1.msra.mxu0 0.0
        %7329 = vmatprep.subr.mxu0 0.0
        %7330 = vmatpush1.msra.mxu0 0.0
        %7331 = vmatprep.subr.mxu0 0.0
        %7332 = vmatpush1.msra.mxu0 0.0
        %7333 = vmatprep.subr.mxu0 0.0
        %7334 = vmatpush1.msra.mxu0 0.0
        %7335 = vmatprep.subr.mxu0 0.0
        %7336 = vmatpush1.msra.mxu0 0.0
        %7337 = vmatprep.subr.mxu0 0.0
        %7338 = vmatpush1.msra.mxu0 0.0
        %7339 = vmatprep.subr.mxu0 0.0
        %7340 = vmatpush1.msra.mxu0 0.0
        %7341 = vmatprep.subr.mxu0 0.0
        %7342 = vmatpush1.msra.mxu0 0.0
        %7343 = vmatprep.subr.mxu0 0.0
        %7344 = vmatpush1.msra.mxu0 0.0
        %7345 = vmatprep.subr.mxu0 0.0
        %7346 = vmatpush1.msra.mxu0 0.0
        %7347 = vmatprep.subr.mxu0 0.0
        %7348 = vmatpush1.msra.mxu0 0.0
        %7349 = vmatprep.subr.mxu0 0.0
        %v7350 = vand.u32 %v280, 4294901760
        %v7351 = vsub.f32 %v280, %v7350
        %v7352 = vand.u32 %v7351, 4294901760
        %7353 = vmatpush1.msra.mxu0 %v7352
        %7354 = vmatprep.subr.mxu0 0.0
        %v7355 = vand.u32 %v279, 4294901760
        %v7356 = vsub.f32 %v279, %v7355
        %v7357 = vand.u32 %v7356, 4294901760
        %7358 = vmatpush1.msra.mxu0 %v7357
        %7359 = vmatprep.subr.mxu0 0.0
        %v7360 = vand.u32 %v278, 4294901760
        %v7361 = vsub.f32 %v278, %v7360
        %v7362 = vand.u32 %v7361, 4294901760
        %7363 = vmatpush1.msra.mxu0 %v7362
        %7364 = vmatprep.subr.mxu0 0.0
        %v7365 = vand.u32 %v277, 4294901760
        %v7366 = vsub.f32 %v277, %v7365
        %v7367 = vand.u32 %v7366, 4294901760
        %7368 = vmatpush1.msra.mxu0 %v7367
        %7369 = vmatprep.subr.mxu0 0.0
        %7370 = vmatpush2.msra.mxu0 0.0
        %7371 = vmatprep.subr.mxu0 0.0
        %7372 = vmatpush2.msra.mxu0 0.0
        %7373 = vmatprep.subr.mxu0 0.0
        %7374 = vmatpush2.msra.mxu0 0.0
        %7375 = vmatprep.subr.mxu0 0.0
        %7376 = vmatpush2.msra.mxu0 0.0
        %7377 = vmatprep.subr.mxu0 0.0
        %7378 = vmatpush2.msra.mxu0 0.0
        %7379 = vmatprep.subr.mxu0 0.0
        %7380 = vmatpush2.msra.mxu0 0.0
        %7381 = vmatprep.subr.mxu0 0.0
        %7382 = vmatpush2.msra.mxu0 0.0
        %7383 = vmatprep.subr.mxu0 0.0
        %7384 = vmatpush2.msra.mxu0 0.0
        %7385 = vmatprep.subr.mxu0 0.0
        %7386 = vmatpush2.msra.mxu0 0.0
        %7387 = vmatprep.subr.mxu0 0.0
        %7388 = vmatpush2.msra.mxu0 0.0
        %7389 = vmatprep.subr.mxu0 0.0
        %7390 = vmatpush2.msra.mxu0 0.0
        %7391 = vmatprep.subr.mxu0 0.0
        %7392 = vmatpush2.msra.mxu0 0.0
        %7393 = vmatprep.subr.mxu0 0.0
        %7394 = vmatpush2.msra.mxu0 0.0
        %7395 = vmatprep.subr.mxu0 0.0
        %7396 = vmatpush2.msra.mxu0 0.0
        %7397 = vmatprep.subr.mxu0 0.0
        %7398 = vmatpush2.msra.mxu0 0.0
        %7399 = vmatprep.subr.mxu0 0.0
        %7400 = vmatpush2.msra.mxu0 0.0
        %7401 = vmatprep.mubr.f32.mxu0 0.0
        %v7402 = vand.u32 %v6996, 4294901760
        %7403 = vmatmul.mubr.f32.gmra.mxu0 %v7402
        %v7404 = vpop.f32.mrf.mxu0
        %v7405 = vadd.f32 %v7322, %v7404
        %v7406 = vpop.f32.mrf.mxu0
        %7407 = vdwg.mxu0
        %7408 = vmatprep.subr.mxu0 0.0
        %7409 = vmatpush1.msra.mxu0 0.0
        %7410 = vmatprep.subr.mxu0 0.0
        %7411 = vmatpush1.msra.mxu0 0.0
        %7412 = vmatprep.subr.mxu0 0.0
        %7413 = vmatpush1.msra.mxu0 0.0
        %7414 = vmatprep.subr.mxu0 0.0
        %7415 = vmatpush1.msra.mxu0 0.0
        %7416 = vmatprep.subr.mxu0 0.0
        %7417 = vmatpush1.msra.mxu0 0.0
        %7418 = vmatprep.subr.mxu0 0.0
        %7419 = vmatpush1.msra.mxu0 0.0
        %7420 = vmatprep.subr.mxu0 0.0
        %7421 = vmatpush1.msra.mxu0 0.0
        %7422 = vmatprep.subr.mxu0 0.0
        %7423 = vmatpush1.msra.mxu0 0.0
        %7424 = vmatprep.subr.mxu0 0.0
        %7425 = vmatpush1.msra.mxu0 0.0
        %7426 = vmatprep.subr.mxu0 0.0
        %7427 = vmatpush1.msra.mxu0 0.0
        %7428 = vmatprep.subr.mxu0 0.0
        %7429 = vmatpush1.msra.mxu0 0.0
        %7430 = vmatprep.subr.mxu0 0.0
        %7431 = vmatpush1.msra.mxu0 0.0
        %7432 = vmatprep.subr.mxu0 0.0
        %v7433 = vand.u32 %v280, 4294901760
        %7434 = vmatpush1.msra.mxu0 %v7433
        %7435 = vmatprep.subr.mxu0 0.0
        %v7436 = vand.u32 %v279, 4294901760
        %7437 = vmatpush1.msra.mxu0 %v7436
        %7438 = vmatprep.subr.mxu0 0.0
        %v7439 = vand.u32 %v278, 4294901760
        %7440 = vmatpush1.msra.mxu0 %v7439
        %7441 = vmatprep.subr.mxu0 0.0
        %v7442 = vand.u32 %v277, 4294901760
        %7443 = vmatpush1.msra.mxu0 %v7442
        %7444 = vmatprep.subr.mxu0 0.0
        %7445 = vmatpush2.msra.mxu0 0.0
        %7446 = vmatprep.subr.mxu0 0.0
        %7447 = vmatpush2.msra.mxu0 0.0
        %7448 = vmatprep.subr.mxu0 0.0
        %7449 = vmatpush2.msra.mxu0 0.0
        %7450 = vmatprep.subr.mxu0 0.0
        %7451 = vmatpush2.msra.mxu0 0.0
        %7452 = vmatprep.subr.mxu0 0.0
        %7453 = vmatpush2.msra.mxu0 0.0
        %7454 = vmatprep.subr.mxu0 0.0
        %7455 = vmatpush2.msra.mxu0 0.0
        %7456 = vmatprep.subr.mxu0 0.0
        %7457 = vmatpush2.msra.mxu0 0.0
        %7458 = vmatprep.subr.mxu0 0.0
        %7459 = vmatpush2.msra.mxu0 0.0
        %7460 = vmatprep.subr.mxu0 0.0
        %7461 = vmatpush2.msra.mxu0 0.0
        %7462 = vmatprep.subr.mxu0 0.0
        %7463 = vmatpush2.msra.mxu0 0.0
        %7464 = vmatprep.subr.mxu0 0.0
        %7465 = vmatpush2.msra.mxu0 0.0
        %7466 = vmatprep.subr.mxu0 0.0
        %7467 = vmatpush2.msra.mxu0 0.0
        %7468 = vmatprep.subr.mxu0 0.0
        %7469 = vmatpush2.msra.mxu0 0.0
        %7470 = vmatprep.subr.mxu0 0.0
        %7471 = vmatpush2.msra.mxu0 0.0
        %7472 = vmatprep.subr.mxu0 0.0
        %7473 = vmatpush2.msra.mxu0 0.0
        %7474 = vmatprep.subr.mxu0 0.0
        %7475 = vmatpush2.msra.mxu0 0.0
        %7476 = vmatprep.mubr.f32.mxu0 0.0
        %v7477 = vand.u32 %v6996, 4294901760
        %7478 = vmatmul.mubr.f32.gmra.mxu0 %v7477
        %v7479 = vpop.f32.mrf.mxu0
        %v7480 = vadd.f32 %v7405, %v7479
        %v7481 = vpop.f32.mrf.mxu0
        %7482 = vdwg.mxu0
        %v7483 = vld [vmem:[#allocation2 + $0x70] sm:$0xff]
        %v7484 = vld [vmem:[#allocation2 + $0x78] sm:$0xff]
        %v7486 = vsel %vm1275, %v7480, 0
        %7488 = vmatprep.subr.mxu0 0.0
        %7489 = vmatpush1.msra.mxu0 0.0
        %7490 = vmatprep.subr.mxu0 0.0
        %7491 = vmatpush1.msra.mxu0 0.0
        %7492 = vmatprep.subr.mxu0 0.0
        %7493 = vmatpush1.msra.mxu0 0.0
        %7494 = vmatprep.subr.mxu0 0.0
        %7495 = vmatpush1.msra.mxu0 0.0
        %7496 = vmatprep.subr.mxu0 0.0
        %7497 = vmatpush1.msra.mxu0 0.0
        %7498 = vmatprep.subr.mxu0 0.0
        %7499 = vmatpush1.msra.mxu0 0.0
        %7500 = vmatprep.subr.mxu0 0.0
        %7501 = vmatpush1.msra.mxu0 0.0
        %7502 = vmatprep.subr.mxu0 0.0
        %7503 = vmatpush1.msra.mxu0 0.0
        %7504 = vmatprep.subr.mxu0 0.0
        %7505 = vmatpush1.msra.mxu0 0.0
        %7506 = vmatprep.subr.mxu0 0.0
        %7507 = vmatpush1.msra.mxu0 0.0
        %7508 = vmatprep.subr.mxu0 0.0
        %7509 = vmatpush1.msra.mxu0 0.0
        %7510 = vmatprep.subr.mxu0 0.0
        %7511 = vmatpush1.msra.mxu0 0.0
        %7512 = vmatprep.subr.mxu0 0.0
        %7513 = vmatpush1.msra.mxu0 0.0
        %7514 = vmatprep.subr.mxu0 0.0
        %7515 = vmatpush1.msra.mxu0 0.0
        %7516 = vmatprep.subr.mxu0 0.0
        %v7517 = vand.u32 %v7484, 4294901760
        %7518 = vmatpush1.msra.mxu0 %v7517
        %7519 = vmatprep.subr.mxu0 0.0
        %v7520 = vand.u32 %v7483, 4294901760
        %7521 = vmatpush1.msra.mxu0 %v7520
        %7522 = vmatprep.subr.mxu0 0.0
        %7523 = vmatpush2.msra.mxu0 0.0
        %7524 = vmatprep.subr.mxu0 0.0
        %7525 = vmatpush2.msra.mxu0 0.0
        %7526 = vmatprep.subr.mxu0 0.0
        %7527 = vmatpush2.msra.mxu0 0.0
        %7528 = vmatprep.subr.mxu0 0.0
        %7529 = vmatpush2.msra.mxu0 0.0
        %7530 = vmatprep.subr.mxu0 0.0
        %7531 = vmatpush2.msra.mxu0 0.0
        %7532 = vmatprep.subr.mxu0 0.0
        %7533 = vmatpush2.msra.mxu0 0.0
        %7534 = vmatprep.subr.mxu0 0.0
        %7535 = vmatpush2.msra.mxu0 0.0
        %7536 = vmatprep.subr.mxu0 0.0
        %7537 = vmatpush2.msra.mxu0 0.0
        %7538 = vmatprep.subr.mxu0 0.0
        %7539 = vmatpush2.msra.mxu0 0.0
        %7540 = vmatprep.subr.mxu0 0.0
        %7541 = vmatpush2.msra.mxu0 0.0
        %7542 = vmatprep.subr.mxu0 0.0
        %7543 = vmatpush2.msra.mxu0 0.0
        %7544 = vmatprep.subr.mxu0 0.0
        %7545 = vmatpush2.msra.mxu0 0.0
        %7546 = vmatprep.subr.mxu0 0.0
        %7547 = vmatpush2.msra.mxu0 0.0
        %7548 = vmatprep.subr.mxu0 0.0
        %7549 = vmatpush2.msra.mxu0 0.0
        %7550 = vmatprep.subr.mxu0 0.0
        %7551 = vmatpush2.msra.mxu0 0.0
        %7552 = vmatprep.subr.mxu0 0.0
        %7553 = vmatpush2.msra.mxu0 0.0
        %7554 = vmatprep.mubr.f32.mxu0 0.0
        %v7555 = vand.u32 %v7486, 4294901760
        %v7556 = vsub.f32 %v7486, %v7555
        %v7557 = vand.u32 %v7556, 4294901760
        %v7558 = vsub.f32 %v7556, %v7557
        %v7559 = vand.u32 %v7558, 4294901760
        %7560 = vmatmul.mubr.f32.gmra.mxu0 %v7559
        %v7561 = vpop.f32.mrf.mxu0
        %v7562 = vadd.f32 0.0, %v7561
        %v7563 = vpop.f32.mrf.mxu0
        %7564 = vdwg.mxu0
        %7565 = vmatprep.subr.mxu0 0.0
        %7566 = vmatpush1.msra.mxu0 0.0
        %7567 = vmatprep.subr.mxu0 0.0
        %7568 = vmatpush1.msra.mxu0 0.0
        %7569 = vmatprep.subr.mxu0 0.0
        %7570 = vmatpush1.msra.mxu0 0.0
        %7571 = vmatprep.subr.mxu0 0.0
        %7572 = vmatpush1.msra.mxu0 0.0
        %7573 = vmatprep.subr.mxu0 0.0
        %7574 = vmatpush1.msra.mxu0 0.0
        %7575 = vmatprep.subr.mxu0 0.0
        %7576 = vmatpush1.msra.mxu0 0.0
        %7577 = vmatprep.subr.mxu0 0.0
        %7578 = vmatpush1.msra.mxu0 0.0
        %7579 = vmatprep.subr.mxu0 0.0
        %7580 = vmatpush1.msra.mxu0 0.0
        %7581 = vmatprep.subr.mxu0 0.0
        %7582 = vmatpush1.msra.mxu0 0.0
        %7583 = vmatprep.subr.mxu0 0.0
        %7584 = vmatpush1.msra.mxu0 0.0
        %7585 = vmatprep.subr.mxu0 0.0
        %7586 = vmatpush1.msra.mxu0 0.0
        %7587 = vmatprep.subr.mxu0 0.0
        %7588 = vmatpush1.msra.mxu0 0.0
        %7589 = vmatprep.subr.mxu0 0.0
        %7590 = vmatpush1.msra.mxu0 0.0
        %7591 = vmatprep.subr.mxu0 0.0
        %7592 = vmatpush1.msra.mxu0 0.0
        %7593 = vmatprep.subr.mxu0 0.0
        %v7594 = vand.u32 %v7484, 4294901760
        %v7595 = vsub.f32 %v7484, %v7594
        %v7596 = vand.u32 %v7595, 4294901760
        %v7597 = vsub.f32 %v7595, %v7596
        %v7598 = vand.u32 %v7597, 4294901760
        %7599 = vmatpush1.msra.mxu0 %v7598
        %7600 = vmatprep.subr.mxu0 0.0
        %v7601 = vand.u32 %v7483, 4294901760
        %v7602 = vsub.f32 %v7483, %v7601
        %v7603 = vand.u32 %v7602, 4294901760
        %v7604 = vsub.f32 %v7602, %v7603
        %v7605 = vand.u32 %v7604, 4294901760
        %7606 = vmatpush1.msra.mxu0 %v7605
        %7607 = vmatprep.subr.mxu0 0.0
        %7608 = vmatpush2.msra.mxu0 0.0
        %7609 = vmatprep.subr.mxu0 0.0
        %7610 = vmatpush2.msra.mxu0 0.0
        %7611 = vmatprep.subr.mxu0 0.0
        %7612 = vmatpush2.msra.mxu0 0.0
        %7613 = vmatprep.subr.mxu0 0.0
        %7614 = vmatpush2.msra.mxu0 0.0
        %7615 = vmatprep.subr.mxu0 0.0
        %7616 = vmatpush2.msra.mxu0 0.0
        %7617 = vmatprep.subr.mxu0 0.0
        %7618 = vmatpush2.msra.mxu0 0.0
        %7619 = vmatprep.subr.mxu0 0.0
        %7620 = vmatpush2.msra.mxu0 0.0
        %7621 = vmatprep.subr.mxu0 0.0
        %7622 = vmatpush2.msra.mxu0 0.0
        %7623 = vmatprep.subr.mxu0 0.0
        %7624 = vmatpush2.msra.mxu0 0.0
        %7625 = vmatprep.subr.mxu0 0.0
        %7626 = vmatpush2.msra.mxu0 0.0
        %7627 = vmatprep.subr.mxu0 0.0
        %7628 = vmatpush2.msra.mxu0 0.0
        %7629 = vmatprep.subr.mxu0 0.0
        %7630 = vmatpush2.msra.mxu0 0.0
        %7631 = vmatprep.subr.mxu0 0.0
        %7632 = vmatpush2.msra.mxu0 0.0
        %7633 = vmatprep.subr.mxu0 0.0
        %7634 = vmatpush2.msra.mxu0 0.0
        %7635 = vmatprep.subr.mxu0 0.0
        %7636 = vmatpush2.msra.mxu0 0.0
        %7637 = vmatprep.subr.mxu0 0.0
        %7638 = vmatpush2.msra.mxu0 0.0
        %7639 = vmatprep.mubr.f32.mxu0 0.0
        %v7640 = vand.u32 %v7486, 4294901760
        %7641 = vmatmul.mubr.f32.gmra.mxu0 %v7640
        %v7642 = vpop.f32.mrf.mxu0
        %v7643 = vadd.f32 %v7562, %v7642
        %v7644 = vpop.f32.mrf.mxu0
        %7645 = vdwg.mxu0
        %7646 = vmatprep.subr.mxu0 0.0
        %7647 = vmatpush1.msra.mxu0 0.0
        %7648 = vmatprep.subr.mxu0 0.0
        %7649 = vmatpush1.msra.mxu0 0.0
        %7650 = vmatprep.subr.mxu0 0.0
        %7651 = vmatpush1.msra.mxu0 0.0
        %7652 = vmatprep.subr.mxu0 0.0
        %7653 = vmatpush1.msra.mxu0 0.0
        %7654 = vmatprep.subr.mxu0 0.0
        %7655 = vmatpush1.msra.mxu0 0.0
        %7656 = vmatprep.subr.mxu0 0.0
        %7657 = vmatpush1.msra.mxu0 0.0
        %7658 = vmatprep.subr.mxu0 0.0
        %7659 = vmatpush1.msra.mxu0 0.0
        %7660 = vmatprep.subr.mxu0 0.0
        %7661 = vmatpush1.msra.mxu0 0.0
        %7662 = vmatprep.subr.mxu0 0.0
        %7663 = vmatpush1.msra.mxu0 0.0
        %7664 = vmatprep.subr.mxu0 0.0
        %7665 = vmatpush1.msra.mxu0 0.0
        %7666 = vmatprep.subr.mxu0 0.0
        %7667 = vmatpush1.msra.mxu0 0.0
        %7668 = vmatprep.subr.mxu0 0.0
        %7669 = vmatpush1.msra.mxu0 0.0
        %7670 = vmatprep.subr.mxu0 0.0
        %7671 = vmatpush1.msra.mxu0 0.0
        %7672 = vmatprep.subr.mxu0 0.0
        %7673 = vmatpush1.msra.mxu0 0.0
        %7674 = vmatprep.subr.mxu0 0.0
        %v7675 = vand.u32 %v7484, 4294901760
        %v7676 = vsub.f32 %v7484, %v7675
        %7677 = vmatpush1.msra.mxu0 %v7676
        %7678 = vmatprep.subr.mxu0 0.0
        %v7679 = vand.u32 %v7483, 4294901760
        %v7680 = vsub.f32 %v7483, %v7679
        %7681 = vmatpush1.msra.mxu0 %v7680
        %7682 = vmatprep.subr.mxu0 0.0
        %7683 = vmatpush2.msra.mxu0 0.0
        %7684 = vmatprep.subr.mxu0 0.0
        %7685 = vmatpush2.msra.mxu0 0.0
        %7686 = vmatprep.subr.mxu0 0.0
        %7687 = vmatpush2.msra.mxu0 0.0
        %7688 = vmatprep.subr.mxu0 0.0
        %7689 = vmatpush2.msra.mxu0 0.0
        %7690 = vmatprep.subr.mxu0 0.0
        %7691 = vmatpush2.msra.mxu0 0.0
        %7692 = vmatprep.subr.mxu0 0.0
        %7693 = vmatpush2.msra.mxu0 0.0
        %7694 = vmatprep.subr.mxu0 0.0
        %7695 = vmatpush2.msra.mxu0 0.0
        %7696 = vmatprep.subr.mxu0 0.0
        %7697 = vmatpush2.msra.mxu0 0.0
        %7698 = vmatprep.subr.mxu0 0.0
        %7699 = vmatpush2.msra.mxu0 0.0
        %7700 = vmatprep.subr.mxu0 0.0
        %7701 = vmatpush2.msra.mxu0 0.0
        %7702 = vmatprep.subr.mxu0 0.0
        %7703 = vmatpush2.msra.mxu0 0.0
        %7704 = vmatprep.subr.mxu0 0.0
        %7705 = vmatpush2.msra.mxu0 0.0
        %7706 = vmatprep.subr.mxu0 0.0
        %7707 = vmatpush2.msra.mxu0 0.0
        %7708 = vmatprep.subr.mxu0 0.0
        %7709 = vmatpush2.msra.mxu0 0.0
        %7710 = vmatprep.subr.mxu0 0.0
        %7711 = vmatpush2.msra.mxu0 0.0
        %7712 = vmatprep.subr.mxu0 0.0
        %7713 = vmatpush2.msra.mxu0 0.0
        %7714 = vmatprep.mubr.f32.mxu0 0.0
        %v7715 = vand.u32 %v7486, 4294901760
        %v7716 = vsub.f32 %v7486, %v7715
        %7717 = vmatmul.mubr.f32.gmra.mxu0 %v7716
        %v7718 = vpop.f32.mrf.mxu0
        %v7719 = vadd.f32 %v7643, %v7718
        %v7720 = vpop.f32.mrf.mxu0
        %7721 = vdwg.mxu0
        %7722 = vmatprep.subr.mxu0 0.0
        %7723 = vmatpush1.msra.mxu0 0.0
        %7724 = vmatprep.subr.mxu0 0.0
        %7725 = vmatpush1.msra.mxu0 0.0
        %7726 = vmatprep.subr.mxu0 0.0
        %7727 = vmatpush1.msra.mxu0 0.0
        %7728 = vmatprep.subr.mxu0 0.0
        %7729 = vmatpush1.msra.mxu0 0.0
        %7730 = vmatprep.subr.mxu0 0.0
        %7731 = vmatpush1.msra.mxu0 0.0
        %7732 = vmatprep.subr.mxu0 0.0
        %7733 = vmatpush1.msra.mxu0 0.0
        %7734 = vmatprep.subr.mxu0 0.0
        %7735 = vmatpush1.msra.mxu0 0.0
        %7736 = vmatprep.subr.mxu0 0.0
        %7737 = vmatpush1.msra.mxu0 0.0
        %7738 = vmatprep.subr.mxu0 0.0
        %7739 = vmatpush1.msra.mxu0 0.0
        %7740 = vmatprep.subr.mxu0 0.0
        %7741 = vmatpush1.msra.mxu0 0.0
        %7742 = vmatprep.subr.mxu0 0.0
        %7743 = vmatpush1.msra.mxu0 0.0
        %7744 = vmatprep.subr.mxu0 0.0
        %7745 = vmatpush1.msra.mxu0 0.0
        %7746 = vmatprep.subr.mxu0 0.0
        %7747 = vmatpush1.msra.mxu0 0.0
        %7748 = vmatprep.subr.mxu0 0.0
        %7749 = vmatpush1.msra.mxu0 0.0
        %7750 = vmatprep.subr.mxu0 0.0
        %v7751 = vand.u32 %v7484, 4294901760
        %7752 = vmatpush1.msra.mxu0 %v7751
        %7753 = vmatprep.subr.mxu0 0.0
        %v7754 = vand.u32 %v7483, 4294901760
        %7755 = vmatpush1.msra.mxu0 %v7754
        %7756 = vmatprep.subr.mxu0 0.0
        %7757 = vmatpush2.msra.mxu0 0.0
        %7758 = vmatprep.subr.mxu0 0.0
        %7759 = vmatpush2.msra.mxu0 0.0
        %7760 = vmatprep.subr.mxu0 0.0
        %7761 = vmatpush2.msra.mxu0 0.0
        %7762 = vmatprep.subr.mxu0 0.0
        %7763 = vmatpush2.msra.mxu0 0.0
        %7764 = vmatprep.subr.mxu0 0.0
        %7765 = vmatpush2.msra.mxu0 0.0
        %7766 = vmatprep.subr.mxu0 0.0
        %7767 = vmatpush2.msra.mxu0 0.0
        %7768 = vmatprep.subr.mxu0 0.0
        %7769 = vmatpush2.msra.mxu0 0.0
        %7770 = vmatprep.subr.mxu0 0.0
        %7771 = vmatpush2.msra.mxu0 0.0
        %7772 = vmatprep.subr.mxu0 0.0
        %7773 = vmatpush2.msra.mxu0 0.0
        %7774 = vmatprep.subr.mxu0 0.0
        %7775 = vmatpush2.msra.mxu0 0.0
        %7776 = vmatprep.subr.mxu0 0.0
        %7777 = vmatpush2.msra.mxu0 0.0
        %7778 = vmatprep.subr.mxu0 0.0
        %7779 = vmatpush2.msra.mxu0 0.0
        %7780 = vmatprep.subr.mxu0 0.0
        %7781 = vmatpush2.msra.mxu0 0.0
        %7782 = vmatprep.subr.mxu0 0.0
        %7783 = vmatpush2.msra.mxu0 0.0
        %7784 = vmatprep.subr.mxu0 0.0
        %7785 = vmatpush2.msra.mxu0 0.0
        %7786 = vmatprep.subr.mxu0 0.0
        %7787 = vmatpush2.msra.mxu0 0.0
        %7788 = vmatprep.mubr.f32.mxu0 0.0
        %v7789 = vand.u32 %v7486, 4294901760
        %v7790 = vsub.f32 %v7486, %v7789
        %v7791 = vand.u32 %v7790, 4294901760
        %7792 = vmatmul.mubr.f32.gmra.mxu0 %v7791
        %v7793 = vpop.f32.mrf.mxu0
        %v7794 = vadd.f32 %v7719, %v7793
        %v7795 = vpop.f32.mrf.mxu0
        %7796 = vdwg.mxu0
        %7797 = vmatprep.subr.mxu0 0.0
        %7798 = vmatpush1.msra.mxu0 0.0
        %7799 = vmatprep.subr.mxu0 0.0
        %7800 = vmatpush1.msra.mxu0 0.0
        %7801 = vmatprep.subr.mxu0 0.0
        %7802 = vmatpush1.msra.mxu0 0.0
        %7803 = vmatprep.subr.mxu0 0.0
        %7804 = vmatpush1.msra.mxu0 0.0
        %7805 = vmatprep.subr.mxu0 0.0
        %7806 = vmatpush1.msra.mxu0 0.0
        %7807 = vmatprep.subr.mxu0 0.0
        %7808 = vmatpush1.msra.mxu0 0.0
        %7809 = vmatprep.subr.mxu0 0.0
        %7810 = vmatpush1.msra.mxu0 0.0
        %7811 = vmatprep.subr.mxu0 0.0
        %7812 = vmatpush1.msra.mxu0 0.0
        %7813 = vmatprep.subr.mxu0 0.0
        %7814 = vmatpush1.msra.mxu0 0.0
        %7815 = vmatprep.subr.mxu0 0.0
        %7816 = vmatpush1.msra.mxu0 0.0
        %7817 = vmatprep.subr.mxu0 0.0
        %7818 = vmatpush1.msra.mxu0 0.0
        %7819 = vmatprep.subr.mxu0 0.0
        %7820 = vmatpush1.msra.mxu0 0.0
        %7821 = vmatprep.subr.mxu0 0.0
        %7822 = vmatpush1.msra.mxu0 0.0
        %7823 = vmatprep.subr.mxu0 0.0
        %7824 = vmatpush1.msra.mxu0 0.0
        %7825 = vmatprep.subr.mxu0 0.0
        %v7826 = vand.u32 %v7484, 4294901760
        %v7827 = vsub.f32 %v7484, %v7826
        %v7828 = vand.u32 %v7827, 4294901760
        %7829 = vmatpush1.msra.mxu0 %v7828
        %7830 = vmatprep.subr.mxu0 0.0
        %v7831 = vand.u32 %v7483, 4294901760
        %v7832 = vsub.f32 %v7483, %v7831
        %v7833 = vand.u32 %v7832, 4294901760
        %7834 = vmatpush1.msra.mxu0 %v7833
        %7835 = vmatprep.subr.mxu0 0.0
        %7836 = vmatpush2.msra.mxu0 0.0
        %7837 = vmatprep.subr.mxu0 0.0
        %7838 = vmatpush2.msra.mxu0 0.0
        %7839 = vmatprep.subr.mxu0 0.0
        %7840 = vmatpush2.msra.mxu0 0.0
        %7841 = vmatprep.subr.mxu0 0.0
        %7842 = vmatpush2.msra.mxu0 0.0
        %7843 = vmatprep.subr.mxu0 0.0
        %7844 = vmatpush2.msra.mxu0 0.0
        %7845 = vmatprep.subr.mxu0 0.0
        %7846 = vmatpush2.msra.mxu0 0.0
        %7847 = vmatprep.subr.mxu0 0.0
        %7848 = vmatpush2.msra.mxu0 0.0
        %7849 = vmatprep.subr.mxu0 0.0
        %7850 = vmatpush2.msra.mxu0 0.0
        %7851 = vmatprep.subr.mxu0 0.0
        %7852 = vmatpush2.msra.mxu0 0.0
        %7853 = vmatprep.subr.mxu0 0.0
        %7854 = vmatpush2.msra.mxu0 0.0
        %7855 = vmatprep.subr.mxu0 0.0
        %7856 = vmatpush2.msra.mxu0 0.0
        %7857 = vmatprep.subr.mxu0 0.0
        %7858 = vmatpush2.msra.mxu0 0.0
        %7859 = vmatprep.subr.mxu0 0.0
        %7860 = vmatpush2.msra.mxu0 0.0
        %7861 = vmatprep.subr.mxu0 0.0
        %7862 = vmatpush2.msra.mxu0 0.0
        %7863 = vmatprep.subr.mxu0 0.0
        %7864 = vmatpush2.msra.mxu0 0.0
        %7865 = vmatprep.subr.mxu0 0.0
        %7866 = vmatpush2.msra.mxu0 0.0
        %7867 = vmatprep.mubr.f32.mxu0 0.0
        %v7868 = vand.u32 %v7486, 4294901760
        %7869 = vmatmul.mubr.f32.gmra.mxu0 %v7868
        %v7870 = vpop.f32.mrf.mxu0
        %v7871 = vadd.f32 %v7794, %v7870
        %v7872 = vpop.f32.mrf.mxu0
        %7873 = vdwg.mxu0
        %7874 = vmatprep.subr.mxu0 0.0
        %7875 = vmatpush1.msra.mxu0 0.0
        %7876 = vmatprep.subr.mxu0 0.0
        %7877 = vmatpush1.msra.mxu0 0.0
        %7878 = vmatprep.subr.mxu0 0.0
        %7879 = vmatpush1.msra.mxu0 0.0
        %7880 = vmatprep.subr.mxu0 0.0
        %7881 = vmatpush1.msra.mxu0 0.0
        %7882 = vmatprep.subr.mxu0 0.0
        %7883 = vmatpush1.msra.mxu0 0.0
        %7884 = vmatprep.subr.mxu0 0.0
        %7885 = vmatpush1.msra.mxu0 0.0
        %7886 = vmatprep.subr.mxu0 0.0
        %7887 = vmatpush1.msra.mxu0 0.0
        %7888 = vmatprep.subr.mxu0 0.0
        %7889 = vmatpush1.msra.mxu0 0.0
        %7890 = vmatprep.subr.mxu0 0.0
        %7891 = vmatpush1.msra.mxu0 0.0
        %7892 = vmatprep.subr.mxu0 0.0
        %7893 = vmatpush1.msra.mxu0 0.0
        %7894 = vmatprep.subr.mxu0 0.0
        %7895 = vmatpush1.msra.mxu0 0.0
        %7896 = vmatprep.subr.mxu0 0.0
        %7897 = vmatpush1.msra.mxu0 0.0
        %7898 = vmatprep.subr.mxu0 0.0
        %7899 = vmatpush1.msra.mxu0 0.0
        %7900 = vmatprep.subr.mxu0 0.0
        %7901 = vmatpush1.msra.mxu0 0.0
        %7902 = vmatprep.subr.mxu0 0.0
        %v7903 = vand.u32 %v7484, 4294901760
        %7904 = vmatpush1.msra.mxu0 %v7903
        %7905 = vmatprep.subr.mxu0 0.0
        %v7906 = vand.u32 %v7483, 4294901760
        %7907 = vmatpush1.msra.mxu0 %v7906
        %7908 = vmatprep.subr.mxu0 0.0
        %7909 = vmatpush2.msra.mxu0 0.0
        %7910 = vmatprep.subr.mxu0 0.0
        %7911 = vmatpush2.msra.mxu0 0.0
        %7912 = vmatprep.subr.mxu0 0.0
        %7913 = vmatpush2.msra.mxu0 0.0
        %7914 = vmatprep.subr.mxu0 0.0
        %7915 = vmatpush2.msra.mxu0 0.0
        %7916 = vmatprep.subr.mxu0 0.0
        %7917 = vmatpush2.msra.mxu0 0.0
        %7918 = vmatprep.subr.mxu0 0.0
        %7919 = vmatpush2.msra.mxu0 0.0
        %7920 = vmatprep.subr.mxu0 0.0
        %7921 = vmatpush2.msra.mxu0 0.0
        %7922 = vmatprep.subr.mxu0 0.0
        %7923 = vmatpush2.msra.mxu0 0.0
        %7924 = vmatprep.subr.mxu0 0.0
        %7925 = vmatpush2.msra.mxu0 0.0
        %7926 = vmatprep.subr.mxu0 0.0
        %7927 = vmatpush2.msra.mxu0 0.0
        %7928 = vmatprep.subr.mxu0 0.0
        %7929 = vmatpush2.msra.mxu0 0.0
        %7930 = vmatprep.subr.mxu0 0.0
        %7931 = vmatpush2.msra.mxu0 0.0
        %7932 = vmatprep.subr.mxu0 0.0
        %7933 = vmatpush2.msra.mxu0 0.0
        %7934 = vmatprep.subr.mxu0 0.0
        %7935 = vmatpush2.msra.mxu0 0.0
        %7936 = vmatprep.subr.mxu0 0.0
        %7937 = vmatpush2.msra.mxu0 0.0
        %7938 = vmatprep.subr.mxu0 0.0
        %7939 = vmatpush2.msra.mxu0 0.0
        %7940 = vmatprep.mubr.f32.mxu0 0.0
        %v7941 = vand.u32 %v7486, 4294901760
        %7942 = vmatmul.mubr.f32.gmra.mxu0 %v7941
        %v7943 = vpop.f32.mrf.mxu0
        %v7944 = vadd.f32 %v7871, %v7943
        %v7945 = vpop.f32.mrf.mxu0
        %7946 = vdwg.mxu0
        %v7947 = vadd.f32 %v6989, %v7944
        %7948 = vset.pattern.permute.xlu0 8
        %7949 = vperm.xlu0 %7948, %v283
        %v7950 = vpop.permute.xlu0 %7949
        %vm7951 = vcmp.eq.s32.totalorder %v7950, %v282
        %v7952 = vsel %vm7951, 1.0, 0.0
        %v7954 = vsel %vm289, %v7952, 0
        %7956 = vmatprep.subr.mxu0 0.0
        %7957 = vmatpush1.msra.mxu0 0.0
        %7958 = vmatprep.subr.mxu0 0.0
        %7959 = vmatpush1.msra.mxu0 0.0
        %7960 = vmatprep.subr.mxu0 0.0
        %7961 = vmatpush1.msra.mxu0 0.0
        %7962 = vmatprep.subr.mxu0 0.0
        %7963 = vmatpush1.msra.mxu0 0.0
        %7964 = vmatprep.subr.mxu0 0.0
        %7965 = vmatpush1.msra.mxu0 0.0
        %7966 = vmatprep.subr.mxu0 0.0
        %7967 = vmatpush1.msra.mxu0 0.0
        %7968 = vmatprep.subr.mxu0 0.0
        %7969 = vmatpush1.msra.mxu0 0.0
        %7970 = vmatprep.subr.mxu0 0.0
        %7971 = vmatpush1.msra.mxu0 0.0
        %7972 = vmatprep.subr.mxu0 0.0
        %7973 = vmatpush1.msra.mxu0 0.0
        %7974 = vmatprep.subr.mxu0 0.0
        %7975 = vmatpush1.msra.mxu0 0.0
        %7976 = vmatprep.subr.mxu0 0.0
        %7977 = vmatpush1.msra.mxu0 0.0
        %7978 = vmatprep.subr.mxu0 0.0
        %7979 = vmatpush1.msra.mxu0 0.0
        %7980 = vmatprep.subr.mxu0 0.0
        %v7981 = vand.u32 %v280, 4294901760
        %7982 = vmatpush1.msra.mxu0 %v7981
        %7983 = vmatprep.subr.mxu0 0.0
        %v7984 = vand.u32 %v279, 4294901760
        %7985 = vmatpush1.msra.mxu0 %v7984
        %7986 = vmatprep.subr.mxu0 0.0
        %v7987 = vand.u32 %v278, 4294901760
        %7988 = vmatpush1.msra.mxu0 %v7987
        %7989 = vmatprep.subr.mxu0 0.0
        %v7990 = vand.u32 %v277, 4294901760
        %7991 = vmatpush1.msra.mxu0 %v7990
        %7992 = vmatprep.subr.mxu0 0.0
        %7993 = vmatpush2.msra.mxu0 0.0
        %7994 = vmatprep.subr.mxu0 0.0
        %7995 = vmatpush2.msra.mxu0 0.0
        %7996 = vmatprep.subr.mxu0 0.0
        %7997 = vmatpush2.msra.mxu0 0.0
        %7998 = vmatprep.subr.mxu0 0.0
        %7999 = vmatpush2.msra.mxu0 0.0
        %8000 = vmatprep.subr.mxu0 0.0
        %8001 = vmatpush2.msra.mxu0 0.0
        %8002 = vmatprep.subr.mxu0 0.0
        %8003 = vmatpush2.msra.mxu0 0.0
        %8004 = vmatprep.subr.mxu0 0.0
        %8005 = vmatpush2.msra.mxu0 0.0
        %8006 = vmatprep.subr.mxu0 0.0
        %8007 = vmatpush2.msra.mxu0 0.0
        %8008 = vmatprep.subr.mxu0 0.0
        %8009 = vmatpush2.msra.mxu0 0.0
        %8010 = vmatprep.subr.mxu0 0.0
        %8011 = vmatpush2.msra.mxu0 0.0
        %8012 = vmatprep.subr.mxu0 0.0
        %8013 = vmatpush2.msra.mxu0 0.0
        %8014 = vmatprep.subr.mxu0 0.0
        %8015 = vmatpush2.msra.mxu0 0.0
        %8016 = vmatprep.subr.mxu0 0.0
        %8017 = vmatpush2.msra.mxu0 0.0
        %8018 = vmatprep.subr.mxu0 0.0
        %8019 = vmatpush2.msra.mxu0 0.0
        %8020 = vmatprep.subr.mxu0 0.0
        %8021 = vmatpush2.msra.mxu0 0.0
        %8022 = vmatprep.subr.mxu0 0.0
        %8023 = vmatpush2.msra.mxu0 0.0
        %8024 = vmatprep.mubr.f32.mxu0 0.0
        %v8025 = vand.u32 %v7954, 4294901760
        %v8026 = vsub.f32 %v7954, %v8025
        %v8027 = vand.u32 %v8026, 4294901760
        %v8028 = vsub.f32 %v8026, %v8027
        %v8029 = vand.u32 %v8028, 4294901760
        %8030 = vmatmul.mubr.f32.gmra.mxu0 %v8029
        %v8031 = vpop.f32.mrf.mxu0
        %v8032 = vadd.f32 0.0, %v8031
        %v8033 = vpop.f32.mrf.mxu0
        %8034 = vdwg.mxu0
        %8035 = vmatprep.subr.mxu0 0.0
        %8036 = vmatpush1.msra.mxu0 0.0
        %8037 = vmatprep.subr.mxu0 0.0
        %8038 = vmatpush1.msra.mxu0 0.0
        %8039 = vmatprep.subr.mxu0 0.0
        %8040 = vmatpush1.msra.mxu0 0.0
        %8041 = vmatprep.subr.mxu0 0.0
        %8042 = vmatpush1.msra.mxu0 0.0
        %8043 = vmatprep.subr.mxu0 0.0
        %8044 = vmatpush1.msra.mxu0 0.0
        %8045 = vmatprep.subr.mxu0 0.0
        %8046 = vmatpush1.msra.mxu0 0.0
        %8047 = vmatprep.subr.mxu0 0.0
        %8048 = vmatpush1.msra.mxu0 0.0
        %8049 = vmatprep.subr.mxu0 0.0
        %8050 = vmatpush1.msra.mxu0 0.0
        %8051 = vmatprep.subr.mxu0 0.0
        %8052 = vmatpush1.msra.mxu0 0.0
        %8053 = vmatprep.subr.mxu0 0.0
        %8054 = vmatpush1.msra.mxu0 0.0
        %8055 = vmatprep.subr.mxu0 0.0
        %8056 = vmatpush1.msra.mxu0 0.0
        %8057 = vmatprep.subr.mxu0 0.0
        %8058 = vmatpush1.msra.mxu0 0.0
        %8059 = vmatprep.subr.mxu0 0.0
        %v8060 = vand.u32 %v280, 4294901760
        %v8061 = vsub.f32 %v280, %v8060
        %v8062 = vand.u32 %v8061, 4294901760
        %v8063 = vsub.f32 %v8061, %v8062
        %v8064 = vand.u32 %v8063, 4294901760
        %8065 = vmatpush1.msra.mxu0 %v8064
        %8066 = vmatprep.subr.mxu0 0.0
        %v8067 = vand.u32 %v279, 4294901760
        %v8068 = vsub.f32 %v279, %v8067
        %v8069 = vand.u32 %v8068, 4294901760
        %v8070 = vsub.f32 %v8068, %v8069
        %v8071 = vand.u32 %v8070, 4294901760
        %8072 = vmatpush1.msra.mxu0 %v8071
        %8073 = vmatprep.subr.mxu0 0.0
        %v8074 = vand.u32 %v278, 4294901760
        %v8075 = vsub.f32 %v278, %v8074
        %v8076 = vand.u32 %v8075, 4294901760
        %v8077 = vsub.f32 %v8075, %v8076
        %v8078 = vand.u32 %v8077, 4294901760
        %8079 = vmatpush1.msra.mxu0 %v8078
        %8080 = vmatprep.subr.mxu0 0.0
        %v8081 = vand.u32 %v277, 4294901760
        %v8082 = vsub.f32 %v277, %v8081
        %v8083 = vand.u32 %v8082, 4294901760
        %v8084 = vsub.f32 %v8082, %v8083
        %v8085 = vand.u32 %v8084, 4294901760
        %8086 = vmatpush1.msra.mxu0 %v8085
        %8087 = vmatprep.subr.mxu0 0.0
        %8088 = vmatpush2.msra.mxu0 0.0
        %8089 = vmatprep.subr.mxu0 0.0
        %8090 = vmatpush2.msra.mxu0 0.0
        %8091 = vmatprep.subr.mxu0 0.0
        %8092 = vmatpush2.msra.mxu0 0.0
        %8093 = vmatprep.subr.mxu0 0.0
        %8094 = vmatpush2.msra.mxu0 0.0
        %8095 = vmatprep.subr.mxu0 0.0
        %8096 = vmatpush2.msra.mxu0 0.0
        %8097 = vmatprep.subr.mxu0 0.0
        %8098 = vmatpush2.msra.mxu0 0.0
        %8099 = vmatprep.subr.mxu0 0.0
        %8100 = vmatpush2.msra.mxu0 0.0
        %8101 = vmatprep.subr.mxu0 0.0
        %8102 = vmatpush2.msra.mxu0 0.0
        %8103 = vmatprep.subr.mxu0 0.0
        %8104 = vmatpush2.msra.mxu0 0.0
        %8105 = vmatprep.subr.mxu0 0.0
        %8106 = vmatpush2.msra.mxu0 0.0
        %8107 = vmatprep.subr.mxu0 0.0
        %8108 = vmatpush2.msra.mxu0 0.0
        %8109 = vmatprep.subr.mxu0 0.0
        %8110 = vmatpush2.msra.mxu0 0.0
        %8111 = vmatprep.subr.mxu0 0.0
        %8112 = vmatpush2.msra.mxu0 0.0
        %8113 = vmatprep.subr.mxu0 0.0
        %8114 = vmatpush2.msra.mxu0 0.0
        %8115 = vmatprep.subr.mxu0 0.0
        %8116 = vmatpush2.msra.mxu0 0.0
        %8117 = vmatprep.subr.mxu0 0.0
        %8118 = vmatpush2.msra.mxu0 0.0
        %8119 = vmatprep.mubr.f32.mxu0 0.0
        %v8120 = vand.u32 %v7954, 4294901760
        %8121 = vmatmul.mubr.f32.gmra.mxu0 %v8120
        %v8122 = vpop.f32.mrf.mxu0
        %v8123 = vadd.f32 %v8032, %v8122
        %v8124 = vpop.f32.mrf.mxu0
        %8125 = vdwg.mxu0
        %8126 = vmatprep.subr.mxu0 0.0
        %8127 = vmatpush1.msra.mxu0 0.0
        %8128 = vmatprep.subr.mxu0 0.0
        %8129 = vmatpush1.msra.mxu0 0.0
        %8130 = vmatprep.subr.mxu0 0.0
        %8131 = vmatpush1.msra.mxu0 0.0
        %8132 = vmatprep.subr.mxu0 0.0
        %8133 = vmatpush1.msra.mxu0 0.0
        %8134 = vmatprep.subr.mxu0 0.0
        %8135 = vmatpush1.msra.mxu0 0.0
        %8136 = vmatprep.subr.mxu0 0.0
        %8137 = vmatpush1.msra.mxu0 0.0
        %8138 = vmatprep.subr.mxu0 0.0
        %8139 = vmatpush1.msra.mxu0 0.0
        %8140 = vmatprep.subr.mxu0 0.0
        %8141 = vmatpush1.msra.mxu0 0.0
        %8142 = vmatprep.subr.mxu0 0.0
        %8143 = vmatpush1.msra.mxu0 0.0
        %8144 = vmatprep.subr.mxu0 0.0
        %8145 = vmatpush1.msra.mxu0 0.0
        %8146 = vmatprep.subr.mxu0 0.0
        %8147 = vmatpush1.msra.mxu0 0.0
        %8148 = vmatprep.subr.mxu0 0.0
        %8149 = vmatpush1.msra.mxu0 0.0
        %8150 = vmatprep.subr.mxu0 0.0
        %v8151 = vand.u32 %v280, 4294901760
        %v8152 = vsub.f32 %v280, %v8151
        %8153 = vmatpush1.msra.mxu0 %v8152
        %8154 = vmatprep.subr.mxu0 0.0
        %v8155 = vand.u32 %v279, 4294901760
        %v8156 = vsub.f32 %v279, %v8155
        %8157 = vmatpush1.msra.mxu0 %v8156
        %8158 = vmatprep.subr.mxu0 0.0
        %v8159 = vand.u32 %v278, 4294901760
        %v8160 = vsub.f32 %v278, %v8159
        %8161 = vmatpush1.msra.mxu0 %v8160
        %8162 = vmatprep.subr.mxu0 0.0
        %v8163 = vand.u32 %v277, 4294901760
        %v8164 = vsub.f32 %v277, %v8163
        %8165 = vmatpush1.msra.mxu0 %v8164
        %8166 = vmatprep.subr.mxu0 0.0
        %8167 = vmatpush2.msra.mxu0 0.0
        %8168 = vmatprep.subr.mxu0 0.0
        %8169 = vmatpush2.msra.mxu0 0.0
        %8170 = vmatprep.subr.mxu0 0.0
        %8171 = vmatpush2.msra.mxu0 0.0
        %8172 = vmatprep.subr.mxu0 0.0
        %8173 = vmatpush2.msra.mxu0 0.0
        %8174 = vmatprep.subr.mxu0 0.0
        %8175 = vmatpush2.msra.mxu0 0.0
        %8176 = vmatprep.subr.mxu0 0.0
        %8177 = vmatpush2.msra.mxu0 0.0
        %8178 = vmatprep.subr.mxu0 0.0
        %8179 = vmatpush2.msra.mxu0 0.0
        %8180 = vmatprep.subr.mxu0 0.0
        %8181 = vmatpush2.msra.mxu0 0.0
        %8182 = vmatprep.subr.mxu0 0.0
        %8183 = vmatpush2.msra.mxu0 0.0
        %8184 = vmatprep.subr.mxu0 0.0
        %8185 = vmatpush2.msra.mxu0 0.0
        %8186 = vmatprep.subr.mxu0 0.0
        %8187 = vmatpush2.msra.mxu0 0.0
        %8188 = vmatprep.subr.mxu0 0.0
        %8189 = vmatpush2.msra.mxu0 0.0
        %8190 = vmatprep.subr.mxu0 0.0
        %8191 = vmatpush2.msra.mxu0 0.0
        %8192 = vmatprep.subr.mxu0 0.0
        %8193 = vmatpush2.msra.mxu0 0.0
        %8194 = vmatprep.subr.mxu0 0.0
        %8195 = vmatpush2.msra.mxu0 0.0
        %8196 = vmatprep.subr.mxu0 0.0
        %8197 = vmatpush2.msra.mxu0 0.0
        %8198 = vmatprep.mubr.f32.mxu0 0.0
        %v8199 = vand.u32 %v7954, 4294901760
        %v8200 = vsub.f32 %v7954, %v8199
        %8201 = vmatmul.mubr.f32.gmra.mxu0 %v8200
        %v8202 = vpop.f32.mrf.mxu0
        %v8203 = vadd.f32 %v8123, %v8202
        %v8204 = vpop.f32.mrf.mxu0
        %8205 = vdwg.mxu0
        %8206 = vmatprep.subr.mxu0 0.0
        %8207 = vmatpush1.msra.mxu0 0.0
        %8208 = vmatprep.subr.mxu0 0.0
        %8209 = vmatpush1.msra.mxu0 0.0
        %8210 = vmatprep.subr.mxu0 0.0
        %8211 = vmatpush1.msra.mxu0 0.0
        %8212 = vmatprep.subr.mxu0 0.0
        %8213 = vmatpush1.msra.mxu0 0.0
        %8214 = vmatprep.subr.mxu0 0.0
        %8215 = vmatpush1.msra.mxu0 0.0
        %8216 = vmatprep.subr.mxu0 0.0
        %8217 = vmatpush1.msra.mxu0 0.0
        %8218 = vmatprep.subr.mxu0 0.0
        %8219 = vmatpush1.msra.mxu0 0.0
        %8220 = vmatprep.subr.mxu0 0.0
        %8221 = vmatpush1.msra.mxu0 0.0
        %8222 = vmatprep.subr.mxu0 0.0
        %8223 = vmatpush1.msra.mxu0 0.0
        %8224 = vmatprep.subr.mxu0 0.0
        %8225 = vmatpush1.msra.mxu0 0.0
        %8226 = vmatprep.subr.mxu0 0.0
        %8227 = vmatpush1.msra.mxu0 0.0
        %8228 = vmatprep.subr.mxu0 0.0
        %8229 = vmatpush1.msra.mxu0 0.0
        %8230 = vmatprep.subr.mxu0 0.0
        %v8231 = vand.u32 %v280, 4294901760
        %8232 = vmatpush1.msra.mxu0 %v8231
        %8233 = vmatprep.subr.mxu0 0.0
        %v8234 = vand.u32 %v279, 4294901760
        %8235 = vmatpush1.msra.mxu0 %v8234
        %8236 = vmatprep.subr.mxu0 0.0
        %v8237 = vand.u32 %v278, 4294901760
        %8238 = vmatpush1.msra.mxu0 %v8237
        %8239 = vmatprep.subr.mxu0 0.0
        %v8240 = vand.u32 %v277, 4294901760
        %8241 = vmatpush1.msra.mxu0 %v8240
        %8242 = vmatprep.subr.mxu0 0.0
        %8243 = vmatpush2.msra.mxu0 0.0
        %8244 = vmatprep.subr.mxu0 0.0
        %8245 = vmatpush2.msra.mxu0 0.0
        %8246 = vmatprep.subr.mxu0 0.0
        %8247 = vmatpush2.msra.mxu0 0.0
        %8248 = vmatprep.subr.mxu0 0.0
        %8249 = vmatpush2.msra.mxu0 0.0
        %8250 = vmatprep.subr.mxu0 0.0
        %8251 = vmatpush2.msra.mxu0 0.0
        %8252 = vmatprep.subr.mxu0 0.0
        %8253 = vmatpush2.msra.mxu0 0.0
        %8254 = vmatprep.subr.mxu0 0.0
        %8255 = vmatpush2.msra.mxu0 0.0
        %8256 = vmatprep.subr.mxu0 0.0
        %8257 = vmatpush2.msra.mxu0 0.0
        %8258 = vmatprep.subr.mxu0 0.0
        %8259 = vmatpush2.msra.mxu0 0.0
        %8260 = vmatprep.subr.mxu0 0.0
        %8261 = vmatpush2.msra.mxu0 0.0
        %8262 = vmatprep.subr.mxu0 0.0
        %8263 = vmatpush2.msra.mxu0 0.0
        %8264 = vmatprep.subr.mxu0 0.0
        %8265 = vmatpush2.msra.mxu0 0.0
        %8266 = vmatprep.subr.mxu0 0.0
        %8267 = vmatpush2.msra.mxu0 0.0
        %8268 = vmatprep.subr.mxu0 0.0
        %8269 = vmatpush2.msra.mxu0 0.0
        %8270 = vmatprep.subr.mxu0 0.0
        %8271 = vmatpush2.msra.mxu0 0.0
        %8272 = vmatprep.subr.mxu0 0.0
        %8273 = vmatpush2.msra.mxu0 0.0
        %8274 = vmatprep.mubr.f32.mxu0 0.0
        %v8275 = vand.u32 %v7954, 4294901760
        %v8276 = vsub.f32 %v7954, %v8275
        %v8277 = vand.u32 %v8276, 4294901760
        %8278 = vmatmul.mubr.f32.gmra.mxu0 %v8277
        %v8279 = vpop.f32.mrf.mxu0
        %v8280 = vadd.f32 %v8203, %v8279
        %v8281 = vpop.f32.mrf.mxu0
        %8282 = vdwg.mxu0
        %8283 = vmatprep.subr.mxu0 0.0
        %8284 = vmatpush1.msra.mxu0 0.0
        %8285 = vmatprep.subr.mxu0 0.0
        %8286 = vmatpush1.msra.mxu0 0.0
        %8287 = vmatprep.subr.mxu0 0.0
        %8288 = vmatpush1.msra.mxu0 0.0
        %8289 = vmatprep.subr.mxu0 0.0
        %8290 = vmatpush1.msra.mxu0 0.0
        %8291 = vmatprep.subr.mxu0 0.0
        %8292 = vmatpush1.msra.mxu0 0.0
        %8293 = vmatprep.subr.mxu0 0.0
        %8294 = vmatpush1.msra.mxu0 0.0
        %8295 = vmatprep.subr.mxu0 0.0
        %8296 = vmatpush1.msra.mxu0 0.0
        %8297 = vmatprep.subr.mxu0 0.0
        %8298 = vmatpush1.msra.mxu0 0.0
        %8299 = vmatprep.subr.mxu0 0.0
        %8300 = vmatpush1.msra.mxu0 0.0
        %8301 = vmatprep.subr.mxu0 0.0
        %8302 = vmatpush1.msra.mxu0 0.0
        %8303 = vmatprep.subr.mxu0 0.0
        %8304 = vmatpush1.msra.mxu0 0.0
        %8305 = vmatprep.subr.mxu0 0.0
        %8306 = vmatpush1.msra.mxu0 0.0
        %8307 = vmatprep.subr.mxu0 0.0
        %v8308 = vand.u32 %v280, 4294901760
        %v8309 = vsub.f32 %v280, %v8308
        %v8310 = vand.u32 %v8309, 4294901760
        %8311 = vmatpush1.msra.mxu0 %v8310
        %8312 = vmatprep.subr.mxu0 0.0
        %v8313 = vand.u32 %v279, 4294901760
        %v8314 = vsub.f32 %v279, %v8313
        %v8315 = vand.u32 %v8314, 4294901760
        %8316 = vmatpush1.msra.mxu0 %v8315
        %8317 = vmatprep.subr.mxu0 0.0
        %v8318 = vand.u32 %v278, 4294901760
        %v8319 = vsub.f32 %v278, %v8318
        %v8320 = vand.u32 %v8319, 4294901760
        %8321 = vmatpush1.msra.mxu0 %v8320
        %8322 = vmatprep.subr.mxu0 0.0
        %v8323 = vand.u32 %v277, 4294901760
        %v8324 = vsub.f32 %v277, %v8323
        %v8325 = vand.u32 %v8324, 4294901760
        %8326 = vmatpush1.msra.mxu0 %v8325
        %8327 = vmatprep.subr.mxu0 0.0
        %8328 = vmatpush2.msra.mxu0 0.0
        %8329 = vmatprep.subr.mxu0 0.0
        %8330 = vmatpush2.msra.mxu0 0.0
        %8331 = vmatprep.subr.mxu0 0.0
        %8332 = vmatpush2.msra.mxu0 0.0
        %8333 = vmatprep.subr.mxu0 0.0
        %8334 = vmatpush2.msra.mxu0 0.0
        %8335 = vmatprep.subr.mxu0 0.0
        %8336 = vmatpush2.msra.mxu0 0.0
        %8337 = vmatprep.subr.mxu0 0.0
        %8338 = vmatpush2.msra.mxu0 0.0
        %8339 = vmatprep.subr.mxu0 0.0
        %8340 = vmatpush2.msra.mxu0 0.0
        %8341 = vmatprep.subr.mxu0 0.0
        %8342 = vmatpush2.msra.mxu0 0.0
        %8343 = vmatprep.subr.mxu0 0.0
        %8344 = vmatpush2.msra.mxu0 0.0
        %8345 = vmatprep.subr.mxu0 0.0
        %8346 = vmatpush2.msra.mxu0 0.0
        %8347 = vmatprep.subr.mxu0 0.0
        %8348 = vmatpush2.msra.mxu0 0.0
        %8349 = vmatprep.subr.mxu0 0.0
        %8350 = vmatpush2.msra.mxu0 0.0
        %8351 = vmatprep.subr.mxu0 0.0
        %8352 = vmatpush2.msra.mxu0 0.0
        %8353 = vmatprep.subr.mxu0 0.0
        %8354 = vmatpush2.msra.mxu0 0.0
        %8355 = vmatprep.subr.mxu0 0.0
        %8356 = vmatpush2.msra.mxu0 0.0
        %8357 = vmatprep.subr.mxu0 0.0
        %8358 = vmatpush2.msra.mxu0 0.0
        %8359 = vmatprep.mubr.f32.mxu0 0.0
        %v8360 = vand.u32 %v7954, 4294901760
        %8361 = vmatmul.mubr.f32.gmra.mxu0 %v8360
        %v8362 = vpop.f32.mrf.mxu0
        %v8363 = vadd.f32 %v8280, %v8362
        %v8364 = vpop.f32.mrf.mxu0
        %8365 = vdwg.mxu0
        %8366 = vmatprep.subr.mxu0 0.0
        %8367 = vmatpush1.msra.mxu0 0.0
        %8368 = vmatprep.subr.mxu0 0.0
        %8369 = vmatpush1.msra.mxu0 0.0
        %8370 = vmatprep.subr.mxu0 0.0
        %8371 = vmatpush1.msra.mxu0 0.0
        %8372 = vmatprep.subr.mxu0 0.0
        %8373 = vmatpush1.msra.mxu0 0.0
        %8374 = vmatprep.subr.mxu0 0.0
        %8375 = vmatpush1.msra.mxu0 0.0
        %8376 = vmatprep.subr.mxu0 0.0
        %8377 = vmatpush1.msra.mxu0 0.0
        %8378 = vmatprep.subr.mxu0 0.0
        %8379 = vmatpush1.msra.mxu0 0.0
        %8380 = vmatprep.subr.mxu0 0.0
        %8381 = vmatpush1.msra.mxu0 0.0
        %8382 = vmatprep.subr.mxu0 0.0
        %8383 = vmatpush1.msra.mxu0 0.0
        %8384 = vmatprep.subr.mxu0 0.0
        %8385 = vmatpush1.msra.mxu0 0.0
        %8386 = vmatprep.subr.mxu0 0.0
        %8387 = vmatpush1.msra.mxu0 0.0
        %8388 = vmatprep.subr.mxu0 0.0
        %8389 = vmatpush1.msra.mxu0 0.0
        %8390 = vmatprep.subr.mxu0 0.0
        %v8391 = vand.u32 %v280, 4294901760
        %8392 = vmatpush1.msra.mxu0 %v8391
        %8393 = vmatprep.subr.mxu0 0.0
        %v8394 = vand.u32 %v279, 4294901760
        %8395 = vmatpush1.msra.mxu0 %v8394
        %8396 = vmatprep.subr.mxu0 0.0
        %v8397 = vand.u32 %v278, 4294901760
        %8398 = vmatpush1.msra.mxu0 %v8397
        %8399 = vmatprep.subr.mxu0 0.0
        %v8400 = vand.u32 %v277, 4294901760
        %8401 = vmatpush1.msra.mxu0 %v8400
        %8402 = vmatprep.subr.mxu0 0.0
        %8403 = vmatpush2.msra.mxu0 0.0
        %8404 = vmatprep.subr.mxu0 0.0
        %8405 = vmatpush2.msra.mxu0 0.0
        %8406 = vmatprep.subr.mxu0 0.0
        %8407 = vmatpush2.msra.mxu0 0.0
        %8408 = vmatprep.subr.mxu0 0.0
        %8409 = vmatpush2.msra.mxu0 0.0
        %8410 = vmatprep.subr.mxu0 0.0
        %8411 = vmatpush2.msra.mxu0 0.0
        %8412 = vmatprep.subr.mxu0 0.0
        %8413 = vmatpush2.msra.mxu0 0.0
        %8414 = vmatprep.subr.mxu0 0.0
        %8415 = vmatpush2.msra.mxu0 0.0
        %8416 = vmatprep.subr.mxu0 0.0
        %8417 = vmatpush2.msra.mxu0 0.0
        %8418 = vmatprep.subr.mxu0 0.0
        %8419 = vmatpush2.msra.mxu0 0.0
        %8420 = vmatprep.subr.mxu0 0.0
        %8421 = vmatpush2.msra.mxu0 0.0
        %8422 = vmatprep.subr.mxu0 0.0
        %8423 = vmatpush2.msra.mxu0 0.0
        %8424 = vmatprep.subr.mxu0 0.0
        %8425 = vmatpush2.msra.mxu0 0.0
        %8426 = vmatprep.subr.mxu0 0.0
        %8427 = vmatpush2.msra.mxu0 0.0
        %8428 = vmatprep.subr.mxu0 0.0
        %8429 = vmatpush2.msra.mxu0 0.0
        %8430 = vmatprep.subr.mxu0 0.0
        %8431 = vmatpush2.msra.mxu0 0.0
        %8432 = vmatprep.subr.mxu0 0.0
        %8433 = vmatpush2.msra.mxu0 0.0
        %8434 = vmatprep.mubr.f32.mxu0 0.0
        %v8435 = vand.u32 %v7954, 4294901760
        %8436 = vmatmul.mubr.f32.gmra.mxu0 %v8435
        %v8437 = vpop.f32.mrf.mxu0
        %v8438 = vadd.f32 %v8363, %v8437
        %v8439 = vpop.f32.mrf.mxu0
        %8440 = vdwg.mxu0
        %v8441 = vld [vmem:[#allocation2 + $0x80] sm:$0xff]
        %v8442 = vld [vmem:[#allocation2 + $0x88] sm:$0xff]
        %v8444 = vsel %vm1275, %v8438, 0
        %8446 = vmatprep.subr.mxu0 0.0
        %8447 = vmatpush1.msra.mxu0 0.0
        %8448 = vmatprep.subr.mxu0 0.0
        %8449 = vmatpush1.msra.mxu0 0.0
        %8450 = vmatprep.subr.mxu0 0.0
        %8451 = vmatpush1.msra.mxu0 0.0
        %8452 = vmatprep.subr.mxu0 0.0
        %8453 = vmatpush1.msra.mxu0 0.0
        %8454 = vmatprep.subr.mxu0 0.0
        %8455 = vmatpush1.msra.mxu0 0.0
        %8456 = vmatprep.subr.mxu0 0.0
        %8457 = vmatpush1.msra.mxu0 0.0
        %8458 = vmatprep.subr.mxu0 0.0
        %8459 = vmatpush1.msra.mxu0 0.0
        %8460 = vmatprep.subr.mxu0 0.0
        %8461 = vmatpush1.msra.mxu0 0.0
        %8462 = vmatprep.subr.mxu0 0.0
        %8463 = vmatpush1.msra.mxu0 0.0
        %8464 = vmatprep.subr.mxu0 0.0
        %8465 = vmatpush1.msra.mxu0 0.0
        %8466 = vmatprep.subr.mxu0 0.0
        %8467 = vmatpush1.msra.mxu0 0.0
        %8468 = vmatprep.subr.mxu0 0.0
        %8469 = vmatpush1.msra.mxu0 0.0
        %8470 = vmatprep.subr.mxu0 0.0
        %8471 = vmatpush1.msra.mxu0 0.0
        %8472 = vmatprep.subr.mxu0 0.0
        %8473 = vmatpush1.msra.mxu0 0.0
        %8474 = vmatprep.subr.mxu0 0.0
        %v8475 = vand.u32 %v8442, 4294901760
        %8476 = vmatpush1.msra.mxu0 %v8475
        %8477 = vmatprep.subr.mxu0 0.0
        %v8478 = vand.u32 %v8441, 4294901760
        %8479 = vmatpush1.msra.mxu0 %v8478
        %8480 = vmatprep.subr.mxu0 0.0
        %8481 = vmatpush2.msra.mxu0 0.0
        %8482 = vmatprep.subr.mxu0 0.0
        %8483 = vmatpush2.msra.mxu0 0.0
        %8484 = vmatprep.subr.mxu0 0.0
        %8485 = vmatpush2.msra.mxu0 0.0
        %8486 = vmatprep.subr.mxu0 0.0
        %8487 = vmatpush2.msra.mxu0 0.0
        %8488 = vmatprep.subr.mxu0 0.0
        %8489 = vmatpush2.msra.mxu0 0.0
        %8490 = vmatprep.subr.mxu0 0.0
        %8491 = vmatpush2.msra.mxu0 0.0
        %8492 = vmatprep.subr.mxu0 0.0
        %8493 = vmatpush2.msra.mxu0 0.0
        %8494 = vmatprep.subr.mxu0 0.0
        %8495 = vmatpush2.msra.mxu0 0.0
        %8496 = vmatprep.subr.mxu0 0.0
        %8497 = vmatpush2.msra.mxu0 0.0
        %8498 = vmatprep.subr.mxu0 0.0
        %8499 = vmatpush2.msra.mxu0 0.0
        %8500 = vmatprep.subr.mxu0 0.0
        %8501 = vmatpush2.msra.mxu0 0.0
        %8502 = vmatprep.subr.mxu0 0.0
        %8503 = vmatpush2.msra.mxu0 0.0
        %8504 = vmatprep.subr.mxu0 0.0
        %8505 = vmatpush2.msra.mxu0 0.0
        %8506 = vmatprep.subr.mxu0 0.0
        %8507 = vmatpush2.msra.mxu0 0.0
        %8508 = vmatprep.subr.mxu0 0.0
        %8509 = vmatpush2.msra.mxu0 0.0
        %8510 = vmatprep.subr.mxu0 0.0
        %8511 = vmatpush2.msra.mxu0 0.0
        %8512 = vmatprep.mubr.f32.mxu0 0.0
        %v8513 = vand.u32 %v8444, 4294901760
        %v8514 = vsub.f32 %v8444, %v8513
        %v8515 = vand.u32 %v8514, 4294901760
        %v8516 = vsub.f32 %v8514, %v8515
        %v8517 = vand.u32 %v8516, 4294901760
        %8518 = vmatmul.mubr.f32.gmra.mxu0 %v8517
        %v8519 = vpop.f32.mrf.mxu0
        %v8520 = vadd.f32 0.0, %v8519
        %v8521 = vpop.f32.mrf.mxu0
        %8522 = vdwg.mxu0
        %8523 = vmatprep.subr.mxu0 0.0
        %8524 = vmatpush1.msra.mxu0 0.0
        %8525 = vmatprep.subr.mxu0 0.0
        %8526 = vmatpush1.msra.mxu0 0.0
        %8527 = vmatprep.subr.mxu0 0.0
        %8528 = vmatpush1.msra.mxu0 0.0
        %8529 = vmatprep.subr.mxu0 0.0
        %8530 = vmatpush1.msra.mxu0 0.0
        %8531 = vmatprep.subr.mxu0 0.0
        %8532 = vmatpush1.msra.mxu0 0.0
        %8533 = vmatprep.subr.mxu0 0.0
        %8534 = vmatpush1.msra.mxu0 0.0
        %8535 = vmatprep.subr.mxu0 0.0
        %8536 = vmatpush1.msra.mxu0 0.0
        %8537 = vmatprep.subr.mxu0 0.0
        %8538 = vmatpush1.msra.mxu0 0.0
        %8539 = vmatprep.subr.mxu0 0.0
        %8540 = vmatpush1.msra.mxu0 0.0
        %8541 = vmatprep.subr.mxu0 0.0
        %8542 = vmatpush1.msra.mxu0 0.0
        %8543 = vmatprep.subr.mxu0 0.0
        %8544 = vmatpush1.msra.mxu0 0.0
        %8545 = vmatprep.subr.mxu0 0.0
        %8546 = vmatpush1.msra.mxu0 0.0
        %8547 = vmatprep.subr.mxu0 0.0
        %8548 = vmatpush1.msra.mxu0 0.0
        %8549 = vmatprep.subr.mxu0 0.0
        %8550 = vmatpush1.msra.mxu0 0.0
        %8551 = vmatprep.subr.mxu0 0.0
        %v8552 = vand.u32 %v8442, 4294901760
        %v8553 = vsub.f32 %v8442, %v8552
        %v8554 = vand.u32 %v8553, 4294901760
        %v8555 = vsub.f32 %v8553, %v8554
        %v8556 = vand.u32 %v8555, 4294901760
        %8557 = vmatpush1.msra.mxu0 %v8556
        %8558 = vmatprep.subr.mxu0 0.0
        %v8559 = vand.u32 %v8441, 4294901760
        %v8560 = vsub.f32 %v8441, %v8559
        %v8561 = vand.u32 %v8560, 4294901760
        %v8562 = vsub.f32 %v8560, %v8561
        %v8563 = vand.u32 %v8562, 4294901760
        %8564 = vmatpush1.msra.mxu0 %v8563
        %8565 = vmatprep.subr.mxu0 0.0
        %8566 = vmatpush2.msra.mxu0 0.0
        %8567 = vmatprep.subr.mxu0 0.0
        %8568 = vmatpush2.msra.mxu0 0.0
        %8569 = vmatprep.subr.mxu0 0.0
        %8570 = vmatpush2.msra.mxu0 0.0
        %8571 = vmatprep.subr.mxu0 0.0
        %8572 = vmatpush2.msra.mxu0 0.0
        %8573 = vmatprep.subr.mxu0 0.0
        %8574 = vmatpush2.msra.mxu0 0.0
        %8575 = vmatprep.subr.mxu0 0.0
        %8576 = vmatpush2.msra.mxu0 0.0
        %8577 = vmatprep.subr.mxu0 0.0
        %8578 = vmatpush2.msra.mxu0 0.0
        %8579 = vmatprep.subr.mxu0 0.0
        %8580 = vmatpush2.msra.mxu0 0.0
        %8581 = vmatprep.subr.mxu0 0.0
        %8582 = vmatpush2.msra.mxu0 0.0
        %8583 = vmatprep.subr.mxu0 0.0
        %8584 = vmatpush2.msra.mxu0 0.0
        %8585 = vmatprep.subr.mxu0 0.0
        %8586 = vmatpush2.msra.mxu0 0.0
        %8587 = vmatprep.subr.mxu0 0.0
        %8588 = vmatpush2.msra.mxu0 0.0
        %8589 = vmatprep.subr.mxu0 0.0
        %8590 = vmatpush2.msra.mxu0 0.0
        %8591 = vmatprep.subr.mxu0 0.0
        %8592 = vmatpush2.msra.mxu0 0.0
        %8593 = vmatprep.subr.mxu0 0.0
        %8594 = vmatpush2.msra.mxu0 0.0
        %8595 = vmatprep.subr.mxu0 0.0
        %8596 = vmatpush2.msra.mxu0 0.0
        %8597 = vmatprep.mubr.f32.mxu0 0.0
        %v8598 = vand.u32 %v8444, 4294901760
        %8599 = vmatmul.mubr.f32.gmra.mxu0 %v8598
        %v8600 = vpop.f32.mrf.mxu0
        %v8601 = vadd.f32 %v8520, %v8600
        %v8602 = vpop.f32.mrf.mxu0
        %8603 = vdwg.mxu0
        %8604 = vmatprep.subr.mxu0 0.0
        %8605 = vmatpush1.msra.mxu0 0.0
        %8606 = vmatprep.subr.mxu0 0.0
        %8607 = vmatpush1.msra.mxu0 0.0
        %8608 = vmatprep.subr.mxu0 0.0
        %8609 = vmatpush1.msra.mxu0 0.0
        %8610 = vmatprep.subr.mxu0 0.0
        %8611 = vmatpush1.msra.mxu0 0.0
        %8612 = vmatprep.subr.mxu0 0.0
        %8613 = vmatpush1.msra.mxu0 0.0
        %8614 = vmatprep.subr.mxu0 0.0
        %8615 = vmatpush1.msra.mxu0 0.0
        %8616 = vmatprep.subr.mxu0 0.0
        %8617 = vmatpush1.msra.mxu0 0.0
        %8618 = vmatprep.subr.mxu0 0.0
        %8619 = vmatpush1.msra.mxu0 0.0
        %8620 = vmatprep.subr.mxu0 0.0
        %8621 = vmatpush1.msra.mxu0 0.0
        %8622 = vmatprep.subr.mxu0 0.0
        %8623 = vmatpush1.msra.mxu0 0.0
        %8624 = vmatprep.subr.mxu0 0.0
        %8625 = vmatpush1.msra.mxu0 0.0
        %8626 = vmatprep.subr.mxu0 0.0
        %8627 = vmatpush1.msra.mxu0 0.0
        %8628 = vmatprep.subr.mxu0 0.0
        %8629 = vmatpush1.msra.mxu0 0.0
        %8630 = vmatprep.subr.mxu0 0.0
        %8631 = vmatpush1.msra.mxu0 0.0
        %8632 = vmatprep.subr.mxu0 0.0
        %v8633 = vand.u32 %v8442, 4294901760
        %v8634 = vsub.f32 %v8442, %v8633
        %8635 = vmatpush1.msra.mxu0 %v8634
        %8636 = vmatprep.subr.mxu0 0.0
        %v8637 = vand.u32 %v8441, 4294901760
        %v8638 = vsub.f32 %v8441, %v8637
        %8639 = vmatpush1.msra.mxu0 %v8638
        %8640 = vmatprep.subr.mxu0 0.0
        %8641 = vmatpush2.msra.mxu0 0.0
        %8642 = vmatprep.subr.mxu0 0.0
        %8643 = vmatpush2.msra.mxu0 0.0
        %8644 = vmatprep.subr.mxu0 0.0
        %8645 = vmatpush2.msra.mxu0 0.0
        %8646 = vmatprep.subr.mxu0 0.0
        %8647 = vmatpush2.msra.mxu0 0.0
        %8648 = vmatprep.subr.mxu0 0.0
        %8649 = vmatpush2.msra.mxu0 0.0
        %8650 = vmatprep.subr.mxu0 0.0
        %8651 = vmatpush2.msra.mxu0 0.0
        %8652 = vmatprep.subr.mxu0 0.0
        %8653 = vmatpush2.msra.mxu0 0.0
        %8654 = vmatprep.subr.mxu0 0.0
        %8655 = vmatpush2.msra.mxu0 0.0
        %8656 = vmatprep.subr.mxu0 0.0
        %8657 = vmatpush2.msra.mxu0 0.0
        %8658 = vmatprep.subr.mxu0 0.0
        %8659 = vmatpush2.msra.mxu0 0.0
        %8660 = vmatprep.subr.mxu0 0.0
        %8661 = vmatpush2.msra.mxu0 0.0
        %8662 = vmatprep.subr.mxu0 0.0
        %8663 = vmatpush2.msra.mxu0 0.0
        %8664 = vmatprep.subr.mxu0 0.0
        %8665 = vmatpush2.msra.mxu0 0.0
        %8666 = vmatprep.subr.mxu0 0.0
        %8667 = vmatpush2.msra.mxu0 0.0
        %8668 = vmatprep.subr.mxu0 0.0
        %8669 = vmatpush2.msra.mxu0 0.0
        %8670 = vmatprep.subr.mxu0 0.0
        %8671 = vmatpush2.msra.mxu0 0.0
        %8672 = vmatprep.mubr.f32.mxu0 0.0
        %v8673 = vand.u32 %v8444, 4294901760
        %v8674 = vsub.f32 %v8444, %v8673
        %8675 = vmatmul.mubr.f32.gmra.mxu0 %v8674
        %v8676 = vpop.f32.mrf.mxu0
        %v8677 = vadd.f32 %v8601, %v8676
        %v8678 = vpop.f32.mrf.mxu0
        %8679 = vdwg.mxu0
        %8680 = vmatprep.subr.mxu0 0.0
        %8681 = vmatpush1.msra.mxu0 0.0
        %8682 = vmatprep.subr.mxu0 0.0
        %8683 = vmatpush1.msra.mxu0 0.0
        %8684 = vmatprep.subr.mxu0 0.0
        %8685 = vmatpush1.msra.mxu0 0.0
        %8686 = vmatprep.subr.mxu0 0.0
        %8687 = vmatpush1.msra.mxu0 0.0
        %8688 = vmatprep.subr.mxu0 0.0
        %8689 = vmatpush1.msra.mxu0 0.0
        %8690 = vmatprep.subr.mxu0 0.0
        %8691 = vmatpush1.msra.mxu0 0.0
        %8692 = vmatprep.subr.mxu0 0.0
        %8693 = vmatpush1.msra.mxu0 0.0
        %8694 = vmatprep.subr.mxu0 0.0
        %8695 = vmatpush1.msra.mxu0 0.0
        %8696 = vmatprep.subr.mxu0 0.0
        %8697 = vmatpush1.msra.mxu0 0.0
        %8698 = vmatprep.subr.mxu0 0.0
        %8699 = vmatpush1.msra.mxu0 0.0
        %8700 = vmatprep.subr.mxu0 0.0
        %8701 = vmatpush1.msra.mxu0 0.0
        %8702 = vmatprep.subr.mxu0 0.0
        %8703 = vmatpush1.msra.mxu0 0.0
        %8704 = vmatprep.subr.mxu0 0.0
        %8705 = vmatpush1.msra.mxu0 0.0
        %8706 = vmatprep.subr.mxu0 0.0
        %8707 = vmatpush1.msra.mxu0 0.0
        %8708 = vmatprep.subr.mxu0 0.0
        %v8709 = vand.u32 %v8442, 4294901760
        %8710 = vmatpush1.msra.mxu0 %v8709
        %8711 = vmatprep.subr.mxu0 0.0
        %v8712 = vand.u32 %v8441, 4294901760
        %8713 = vmatpush1.msra.mxu0 %v8712
        %8714 = vmatprep.subr.mxu0 0.0
        %8715 = vmatpush2.msra.mxu0 0.0
        %8716 = vmatprep.subr.mxu0 0.0
        %8717 = vmatpush2.msra.mxu0 0.0
        %8718 = vmatprep.subr.mxu0 0.0
        %8719 = vmatpush2.msra.mxu0 0.0
        %8720 = vmatprep.subr.mxu0 0.0
        %8721 = vmatpush2.msra.mxu0 0.0
        %8722 = vmatprep.subr.mxu0 0.0
        %8723 = vmatpush2.msra.mxu0 0.0
        %8724 = vmatprep.subr.mxu0 0.0
        %8725 = vmatpush2.msra.mxu0 0.0
        %8726 = vmatprep.subr.mxu0 0.0
        %8727 = vmatpush2.msra.mxu0 0.0
        %8728 = vmatprep.subr.mxu0 0.0
        %8729 = vmatpush2.msra.mxu0 0.0
        %8730 = vmatprep.subr.mxu0 0.0
        %8731 = vmatpush2.msra.mxu0 0.0
        %8732 = vmatprep.subr.mxu0 0.0
        %8733 = vmatpush2.msra.mxu0 0.0
        %8734 = vmatprep.subr.mxu0 0.0
        %8735 = vmatpush2.msra.mxu0 0.0
        %8736 = vmatprep.subr.mxu0 0.0
        %8737 = vmatpush2.msra.mxu0 0.0
        %8738 = vmatprep.subr.mxu0 0.0
        %8739 = vmatpush2.msra.mxu0 0.0
        %8740 = vmatprep.subr.mxu0 0.0
        %8741 = vmatpush2.msra.mxu0 0.0
        %8742 = vmatprep.subr.mxu0 0.0
        %8743 = vmatpush2.msra.mxu0 0.0
        %8744 = vmatprep.subr.mxu0 0.0
        %8745 = vmatpush2.msra.mxu0 0.0
        %8746 = vmatprep.mubr.f32.mxu0 0.0
        %v8747 = vand.u32 %v8444, 4294901760
        %v8748 = vsub.f32 %v8444, %v8747
        %v8749 = vand.u32 %v8748, 4294901760
        %8750 = vmatmul.mubr.f32.gmra.mxu0 %v8749
        %v8751 = vpop.f32.mrf.mxu0
        %v8752 = vadd.f32 %v8677, %v8751
        %v8753 = vpop.f32.mrf.mxu0
        %8754 = vdwg.mxu0
        %8755 = vmatprep.subr.mxu0 0.0
        %8756 = vmatpush1.msra.mxu0 0.0
        %8757 = vmatprep.subr.mxu0 0.0
        %8758 = vmatpush1.msra.mxu0 0.0
        %8759 = vmatprep.subr.mxu0 0.0
        %8760 = vmatpush1.msra.mxu0 0.0
        %8761 = vmatprep.subr.mxu0 0.0
        %8762 = vmatpush1.msra.mxu0 0.0
        %8763 = vmatprep.subr.mxu0 0.0
        %8764 = vmatpush1.msra.mxu0 0.0
        %8765 = vmatprep.subr.mxu0 0.0
        %8766 = vmatpush1.msra.mxu0 0.0
        %8767 = vmatprep.subr.mxu0 0.0
        %8768 = vmatpush1.msra.mxu0 0.0
        %8769 = vmatprep.subr.mxu0 0.0
        %8770 = vmatpush1.msra.mxu0 0.0
        %8771 = vmatprep.subr.mxu0 0.0
        %8772 = vmatpush1.msra.mxu0 0.0
        %8773 = vmatprep.subr.mxu0 0.0
        %8774 = vmatpush1.msra.mxu0 0.0
        %8775 = vmatprep.subr.mxu0 0.0
        %8776 = vmatpush1.msra.mxu0 0.0
        %8777 = vmatprep.subr.mxu0 0.0
        %8778 = vmatpush1.msra.mxu0 0.0
        %8779 = vmatprep.subr.mxu0 0.0
        %8780 = vmatpush1.msra.mxu0 0.0
        %8781 = vmatprep.subr.mxu0 0.0
        %8782 = vmatpush1.msra.mxu0 0.0
        %8783 = vmatprep.subr.mxu0 0.0
        %v8784 = vand.u32 %v8442, 4294901760
        %v8785 = vsub.f32 %v8442, %v8784
        %v8786 = vand.u32 %v8785, 4294901760
        %8787 = vmatpush1.msra.mxu0 %v8786
        %8788 = vmatprep.subr.mxu0 0.0
        %v8789 = vand.u32 %v8441, 4294901760
        %v8790 = vsub.f32 %v8441, %v8789
        %v8791 = vand.u32 %v8790, 4294901760
        %8792 = vmatpush1.msra.mxu0 %v8791
        %8793 = vmatprep.subr.mxu0 0.0
        %8794 = vmatpush2.msra.mxu0 0.0
        %8795 = vmatprep.subr.mxu0 0.0
        %8796 = vmatpush2.msra.mxu0 0.0
        %8797 = vmatprep.subr.mxu0 0.0
        %8798 = vmatpush2.msra.mxu0 0.0
        %8799 = vmatprep.subr.mxu0 0.0
        %8800 = vmatpush2.msra.mxu0 0.0
        %8801 = vmatprep.subr.mxu0 0.0
        %8802 = vmatpush2.msra.mxu0 0.0
        %8803 = vmatprep.subr.mxu0 0.0
        %8804 = vmatpush2.msra.mxu0 0.0
        %8805 = vmatprep.subr.mxu0 0.0
        %8806 = vmatpush2.msra.mxu0 0.0
        %8807 = vmatprep.subr.mxu0 0.0
        %8808 = vmatpush2.msra.mxu0 0.0
        %8809 = vmatprep.subr.mxu0 0.0
        %8810 = vmatpush2.msra.mxu0 0.0
        %8811 = vmatprep.subr.mxu0 0.0
        %8812 = vmatpush2.msra.mxu0 0.0
        %8813 = vmatprep.subr.mxu0 0.0
        %8814 = vmatpush2.msra.mxu0 0.0
        %8815 = vmatprep.subr.mxu0 0.0
        %8816 = vmatpush2.msra.mxu0 0.0
        %8817 = vmatprep.subr.mxu0 0.0
        %8818 = vmatpush2.msra.mxu0 0.0
        %8819 = vmatprep.subr.mxu0 0.0
        %8820 = vmatpush2.msra.mxu0 0.0
        %8821 = vmatprep.subr.mxu0 0.0
        %8822 = vmatpush2.msra.mxu0 0.0
        %8823 = vmatprep.subr.mxu0 0.0
        %8824 = vmatpush2.msra.mxu0 0.0
        %8825 = vmatprep.mubr.f32.mxu0 0.0
        %v8826 = vand.u32 %v8444, 4294901760
        %8827 = vmatmul.mubr.f32.gmra.mxu0 %v8826
        %v8828 = vpop.f32.mrf.mxu0
        %v8829 = vadd.f32 %v8752, %v8828
        %v8830 = vpop.f32.mrf.mxu0
        %8831 = vdwg.mxu0
        %8832 = vmatprep.subr.mxu0 0.0
        %8833 = vmatpush1.msra.mxu0 0.0
        %8834 = vmatprep.subr.mxu0 0.0
        %8835 = vmatpush1.msra.mxu0 0.0
        %8836 = vmatprep.subr.mxu0 0.0
        %8837 = vmatpush1.msra.mxu0 0.0
        %8838 = vmatprep.subr.mxu0 0.0
        %8839 = vmatpush1.msra.mxu0 0.0
        %8840 = vmatprep.subr.mxu0 0.0
        %8841 = vmatpush1.msra.mxu0 0.0
        %8842 = vmatprep.subr.mxu0 0.0
        %8843 = vmatpush1.msra.mxu0 0.0
        %8844 = vmatprep.subr.mxu0 0.0
        %8845 = vmatpush1.msra.mxu0 0.0
        %8846 = vmatprep.subr.mxu0 0.0
        %8847 = vmatpush1.msra.mxu0 0.0
        %8848 = vmatprep.subr.mxu0 0.0
        %8849 = vmatpush1.msra.mxu0 0.0
        %8850 = vmatprep.subr.mxu0 0.0
        %8851 = vmatpush1.msra.mxu0 0.0
        %8852 = vmatprep.subr.mxu0 0.0
        %8853 = vmatpush1.msra.mxu0 0.0
        %8854 = vmatprep.subr.mxu0 0.0
        %8855 = vmatpush1.msra.mxu0 0.0
        %8856 = vmatprep.subr.mxu0 0.0
        %8857 = vmatpush1.msra.mxu0 0.0
        %8858 = vmatprep.subr.mxu0 0.0
        %8859 = vmatpush1.msra.mxu0 0.0
        %8860 = vmatprep.subr.mxu0 0.0
        %v8861 = vand.u32 %v8442, 4294901760
        %8862 = vmatpush1.msra.mxu0 %v8861
        %8863 = vmatprep.subr.mxu0 0.0
        %v8864 = vand.u32 %v8441, 4294901760
        %8865 = vmatpush1.msra.mxu0 %v8864
        %8866 = vmatprep.subr.mxu0 0.0
        %8867 = vmatpush2.msra.mxu0 0.0
        %8868 = vmatprep.subr.mxu0 0.0
        %8869 = vmatpush2.msra.mxu0 0.0
        %8870 = vmatprep.subr.mxu0 0.0
        %8871 = vmatpush2.msra.mxu0 0.0
        %8872 = vmatprep.subr.mxu0 0.0
        %8873 = vmatpush2.msra.mxu0 0.0
        %8874 = vmatprep.subr.mxu0 0.0
        %8875 = vmatpush2.msra.mxu0 0.0
        %8876 = vmatprep.subr.mxu0 0.0
        %8877 = vmatpush2.msra.mxu0 0.0
        %8878 = vmatprep.subr.mxu0 0.0
        %8879 = vmatpush2.msra.mxu0 0.0
        %8880 = vmatprep.subr.mxu0 0.0
        %8881 = vmatpush2.msra.mxu0 0.0
        %8882 = vmatprep.subr.mxu0 0.0
        %8883 = vmatpush2.msra.mxu0 0.0
        %8884 = vmatprep.subr.mxu0 0.0
        %8885 = vmatpush2.msra.mxu0 0.0
        %8886 = vmatprep.subr.mxu0 0.0
        %8887 = vmatpush2.msra.mxu0 0.0
        %8888 = vmatprep.subr.mxu0 0.0
        %8889 = vmatpush2.msra.mxu0 0.0
        %8890 = vmatprep.subr.mxu0 0.0
        %8891 = vmatpush2.msra.mxu0 0.0
        %8892 = vmatprep.subr.mxu0 0.0
        %8893 = vmatpush2.msra.mxu0 0.0
        %8894 = vmatprep.subr.mxu0 0.0
        %8895 = vmatpush2.msra.mxu0 0.0
        %8896 = vmatprep.subr.mxu0 0.0
        %8897 = vmatpush2.msra.mxu0 0.0
        %8898 = vmatprep.mubr.f32.mxu0 0.0
        %v8899 = vand.u32 %v8444, 4294901760
        %8900 = vmatmul.mubr.f32.gmra.mxu0 %v8899
        %v8901 = vpop.f32.mrf.mxu0
        %v8902 = vadd.f32 %v8829, %v8901
        %v8903 = vpop.f32.mrf.mxu0
        %8904 = vdwg.mxu0
        %v8905 = vadd.f32 %v7947, %v8902
        %8906 = vset.pattern.permute.xlu0 9
        %8907 = vperm.xlu0 %8906, %v283
        %v8908 = vpop.permute.xlu0 %8907
        %vm8909 = vcmp.eq.s32.totalorder %v8908, %v282
        %v8910 = vsel %vm8909, 1.0, 0.0
        %v8912 = vsel %vm289, %v8910, 0
        %8914 = vmatprep.subr.mxu0 0.0
        %8915 = vmatpush1.msra.mxu0 0.0
        %8916 = vmatprep.subr.mxu0 0.0
        %8917 = vmatpush1.msra.mxu0 0.0
        %8918 = vmatprep.subr.mxu0 0.0
        %8919 = vmatpush1.msra.mxu0 0.0
        %8920 = vmatprep.subr.mxu0 0.0
        %8921 = vmatpush1.msra.mxu0 0.0
        %8922 = vmatprep.subr.mxu0 0.0
        %8923 = vmatpush1.msra.mxu0 0.0
        %8924 = vmatprep.subr.mxu0 0.0
        %8925 = vmatpush1.msra.mxu0 0.0
        %8926 = vmatprep.subr.mxu0 0.0
        %8927 = vmatpush1.msra.mxu0 0.0
        %8928 = vmatprep.subr.mxu0 0.0
        %8929 = vmatpush1.msra.mxu0 0.0
        %8930 = vmatprep.subr.mxu0 0.0
        %8931 = vmatpush1.msra.mxu0 0.0
        %8932 = vmatprep.subr.mxu0 0.0
        %8933 = vmatpush1.msra.mxu0 0.0
        %8934 = vmatprep.subr.mxu0 0.0
        %8935 = vmatpush1.msra.mxu0 0.0
        %8936 = vmatprep.subr.mxu0 0.0
        %8937 = vmatpush1.msra.mxu0 0.0
        %8938 = vmatprep.subr.mxu0 0.0
        %v8939 = vand.u32 %v280, 4294901760
        %8940 = vmatpush1.msra.mxu0 %v8939
        %8941 = vmatprep.subr.mxu0 0.0
        %v8942 = vand.u32 %v279, 4294901760
        %8943 = vmatpush1.msra.mxu0 %v8942
        %8944 = vmatprep.subr.mxu0 0.0
        %v8945 = vand.u32 %v278, 4294901760
        %8946 = vmatpush1.msra.mxu0 %v8945
        %8947 = vmatprep.subr.mxu0 0.0
        %v8948 = vand.u32 %v277, 4294901760
        %8949 = vmatpush1.msra.mxu0 %v8948
        %8950 = vmatprep.subr.mxu0 0.0
        %8951 = vmatpush2.msra.mxu0 0.0
        %8952 = vmatprep.subr.mxu0 0.0
        %8953 = vmatpush2.msra.mxu0 0.0
        %8954 = vmatprep.subr.mxu0 0.0
        %8955 = vmatpush2.msra.mxu0 0.0
        %8956 = vmatprep.subr.mxu0 0.0
        %8957 = vmatpush2.msra.mxu0 0.0
        %8958 = vmatprep.subr.mxu0 0.0
        %8959 = vmatpush2.msra.mxu0 0.0
        %8960 = vmatprep.subr.mxu0 0.0
        %8961 = vmatpush2.msra.mxu0 0.0
        %8962 = vmatprep.subr.mxu0 0.0
        %8963 = vmatpush2.msra.mxu0 0.0
        %8964 = vmatprep.subr.mxu0 0.0
        %8965 = vmatpush2.msra.mxu0 0.0
        %8966 = vmatprep.subr.mxu0 0.0
        %8967 = vmatpush2.msra.mxu0 0.0
        %8968 = vmatprep.subr.mxu0 0.0
        %8969 = vmatpush2.msra.mxu0 0.0
        %8970 = vmatprep.subr.mxu0 0.0
        %8971 = vmatpush2.msra.mxu0 0.0
        %8972 = vmatprep.subr.mxu0 0.0
        %8973 = vmatpush2.msra.mxu0 0.0
        %8974 = vmatprep.subr.mxu0 0.0
        %8975 = vmatpush2.msra.mxu0 0.0
        %8976 = vmatprep.subr.mxu0 0.0
        %8977 = vmatpush2.msra.mxu0 0.0
        %8978 = vmatprep.subr.mxu0 0.0
        %8979 = vmatpush2.msra.mxu0 0.0
        %8980 = vmatprep.subr.mxu0 0.0
        %8981 = vmatpush2.msra.mxu0 0.0
        %8982 = vmatprep.mubr.f32.mxu0 0.0
        %v8983 = vand.u32 %v8912, 4294901760
        %v8984 = vsub.f32 %v8912, %v8983
        %v8985 = vand.u32 %v8984, 4294901760
        %v8986 = vsub.f32 %v8984, %v8985
        %v8987 = vand.u32 %v8986, 4294901760
        %8988 = vmatmul.mubr.f32.gmra.mxu0 %v8987
        %v8989 = vpop.f32.mrf.mxu0
        %v8990 = vadd.f32 0.0, %v8989
        %v8991 = vpop.f32.mrf.mxu0
        %8992 = vdwg.mxu0
        %8993 = vmatprep.subr.mxu0 0.0
        %8994 = vmatpush1.msra.mxu0 0.0
        %8995 = vmatprep.subr.mxu0 0.0
        %8996 = vmatpush1.msra.mxu0 0.0
        %8997 = vmatprep.subr.mxu0 0.0
        %8998 = vmatpush1.msra.mxu0 0.0
        %8999 = vmatprep.subr.mxu0 0.0
        %9000 = vmatpush1.msra.mxu0 0.0
        %9001 = vmatprep.subr.mxu0 0.0
        %9002 = vmatpush1.msra.mxu0 0.0
        %9003 = vmatprep.subr.mxu0 0.0
        %9004 = vmatpush1.msra.mxu0 0.0
        %9005 = vmatprep.subr.mxu0 0.0
        %9006 = vmatpush1.msra.mxu0 0.0
        %9007 = vmatprep.subr.mxu0 0.0
        %9008 = vmatpush1.msra.mxu0 0.0
        %9009 = vmatprep.subr.mxu0 0.0
        %9010 = vmatpush1.msra.mxu0 0.0
        %9011 = vmatprep.subr.mxu0 0.0
        %9012 = vmatpush1.msra.mxu0 0.0
        %9013 = vmatprep.subr.mxu0 0.0
        %9014 = vmatpush1.msra.mxu0 0.0
        %9015 = vmatprep.subr.mxu0 0.0
        %9016 = vmatpush1.msra.mxu0 0.0
        %9017 = vmatprep.subr.mxu0 0.0
        %v9018 = vand.u32 %v280, 4294901760
        %v9019 = vsub.f32 %v280, %v9018
        %v9020 = vand.u32 %v9019, 4294901760
        %v9021 = vsub.f32 %v9019, %v9020
        %v9022 = vand.u32 %v9021, 4294901760
        %9023 = vmatpush1.msra.mxu0 %v9022
        %9024 = vmatprep.subr.mxu0 0.0
        %v9025 = vand.u32 %v279, 4294901760
        %v9026 = vsub.f32 %v279, %v9025
        %v9027 = vand.u32 %v9026, 4294901760
        %v9028 = vsub.f32 %v9026, %v9027
        %v9029 = vand.u32 %v9028, 4294901760
        %9030 = vmatpush1.msra.mxu0 %v9029
        %9031 = vmatprep.subr.mxu0 0.0
        %v9032 = vand.u32 %v278, 4294901760
        %v9033 = vsub.f32 %v278, %v9032
        %v9034 = vand.u32 %v9033, 4294901760
        %v9035 = vsub.f32 %v9033, %v9034
        %v9036 = vand.u32 %v9035, 4294901760
        %9037 = vmatpush1.msra.mxu0 %v9036
        %9038 = vmatprep.subr.mxu0 0.0
        %v9039 = vand.u32 %v277, 4294901760
        %v9040 = vsub.f32 %v277, %v9039
        %v9041 = vand.u32 %v9040, 4294901760
        %v9042 = vsub.f32 %v9040, %v9041
        %v9043 = vand.u32 %v9042, 4294901760
        %9044 = vmatpush1.msra.mxu0 %v9043
        %9045 = vmatprep.subr.mxu0 0.0
        %9046 = vmatpush2.msra.mxu0 0.0
        %9047 = vmatprep.subr.mxu0 0.0
        %9048 = vmatpush2.msra.mxu0 0.0
        %9049 = vmatprep.subr.mxu0 0.0
        %9050 = vmatpush2.msra.mxu0 0.0
        %9051 = vmatprep.subr.mxu0 0.0
        %9052 = vmatpush2.msra.mxu0 0.0
        %9053 = vmatprep.subr.mxu0 0.0
        %9054 = vmatpush2.msra.mxu0 0.0
        %9055 = vmatprep.subr.mxu0 0.0
        %9056 = vmatpush2.msra.mxu0 0.0
        %9057 = vmatprep.subr.mxu0 0.0
        %9058 = vmatpush2.msra.mxu0 0.0
        %9059 = vmatprep.subr.mxu0 0.0
        %9060 = vmatpush2.msra.mxu0 0.0
        %9061 = vmatprep.subr.mxu0 0.0
        %9062 = vmatpush2.msra.mxu0 0.0
        %9063 = vmatprep.subr.mxu0 0.0
        %9064 = vmatpush2.msra.mxu0 0.0
        %9065 = vmatprep.subr.mxu0 0.0
        %9066 = vmatpush2.msra.mxu0 0.0
        %9067 = vmatprep.subr.mxu0 0.0
        %9068 = vmatpush2.msra.mxu0 0.0
        %9069 = vmatprep.subr.mxu0 0.0
        %9070 = vmatpush2.msra.mxu0 0.0
        %9071 = vmatprep.subr.mxu0 0.0
        %9072 = vmatpush2.msra.mxu0 0.0
        %9073 = vmatprep.subr.mxu0 0.0
        %9074 = vmatpush2.msra.mxu0 0.0
        %9075 = vmatprep.subr.mxu0 0.0
        %9076 = vmatpush2.msra.mxu0 0.0
        %9077 = vmatprep.mubr.f32.mxu0 0.0
        %v9078 = vand.u32 %v8912, 4294901760
        %9079 = vmatmul.mubr.f32.gmra.mxu0 %v9078
        %v9080 = vpop.f32.mrf.mxu0
        %v9081 = vadd.f32 %v8990, %v9080
        %v9082 = vpop.f32.mrf.mxu0
        %9083 = vdwg.mxu0
        %9084 = vmatprep.subr.mxu0 0.0
        %9085 = vmatpush1.msra.mxu0 0.0
        %9086 = vmatprep.subr.mxu0 0.0
        %9087 = vmatpush1.msra.mxu0 0.0
        %9088 = vmatprep.subr.mxu0 0.0
        %9089 = vmatpush1.msra.mxu0 0.0
        %9090 = vmatprep.subr.mxu0 0.0
        %9091 = vmatpush1.msra.mxu0 0.0
        %9092 = vmatprep.subr.mxu0 0.0
        %9093 = vmatpush1.msra.mxu0 0.0
        %9094 = vmatprep.subr.mxu0 0.0
        %9095 = vmatpush1.msra.mxu0 0.0
        %9096 = vmatprep.subr.mxu0 0.0
        %9097 = vmatpush1.msra.mxu0 0.0
        %9098 = vmatprep.subr.mxu0 0.0
        %9099 = vmatpush1.msra.mxu0 0.0
        %9100 = vmatprep.subr.mxu0 0.0
        %9101 = vmatpush1.msra.mxu0 0.0
        %9102 = vmatprep.subr.mxu0 0.0
        %9103 = vmatpush1.msra.mxu0 0.0
        %9104 = vmatprep.subr.mxu0 0.0
        %9105 = vmatpush1.msra.mxu0 0.0
        %9106 = vmatprep.subr.mxu0 0.0
        %9107 = vmatpush1.msra.mxu0 0.0
        %9108 = vmatprep.subr.mxu0 0.0
        %v9109 = vand.u32 %v280, 4294901760
        %v9110 = vsub.f32 %v280, %v9109
        %9111 = vmatpush1.msra.mxu0 %v9110
        %9112 = vmatprep.subr.mxu0 0.0
        %v9113 = vand.u32 %v279, 4294901760
        %v9114 = vsub.f32 %v279, %v9113
        %9115 = vmatpush1.msra.mxu0 %v9114
        %9116 = vmatprep.subr.mxu0 0.0
        %v9117 = vand.u32 %v278, 4294901760
        %v9118 = vsub.f32 %v278, %v9117
        %9119 = vmatpush1.msra.mxu0 %v9118
        %9120 = vmatprep.subr.mxu0 0.0
        %v9121 = vand.u32 %v277, 4294901760
        %v9122 = vsub.f32 %v277, %v9121
        %9123 = vmatpush1.msra.mxu0 %v9122
        %9124 = vmatprep.subr.mxu0 0.0
        %9125 = vmatpush2.msra.mxu0 0.0
        %9126 = vmatprep.subr.mxu0 0.0
        %9127 = vmatpush2.msra.mxu0 0.0
        %9128 = vmatprep.subr.mxu0 0.0
        %9129 = vmatpush2.msra.mxu0 0.0
        %9130 = vmatprep.subr.mxu0 0.0
        %9131 = vmatpush2.msra.mxu0 0.0
        %9132 = vmatprep.subr.mxu0 0.0
        %9133 = vmatpush2.msra.mxu0 0.0
        %9134 = vmatprep.subr.mxu0 0.0
        %9135 = vmatpush2.msra.mxu0 0.0
        %9136 = vmatprep.subr.mxu0 0.0
        %9137 = vmatpush2.msra.mxu0 0.0
        %9138 = vmatprep.subr.mxu0 0.0
        %9139 = vmatpush2.msra.mxu0 0.0
        %9140 = vmatprep.subr.mxu0 0.0
        %9141 = vmatpush2.msra.mxu0 0.0
        %9142 = vmatprep.subr.mxu0 0.0
        %9143 = vmatpush2.msra.mxu0 0.0
        %9144 = vmatprep.subr.mxu0 0.0
        %9145 = vmatpush2.msra.mxu0 0.0
        %9146 = vmatprep.subr.mxu0 0.0
        %9147 = vmatpush2.msra.mxu0 0.0
        %9148 = vmatprep.subr.mxu0 0.0
        %9149 = vmatpush2.msra.mxu0 0.0
        %9150 = vmatprep.subr.mxu0 0.0
        %9151 = vmatpush2.msra.mxu0 0.0
        %9152 = vmatprep.subr.mxu0 0.0
        %9153 = vmatpush2.msra.mxu0 0.0
        %9154 = vmatprep.subr.mxu0 0.0
        %9155 = vmatpush2.msra.mxu0 0.0
        %9156 = vmatprep.mubr.f32.mxu0 0.0
        %v9157 = vand.u32 %v8912, 4294901760
        %v9158 = vsub.f32 %v8912, %v9157
        %9159 = vmatmul.mubr.f32.gmra.mxu0 %v9158
        %v9160 = vpop.f32.mrf.mxu0
        %v9161 = vadd.f32 %v9081, %v9160
        %v9162 = vpop.f32.mrf.mxu0
        %9163 = vdwg.mxu0
        %9164 = vmatprep.subr.mxu0 0.0
        %9165 = vmatpush1.msra.mxu0 0.0
        %9166 = vmatprep.subr.mxu0 0.0
        %9167 = vmatpush1.msra.mxu0 0.0
        %9168 = vmatprep.subr.mxu0 0.0
        %9169 = vmatpush1.msra.mxu0 0.0
        %9170 = vmatprep.subr.mxu0 0.0
        %9171 = vmatpush1.msra.mxu0 0.0
        %9172 = vmatprep.subr.mxu0 0.0
        %9173 = vmatpush1.msra.mxu0 0.0
        %9174 = vmatprep.subr.mxu0 0.0
        %9175 = vmatpush1.msra.mxu0 0.0
        %9176 = vmatprep.subr.mxu0 0.0
        %9177 = vmatpush1.msra.mxu0 0.0
        %9178 = vmatprep.subr.mxu0 0.0
        %9179 = vmatpush1.msra.mxu0 0.0
        %9180 = vmatprep.subr.mxu0 0.0
        %9181 = vmatpush1.msra.mxu0 0.0
        %9182 = vmatprep.subr.mxu0 0.0
        %9183 = vmatpush1.msra.mxu0 0.0
        %9184 = vmatprep.subr.mxu0 0.0
        %9185 = vmatpush1.msra.mxu0 0.0
        %9186 = vmatprep.subr.mxu0 0.0
        %9187 = vmatpush1.msra.mxu0 0.0
        %9188 = vmatprep.subr.mxu0 0.0
        %v9189 = vand.u32 %v280, 4294901760
        %9190 = vmatpush1.msra.mxu0 %v9189
        %9191 = vmatprep.subr.mxu0 0.0
        %v9192 = vand.u32 %v279, 4294901760
        %9193 = vmatpush1.msra.mxu0 %v9192
        %9194 = vmatprep.subr.mxu0 0.0
        %v9195 = vand.u32 %v278, 4294901760
        %9196 = vmatpush1.msra.mxu0 %v9195
        %9197 = vmatprep.subr.mxu0 0.0
        %v9198 = vand.u32 %v277, 4294901760
        %9199 = vmatpush1.msra.mxu0 %v9198
        %9200 = vmatprep.subr.mxu0 0.0
        %9201 = vmatpush2.msra.mxu0 0.0
        %9202 = vmatprep.subr.mxu0 0.0
        %9203 = vmatpush2.msra.mxu0 0.0
        %9204 = vmatprep.subr.mxu0 0.0
        %9205 = vmatpush2.msra.mxu0 0.0
        %9206 = vmatprep.subr.mxu0 0.0
        %9207 = vmatpush2.msra.mxu0 0.0
        %9208 = vmatprep.subr.mxu0 0.0
        %9209 = vmatpush2.msra.mxu0 0.0
        %9210 = vmatprep.subr.mxu0 0.0
        %9211 = vmatpush2.msra.mxu0 0.0
        %9212 = vmatprep.subr.mxu0 0.0
        %9213 = vmatpush2.msra.mxu0 0.0
        %9214 = vmatprep.subr.mxu0 0.0
        %9215 = vmatpush2.msra.mxu0 0.0
        %9216 = vmatprep.subr.mxu0 0.0
        %9217 = vmatpush2.msra.mxu0 0.0
        %9218 = vmatprep.subr.mxu0 0.0
        %9219 = vmatpush2.msra.mxu0 0.0
        %9220 = vmatprep.subr.mxu0 0.0
        %9221 = vmatpush2.msra.mxu0 0.0
        %9222 = vmatprep.subr.mxu0 0.0
        %9223 = vmatpush2.msra.mxu0 0.0
        %9224 = vmatprep.subr.mxu0 0.0
        %9225 = vmatpush2.msra.mxu0 0.0
        %9226 = vmatprep.subr.mxu0 0.0
        %9227 = vmatpush2.msra.mxu0 0.0
        %9228 = vmatprep.subr.mxu0 0.0
        %9229 = vmatpush2.msra.mxu0 0.0
        %9230 = vmatprep.subr.mxu0 0.0
        %9231 = vmatpush2.msra.mxu0 0.0
        %9232 = vmatprep.mubr.f32.mxu0 0.0
        %v9233 = vand.u32 %v8912, 4294901760
        %v9234 = vsub.f32 %v8912, %v9233
        %v9235 = vand.u32 %v9234, 4294901760
        %9236 = vmatmul.mubr.f32.gmra.mxu0 %v9235
        %v9237 = vpop.f32.mrf.mxu0
        %v9238 = vadd.f32 %v9161, %v9237
        %v9239 = vpop.f32.mrf.mxu0
        %9240 = vdwg.mxu0
        %9241 = vmatprep.subr.mxu0 0.0
        %9242 = vmatpush1.msra.mxu0 0.0
        %9243 = vmatprep.subr.mxu0 0.0
        %9244 = vmatpush1.msra.mxu0 0.0
        %9245 = vmatprep.subr.mxu0 0.0
        %9246 = vmatpush1.msra.mxu0 0.0
        %9247 = vmatprep.subr.mxu0 0.0
        %9248 = vmatpush1.msra.mxu0 0.0
        %9249 = vmatprep.subr.mxu0 0.0
        %9250 = vmatpush1.msra.mxu0 0.0
        %9251 = vmatprep.subr.mxu0 0.0
        %9252 = vmatpush1.msra.mxu0 0.0
        %9253 = vmatprep.subr.mxu0 0.0
        %9254 = vmatpush1.msra.mxu0 0.0
        %9255 = vmatprep.subr.mxu0 0.0
        %9256 = vmatpush1.msra.mxu0 0.0
        %9257 = vmatprep.subr.mxu0 0.0
        %9258 = vmatpush1.msra.mxu0 0.0
        %9259 = vmatprep.subr.mxu0 0.0
        %9260 = vmatpush1.msra.mxu0 0.0
        %9261 = vmatprep.subr.mxu0 0.0
        %9262 = vmatpush1.msra.mxu0 0.0
        %9263 = vmatprep.subr.mxu0 0.0
        %9264 = vmatpush1.msra.mxu0 0.0
        %9265 = vmatprep.subr.mxu0 0.0
        %v9266 = vand.u32 %v280, 4294901760
        %v9267 = vsub.f32 %v280, %v9266
        %v9268 = vand.u32 %v9267, 4294901760
        %9269 = vmatpush1.msra.mxu0 %v9268
        %9270 = vmatprep.subr.mxu0 0.0
        %v9271 = vand.u32 %v279, 4294901760
        %v9272 = vsub.f32 %v279, %v9271
        %v9273 = vand.u32 %v9272, 4294901760
        %9274 = vmatpush1.msra.mxu0 %v9273
        %9275 = vmatprep.subr.mxu0 0.0
        %v9276 = vand.u32 %v278, 4294901760
        %v9277 = vsub.f32 %v278, %v9276
        %v9278 = vand.u32 %v9277, 4294901760
        %9279 = vmatpush1.msra.mxu0 %v9278
        %9280 = vmatprep.subr.mxu0 0.0
        %v9281 = vand.u32 %v277, 4294901760
        %v9282 = vsub.f32 %v277, %v9281
        %v9283 = vand.u32 %v9282, 4294901760
        %9284 = vmatpush1.msra.mxu0 %v9283
        %9285 = vmatprep.subr.mxu0 0.0
        %9286 = vmatpush2.msra.mxu0 0.0
        %9287 = vmatprep.subr.mxu0 0.0
        %9288 = vmatpush2.msra.mxu0 0.0
        %9289 = vmatprep.subr.mxu0 0.0
        %9290 = vmatpush2.msra.mxu0 0.0
        %9291 = vmatprep.subr.mxu0 0.0
        %9292 = vmatpush2.msra.mxu0 0.0
        %9293 = vmatprep.subr.mxu0 0.0
        %9294 = vmatpush2.msra.mxu0 0.0
        %9295 = vmatprep.subr.mxu0 0.0
        %9296 = vmatpush2.msra.mxu0 0.0
        %9297 = vmatprep.subr.mxu0 0.0
        %9298 = vmatpush2.msra.mxu0 0.0
        %9299 = vmatprep.subr.mxu0 0.0
        %9300 = vmatpush2.msra.mxu0 0.0
        %9301 = vmatprep.subr.mxu0 0.0
        %9302 = vmatpush2.msra.mxu0 0.0
        %9303 = vmatprep.subr.mxu0 0.0
        %9304 = vmatpush2.msra.mxu0 0.0
        %9305 = vmatprep.subr.mxu0 0.0
        %9306 = vmatpush2.msra.mxu0 0.0
        %9307 = vmatprep.subr.mxu0 0.0
        %9308 = vmatpush2.msra.mxu0 0.0
        %9309 = vmatprep.subr.mxu0 0.0
        %9310 = vmatpush2.msra.mxu0 0.0
        %9311 = vmatprep.subr.mxu0 0.0
        %9312 = vmatpush2.msra.mxu0 0.0
        %9313 = vmatprep.subr.mxu0 0.0
        %9314 = vmatpush2.msra.mxu0 0.0
        %9315 = vmatprep.subr.mxu0 0.0
        %9316 = vmatpush2.msra.mxu0 0.0
        %9317 = vmatprep.mubr.f32.mxu0 0.0
        %v9318 = vand.u32 %v8912, 4294901760
        %9319 = vmatmul.mubr.f32.gmra.mxu0 %v9318
        %v9320 = vpop.f32.mrf.mxu0
        %v9321 = vadd.f32 %v9238, %v9320
        %v9322 = vpop.f32.mrf.mxu0
        %9323 = vdwg.mxu0
        %9324 = vmatprep.subr.mxu0 0.0
        %9325 = vmatpush1.msra.mxu0 0.0
        %9326 = vmatprep.subr.mxu0 0.0
        %9327 = vmatpush1.msra.mxu0 0.0
        %9328 = vmatprep.subr.mxu0 0.0
        %9329 = vmatpush1.msra.mxu0 0.0
        %9330 = vmatprep.subr.mxu0 0.0
        %9331 = vmatpush1.msra.mxu0 0.0
        %9332 = vmatprep.subr.mxu0 0.0
        %9333 = vmatpush1.msra.mxu0 0.0
        %9334 = vmatprep.subr.mxu0 0.0
        %9335 = vmatpush1.msra.mxu0 0.0
        %9336 = vmatprep.subr.mxu0 0.0
        %9337 = vmatpush1.msra.mxu0 0.0
        %9338 = vmatprep.subr.mxu0 0.0
        %9339 = vmatpush1.msra.mxu0 0.0
        %9340 = vmatprep.subr.mxu0 0.0
        %9341 = vmatpush1.msra.mxu0 0.0
        %9342 = vmatprep.subr.mxu0 0.0
        %9343 = vmatpush1.msra.mxu0 0.0
        %9344 = vmatprep.subr.mxu0 0.0
        %9345 = vmatpush1.msra.mxu0 0.0
        %9346 = vmatprep.subr.mxu0 0.0
        %9347 = vmatpush1.msra.mxu0 0.0
        %9348 = vmatprep.subr.mxu0 0.0
        %v9349 = vand.u32 %v280, 4294901760
        %9350 = vmatpush1.msra.mxu0 %v9349
        %9351 = vmatprep.subr.mxu0 0.0
        %v9352 = vand.u32 %v279, 4294901760
        %9353 = vmatpush1.msra.mxu0 %v9352
        %9354 = vmatprep.subr.mxu0 0.0
        %v9355 = vand.u32 %v278, 4294901760
        %9356 = vmatpush1.msra.mxu0 %v9355
        %9357 = vmatprep.subr.mxu0 0.0
        %v9358 = vand.u32 %v277, 4294901760
        %9359 = vmatpush1.msra.mxu0 %v9358
        %9360 = vmatprep.subr.mxu0 0.0
        %9361 = vmatpush2.msra.mxu0 0.0
        %9362 = vmatprep.subr.mxu0 0.0
        %9363 = vmatpush2.msra.mxu0 0.0
        %9364 = vmatprep.subr.mxu0 0.0
        %9365 = vmatpush2.msra.mxu0 0.0
        %9366 = vmatprep.subr.mxu0 0.0
        %9367 = vmatpush2.msra.mxu0 0.0
        %9368 = vmatprep.subr.mxu0 0.0
        %9369 = vmatpush2.msra.mxu0 0.0
        %9370 = vmatprep.subr.mxu0 0.0
        %9371 = vmatpush2.msra.mxu0 0.0
        %9372 = vmatprep.subr.mxu0 0.0
        %9373 = vmatpush2.msra.mxu0 0.0
        %9374 = vmatprep.subr.mxu0 0.0
        %9375 = vmatpush2.msra.mxu0 0.0
        %9376 = vmatprep.subr.mxu0 0.0
        %9377 = vmatpush2.msra.mxu0 0.0
        %9378 = vmatprep.subr.mxu0 0.0
        %9379 = vmatpush2.msra.mxu0 0.0
        %9380 = vmatprep.subr.mxu0 0.0
        %9381 = vmatpush2.msra.mxu0 0.0
        %9382 = vmatprep.subr.mxu0 0.0
        %9383 = vmatpush2.msra.mxu0 0.0
        %9384 = vmatprep.subr.mxu0 0.0
        %9385 = vmatpush2.msra.mxu0 0.0
        %9386 = vmatprep.subr.mxu0 0.0
        %9387 = vmatpush2.msra.mxu0 0.0
        %9388 = vmatprep.subr.mxu0 0.0
        %9389 = vmatpush2.msra.mxu0 0.0
        %9390 = vmatprep.subr.mxu0 0.0
        %9391 = vmatpush2.msra.mxu0 0.0
        %9392 = vmatprep.mubr.f32.mxu0 0.0
        %v9393 = vand.u32 %v8912, 4294901760
        %9394 = vmatmul.mubr.f32.gmra.mxu0 %v9393
        %v9395 = vpop.f32.mrf.mxu0
        %v9396 = vadd.f32 %v9321, %v9395
        %v9397 = vpop.f32.mrf.mxu0
        %9398 = vdwg.mxu0
        %v9399 = vld [vmem:[#allocation2 + $0x90] sm:$0xff]
        %v9400 = vld [vmem:[#allocation2 + $0x98] sm:$0xff]
        %v9402 = vsel %vm1275, %v9396, 0
        %9404 = vmatprep.subr.mxu0 0.0
        %9405 = vmatpush1.msra.mxu0 0.0
        %9406 = vmatprep.subr.mxu0 0.0
        %9407 = vmatpush1.msra.mxu0 0.0
        %9408 = vmatprep.subr.mxu0 0.0
        %9409 = vmatpush1.msra.mxu0 0.0
        %9410 = vmatprep.subr.mxu0 0.0
        %9411 = vmatpush1.msra.mxu0 0.0
        %9412 = vmatprep.subr.mxu0 0.0
        %9413 = vmatpush1.msra.mxu0 0.0
        %9414 = vmatprep.subr.mxu0 0.0
        %9415 = vmatpush1.msra.mxu0 0.0
        %9416 = vmatprep.subr.mxu0 0.0
        %9417 = vmatpush1.msra.mxu0 0.0
        %9418 = vmatprep.subr.mxu0 0.0
        %9419 = vmatpush1.msra.mxu0 0.0
        %9420 = vmatprep.subr.mxu0 0.0
        %9421 = vmatpush1.msra.mxu0 0.0
        %9422 = vmatprep.subr.mxu0 0.0
        %9423 = vmatpush1.msra.mxu0 0.0
        %9424 = vmatprep.subr.mxu0 0.0
        %9425 = vmatpush1.msra.mxu0 0.0
        %9426 = vmatprep.subr.mxu0 0.0
        %9427 = vmatpush1.msra.mxu0 0.0
        %9428 = vmatprep.subr.mxu0 0.0
        %9429 = vmatpush1.msra.mxu0 0.0
        %9430 = vmatprep.subr.mxu0 0.0
        %9431 = vmatpush1.msra.mxu0 0.0
        %9432 = vmatprep.subr.mxu0 0.0
        %v9433 = vand.u32 %v9400, 4294901760
        %9434 = vmatpush1.msra.mxu0 %v9433
        %9435 = vmatprep.subr.mxu0 0.0
        %v9436 = vand.u32 %v9399, 4294901760
        %9437 = vmatpush1.msra.mxu0 %v9436
        %9438 = vmatprep.subr.mxu0 0.0
        %9439 = vmatpush2.msra.mxu0 0.0
        %9440 = vmatprep.subr.mxu0 0.0
        %9441 = vmatpush2.msra.mxu0 0.0
        %9442 = vmatprep.subr.mxu0 0.0
        %9443 = vmatpush2.msra.mxu0 0.0
        %9444 = vmatprep.subr.mxu0 0.0
        %9445 = vmatpush2.msra.mxu0 0.0
        %9446 = vmatprep.subr.mxu0 0.0
        %9447 = vmatpush2.msra.mxu0 0.0
        %9448 = vmatprep.subr.mxu0 0.0
        %9449 = vmatpush2.msra.mxu0 0.0
        %9450 = vmatprep.subr.mxu0 0.0
        %9451 = vmatpush2.msra.mxu0 0.0
        %9452 = vmatprep.subr.mxu0 0.0
        %9453 = vmatpush2.msra.mxu0 0.0
        %9454 = vmatprep.subr.mxu0 0.0
        %9455 = vmatpush2.msra.mxu0 0.0
        %9456 = vmatprep.subr.mxu0 0.0
        %9457 = vmatpush2.msra.mxu0 0.0
        %9458 = vmatprep.subr.mxu0 0.0
        %9459 = vmatpush2.msra.mxu0 0.0
        %9460 = vmatprep.subr.mxu0 0.0
        %9461 = vmatpush2.msra.mxu0 0.0
        %9462 = vmatprep.subr.mxu0 0.0
        %9463 = vmatpush2.msra.mxu0 0.0
        %9464 = vmatprep.subr.mxu0 0.0
        %9465 = vmatpush2.msra.mxu0 0.0
        %9466 = vmatprep.subr.mxu0 0.0
        %9467 = vmatpush2.msra.mxu0 0.0
        %9468 = vmatprep.subr.mxu0 0.0
        %9469 = vmatpush2.msra.mxu0 0.0
        %9470 = vmatprep.mubr.f32.mxu0 0.0
        %v9471 = vand.u32 %v9402, 4294901760
        %v9472 = vsub.f32 %v9402, %v9471
        %v9473 = vand.u32 %v9472, 4294901760
        %v9474 = vsub.f32 %v9472, %v9473
        %v9475 = vand.u32 %v9474, 4294901760
        %9476 = vmatmul.mubr.f32.gmra.mxu0 %v9475
        %v9477 = vpop.f32.mrf.mxu0
        %v9478 = vadd.f32 0.0, %v9477
        %v9479 = vpop.f32.mrf.mxu0
        %9480 = vdwg.mxu0
        %9481 = vmatprep.subr.mxu0 0.0
        %9482 = vmatpush1.msra.mxu0 0.0
        %9483 = vmatprep.subr.mxu0 0.0
        %9484 = vmatpush1.msra.mxu0 0.0
        %9485 = vmatprep.subr.mxu0 0.0
        %9486 = vmatpush1.msra.mxu0 0.0
        %9487 = vmatprep.subr.mxu0 0.0
        %9488 = vmatpush1.msra.mxu0 0.0
        %9489 = vmatprep.subr.mxu0 0.0
        %9490 = vmatpush1.msra.mxu0 0.0
        %9491 = vmatprep.subr.mxu0 0.0
        %9492 = vmatpush1.msra.mxu0 0.0
        %9493 = vmatprep.subr.mxu0 0.0
        %9494 = vmatpush1.msra.mxu0 0.0
        %9495 = vmatprep.subr.mxu0 0.0
        %9496 = vmatpush1.msra.mxu0 0.0
        %9497 = vmatprep.subr.mxu0 0.0
        %9498 = vmatpush1.msra.mxu0 0.0
        %9499 = vmatprep.subr.mxu0 0.0
        %9500 = vmatpush1.msra.mxu0 0.0
        %9501 = vmatprep.subr.mxu0 0.0
        %9502 = vmatpush1.msra.mxu0 0.0
        %9503 = vmatprep.subr.mxu0 0.0
        %9504 = vmatpush1.msra.mxu0 0.0
        %9505 = vmatprep.subr.mxu0 0.0
        %9506 = vmatpush1.msra.mxu0 0.0
        %9507 = vmatprep.subr.mxu0 0.0
        %9508 = vmatpush1.msra.mxu0 0.0
        %9509 = vmatprep.subr.mxu0 0.0
        %v9510 = vand.u32 %v9400, 4294901760
        %v9511 = vsub.f32 %v9400, %v9510
        %v9512 = vand.u32 %v9511, 4294901760
        %v9513 = vsub.f32 %v9511, %v9512
        %v9514 = vand.u32 %v9513, 4294901760
        %9515 = vmatpush1.msra.mxu0 %v9514
        %9516 = vmatprep.subr.mxu0 0.0
        %v9517 = vand.u32 %v9399, 4294901760
        %v9518 = vsub.f32 %v9399, %v9517
        %v9519 = vand.u32 %v9518, 4294901760
        %v9520 = vsub.f32 %v9518, %v9519
        %v9521 = vand.u32 %v9520, 4294901760
        %9522 = vmatpush1.msra.mxu0 %v9521
        %9523 = vmatprep.subr.mxu0 0.0
        %9524 = vmatpush2.msra.mxu0 0.0
        %9525 = vmatprep.subr.mxu0 0.0
        %9526 = vmatpush2.msra.mxu0 0.0
        %9527 = vmatprep.subr.mxu0 0.0
        %9528 = vmatpush2.msra.mxu0 0.0
        %9529 = vmatprep.subr.mxu0 0.0
        %9530 = vmatpush2.msra.mxu0 0.0
        %9531 = vmatprep.subr.mxu0 0.0
        %9532 = vmatpush2.msra.mxu0 0.0
        %9533 = vmatprep.subr.mxu0 0.0
        %9534 = vmatpush2.msra.mxu0 0.0
        %9535 = vmatprep.subr.mxu0 0.0
        %9536 = vmatpush2.msra.mxu0 0.0
        %9537 = vmatprep.subr.mxu0 0.0
        %9538 = vmatpush2.msra.mxu0 0.0
        %9539 = vmatprep.subr.mxu0 0.0
        %9540 = vmatpush2.msra.mxu0 0.0
        %9541 = vmatprep.subr.mxu0 0.0
        %9542 = vmatpush2.msra.mxu0 0.0
        %9543 = vmatprep.subr.mxu0 0.0
        %9544 = vmatpush2.msra.mxu0 0.0
        %9545 = vmatprep.subr.mxu0 0.0
        %9546 = vmatpush2.msra.mxu0 0.0
        %9547 = vmatprep.subr.mxu0 0.0
        %9548 = vmatpush2.msra.mxu0 0.0
        %9549 = vmatprep.subr.mxu0 0.0
        %9550 = vmatpush2.msra.mxu0 0.0
        %9551 = vmatprep.subr.mxu0 0.0
        %9552 = vmatpush2.msra.mxu0 0.0
        %9553 = vmatprep.subr.mxu0 0.0
        %9554 = vmatpush2.msra.mxu0 0.0
        %9555 = vmatprep.mubr.f32.mxu0 0.0
        %v9556 = vand.u32 %v9402, 4294901760
        %9557 = vmatmul.mubr.f32.gmra.mxu0 %v9556
        %v9558 = vpop.f32.mrf.mxu0
        %v9559 = vadd.f32 %v9478, %v9558
        %v9560 = vpop.f32.mrf.mxu0
        %9561 = vdwg.mxu0
        %9562 = vmatprep.subr.mxu0 0.0
        %9563 = vmatpush1.msra.mxu0 0.0
        %9564 = vmatprep.subr.mxu0 0.0
        %9565 = vmatpush1.msra.mxu0 0.0
        %9566 = vmatprep.subr.mxu0 0.0
        %9567 = vmatpush1.msra.mxu0 0.0
        %9568 = vmatprep.subr.mxu0 0.0
        %9569 = vmatpush1.msra.mxu0 0.0
        %9570 = vmatprep.subr.mxu0 0.0
        %9571 = vmatpush1.msra.mxu0 0.0
        %9572 = vmatprep.subr.mxu0 0.0
        %9573 = vmatpush1.msra.mxu0 0.0
        %9574 = vmatprep.subr.mxu0 0.0
        %9575 = vmatpush1.msra.mxu0 0.0
        %9576 = vmatprep.subr.mxu0 0.0
        %9577 = vmatpush1.msra.mxu0 0.0
        %9578 = vmatprep.subr.mxu0 0.0
        %9579 = vmatpush1.msra.mxu0 0.0
        %9580 = vmatprep.subr.mxu0 0.0
        %9581 = vmatpush1.msra.mxu0 0.0
        %9582 = vmatprep.subr.mxu0 0.0
        %9583 = vmatpush1.msra.mxu0 0.0
        %9584 = vmatprep.subr.mxu0 0.0
        %9585 = vmatpush1.msra.mxu0 0.0
        %9586 = vmatprep.subr.mxu0 0.0
        %9587 = vmatpush1.msra.mxu0 0.0
        %9588 = vmatprep.subr.mxu0 0.0
        %9589 = vmatpush1.msra.mxu0 0.0
        %9590 = vmatprep.subr.mxu0 0.0
        %v9591 = vand.u32 %v9400, 4294901760
        %v9592 = vsub.f32 %v9400, %v9591
        %9593 = vmatpush1.msra.mxu0 %v9592
        %9594 = vmatprep.subr.mxu0 0.0
        %v9595 = vand.u32 %v9399, 4294901760
        %v9596 = vsub.f32 %v9399, %v9595
        %9597 = vmatpush1.msra.mxu0 %v9596
        %9598 = vmatprep.subr.mxu0 0.0
        %9599 = vmatpush2.msra.mxu0 0.0
        %9600 = vmatprep.subr.mxu0 0.0
        %9601 = vmatpush2.msra.mxu0 0.0
        %9602 = vmatprep.subr.mxu0 0.0
        %9603 = vmatpush2.msra.mxu0 0.0
        %9604 = vmatprep.subr.mxu0 0.0
        %9605 = vmatpush2.msra.mxu0 0.0
        %9606 = vmatprep.subr.mxu0 0.0
        %9607 = vmatpush2.msra.mxu0 0.0
        %9608 = vmatprep.subr.mxu0 0.0
        %9609 = vmatpush2.msra.mxu0 0.0
        %9610 = vmatprep.subr.mxu0 0.0
        %9611 = vmatpush2.msra.mxu0 0.0
        %9612 = vmatprep.subr.mxu0 0.0
        %9613 = vmatpush2.msra.mxu0 0.0
        %9614 = vmatprep.subr.mxu0 0.0
        %9615 = vmatpush2.msra.mxu0 0.0
        %9616 = vmatprep.subr.mxu0 0.0
        %9617 = vmatpush2.msra.mxu0 0.0
        %9618 = vmatprep.subr.mxu0 0.0
        %9619 = vmatpush2.msra.mxu0 0.0
        %9620 = vmatprep.subr.mxu0 0.0
        %9621 = vmatpush2.msra.mxu0 0.0
        %9622 = vmatprep.subr.mxu0 0.0
        %9623 = vmatpush2.msra.mxu0 0.0
        %9624 = vmatprep.subr.mxu0 0.0
        %9625 = vmatpush2.msra.mxu0 0.0
        %9626 = vmatprep.subr.mxu0 0.0
        %9627 = vmatpush2.msra.mxu0 0.0
        %9628 = vmatprep.subr.mxu0 0.0
        %9629 = vmatpush2.msra.mxu0 0.0
        %9630 = vmatprep.mubr.f32.mxu0 0.0
        %v9631 = vand.u32 %v9402, 4294901760
        %v9632 = vsub.f32 %v9402, %v9631
        %9633 = vmatmul.mubr.f32.gmra.mxu0 %v9632
        %v9634 = vpop.f32.mrf.mxu0
        %v9635 = vadd.f32 %v9559, %v9634
        %v9636 = vpop.f32.mrf.mxu0
        %9637 = vdwg.mxu0
        %9638 = vmatprep.subr.mxu0 0.0
        %9639 = vmatpush1.msra.mxu0 0.0
        %9640 = vmatprep.subr.mxu0 0.0
        %9641 = vmatpush1.msra.mxu0 0.0
        %9642 = vmatprep.subr.mxu0 0.0
        %9643 = vmatpush1.msra.mxu0 0.0
        %9644 = vmatprep.subr.mxu0 0.0
        %9645 = vmatpush1.msra.mxu0 0.0
        %9646 = vmatprep.subr.mxu0 0.0
        %9647 = vmatpush1.msra.mxu0 0.0
        %9648 = vmatprep.subr.mxu0 0.0
        %9649 = vmatpush1.msra.mxu0 0.0
        %9650 = vmatprep.subr.mxu0 0.0
        %9651 = vmatpush1.msra.mxu0 0.0
        %9652 = vmatprep.subr.mxu0 0.0
        %9653 = vmatpush1.msra.mxu0 0.0
        %9654 = vmatprep.subr.mxu0 0.0
        %9655 = vmatpush1.msra.mxu0 0.0
        %9656 = vmatprep.subr.mxu0 0.0
        %9657 = vmatpush1.msra.mxu0 0.0
        %9658 = vmatprep.subr.mxu0 0.0
        %9659 = vmatpush1.msra.mxu0 0.0
        %9660 = vmatprep.subr.mxu0 0.0
        %9661 = vmatpush1.msra.mxu0 0.0
        %9662 = vmatprep.subr.mxu0 0.0
        %9663 = vmatpush1.msra.mxu0 0.0
        %9664 = vmatprep.subr.mxu0 0.0
        %9665 = vmatpush1.msra.mxu0 0.0
        %9666 = vmatprep.subr.mxu0 0.0
        %v9667 = vand.u32 %v9400, 4294901760
        %9668 = vmatpush1.msra.mxu0 %v9667
        %9669 = vmatprep.subr.mxu0 0.0
        %v9670 = vand.u32 %v9399, 4294901760
        %9671 = vmatpush1.msra.mxu0 %v9670
        %9672 = vmatprep.subr.mxu0 0.0
        %9673 = vmatpush2.msra.mxu0 0.0
        %9674 = vmatprep.subr.mxu0 0.0
        %9675 = vmatpush2.msra.mxu0 0.0
        %9676 = vmatprep.subr.mxu0 0.0
        %9677 = vmatpush2.msra.mxu0 0.0
        %9678 = vmatprep.subr.mxu0 0.0
        %9679 = vmatpush2.msra.mxu0 0.0
        %9680 = vmatprep.subr.mxu0 0.0
        %9681 = vmatpush2.msra.mxu0 0.0
        %9682 = vmatprep.subr.mxu0 0.0
        %9683 = vmatpush2.msra.mxu0 0.0
        %9684 = vmatprep.subr.mxu0 0.0
        %9685 = vmatpush2.msra.mxu0 0.0
        %9686 = vmatprep.subr.mxu0 0.0
        %9687 = vmatpush2.msra.mxu0 0.0
        %9688 = vmatprep.subr.mxu0 0.0
        %9689 = vmatpush2.msra.mxu0 0.0
        %9690 = vmatprep.subr.mxu0 0.0
        %9691 = vmatpush2.msra.mxu0 0.0
        %9692 = vmatprep.subr.mxu0 0.0
        %9693 = vmatpush2.msra.mxu0 0.0
        %9694 = vmatprep.subr.mxu0 0.0
        %9695 = vmatpush2.msra.mxu0 0.0
        %9696 = vmatprep.subr.mxu0 0.0
        %9697 = vmatpush2.msra.mxu0 0.0
        %9698 = vmatprep.subr.mxu0 0.0
        %9699 = vmatpush2.msra.mxu0 0.0
        %9700 = vmatprep.subr.mxu0 0.0
        %9701 = vmatpush2.msra.mxu0 0.0
        %9702 = vmatprep.subr.mxu0 0.0
        %9703 = vmatpush2.msra.mxu0 0.0
        %9704 = vmatprep.mubr.f32.mxu0 0.0
        %v9705 = vand.u32 %v9402, 4294901760
        %v9706 = vsub.f32 %v9402, %v9705
        %v9707 = vand.u32 %v9706, 4294901760
        %9708 = vmatmul.mubr.f32.gmra.mxu0 %v9707
        %v9709 = vpop.f32.mrf.mxu0
        %v9710 = vadd.f32 %v9635, %v9709
        %v9711 = vpop.f32.mrf.mxu0
        %9712 = vdwg.mxu0
        %9713 = vmatprep.subr.mxu0 0.0
        %9714 = vmatpush1.msra.mxu0 0.0
        %9715 = vmatprep.subr.mxu0 0.0
        %9716 = vmatpush1.msra.mxu0 0.0
        %9717 = vmatprep.subr.mxu0 0.0
        %9718 = vmatpush1.msra.mxu0 0.0
        %9719 = vmatprep.subr.mxu0 0.0
        %9720 = vmatpush1.msra.mxu0 0.0
        %9721 = vmatprep.subr.mxu0 0.0
        %9722 = vmatpush1.msra.mxu0 0.0
        %9723 = vmatprep.subr.mxu0 0.0
        %9724 = vmatpush1.msra.mxu0 0.0
        %9725 = vmatprep.subr.mxu0 0.0
        %9726 = vmatpush1.msra.mxu0 0.0
        %9727 = vmatprep.subr.mxu0 0.0
        %9728 = vmatpush1.msra.mxu0 0.0
        %9729 = vmatprep.subr.mxu0 0.0
        %9730 = vmatpush1.msra.mxu0 0.0
        %9731 = vmatprep.subr.mxu0 0.0
        %9732 = vmatpush1.msra.mxu0 0.0
        %9733 = vmatprep.subr.mxu0 0.0
        %9734 = vmatpush1.msra.mxu0 0.0
        %9735 = vmatprep.subr.mxu0 0.0
        %9736 = vmatpush1.msra.mxu0 0.0
        %9737 = vmatprep.subr.mxu0 0.0
        %9738 = vmatpush1.msra.mxu0 0.0
        %9739 = vmatprep.subr.mxu0 0.0
        %9740 = vmatpush1.msra.mxu0 0.0
        %9741 = vmatprep.subr.mxu0 0.0
        %v9742 = vand.u32 %v9400, 4294901760
        %v9743 = vsub.f32 %v9400, %v9742
        %v9744 = vand.u32 %v9743, 4294901760
        %9745 = vmatpush1.msra.mxu0 %v9744
        %9746 = vmatprep.subr.mxu0 0.0
        %v9747 = vand.u32 %v9399, 4294901760
        %v9748 = vsub.f32 %v9399, %v9747
        %v9749 = vand.u32 %v9748, 4294901760
        %9750 = vmatpush1.msra.mxu0 %v9749
        %9751 = vmatprep.subr.mxu0 0.0
        %9752 = vmatpush2.msra.mxu0 0.0
        %9753 = vmatprep.subr.mxu0 0.0
        %9754 = vmatpush2.msra.mxu0 0.0
        %9755 = vmatprep.subr.mxu0 0.0
        %9756 = vmatpush2.msra.mxu0 0.0
        %9757 = vmatprep.subr.mxu0 0.0
        %9758 = vmatpush2.msra.mxu0 0.0
        %9759 = vmatprep.subr.mxu0 0.0
        %9760 = vmatpush2.msra.mxu0 0.0
        %9761 = vmatprep.subr.mxu0 0.0
        %9762 = vmatpush2.msra.mxu0 0.0
        %9763 = vmatprep.subr.mxu0 0.0
        %9764 = vmatpush2.msra.mxu0 0.0
        %9765 = vmatprep.subr.mxu0 0.0
        %9766 = vmatpush2.msra.mxu0 0.0
        %9767 = vmatprep.subr.mxu0 0.0
        %9768 = vmatpush2.msra.mxu0 0.0
        %9769 = vmatprep.subr.mxu0 0.0
        %9770 = vmatpush2.msra.mxu0 0.0
        %9771 = vmatprep.subr.mxu0 0.0
        %9772 = vmatpush2.msra.mxu0 0.0
        %9773 = vmatprep.subr.mxu0 0.0
        %9774 = vmatpush2.msra.mxu0 0.0
        %9775 = vmatprep.subr.mxu0 0.0
        %9776 = vmatpush2.msra.mxu0 0.0
        %9777 = vmatprep.subr.mxu0 0.0
        %9778 = vmatpush2.msra.mxu0 0.0
        %9779 = vmatprep.subr.mxu0 0.0
        %9780 = vmatpush2.msra.mxu0 0.0
        %9781 = vmatprep.subr.mxu0 0.0
        %9782 = vmatpush2.msra.mxu0 0.0
        %9783 = vmatprep.mubr.f32.mxu0 0.0
        %v9784 = vand.u32 %v9402, 4294901760
        %9785 = vmatmul.mubr.f32.gmra.mxu0 %v9784
        %v9786 = vpop.f32.mrf.mxu0
        %v9787 = vadd.f32 %v9710, %v9786
        %v9788 = vpop.f32.mrf.mxu0
        %9789 = vdwg.mxu0
        %9790 = vmatprep.subr.mxu0 0.0
        %9791 = vmatpush1.msra.mxu0 0.0
        %9792 = vmatprep.subr.mxu0 0.0
        %9793 = vmatpush1.msra.mxu0 0.0
        %9794 = vmatprep.subr.mxu0 0.0
        %9795 = vmatpush1.msra.mxu0 0.0
        %9796 = vmatprep.subr.mxu0 0.0
        %9797 = vmatpush1.msra.mxu0 0.0
        %9798 = vmatprep.subr.mxu0 0.0
        %9799 = vmatpush1.msra.mxu0 0.0
        %9800 = vmatprep.subr.mxu0 0.0
        %9801 = vmatpush1.msra.mxu0 0.0
        %9802 = vmatprep.subr.mxu0 0.0
        %9803 = vmatpush1.msra.mxu0 0.0
        %9804 = vmatprep.subr.mxu0 0.0
        %9805 = vmatpush1.msra.mxu0 0.0
        %9806 = vmatprep.subr.mxu0 0.0
        %9807 = vmatpush1.msra.mxu0 0.0
        %9808 = vmatprep.subr.mxu0 0.0
        %9809 = vmatpush1.msra.mxu0 0.0
        %9810 = vmatprep.subr.mxu0 0.0
        %9811 = vmatpush1.msra.mxu0 0.0
        %9812 = vmatprep.subr.mxu0 0.0
        %9813 = vmatpush1.msra.mxu0 0.0
        %9814 = vmatprep.subr.mxu0 0.0
        %9815 = vmatpush1.msra.mxu0 0.0
        %9816 = vmatprep.subr.mxu0 0.0
        %9817 = vmatpush1.msra.mxu0 0.0
        %9818 = vmatprep.subr.mxu0 0.0
        %v9819 = vand.u32 %v9400, 4294901760
        %9820 = vmatpush1.msra.mxu0 %v9819
        %9821 = vmatprep.subr.mxu0 0.0
        %v9822 = vand.u32 %v9399, 4294901760
        %9823 = vmatpush1.msra.mxu0 %v9822
        %9824 = vmatprep.subr.mxu0 0.0
        %9825 = vmatpush2.msra.mxu0 0.0
        %9826 = vmatprep.subr.mxu0 0.0
        %9827 = vmatpush2.msra.mxu0 0.0
        %9828 = vmatprep.subr.mxu0 0.0
        %9829 = vmatpush2.msra.mxu0 0.0
        %9830 = vmatprep.subr.mxu0 0.0
        %9831 = vmatpush2.msra.mxu0 0.0
        %9832 = vmatprep.subr.mxu0 0.0
        %9833 = vmatpush2.msra.mxu0 0.0
        %9834 = vmatprep.subr.mxu0 0.0
        %9835 = vmatpush2.msra.mxu0 0.0
        %9836 = vmatprep.subr.mxu0 0.0
        %9837 = vmatpush2.msra.mxu0 0.0
        %9838 = vmatprep.subr.mxu0 0.0
        %9839 = vmatpush2.msra.mxu0 0.0
        %9840 = vmatprep.subr.mxu0 0.0
        %9841 = vmatpush2.msra.mxu0 0.0
        %9842 = vmatprep.subr.mxu0 0.0
        %9843 = vmatpush2.msra.mxu0 0.0
        %9844 = vmatprep.subr.mxu0 0.0
        %9845 = vmatpush2.msra.mxu0 0.0
        %9846 = vmatprep.subr.mxu0 0.0
        %9847 = vmatpush2.msra.mxu0 0.0
        %9848 = vmatprep.subr.mxu0 0.0
        %9849 = vmatpush2.msra.mxu0 0.0
        %9850 = vmatprep.subr.mxu0 0.0
        %9851 = vmatpush2.msra.mxu0 0.0
        %9852 = vmatprep.subr.mxu0 0.0
        %9853 = vmatpush2.msra.mxu0 0.0
        %9854 = vmatprep.subr.mxu0 0.0
        %9855 = vmatpush2.msra.mxu0 0.0
        %9856 = vmatprep.mubr.f32.mxu0 0.0
        %v9857 = vand.u32 %v9402, 4294901760
        %9858 = vmatmul.mubr.f32.gmra.mxu0 %v9857
        %v9859 = vpop.f32.mrf.mxu0
        %v9860 = vadd.f32 %v9787, %v9859
        %v9861 = vpop.f32.mrf.mxu0
        %9862 = vdwg.mxu0
        %v9863 = vadd.f32 %v8905, %v9860
        %v9864 = vld [vmem:[%s3] sm:$0x1]
        %v9866 = vlaneseq
        %v9867 = vshrl.u32 %v9866, 7
        %v9868 = vsub.s32 0, %v9867
        %v9869 = vrot.slane %v9864, %v9868
        %v9871 = vadd.f32 %v9863, %v9869
        %v9872 = vmax.f32 %v9871, 0.0
        %v9873 = vld [vmem:[#allocation5] sm:$0xff]
        %v9874 = vld [vmem:[#allocation5 + $0x8] sm:$0xff]
        %v9875 = vld [vmem:[#allocation5 + $0x10] sm:$0xff]
        %v9876 = vld [vmem:[#allocation5 + $0x18] sm:$0xff]
        %v9877 = vld [vmem:[#allocation5 + $0x20] sm:$0xff]
        %v9878 = vld [vmem:[#allocation5 + $0x28] sm:$0xff]
        %v9879 = vld [vmem:[#allocation5 + $0x30] sm:$0xff]
        %v9880 = vld [vmem:[#allocation5 + $0x38] sm:$0xff]
        %v9881 = vld [vmem:[#allocation5 + $0x40] sm:$0xff]
        %v9882 = vld [vmem:[#allocation5 + $0x48] sm:$0xff]
        %v9883 = vld [vmem:[#allocation5 + $0x50] sm:$0xff]
        %v9884 = vld [vmem:[#allocation5 + $0x58] sm:$0xff]
        %v9885 = vld [vmem:[#allocation5 + $0x60] sm:$0xff]
        %v9886 = vld [vmem:[#allocation5 + $0x68] sm:$0xff]
        %v9887 = vld [vmem:[#allocation5 + $0x70] sm:$0xff]
        %v9888 = vld [vmem:[#allocation5 + $0x78] sm:$0xff]
        %v9889 = vld [vmem:[%s5] sm:$0x1]
        %v9891 = vlaneseq
        %v9892 = vshrl.u32 %v9891, 7
        %v9893 = vsub.s32 0, %v9892
        %v9894 = vrot.slane %v9889, %v9893
        %9896 = vmatprep.subr.mxu0 0.0
        %v9897 = vand.u32 %v9888, 4294901760
        %9898 = vmatpush1.msra.mxu0 %v9897
        %9899 = vmatprep.subr.mxu0 0.0
        %v9900 = vand.u32 %v9887, 4294901760
        %9901 = vmatpush1.msra.mxu0 %v9900
        %9902 = vmatprep.subr.mxu0 0.0
        %v9903 = vand.u32 %v9886, 4294901760
        %9904 = vmatpush1.msra.mxu0 %v9903
        %9905 = vmatprep.subr.mxu0 0.0
        %v9906 = vand.u32 %v9885, 4294901760
        %9907 = vmatpush1.msra.mxu0 %v9906
        %9908 = vmatprep.subr.mxu0 0.0
        %v9909 = vand.u32 %v9884, 4294901760
        %9910 = vmatpush1.msra.mxu0 %v9909
        %9911 = vmatprep.subr.mxu0 0.0
        %v9912 = vand.u32 %v9883, 4294901760
        %9913 = vmatpush1.msra.mxu0 %v9912
        %9914 = vmatprep.subr.mxu0 0.0
        %v9915 = vand.u32 %v9882, 4294901760
        %9916 = vmatpush1.msra.mxu0 %v9915
        %9917 = vmatprep.subr.mxu0 0.0
        %v9918 = vand.u32 %v9881, 4294901760
        %9919 = vmatpush1.msra.mxu0 %v9918
        %9920 = vmatprep.subr.mxu0 0.0
        %v9921 = vand.u32 %v9880, 4294901760
        %9922 = vmatpush1.msra.mxu0 %v9921
        %9923 = vmatprep.subr.mxu0 0.0
        %v9924 = vand.u32 %v9879, 4294901760
        %9925 = vmatpush1.msra.mxu0 %v9924
        %9926 = vmatprep.subr.mxu0 0.0
        %v9927 = vand.u32 %v9878, 4294901760
        %9928 = vmatpush1.msra.mxu0 %v9927
        %9929 = vmatprep.subr.mxu0 0.0
        %v9930 = vand.u32 %v9877, 4294901760
        %9931 = vmatpush1.msra.mxu0 %v9930
        %9932 = vmatprep.subr.mxu0 0.0
        %v9933 = vand.u32 %v9876, 4294901760
        %9934 = vmatpush1.msra.mxu0 %v9933
        %9935 = vmatprep.subr.mxu0 0.0
        %v9936 = vand.u32 %v9875, 4294901760
        %9937 = vmatpush1.msra.mxu0 %v9936
        %9938 = vmatprep.subr.mxu0 0.0
        %v9939 = vand.u32 %v9874, 4294901760
        %9940 = vmatpush1.msra.mxu0 %v9939
        %9941 = vmatprep.subr.mxu0 0.0
        %v9942 = vand.u32 %v9873, 4294901760
        %9943 = vmatpush1.msra.mxu0 %v9942
        %9944 = vmatprep.subr.mxu0 0.0
        %9945 = vmatpush2.msra.mxu0 0.0
        %9946 = vmatprep.subr.mxu0 0.0
        %9947 = vmatpush2.msra.mxu0 0.0
        %9948 = vmatprep.subr.mxu0 0.0
        %9949 = vmatpush2.msra.mxu0 0.0
        %9950 = vmatprep.subr.mxu0 0.0
        %9951 = vmatpush2.msra.mxu0 0.0
        %9952 = vmatprep.subr.mxu0 0.0
        %9953 = vmatpush2.msra.mxu0 0.0
        %9954 = vmatprep.subr.mxu0 0.0
        %9955 = vmatpush2.msra.mxu0 0.0
        %9956 = vmatprep.subr.mxu0 0.0
        %9957 = vmatpush2.msra.mxu0 0.0
        %9958 = vmatprep.subr.mxu0 0.0
        %9959 = vmatpush2.msra.mxu0 0.0
        %9960 = vmatprep.subr.mxu0 0.0
        %9961 = vmatpush2.msra.mxu0 0.0
        %9962 = vmatprep.subr.mxu0 0.0
        %9963 = vmatpush2.msra.mxu0 0.0
        %9964 = vmatprep.subr.mxu0 0.0
        %9965 = vmatpush2.msra.mxu0 0.0
        %9966 = vmatprep.subr.mxu0 0.0
        %9967 = vmatpush2.msra.mxu0 0.0
        %9968 = vmatprep.subr.mxu0 0.0
        %9969 = vmatpush2.msra.mxu0 0.0
        %9970 = vmatprep.subr.mxu0 0.0
        %9971 = vmatpush2.msra.mxu0 0.0
        %9972 = vmatprep.subr.mxu0 0.0
        %9973 = vmatpush2.msra.mxu0 0.0
        %9974 = vmatprep.subr.mxu0 0.0
        %9975 = vmatpush2.msra.mxu0 0.0
        %9976 = vmatprep.mubr.f32.mxu0 0.0
        %v9977 = vand.u32 %v9872, 4294901760
        %v9978 = vsub.f32 %v9872, %v9977
        %v9979 = vand.u32 %v9978, 4294901760
        %v9980 = vsub.f32 %v9978, %v9979
        %v9981 = vand.u32 %v9980, 4294901760
        %9982 = vmatmul.mubr.f32.gmra.mxu0 %v9981
        %v9983 = vpop.f32.mrf.mxu0
        %v9984 = vadd.f32 %v9894, %v9983
        %v9985 = vpop.f32.mrf.mxu0
        %9986 = vdwg.mxu0
        %9987 = vmatprep.subr.mxu0 0.0
        %v9988 = vand.u32 %v9888, 4294901760
        %v9989 = vsub.f32 %v9888, %v9988
        %v9990 = vand.u32 %v9989, 4294901760
        %v9991 = vsub.f32 %v9989, %v9990
        %v9992 = vand.u32 %v9991, 4294901760
        %9993 = vmatpush1.msra.mxu0 %v9992
        %9994 = vmatprep.subr.mxu0 0.0
        %v9995 = vand.u32 %v9887, 4294901760
        %v9996 = vsub.f32 %v9887, %v9995
        %v9997 = vand.u32 %v9996, 4294901760
        %v9998 = vsub.f32 %v9996, %v9997
        %v9999 = vand.u32 %v9998, 4294901760
        %10000 = vmatpush1.msra.mxu0 %v9999
        %10001 = vmatprep.subr.mxu0 0.0
        %v10002 = vand.u32 %v9886, 4294901760
        %v10003 = vsub.f32 %v9886, %v10002
        %v10004 = vand.u32 %v10003, 4294901760
        %v10005 = vsub.f32 %v10003, %v10004
        %v10006 = vand.u32 %v10005, 4294901760
        %10007 = vmatpush1.msra.mxu0 %v10006
        %10008 = vmatprep.subr.mxu0 0.0
        %v10009 = vand.u32 %v9885, 4294901760
        %v10010 = vsub.f32 %v9885, %v10009
        %v10011 = vand.u32 %v10010, 4294901760
        %v10012 = vsub.f32 %v10010, %v10011
        %v10013 = vand.u32 %v10012, 4294901760
        %10014 = vmatpush1.msra.mxu0 %v10013
        %10015 = vmatprep.subr.mxu0 0.0
        %v10016 = vand.u32 %v9884, 4294901760
        %v10017 = vsub.f32 %v9884, %v10016
        %v10018 = vand.u32 %v10017, 4294901760
        %v10019 = vsub.f32 %v10017, %v10018
        %v10020 = vand.u32 %v10019, 4294901760
        %10021 = vmatpush1.msra.mxu0 %v10020
        %10022 = vmatprep.subr.mxu0 0.0
        %v10023 = vand.u32 %v9883, 4294901760
        %v10024 = vsub.f32 %v9883, %v10023
        %v10025 = vand.u32 %v10024, 4294901760
        %v10026 = vsub.f32 %v10024, %v10025
        %v10027 = vand.u32 %v10026, 4294901760
        %10028 = vmatpush1.msra.mxu0 %v10027
        %10029 = vmatprep.subr.mxu0 0.0
        %v10030 = vand.u32 %v9882, 4294901760
        %v10031 = vsub.f32 %v9882, %v10030
        %v10032 = vand.u32 %v10031, 4294901760
        %v10033 = vsub.f32 %v10031, %v10032
        %v10034 = vand.u32 %v10033, 4294901760
        %10035 = vmatpush1.msra.mxu0 %v10034
        %10036 = vmatprep.subr.mxu0 0.0
        %v10037 = vand.u32 %v9881, 4294901760
        %v10038 = vsub.f32 %v9881, %v10037
        %v10039 = vand.u32 %v10038, 4294901760
        %v10040 = vsub.f32 %v10038, %v10039
        %v10041 = vand.u32 %v10040, 4294901760
        %10042 = vmatpush1.msra.mxu0 %v10041
        %10043 = vmatprep.subr.mxu0 0.0
        %v10044 = vand.u32 %v9880, 4294901760
        %v10045 = vsub.f32 %v9880, %v10044
        %v10046 = vand.u32 %v10045, 4294901760
        %v10047 = vsub.f32 %v10045, %v10046
        %v10048 = vand.u32 %v10047, 4294901760
        %10049 = vmatpush1.msra.mxu0 %v10048
        %10050 = vmatprep.subr.mxu0 0.0
        %v10051 = vand.u32 %v9879, 4294901760
        %v10052 = vsub.f32 %v9879, %v10051
        %v10053 = vand.u32 %v10052, 4294901760
        %v10054 = vsub.f32 %v10052, %v10053
        %v10055 = vand.u32 %v10054, 4294901760
        %10056 = vmatpush1.msra.mxu0 %v10055
        %10057 = vmatprep.subr.mxu0 0.0
        %v10058 = vand.u32 %v9878, 4294901760
        %v10059 = vsub.f32 %v9878, %v10058
        %v10060 = vand.u32 %v10059, 4294901760
        %v10061 = vsub.f32 %v10059, %v10060
        %v10062 = vand.u32 %v10061, 4294901760
        %10063 = vmatpush1.msra.mxu0 %v10062
        %10064 = vmatprep.subr.mxu0 0.0
        %v10065 = vand.u32 %v9877, 4294901760
        %v10066 = vsub.f32 %v9877, %v10065
        %v10067 = vand.u32 %v10066, 4294901760
        %v10068 = vsub.f32 %v10066, %v10067
        %v10069 = vand.u32 %v10068, 4294901760
        %10070 = vmatpush1.msra.mxu0 %v10069
        %10071 = vmatprep.subr.mxu0 0.0
        %v10072 = vand.u32 %v9876, 4294901760
        %v10073 = vsub.f32 %v9876, %v10072
        %v10074 = vand.u32 %v10073, 4294901760
        %v10075 = vsub.f32 %v10073, %v10074
        %v10076 = vand.u32 %v10075, 4294901760
        %10077 = vmatpush1.msra.mxu0 %v10076
        %10078 = vmatprep.subr.mxu0 0.0
        %v10079 = vand.u32 %v9875, 4294901760
        %v10080 = vsub.f32 %v9875, %v10079
        %v10081 = vand.u32 %v10080, 4294901760
        %v10082 = vsub.f32 %v10080, %v10081
        %v10083 = vand.u32 %v10082, 4294901760
        %10084 = vmatpush1.msra.mxu0 %v10083
        %10085 = vmatprep.subr.mxu0 0.0
        %v10086 = vand.u32 %v9874, 4294901760
        %v10087 = vsub.f32 %v9874, %v10086
        %v10088 = vand.u32 %v10087, 4294901760
        %v10089 = vsub.f32 %v10087, %v10088
        %v10090 = vand.u32 %v10089, 4294901760
        %10091 = vmatpush1.msra.mxu0 %v10090
        %10092 = vmatprep.subr.mxu0 0.0
        %v10093 = vand.u32 %v9873, 4294901760
        %v10094 = vsub.f32 %v9873, %v10093
        %v10095 = vand.u32 %v10094, 4294901760
        %v10096 = vsub.f32 %v10094, %v10095
        %v10097 = vand.u32 %v10096, 4294901760
        %10098 = vmatpush1.msra.mxu0 %v10097
        %10099 = vmatprep.subr.mxu0 0.0
        %10100 = vmatpush2.msra.mxu0 0.0
        %10101 = vmatprep.subr.mxu0 0.0
        %10102 = vmatpush2.msra.mxu0 0.0
        %10103 = vmatprep.subr.mxu0 0.0
        %10104 = vmatpush2.msra.mxu0 0.0
        %10105 = vmatprep.subr.mxu0 0.0
        %10106 = vmatpush2.msra.mxu0 0.0
        %10107 = vmatprep.subr.mxu0 0.0
        %10108 = vmatpush2.msra.mxu0 0.0
        %10109 = vmatprep.subr.mxu0 0.0
        %10110 = vmatpush2.msra.mxu0 0.0
        %10111 = vmatprep.subr.mxu0 0.0
        %10112 = vmatpush2.msra.mxu0 0.0
        %10113 = vmatprep.subr.mxu0 0.0
        %10114 = vmatpush2.msra.mxu0 0.0
        %10115 = vmatprep.subr.mxu0 0.0
        %10116 = vmatpush2.msra.mxu0 0.0
        %10117 = vmatprep.subr.mxu0 0.0
        %10118 = vmatpush2.msra.mxu0 0.0
        %10119 = vmatprep.subr.mxu0 0.0
        %10120 = vmatpush2.msra.mxu0 0.0
        %10121 = vmatprep.subr.mxu0 0.0
        %10122 = vmatpush2.msra.mxu0 0.0
        %10123 = vmatprep.subr.mxu0 0.0
        %10124 = vmatpush2.msra.mxu0 0.0
        %10125 = vmatprep.subr.mxu0 0.0
        %10126 = vmatpush2.msra.mxu0 0.0
        %10127 = vmatprep.subr.mxu0 0.0
        %10128 = vmatpush2.msra.mxu0 0.0
        %10129 = vmatprep.subr.mxu0 0.0
        %10130 = vmatpush2.msra.mxu0 0.0
        %10131 = vmatprep.mubr.f32.mxu0 0.0
        %v10132 = vand.u32 %v9872, 4294901760
        %10133 = vmatmul.mubr.f32.gmra.mxu0 %v10132
        %v10134 = vpop.f32.mrf.mxu0
        %v10135 = vadd.f32 %v9984, %v10134
        %v10136 = vpop.f32.mrf.mxu0
        %10137 = vdwg.mxu0
        %10138 = vmatprep.subr.mxu0 0.0
        %v10139 = vand.u32 %v9888, 4294901760
        %v10140 = vsub.f32 %v9888, %v10139
        %10141 = vmatpush1.msra.mxu0 %v10140
        %10142 = vmatprep.subr.mxu0 0.0
        %v10143 = vand.u32 %v9887, 4294901760
        %v10144 = vsub.f32 %v9887, %v10143
        %10145 = vmatpush1.msra.mxu0 %v10144
        %10146 = vmatprep.subr.mxu0 0.0
        %v10147 = vand.u32 %v9886, 4294901760
        %v10148 = vsub.f32 %v9886, %v10147
        %10149 = vmatpush1.msra.mxu0 %v10148
        %10150 = vmatprep.subr.mxu0 0.0
        %v10151 = vand.u32 %v9885, 4294901760
        %v10152 = vsub.f32 %v9885, %v10151
        %10153 = vmatpush1.msra.mxu0 %v10152
        %10154 = vmatprep.subr.mxu0 0.0
        %v10155 = vand.u32 %v9884, 4294901760
        %v10156 = vsub.f32 %v9884, %v10155
        %10157 = vmatpush1.msra.mxu0 %v10156
        %10158 = vmatprep.subr.mxu0 0.0
        %v10159 = vand.u32 %v9883, 4294901760
        %v10160 = vsub.f32 %v9883, %v10159
        %10161 = vmatpush1.msra.mxu0 %v10160
        %10162 = vmatprep.subr.mxu0 0.0
        %v10163 = vand.u32 %v9882, 4294901760
        %v10164 = vsub.f32 %v9882, %v10163
        %10165 = vmatpush1.msra.mxu0 %v10164
        %10166 = vmatprep.subr.mxu0 0.0
        %v10167 = vand.u32 %v9881, 4294901760
        %v10168 = vsub.f32 %v9881, %v10167
        %10169 = vmatpush1.msra.mxu0 %v10168
        %10170 = vmatprep.subr.mxu0 0.0
        %v10171 = vand.u32 %v9880, 4294901760
        %v10172 = vsub.f32 %v9880, %v10171
        %10173 = vmatpush1.msra.mxu0 %v10172
        %10174 = vmatprep.subr.mxu0 0.0
        %v10175 = vand.u32 %v9879, 4294901760
        %v10176 = vsub.f32 %v9879, %v10175
        %10177 = vmatpush1.msra.mxu0 %v10176
        %10178 = vmatprep.subr.mxu0 0.0
        %v10179 = vand.u32 %v9878, 4294901760
        %v10180 = vsub.f32 %v9878, %v10179
        %10181 = vmatpush1.msra.mxu0 %v10180
        %10182 = vmatprep.subr.mxu0 0.0
        %v10183 = vand.u32 %v9877, 4294901760
        %v10184 = vsub.f32 %v9877, %v10183
        %10185 = vmatpush1.msra.mxu0 %v10184
        %10186 = vmatprep.subr.mxu0 0.0
        %v10187 = vand.u32 %v9876, 4294901760
        %v10188 = vsub.f32 %v9876, %v10187
        %10189 = vmatpush1.msra.mxu0 %v10188
        %10190 = vmatprep.subr.mxu0 0.0
        %v10191 = vand.u32 %v9875, 4294901760
        %v10192 = vsub.f32 %v9875, %v10191
        %10193 = vmatpush1.msra.mxu0 %v10192
        %10194 = vmatprep.subr.mxu0 0.0
        %v10195 = vand.u32 %v9874, 4294901760
        %v10196 = vsub.f32 %v9874, %v10195
        %10197 = vmatpush1.msra.mxu0 %v10196
        %10198 = vmatprep.subr.mxu0 0.0
        %v10199 = vand.u32 %v9873, 4294901760
        %v10200 = vsub.f32 %v9873, %v10199
        %10201 = vmatpush1.msra.mxu0 %v10200
        %10202 = vmatprep.subr.mxu0 0.0
        %10203 = vmatpush2.msra.mxu0 0.0
        %10204 = vmatprep.subr.mxu0 0.0
        %10205 = vmatpush2.msra.mxu0 0.0
        %10206 = vmatprep.subr.mxu0 0.0
        %10207 = vmatpush2.msra.mxu0 0.0
        %10208 = vmatprep.subr.mxu0 0.0
        %10209 = vmatpush2.msra.mxu0 0.0
        %10210 = vmatprep.subr.mxu0 0.0
        %10211 = vmatpush2.msra.mxu0 0.0
        %10212 = vmatprep.subr.mxu0 0.0
        %10213 = vmatpush2.msra.mxu0 0.0
        %10214 = vmatprep.subr.mxu0 0.0
        %10215 = vmatpush2.msra.mxu0 0.0
        %10216 = vmatprep.subr.mxu0 0.0
        %10217 = vmatpush2.msra.mxu0 0.0
        %10218 = vmatprep.subr.mxu0 0.0
        %10219 = vmatpush2.msra.mxu0 0.0
        %10220 = vmatprep.subr.mxu0 0.0
        %10221 = vmatpush2.msra.mxu0 0.0
        %10222 = vmatprep.subr.mxu0 0.0
        %10223 = vmatpush2.msra.mxu0 0.0
        %10224 = vmatprep.subr.mxu0 0.0
        %10225 = vmatpush2.msra.mxu0 0.0
        %10226 = vmatprep.subr.mxu0 0.0
        %10227 = vmatpush2.msra.mxu0 0.0
        %10228 = vmatprep.subr.mxu0 0.0
        %10229 = vmatpush2.msra.mxu0 0.0
        %10230 = vmatprep.subr.mxu0 0.0
        %10231 = vmatpush2.msra.mxu0 0.0
        %10232 = vmatprep.subr.mxu0 0.0
        %10233 = vmatpush2.msra.mxu0 0.0
        %10234 = vmatprep.mubr.f32.mxu0 0.0
        %v10235 = vand.u32 %v9872, 4294901760
        %v10236 = vsub.f32 %v9872, %v10235
        %10237 = vmatmul.mubr.f32.gmra.mxu0 %v10236
        %v10238 = vpop.f32.mrf.mxu0
        %v10239 = vadd.f32 %v10135, %v10238
        %v10240 = vpop.f32.mrf.mxu0
        %10241 = vdwg.mxu0
        %10242 = vmatprep.subr.mxu0 0.0
        %v10243 = vand.u32 %v9888, 4294901760
        %10244 = vmatpush1.msra.mxu0 %v10243
        %10245 = vmatprep.subr.mxu0 0.0
        %v10246 = vand.u32 %v9887, 4294901760
        %10247 = vmatpush1.msra.mxu0 %v10246
        %10248 = vmatprep.subr.mxu0 0.0
        %v10249 = vand.u32 %v9886, 4294901760
        %10250 = vmatpush1.msra.mxu0 %v10249
        %10251 = vmatprep.subr.mxu0 0.0
        %v10252 = vand.u32 %v9885, 4294901760
        %10253 = vmatpush1.msra.mxu0 %v10252
        %10254 = vmatprep.subr.mxu0 0.0
        %v10255 = vand.u32 %v9884, 4294901760
        %10256 = vmatpush1.msra.mxu0 %v10255
        %10257 = vmatprep.subr.mxu0 0.0
        %v10258 = vand.u32 %v9883, 4294901760
        %10259 = vmatpush1.msra.mxu0 %v10258
        %10260 = vmatprep.subr.mxu0 0.0
        %v10261 = vand.u32 %v9882, 4294901760
        %10262 = vmatpush1.msra.mxu0 %v10261
        %10263 = vmatprep.subr.mxu0 0.0
        %v10264 = vand.u32 %v9881, 4294901760
        %10265 = vmatpush1.msra.mxu0 %v10264
        %10266 = vmatprep.subr.mxu0 0.0
        %v10267 = vand.u32 %v9880, 4294901760
        %10268 = vmatpush1.msra.mxu0 %v10267
        %10269 = vmatprep.subr.mxu0 0.0
        %v10270 = vand.u32 %v9879, 4294901760
        %10271 = vmatpush1.msra.mxu0 %v10270
        %10272 = vmatprep.subr.mxu0 0.0
        %v10273 = vand.u32 %v9878, 4294901760
        %10274 = vmatpush1.msra.mxu0 %v10273
        %10275 = vmatprep.subr.mxu0 0.0
        %v10276 = vand.u32 %v9877, 4294901760
        %10277 = vmatpush1.msra.mxu0 %v10276
        %10278 = vmatprep.subr.mxu0 0.0
        %v10279 = vand.u32 %v9876, 4294901760
        %10280 = vmatpush1.msra.mxu0 %v10279
        %10281 = vmatprep.subr.mxu0 0.0
        %v10282 = vand.u32 %v9875, 4294901760
        %10283 = vmatpush1.msra.mxu0 %v10282
        %10284 = vmatprep.subr.mxu0 0.0
        %v10285 = vand.u32 %v9874, 4294901760
        %10286 = vmatpush1.msra.mxu0 %v10285
        %10287 = vmatprep.subr.mxu0 0.0
        %v10288 = vand.u32 %v9873, 4294901760
        %10289 = vmatpush1.msra.mxu0 %v10288
        %10290 = vmatprep.subr.mxu0 0.0
        %10291 = vmatpush2.msra.mxu0 0.0
        %10292 = vmatprep.subr.mxu0 0.0
        %10293 = vmatpush2.msra.mxu0 0.0
        %10294 = vmatprep.subr.mxu0 0.0
        %10295 = vmatpush2.msra.mxu0 0.0
        %10296 = vmatprep.subr.mxu0 0.0
        %10297 = vmatpush2.msra.mxu0 0.0
        %10298 = vmatprep.subr.mxu0 0.0
        %10299 = vmatpush2.msra.mxu0 0.0
        %10300 = vmatprep.subr.mxu0 0.0
        %10301 = vmatpush2.msra.mxu0 0.0
        %10302 = vmatprep.subr.mxu0 0.0
        %10303 = vmatpush2.msra.mxu0 0.0
        %10304 = vmatprep.subr.mxu0 0.0
        %10305 = vmatpush2.msra.mxu0 0.0
        %10306 = vmatprep.subr.mxu0 0.0
        %10307 = vmatpush2.msra.mxu0 0.0
        %10308 = vmatprep.subr.mxu0 0.0
        %10309 = vmatpush2.msra.mxu0 0.0
        %10310 = vmatprep.subr.mxu0 0.0
        %10311 = vmatpush2.msra.mxu0 0.0
        %10312 = vmatprep.subr.mxu0 0.0
        %10313 = vmatpush2.msra.mxu0 0.0
        %10314 = vmatprep.subr.mxu0 0.0
        %10315 = vmatpush2.msra.mxu0 0.0
        %10316 = vmatprep.subr.mxu0 0.0
        %10317 = vmatpush2.msra.mxu0 0.0
        %10318 = vmatprep.subr.mxu0 0.0
        %10319 = vmatpush2.msra.mxu0 0.0
        %10320 = vmatprep.subr.mxu0 0.0
        %10321 = vmatpush2.msra.mxu0 0.0
        %10322 = vmatprep.mubr.f32.mxu0 0.0
        %v10323 = vand.u32 %v9872, 4294901760
        %v10324 = vsub.f32 %v9872, %v10323
        %v10325 = vand.u32 %v10324, 4294901760
        %10326 = vmatmul.mubr.f32.gmra.mxu0 %v10325
        %v10327 = vpop.f32.mrf.mxu0
        %v10328 = vadd.f32 %v10239, %v10327
        %v10329 = vpop.f32.mrf.mxu0
        %10330 = vdwg.mxu0
        %10331 = vmatprep.subr.mxu0 0.0
        %v10332 = vand.u32 %v9888, 4294901760
        %v10333 = vsub.f32 %v9888, %v10332
        %v10334 = vand.u32 %v10333, 4294901760
        %10335 = vmatpush1.msra.mxu0 %v10334
        %10336 = vmatprep.subr.mxu0 0.0
        %v10337 = vand.u32 %v9887, 4294901760
        %v10338 = vsub.f32 %v9887, %v10337
        %v10339 = vand.u32 %v10338, 4294901760
        %10340 = vmatpush1.msra.mxu0 %v10339
        %10341 = vmatprep.subr.mxu0 0.0
        %v10342 = vand.u32 %v9886, 4294901760
        %v10343 = vsub.f32 %v9886, %v10342
        %v10344 = vand.u32 %v10343, 4294901760
        %10345 = vmatpush1.msra.mxu0 %v10344
        %10346 = vmatprep.subr.mxu0 0.0
        %v10347 = vand.u32 %v9885, 4294901760
        %v10348 = vsub.f32 %v9885, %v10347
        %v10349 = vand.u32 %v10348, 4294901760
        %10350 = vmatpush1.msra.mxu0 %v10349
        %10351 = vmatprep.subr.mxu0 0.0
        %v10352 = vand.u32 %v9884, 4294901760
        %v10353 = vsub.f32 %v9884, %v10352
        %v10354 = vand.u32 %v10353, 4294901760
        %10355 = vmatpush1.msra.mxu0 %v10354
        %10356 = vmatprep.subr.mxu0 0.0
        %v10357 = vand.u32 %v9883, 4294901760
        %v10358 = vsub.f32 %v9883, %v10357
        %v10359 = vand.u32 %v10358, 4294901760
        %10360 = vmatpush1.msra.mxu0 %v10359
        %10361 = vmatprep.subr.mxu0 0.0
        %v10362 = vand.u32 %v9882, 4294901760
        %v10363 = vsub.f32 %v9882, %v10362
        %v10364 = vand.u32 %v10363, 4294901760
        %10365 = vmatpush1.msra.mxu0 %v10364
        %10366 = vmatprep.subr.mxu0 0.0
        %v10367 = vand.u32 %v9881, 4294901760
        %v10368 = vsub.f32 %v9881, %v10367
        %v10369 = vand.u32 %v10368, 4294901760
        %10370 = vmatpush1.msra.mxu0 %v10369
        %10371 = vmatprep.subr.mxu0 0.0
        %v10372 = vand.u32 %v9880, 4294901760
        %v10373 = vsub.f32 %v9880, %v10372
        %v10374 = vand.u32 %v10373, 4294901760
        %10375 = vmatpush1.msra.mxu0 %v10374
        %10376 = vmatprep.subr.mxu0 0.0
        %v10377 = vand.u32 %v9879, 4294901760
        %v10378 = vsub.f32 %v9879, %v10377
        %v10379 = vand.u32 %v10378, 4294901760
        %10380 = vmatpush1.msra.mxu0 %v10379
        %10381 = vmatprep.subr.mxu0 0.0
        %v10382 = vand.u32 %v9878, 4294901760
        %v10383 = vsub.f32 %v9878, %v10382
        %v10384 = vand.u32 %v10383, 4294901760
        %10385 = vmatpush1.msra.mxu0 %v10384
        %10386 = vmatprep.subr.mxu0 0.0
        %v10387 = vand.u32 %v9877, 4294901760
        %v10388 = vsub.f32 %v9877, %v10387
        %v10389 = vand.u32 %v10388, 4294901760
        %10390 = vmatpush1.msra.mxu0 %v10389
        %10391 = vmatprep.subr.mxu0 0.0
        %v10392 = vand.u32 %v9876, 4294901760
        %v10393 = vsub.f32 %v9876, %v10392
        %v10394 = vand.u32 %v10393, 4294901760
        %10395 = vmatpush1.msra.mxu0 %v10394
        %10396 = vmatprep.subr.mxu0 0.0
        %v10397 = vand.u32 %v9875, 4294901760
        %v10398 = vsub.f32 %v9875, %v10397
        %v10399 = vand.u32 %v10398, 4294901760
        %10400 = vmatpush1.msra.mxu0 %v10399
        %10401 = vmatprep.subr.mxu0 0.0
        %v10402 = vand.u32 %v9874, 4294901760
        %v10403 = vsub.f32 %v9874, %v10402
        %v10404 = vand.u32 %v10403, 4294901760
        %10405 = vmatpush1.msra.mxu0 %v10404
        %10406 = vmatprep.subr.mxu0 0.0
        %v10407 = vand.u32 %v9873, 4294901760
        %v10408 = vsub.f32 %v9873, %v10407
        %v10409 = vand.u32 %v10408, 4294901760
        %10410 = vmatpush1.msra.mxu0 %v10409
        %10411 = vmatprep.subr.mxu0 0.0
        %10412 = vmatpush2.msra.mxu0 0.0
        %10413 = vmatprep.subr.mxu0 0.0
        %10414 = vmatpush2.msra.mxu0 0.0
        %10415 = vmatprep.subr.mxu0 0.0
        %10416 = vmatpush2.msra.mxu0 0.0
        %10417 = vmatprep.subr.mxu0 0.0
        %10418 = vmatpush2.msra.mxu0 0.0
        %10419 = vmatprep.subr.mxu0 0.0
        %10420 = vmatpush2.msra.mxu0 0.0
        %10421 = vmatprep.subr.mxu0 0.0
        %10422 = vmatpush2.msra.mxu0 0.0
        %10423 = vmatprep.subr.mxu0 0.0
        %10424 = vmatpush2.msra.mxu0 0.0
        %10425 = vmatprep.subr.mxu0 0.0
        %10426 = vmatpush2.msra.mxu0 0.0
        %10427 = vmatprep.subr.mxu0 0.0
        %10428 = vmatpush2.msra.mxu0 0.0
        %10429 = vmatprep.subr.mxu0 0.0
        %10430 = vmatpush2.msra.mxu0 0.0
        %10431 = vmatprep.subr.mxu0 0.0
        %10432 = vmatpush2.msra.mxu0 0.0
        %10433 = vmatprep.subr.mxu0 0.0
        %10434 = vmatpush2.msra.mxu0 0.0
        %10435 = vmatprep.subr.mxu0 0.0
        %10436 = vmatpush2.msra.mxu0 0.0
        %10437 = vmatprep.subr.mxu0 0.0
        %10438 = vmatpush2.msra.mxu0 0.0
        %10439 = vmatprep.subr.mxu0 0.0
        %10440 = vmatpush2.msra.mxu0 0.0
        %10441 = vmatprep.subr.mxu0 0.0
        %10442 = vmatpush2.msra.mxu0 0.0
        %10443 = vmatprep.mubr.f32.mxu0 0.0
        %v10444 = vand.u32 %v9872, 4294901760
        %10445 = vmatmul.mubr.f32.gmra.mxu0 %v10444
        %v10446 = vpop.f32.mrf.mxu0
        %v10447 = vadd.f32 %v10328, %v10446
        %v10448 = vpop.f32.mrf.mxu0
        %10449 = vdwg.mxu0
        %10450 = vmatprep.subr.mxu0 0.0
        %v10451 = vand.u32 %v9888, 4294901760
        %10452 = vmatpush1.msra.mxu0 %v10451
        %10453 = vmatprep.subr.mxu0 0.0
        %v10454 = vand.u32 %v9887, 4294901760
        %10455 = vmatpush1.msra.mxu0 %v10454
        %10456 = vmatprep.subr.mxu0 0.0
        %v10457 = vand.u32 %v9886, 4294901760
        %10458 = vmatpush1.msra.mxu0 %v10457
        %10459 = vmatprep.subr.mxu0 0.0
        %v10460 = vand.u32 %v9885, 4294901760
        %10461 = vmatpush1.msra.mxu0 %v10460
        %10462 = vmatprep.subr.mxu0 0.0
        %v10463 = vand.u32 %v9884, 4294901760
        %10464 = vmatpush1.msra.mxu0 %v10463
        %10465 = vmatprep.subr.mxu0 0.0
        %v10466 = vand.u32 %v9883, 4294901760
        %10467 = vmatpush1.msra.mxu0 %v10466
        %10468 = vmatprep.subr.mxu0 0.0
        %v10469 = vand.u32 %v9882, 4294901760
        %10470 = vmatpush1.msra.mxu0 %v10469
        %10471 = vmatprep.subr.mxu0 0.0
        %v10472 = vand.u32 %v9881, 4294901760
        %10473 = vmatpush1.msra.mxu0 %v10472
        %10474 = vmatprep.subr.mxu0 0.0
        %v10475 = vand.u32 %v9880, 4294901760
        %10476 = vmatpush1.msra.mxu0 %v10475
        %10477 = vmatprep.subr.mxu0 0.0
        %v10478 = vand.u32 %v9879, 4294901760
        %10479 = vmatpush1.msra.mxu0 %v10478
        %10480 = vmatprep.subr.mxu0 0.0
        %v10481 = vand.u32 %v9878, 4294901760
        %10482 = vmatpush1.msra.mxu0 %v10481
        %10483 = vmatprep.subr.mxu0 0.0
        %v10484 = vand.u32 %v9877, 4294901760
        %10485 = vmatpush1.msra.mxu0 %v10484
        %10486 = vmatprep.subr.mxu0 0.0
        %v10487 = vand.u32 %v9876, 4294901760
        %10488 = vmatpush1.msra.mxu0 %v10487
        %10489 = vmatprep.subr.mxu0 0.0
        %v10490 = vand.u32 %v9875, 4294901760
        %10491 = vmatpush1.msra.mxu0 %v10490
        %10492 = vmatprep.subr.mxu0 0.0
        %v10493 = vand.u32 %v9874, 4294901760
        %10494 = vmatpush1.msra.mxu0 %v10493
        %10495 = vmatprep.subr.mxu0 0.0
        %v10496 = vand.u32 %v9873, 4294901760
        %10497 = vmatpush1.msra.mxu0 %v10496
        %10498 = vmatprep.subr.mxu0 0.0
        %10499 = vmatpush2.msra.mxu0 0.0
        %10500 = vmatprep.subr.mxu0 0.0
        %10501 = vmatpush2.msra.mxu0 0.0
        %10502 = vmatprep.subr.mxu0 0.0
        %10503 = vmatpush2.msra.mxu0 0.0
        %10504 = vmatprep.subr.mxu0 0.0
        %10505 = vmatpush2.msra.mxu0 0.0
        %10506 = vmatprep.subr.mxu0 0.0
        %10507 = vmatpush2.msra.mxu0 0.0
        %10508 = vmatprep.subr.mxu0 0.0
        %10509 = vmatpush2.msra.mxu0 0.0
        %10510 = vmatprep.subr.mxu0 0.0
        %10511 = vmatpush2.msra.mxu0 0.0
        %10512 = vmatprep.subr.mxu0 0.0
        %10513 = vmatpush2.msra.mxu0 0.0
        %10514 = vmatprep.subr.mxu0 0.0
        %10515 = vmatpush2.msra.mxu0 0.0
        %10516 = vmatprep.subr.mxu0 0.0
        %10517 = vmatpush2.msra.mxu0 0.0
        %10518 = vmatprep.subr.mxu0 0.0
        %10519 = vmatpush2.msra.mxu0 0.0
        %10520 = vmatprep.subr.mxu0 0.0
        %10521 = vmatpush2.msra.mxu0 0.0
        %10522 = vmatprep.subr.mxu0 0.0
        %10523 = vmatpush2.msra.mxu0 0.0
        %10524 = vmatprep.subr.mxu0 0.0
        %10525 = vmatpush2.msra.mxu0 0.0
        %10526 = vmatprep.subr.mxu0 0.0
        %10527 = vmatpush2.msra.mxu0 0.0
        %10528 = vmatprep.subr.mxu0 0.0
        %10529 = vmatpush2.msra.mxu0 0.0
        %10530 = vmatprep.mubr.f32.mxu0 0.0
        %v10531 = vand.u32 %v9872, 4294901760
        %10532 = vmatmul.mubr.f32.gmra.mxu0 %v10531
        %v10533 = vpop.f32.mrf.mxu0
        %v10534 = vadd.f32 %v10447, %v10533
        %v10535 = vpop.f32.mrf.mxu0
        %10536 = vdwg.mxu0
        %10537 = vst [vmem:[%s272] sm:$0xff] %v10534
        %s10538 = sand.u32 %s161, 1
        %s10539 = scalar_lea.sflag [#allocation4], %s10538
        %s10540 = sand.u32 %s161, 1
        %s10541 = smul.addr %s10540, 8
        %s10542 = scalar_lea.vmem [#allocation7], %s10541
        // Predicated region
        $region53: #{tpu_custom_call.1} parent=43 // pred_check
          %p10543 = pneg %p171
        $region54: #{tpu_custom_call.1} parent=43 // pred_check_branch
          %10545 = sbr.rel (%p10543) target = $region56
        $region55: #{tpu_custom_call.1} parent=43 // pred_region
          %s10547 = ssub.s32 128, 128
          %10548 = vsyncadd %s10539, %s10547
          %s10549 = smul.addr %s22, 128
          %s10550 = scalar_lea.hbm %s6, %s10549
          %s10552 = sshll.u32 %s10542, 4
          %s10553 = int_to_ptr.vmem [resolvable:$true] %s10552
          %10555 = dma.vmem_to_hbm [thread:$0]  %s10553, 128, %s10550, %s10539
        $region56: #{tpu_custom_call.1} parent=43 // pred_fallthru
          _
      $region44: #{tpu_custom_call.1} parent=5 // pred_fallthru
        _
      %p10556 = scmp.le.s32.totalorder 2, %s17
      // Predicated region
      $region57: #{tpu_custom_call.1} parent=5 // pred_check
        %p10557 = pneg %p10556
      $region58: #{tpu_custom_call.1} parent=5 // pred_check_branch
        %10559 = sbr.rel (%p10557) target = $region60
      $region59: #{tpu_custom_call.1} parent=5 // pred_region
        %s10560 = ssub.s32 %s17, 2
        // Predicated region
        $region61: #{tpu_custom_call.1} parent=59 // pred_check
          %p10561 = pneg %p177
        $region62: #{tpu_custom_call.1} parent=59 // pred_check_branch
          %10563 = sbr.rel (%p10561) target = $region64
        $region63: #{tpu_custom_call.1} parent=59 // pred_region
          %s10564 = sand.u32 %s162, 1
          %s10565 = scalar_lea.sflag [#allocation4], %s10564
          %s10566 = sand.u32 %s162, 1
          %s10567 = smul.addr %s10566, 8
          %s10568 = scalar_lea.vmem [#allocation7], %s10567
          %10569 = dma.done %s10565, 128
        $region64: #{tpu_custom_call.1} parent=59 // pred_fallthru
          _
      $region60: #{tpu_custom_call.1} parent=5 // pred_fallthru
        _
    $region6: #{tpu_custom_call.1} parent=1 // loop_footer
      %s21 = sadd.s32 1, %s17
    $region7: #{tpu_custom_call.1} parent=1 // loop_footer_branch
      %16 = sbr.rel target = $region3
    $region8: #{tpu_custom_call.1} parent=1 // loop_exit
      _
    %10570 = vsyncpa [#allocation3], 1
    %s10571 = scalar_lea.sflag [#allocation3], 1
    %10572 = vsyncpa %s10571, 1
    %10573 = vsyncpa [#allocation6], 1
    %10574 = vsyncpa [#allocation4], 1
    %s10575 = scalar_lea.sflag [#allocation4], 1
    %10576 = vsyncpa %s10575, 1

</llo_original>
